<compile_context>
chip_gen: v7x
topology: tpu7x:2x2x1
jax: 0.10.0
libtpu: 0.0.40
codegen_flags: <defaults>
</compile_context>

<pallas_src>
import math
from functools import partial

import jax
import jax.numpy as jnp
from jax.experimental import pallas as pl
from jax.experimental.pallas import tpu as pltpu

EPS = 1e-8
_GELU_C = math.sqrt(2.0 / math.pi)


def _gelu_tanh(y):
    # TODO(synk): PyTorch nn.GELU() defaults to the exact erf form; erf has no
    # reliable Mosaic lowering, so the tanh approximation is used here.
    return 0.5 * y * (1.0 + jnp.tanh(_GELU_C * (y + 0.044715 * y * y * y)))


# ----------------------------------------------------------------------------
# Kernel bodies
# ----------------------------------------------------------------------------

def _encode_kernel(x_ref, w_ref, b_ref, o_ref, inv_ref, *, h, eps):
    # One batch element: encoder Linear + first layer's inverse-RMS statistic.
    # x: (1, d_in, L); w: (H, d_in) PyTorch Linear weight layout; b: (H, 1).
    xe = jnp.dot(w_ref[...], x_ref[0],
                 preferred_element_type=jnp.float32) + b_ref[...]        # (H, L)
    o_ref[0] = xe
    # PyTorch RMSNorm form: x / (||x|| * d^{-1/2} + eps)  (eps OUTSIDE sqrt).
    ms = jnp.sum(xe * xe, axis=0, keepdims=True) * (1.0 / h)             # (1, L)
    inv_ref[0] = pl.reciprocal(jnp.sqrt(ms) + eps, approx=True)


def _s4_layer_kernel(x_ref, inv_ref, scale_ref, kt_ref, d_ref, w_ref, b_ref,
                     o_ref, invo_ref, *, h, eps):
    # One fused S4D block for one batch element; the intermediate y never
    # leaves VMEM.  Blocks: x (1,H,L) f32; inv (1,1,L); scale (H,1);
    # kt (H,L,L) bf16 Toeplitz; d (H,1); w (2H,H); b (2H,1).
    xb = x_ref[0]                                          # (H, L) raw activation
    inv = inv_ref[0]                                       # (1, L) 1/(rms + eps)

    # Inline prenorm RMSNorm.
    z = xb * inv * scale_ref[...]                          # (H, L)

    # Causal conv y[h, l] = sum_m z[h, m] * k[h, l - m] as ONE batched bf16
    # MXU matmul against the precomputed per-head Toeplitz kt[h, m, l].
    # TODO(synk): M=1 per head (one batch element per grid step) underfills the
    # MXU; the structural fix for long L / small B is the chunked-scan form.
    z_b = z.astype(jnp.bfloat16)[:, None, :]               # (H, 1, L)
    y = jax.lax.dot_general(
        z_b, kt_ref[...],
        dimension_numbers=(((2,), (1,)), ((0,), (0,))),
        preferred_element_type=jnp.float32)[:, 0, :]       # (H, L) f32
    y = y + z * d_ref[...]                                 # D skip
    y = _gelu_tanh(y)

    # output_linear: Conv1d(H, 2H, k=1) + GLU(dim=-2), then residual add.
    v = jnp.dot(w_ref[...].astype(jnp.bfloat16), y.astype(jnp.bfloat16),
                preferred_element_type=jnp.float32) + b_ref[...]         # (2H, L)
    newx = v[:h, :] * jax.nn.sigmoid(v[h:, :]) + xb        # (H, L)
    o_ref[0] = newx

    # Inverse-RMS statistic for the NEXT layer's prenorm RMSNorm.
    ms = jnp.sum(newx * newx, axis=0, keepdims=True) * (1.0 / h)         # (1, L)
    invo_ref[0] = pl.reciprocal(jnp.sqrt(ms) + eps, approx=True)


def _pool_decode_kernel(x_ref, w_ref, b_ref, o_ref, acc_ref, *, inv_L):
    # Mean over L (tiled reduction over an "arbitrary" grid axis), then ONE
    # (B, H) x (H, d_out) matmul in the finalize step.
    li = pl.program_id(0)

    @pl.when(li == 0)
    def _():
        acc_ref[...] = jnp.zeros_like(acc_ref)

    acc_ref[...] += jnp.sum(x_ref[...], axis=-1)           # (B, H)

    @pl.when(li == pl.num_programs(0) - 1)
    def _():
        pooled = acc_ref[...] * inv_L
        o_ref[...] = jnp.dot(pooled, w_ref[...],
                             preferred_element_type=jnp.float32) + b_ref[...]


# ----------------------------------------------------------------------------
# Pallas wrappers
# ----------------------------------------------------------------------------

def encode(x_dlt, w_enc, b_enc, *, eps=EPS):
    B, d_in, L = x_dlt.shape
    H = w_enc.shape[0]
    return pl.pallas_call(
        partial(_encode_kernel, h=H, eps=eps),
        out_shape=(jax.ShapeDtypeStruct((B, H, L), jnp.float32),
                   jax.ShapeDtypeStruct((B, 1, L), jnp.float32)),
        grid=(B,),
        in_specs=[
            pl.BlockSpec((1, d_in, L), lambda b: (b, 0, 0)),
            pl.BlockSpec((H, d_in), lambda b: (0, 0)),       # VMEM-resident
            pl.BlockSpec((H, 1), lambda b: (0, 0)),          # VMEM-resident
        ],
        out_specs=(pl.BlockSpec((1, H, L), lambda b: (b, 0, 0)),
                   pl.BlockSpec((1, 1, L), lambda b: (b, 0, 0))),
        compiler_params=pltpu.CompilerParams(dimension_semantics=("parallel",)),
    )(x_dlt, w_enc, b_enc)


def s4_layer(x_bhl, inv, scale_col, kt_bf16, d_col, w_out, b_out, *, eps=EPS):
    B, H, L = x_bhl.shape
    flops = 2 * B * H * L * L + 2 * B * (2 * H) * H * L
    bytes_acc = (4 * (2 * B * H * L + 2 * B * L)     # activations + stats
                 + 2 * H * L * L                     # bf16 Toeplitz (resident)
                 + 4 * (2 * H * H + 4 * H))          # weights
    return pl.pallas_call(
        partial(_s4_layer_kernel, h=H, eps=eps),
        out_shape=(jax.ShapeDtypeStruct((B, H, L), jnp.float32),
                   jax.ShapeDtypeStruct((B, 1, L), jnp.float32)),
        grid=(B,),
        in_specs=[
            pl.BlockSpec((1, H, L), lambda b: (b, 0, 0)),
            pl.BlockSpec((1, 1, L), lambda b: (b, 0, 0)),
            pl.BlockSpec((H, 1), lambda b: (0, 0)),          # resident
            pl.BlockSpec((H, L, L), lambda b: (0, 0, 0)),    # resident bf16 Toeplitz
            pl.BlockSpec((H, 1), lambda b: (0, 0)),          # resident
            pl.BlockSpec((2 * H, H), lambda b: (0, 0)),      # resident
            pl.BlockSpec((2 * H, 1), lambda b: (0, 0)),      # resident
        ],
        out_specs=(pl.BlockSpec((1, H, L), lambda b: (b, 0, 0)),
                   pl.BlockSpec((1, 1, L), lambda b: (b, 0, 0))),
        compiler_params=pltpu.CompilerParams(
            dimension_semantics=("parallel",),
            # Sized so the resident Toeplitz + double-buffered activation blocks
            # stay well under v7x's 64 MiB physical VMEM; v5e/v6e have 128 MiB.
            vmem_limit_bytes=48 * 1024 * 1024),
        cost_estimate=pl.CostEstimate(flops=flops,
                                      transcendentals=2 * B * H * L,
                                      bytes_accessed=bytes_acc),
    )(x_bhl, inv, scale_col, kt_bf16, d_col, w_out, b_out)


def pool_decode(x_bhl, w_dec, b_dec):
    B, H, L = x_bhl.shape
    dout = w_dec.shape[1]
    lt = 512 if (L % 512 == 0) else L                 # L-tile (multiple of 128 or full L)
    nl = L // lt
    return pl.pallas_call(
        partial(_pool_decode_kernel, inv_L=1.0 / L),
        out_shape=jax.ShapeDtypeStruct((B, dout), jnp.float32),
        grid=(nl,),
        in_specs=[
            pl.BlockSpec((B, H, lt), lambda l: (0, 0, l)),
            pl.BlockSpec((H, dout), lambda l: (0, 0)),
            pl.BlockSpec((1, dout), lambda l: (0, 0)),
        ],
        out_specs=pl.BlockSpec((B, dout), lambda l: (0, 0)),
        scratch_shapes=[pltpu.VMEM((B, H), jnp.float32)],
        compiler_params=pltpu.CompilerParams(dimension_semantics=("arbitrary",)),
    )(x_bhl, w_dec, b_dec)


# ----------------------------------------------------------------------------
# Plain-JAX glue: S4D kernel generation + Toeplitz precompute (per layer)
# ----------------------------------------------------------------------------

def s4d_conv_kernel_weights(lp, L):
    dt = jnp.exp(lp["log_dt"])                                 # (H,)
    C = lp["C_re"] + 1j * lp["C_im"]                           # (H, N2)
    A = -jnp.exp(lp["log_A_real"]) + 1j * lp["A_imag"]         # (H, N2)
    dtA = A * dt[:, None]
    K = dtA[:, :, None] * jnp.arange(L)                        # (H, N2, L)
    C2 = C * (jnp.exp(dtA) - 1.0) / A
    k = 2.0 * jnp.real(jnp.einsum("hn,hnl->hl", C2, jnp.exp(K)))
    return k.astype(jnp.float32)                               # (H, L)


def s4d_toeplitz_bf16(lp, L):
    """Precompute the per-head causal Toeplitz kt[h, m, l] = k[h, l-m] (l>=m)."""
    k = s4d_conv_kernel_weights(lp, L)                         # (H, L)
    idx = jnp.arange(L)
    diff = idx[None, :] - idx[:, None]                         # diff[m, l] = l - m
    gathered = jnp.take(k, jnp.clip(diff, 0, L - 1), axis=1)   # (H, L, L)
    kt = jnp.where(diff[None, :, :] >= 0, gathered, 0.0)
    return kt.astype(jnp.bfloat16)


# ----------------------------------------------------------------------------
# Janus forward
# ----------------------------------------------------------------------------

@jax.jit
def janus_forward(params, x):
    """x: (B, L, d_input) -> (B, d_output)."""
    B, L, d_in = x.shape
    # Tiny transpose of the raw d_input channels only; the (B, H, L) activation
    # then never goes through an HBM-level transpose again.
    x_dlt = jnp.transpose(x, (0, 2, 1))                        # (B, d_in, L)
    x_bhl, inv = encode(x_dlt, params["w_enc"], params["b_enc"])
    for lp in params["layers"]:
        kt = s4d_toeplitz_bf16(lp, L)                          # (H, L, L) bf16
        x_bhl, inv = s4_layer(x_bhl, inv, lp["norm_scale"], kt, lp["D"],
                              lp["w_out"], lp["b_out"])
        # outer Dropout1d / inner DropoutNd: identity in eval mode
    return pool_decode(x_bhl, params["w_dec"], params["b_dec"])


# ----------------------------------------------------------------------------
# Deterministic parameter initialization (shapes from the module __init__)
# ----------------------------------------------------------------------------

def init_params(key, d_input, d_model, d_output, n_layers, d_state):
    H, N2 = d_model, d_state // 2
    keys = jax.random.split(key, 2 + n_layers)
    params = {
        "w_enc": jax.random.normal(keys[0], (H, d_input), jnp.float32)
        / math.sqrt(d_input),
        "b_enc": jnp.zeros((H, 1), jnp.float32),
        "w_dec": jax.random.normal(keys[1], (H, d_output), jnp.float32)
        / math.sqrt(H),
        "b_dec": jnp.zeros((1, d_output), jnp.float32),
        "layers": [],
    }
    for i in range(n_layers):
        kk = jax.random.split(keys[2 + i], 6)
        log_dt = (jax.random.uniform(kk[0], (H,), jnp.float32)
                  * (math.log(0.1) - math.log(0.001)) + math.log(0.001))
        layer = {
            "norm_scale": jnp.ones((H, 1), jnp.float32),
            "log_dt": log_dt,
            "C_re": jax.random.normal(kk[1], (H, N2), jnp.float32) * (2.0 ** -0.5),
            "C_im": jax.random.normal(kk[2], (H, N2), jnp.float32) * (2.0 ** -0.5),
            "log_A_real": jnp.log(0.5 * jnp.ones((H, N2), jnp.float32)),
            "A_imag": math.pi * jnp.tile(jnp.arange(N2, dtype=jnp.float32), (H, 1)),
            "D": jax.random.normal(kk[3], (H, 1), jnp.float32),
            "w_out": jax.random.normal(kk[4], (2 * H, H), jnp.float32)
            / math.sqrt(H),
            "b_out": 0.01 * jax.random.normal(kk[5], (2 * H, 1), jnp.float32),
        }
        params["layers"].append(layer)
    return params


# ----------------------------------------------------------------------------

if __name__ == "__main__":
    # L is a multiple of 128 so every activation store is lane-dense.
    B, L = 2, 128
    d_input, d_model, d_output = 4, 32, 10
    n_layers, d_state = 2, 64

    key = jax.random.PRNGKey(0)
    pkey, xkey = jax.random.split(key)
    params = init_params(pkey, d_input, d_model, d_output, n_layers, d_state)
    x = jax.random.normal(xkey, (B, L, d_input), dtype=jnp.float32)

    out = janus_forward(params, x)
    out = jax.block_until_ready(out)
    assert out.shape == (B, d_output), out.shape
    assert bool(jnp.all(jnp.isfinite(out)))
    print("KERNEL_OK")
</pallas_src>

<mosaic_0001>
module attributes {stable_mosaic.version = 11 : i64} {
  func.func @_encode_kernel(%arg0: i32, %arg1: memref<1x4x128xf32, #tpu.memory_space<vmem>>, %arg2: memref<32x4xf32, #tpu.memory_space<vmem>>, %arg3: memref<32x1xf32, #tpu.memory_space<vmem>>, %arg4: memref<1x32x128xf32, #tpu.memory_space<vmem>>, %arg5: memref<1x1x128xf32, #tpu.memory_space<vmem>>) attributes {dimension_semantics = [#tpu.dimension_semantics<parallel>], iteration_bounds = array<i64: 2>, scalar_prefetch = 0 : i64, scratch_operands = 0 : i64, tpu.core_type = #tpu.core_type<tc>, window_params = [{transform_indices = @transform_0, window_bounds = array<i64: 1, 4, 128>}, {pipeline_mode = #tpu.pipeline_mode<synchronous>, transform_indices = @transform_1, window_bounds = array<i64: 32, 4>}, {pipeline_mode = #tpu.pipeline_mode<synchronous>, transform_indices = @transform_2, window_bounds = array<i64: 32, 1>}, {transform_indices = @transform_3, window_bounds = array<i64: 1, 32, 128>}, {transform_indices = @transform_4, window_bounds = array<i64: 1, 1, 128>}]} {
    %c0 = arith.constant 0 : index
    %c0_0 = arith.constant 0 : index
    %0 = vector.load %arg2[%c0, %c0_0] : memref<32x4xf32, #tpu.memory_space<vmem>>, vector<32x4xf32>
    %c0_1 = arith.constant 0 : index
    %c0_2 = arith.constant 0 : index
    %c0_3 = arith.constant 0 : index
    %1 = vector.load %arg1[%c0_1, %c0_2, %c0_3] : memref<1x4x128xf32, #tpu.memory_space<vmem>>, vector<1x4x128xf32>
    %2 = vector.shape_cast %1 : vector<1x4x128xf32> to vector<4x128xf32>
    %cst = arith.constant dense<0.000000e+00> : vector<32x128xf32>
    %3 = tpu.matmul %0, %2, %cst {dimension_numbers = #tpu.dot_dimension_numbers<[1], [0], [0], [1], [0, 0, 1, 1], [], []>} : vector<32x4xf32>, vector<4x128xf32>, vector<32x128xf32> -> vector<32x128xf32>
    %c0_4 = arith.constant 0 : index
    %c0_5 = arith.constant 0 : index
    %4 = vector.load %arg3[%c0_4, %c0_5] : memref<32x1xf32, #tpu.memory_space<vmem>>, vector<32x1xf32>
    %5 = vector.broadcast %4 : vector<32x1xf32> to vector<32x128xf32>
    %6 = arith.addf %3, %5 : vector<32x128xf32>
    %c0_6 = arith.constant 0 : index
    %c0_7 = arith.constant 0 : index
    %c0_8 = arith.constant 0 : index
    %7 = vector.load %arg4[%c0_6, %c0_7, %c0_8] : memref<1x32x128xf32, #tpu.memory_space<vmem>>, vector<1x32x128xf32>
    %8 = vector.shape_cast %7 : vector<1x32x128xf32> to vector<32x128xf32>
    %9 = vector.shape_cast %6 : vector<32x128xf32> to vector<1x32x128xf32>
    tpu.vector_store %arg4[%c0_6, %c0_7, %c0_8], %9 {strides = array<i32>} : memref<1x32x128xf32, #tpu.memory_space<vmem>>, vector<1x32x128xf32>,
    %10 = arith.mulf %6, %6 : vector<32x128xf32>
    %cst_9 = arith.constant dense<0.000000e+00> : vector<128xf32>
    %11 = vector.multi_reduction <add>, %10, %cst_9 [0] : vector<32x128xf32> to vector<128xf32>
    %12 = vector.shape_cast %11 : vector<128xf32> to vector<1x128xf32>
    %cst_10 = arith.constant 3.125000e-02 : f32
    %13 = vector.broadcast %cst_10 : f32 to vector<1x128xf32>
    %14 = arith.mulf %12, %13 : vector<1x128xf32>
    %15 = math.sqrt %14 : vector<1x128xf32>
    %cst_11 = arith.constant 9.99999993E-9 : f32
    %16 = vector.broadcast %cst_11 : f32 to vector<1x128xf32>
    %17 = arith.addf %15, %16 : vector<1x128xf32>
    %18 = tpu.reciprocal %17 {approx = true} : vector<1x128xf32> -> vector<1x128xf32>
    %c0_12 = arith.constant 0 : index
    %c0_13 = arith.constant 0 : index
    %c0_14 = arith.constant 0 : index
    %19 = vector.load %arg5[%c0_12, %c0_13, %c0_14] : memref<1x1x128xf32, #tpu.memory_space<vmem>>, vector<1x1x128xf32>
    %20 = vector.shape_cast %19 : vector<1x1x128xf32> to vector<1x128xf32>
    %21 = vector.shape_cast %18 : vector<1x128xf32> to vector<1x1x128xf32>
    tpu.vector_store %arg5[%c0_12, %c0_13, %c0_14], %21 {strides = array<i32>} : memref<1x1x128xf32, #tpu.memory_space<vmem>>, vector<1x1x128xf32>,
    return
  }
  func.func @transform_0(%arg0: i32) -> (i32, i32, i32) {
    %c0_i32 = arith.constant 0 : i32
    %c0_i32_0 = arith.constant 0 : i32
    %c0_i32_1 = arith.constant 0 : i32
    return %arg0, %c0_i32, %c0_i32_0 : i32, i32, i32
  }
  func.func @transform_1(%arg0: i32) -> (i32, i32) {
    %c0_i32 = arith.constant 0 : i32
    %c0_i32_0 = arith.constant 0 : i32
    %c0_i32_1 = arith.constant 0 : i32
    return %c0_i32, %c0_i32_0 : i32, i32
  }
  func.func @transform_2(%arg0: i32) -> (i32, i32) {
    %c0_i32 = arith.constant 0 : i32
    %c0_i32_0 = arith.constant 0 : i32
    %c0_i32_1 = arith.constant 0 : i32
    return %c0_i32, %c0_i32_0 : i32, i32
  }
  func.func @transform_3(%arg0: i32) -> (i32, i32, i32) {
    %c0_i32 = arith.constant 0 : i32
    %c0_i32_0 = arith.constant 0 : i32
    %c0_i32_1 = arith.constant 0 : i32
    return %arg0, %c0_i32, %c0_i32_0 : i32, i32, i32
  }
  func.func @transform_4(%arg0: i32) -> (i32, i32, i32) {
    %c0_i32 = arith.constant 0 : i32
    %c0_i32_0 = arith.constant 0 : i32
    %c0_i32_1 = arith.constant 0 : i32
    return %arg0, %c0_i32, %c0_i32_0 : i32, i32, i32
  }
}

module attributes {stable_mosaic.version = 11 : i64} {
  func.func @_s4_layer_kernel(%arg0: i32, %arg1: memref<1x32x128xf32, #tpu.memory_space<vmem>>, %arg2: memref<1x1x128xf32, #tpu.memory_space<vmem>>, %arg3: memref<32x1xf32, #tpu.memory_space<vmem>>, %arg4: memref<32x128x128xbf16, #tpu.memory_space<vmem>>, %arg5: memref<32x1xf32, #tpu.memory_space<vmem>>, %arg6: memref<64x32xf32, #tpu.memory_space<vmem>>, %arg7: memref<64x1xf32, #tpu.memory_space<vmem>>, %arg8: memref<1x32x128xf32, #tpu.memory_space<vmem>>, %arg9: memref<1x1x128xf32, #tpu.memory_space<vmem>>) attributes {dimension_semantics = [#tpu.dimension_semantics<parallel>], iteration_bounds = array<i64: 2>, scalar_prefetch = 0 : i64, scratch_operands = 0 : i64, tpu.core_type = #tpu.core_type<tc>, window_params = [{transform_indices = @transform_0, window_bounds = array<i64: 1, 32, 128>}, {transform_indices = @transform_1, window_bounds = array<i64: 1, 1, 128>}, {pipeline_mode = #tpu.pipeline_mode<synchronous>, transform_indices = @transform_2, window_bounds = array<i64: 32, 1>}, {pipeline_mode = #tpu.pipeline_mode<synchronous>, transform_indices = @transform_3, window_bounds = array<i64: 32, 128, 128>}, {pipeline_mode = #tpu.pipeline_mode<synchronous>, transform_indices = @transform_4, window_bounds = array<i64: 32, 1>}, {pipeline_mode = #tpu.pipeline_mode<synchronous>, transform_indices = @transform_5, window_bounds = array<i64: 64, 32>}, {pipeline_mode = #tpu.pipeline_mode<synchronous>, transform_indices = @transform_6, window_bounds = array<i64: 64, 1>}, {transform_indices = @transform_7, window_bounds = array<i64: 1, 32, 128>}, {transform_indices = @transform_8, window_bounds = array<i64: 1, 1, 128>}]} {
    %c0 = arith.constant 0 : index
    %c0_0 = arith.constant 0 : index
    %c0_1 = arith.constant 0 : index
    %0 = vector.load %arg1[%c0, %c0_0, %c0_1] : memref<1x32x128xf32, #tpu.memory_space<vmem>>, vector<1x32x128xf32>
    %1 = vector.shape_cast %0 : vector<1x32x128xf32> to vector<32x128xf32>
    %c0_2 = arith.constant 0 : index
    %c0_3 = arith.constant 0 : index
    %c0_4 = arith.constant 0 : index
    %2 = vector.load %arg2[%c0_2, %c0_3, %c0_4] : memref<1x1x128xf32, #tpu.memory_space<vmem>>, vector<1x1x128xf32>
    %3 = vector.shape_cast %2 : vector<1x1x128xf32> to vector<1x128xf32>
    %4 = vector.broadcast %3 : vector<1x128xf32> to vector<32x128xf32>
    %5 = arith.mulf %1, %4 : vector<32x128xf32>
    %c0_5 = arith.constant 0 : index
    %c0_6 = arith.constant 0 : index
    %6 = vector.load %arg3[%c0_5, %c0_6] : memref<32x1xf32, #tpu.memory_space<vmem>>, vector<32x1xf32>
    %7 = vector.broadcast %6 : vector<32x1xf32> to vector<32x128xf32>
    %8 = arith.mulf %5, %7 : vector<32x128xf32>
    %9 = arith.truncf %8 : vector<32x128xf32> to vector<32x128xbf16>
    %10 = vector.shape_cast %9 : vector<32x128xbf16> to vector<32x1x128xbf16>
    %c0_7 = arith.constant 0 : index
    %c0_8 = arith.constant 0 : index
    %c0_9 = arith.constant 0 : index
    %11 = vector.load %arg4[%c0_7, %c0_8, %c0_9] : memref<32x128x128xbf16, #tpu.memory_space<vmem>>, vector<32x128x128xbf16>
    %cst = arith.constant dense<0.000000e+00> : vector<32x1x128xf32>
    %12 = tpu.matmul %10, %11, %cst {dimension_numbers = #tpu.dot_dimension_numbers<[2], [1], [1], [2], [0, 0, 0, 1, 1, 2], [0], [0]>} : vector<32x1x128xbf16>, vector<32x128x128xbf16>, vector<32x1x128xf32> -> vector<32x1x128xf32>
    %13 = vector.shape_cast %12 : vector<32x1x128xf32> to vector<32x128xf32>
    %c0_10 = arith.constant 0 : index
    %c0_11 = arith.constant 0 : index
    %14 = vector.load %arg5[%c0_10, %c0_11] : memref<32x1xf32, #tpu.memory_space<vmem>>, vector<32x1xf32>
    %15 = vector.broadcast %14 : vector<32x1xf32> to vector<32x128xf32>
    %16 = arith.mulf %8, %15 : vector<32x128xf32>
    %17 = arith.addf %13, %16 : vector<32x128xf32>
    %cst_12 = arith.constant 5.000000e-01 : f32
    %18 = vector.broadcast %cst_12 : f32 to vector<32x128xf32>
    %19 = arith.mulf %18, %17 : vector<32x128xf32>
    %cst_13 = arith.constant 4.471500e-02 : f32
    %20 = vector.broadcast %cst_13 : f32 to vector<32x128xf32>
    %21 = arith.mulf %20, %17 : vector<32x128xf32>
    %22 = arith.mulf %21, %17 : vector<32x128xf32>
    %23 = arith.mulf %22, %17 : vector<32x128xf32>
    %24 = arith.addf %17, %23 : vector<32x128xf32>
    %cst_14 = arith.constant 0.797884583 : f32
    %25 = vector.broadcast %cst_14 : f32 to vector<32x128xf32>
    %26 = arith.mulf %25, %24 : vector<32x128xf32>
    %27 = math.tanh %26 : vector<32x128xf32>
    %cst_15 = arith.constant 1.000000e+00 : f32
    %28 = vector.broadcast %cst_15 : f32 to vector<32x128xf32>
    %29 = arith.addf %28, %27 : vector<32x128xf32>
    %30 = arith.mulf %19, %29 : vector<32x128xf32>
    %c0_16 = arith.constant 0 : index
    %c0_17 = arith.constant 0 : index
    %31 = vector.load %arg6[%c0_16, %c0_17] : memref<64x32xf32, #tpu.memory_space<vmem>>, vector<64x32xf32>
    %32 = arith.truncf %31 : vector<64x32xf32> to vector<64x32xbf16>
    %33 = arith.truncf %30 : vector<32x128xf32> to vector<32x128xbf16>
    %cst_18 = arith.constant dense<0.000000e+00> : vector<64x128xf32>
    %34 = tpu.matmul %32, %33, %cst_18 {dimension_numbers = #tpu.dot_dimension_numbers<[1], [0], [0], [1], [0, 0, 1, 1], [], []>} : vector<64x32xbf16>, vector<32x128xbf16>, vector<64x128xf32> -> vector<64x128xf32>
    %c0_19 = arith.constant 0 : index
    %c0_20 = arith.constant 0 : index
    %35 = vector.load %arg7[%c0_19, %c0_20] : memref<64x1xf32, #tpu.memory_space<vmem>>, vector<64x1xf32>
    %36 = vector.broadcast %35 : vector<64x1xf32> to vector<64x128xf32>
    %37 = arith.addf %34, %36 : vector<64x128xf32>
    %38 = vector.extract_strided_slice %37 {offsets = [0, 0], sizes = [32, 128], strides = [1, 1]} : vector<64x128xf32> to vector<32x128xf32>
    %39 = vector.extract_strided_slice %37 {offsets = [32, 0], sizes = [32, 128], strides = [1, 1]} : vector<64x128xf32> to vector<32x128xf32>
    %40 = arith.negf %39 : vector<32x128xf32>
    %41 = math.exp %40 : vector<32x128xf32>
    %cst_21 = arith.constant 1.000000e+00 : f32
    %42 = vector.broadcast %cst_21 : f32 to vector<32x128xf32>
    %43 = arith.addf %42, %41 : vector<32x128xf32>
    %44 = arith.divf %42, %43 : vector<32x128xf32>
    %45 = arith.mulf %38, %44 : vector<32x128xf32>
    %46 = arith.addf %45, %1 : vector<32x128xf32>
    %c0_22 = arith.constant 0 : index
    %c0_23 = arith.constant 0 : index
    %c0_24 = arith.constant 0 : index
    %47 = vector.load %arg8[%c0_22, %c0_23, %c0_24] : memref<1x32x128xf32, #tpu.memory_space<vmem>>, vector<1x32x128xf32>
    %48 = vector.shape_cast %47 : vector<1x32x128xf32> to vector<32x128xf32>
    %49 = vector.shape_cast %46 : vector<32x128xf32> to vector<1x32x128xf32>
    tpu.vector_store %arg8[%c0_22, %c0_23, %c0_24], %49 {strides = array<i32>} : memref<1x32x128xf32, #tpu.memory_space<vmem>>, vector<1x32x128xf32>,
    %50 = arith.mulf %46, %46 : vector<32x128xf32>
    %cst_25 = arith.constant dense<0.000000e+00> : vector<128xf32>
    %51 = vector.multi_reduction <add>, %50, %cst_25 [0] : vector<32x128xf32> to vector<128xf32>
    %52 = vector.shape_cast %51 : vector<128xf32> to vector<1x128xf32>
    %cst_26 = arith.constant 3.125000e-02 : f32
    %53 = vector.broadcast %cst_26 : f32 to vector<1x128xf32>
    %54 = arith.mulf %52, %53 : vector<1x128xf32>
    %55 = math.sqrt %54 : vector<1x128xf32>
    %cst_27 = arith.constant 9.99999993E-9 : f32
    %56 = vector.broadcast %cst_27 : f32 to vector<1x128xf32>
    %57 = arith.addf %55, %56 : vector<1x128xf32>
    %58 = tpu.reciprocal %57 {approx = true} : vector<1x128xf32> -> vector<1x128xf32>
    %c0_28 = arith.constant 0 : index
    %c0_29 = arith.constant 0 : index
    %c0_30 = arith.constant 0 : index
    %59 = vector.load %arg9[%c0_28, %c0_29, %c0_30] : memref<1x1x128xf32, #tpu.memory_space<vmem>>, vector<1x1x128xf32>
    %60 = vector.shape_cast %59 : vector<1x1x128xf32> to vector<1x128xf32>
    %61 = vector.shape_cast %58 : vector<1x128xf32> to vector<1x1x128xf32>
    tpu.vector_store %arg9[%c0_28, %c0_29, %c0_30], %61 {strides = array<i32>} : memref<1x1x128xf32, #tpu.memory_space<vmem>>, vector<1x1x128xf32>,
    return
  }
  func.func @transform_0(%arg0: i32) -> (i32, i32, i32) {
    %c0_i32 = arith.constant 0 : i32
    %c0_i32_0 = arith.constant 0 : i32
    %c0_i32_1 = arith.constant 0 : i32
    return %arg0, %c0_i32, %c0_i32_0 : i32, i32, i32
  }
  func.func @transform_1(%arg0: i32) -> (i32, i32, i32) {
    %c0_i32 = arith.constant 0 : i32
    %c0_i32_0 = arith.constant 0 : i32
    %c0_i32_1 = arith.constant 0 : i32
    return %arg0, %c0_i32, %c0_i32_0 : i32, i32, i32
  }
  func.func @transform_2(%arg0: i32) -> (i32, i32) {
    %c0_i32 = arith.constant 0 : i32
    %c0_i32_0 = arith.constant 0 : i32
    %c0_i32_1 = arith.constant 0 : i32
    return %c0_i32, %c0_i32_0 : i32, i32
  }
  func.func @transform_3(%arg0: i32) -> (i32, i32, i32) {
    %c0_i32 = arith.constant 0 : i32
    %c0_i32_0 = arith.constant 0 : i32
    %c0_i32_1 = arith.constant 0 : i32
    %c0_i32_2 = arith.constant 0 : i32
    return %c0_i32, %c0_i32_0, %c0_i32_1 : i32, i32, i32
  }
  func.func @transform_4(%arg0: i32) -> (i32, i32) {
    %c0_i32 = arith.constant 0 : i32
    %c0_i32_0 = arith.constant 0 : i32
    %c0_i32_1 = arith.constant 0 : i32
    return %c0_i32, %c0_i32_0 : i32, i32
  }
  func.func @transform_5(%arg0: i32) -> (i32, i32) {
    %c0_i32 = arith.constant 0 : i32
    %c0_i32_0 = arith.constant 0 : i32
    %c0_i32_1 = arith.constant 0 : i32
    return %c0_i32, %c0_i32_0 : i32, i32
  }
  func.func @transform_6(%arg0: i32) -> (i32, i32) {
    %c0_i32 = arith.constant 0 : i32
    %c0_i32_0 = arith.constant 0 : i32
    %c0_i32_1 = arith.constant 0 : i32
    return %c0_i32, %c0_i32_0 : i32, i32
  }
  func.func @transform_7(%arg0: i32) -> (i32, i32, i32) {
    %c0_i32 = arith.constant 0 : i32
    %c0_i32_0 = arith.constant 0 : i32
    %c0_i32_1 = arith.constant 0 : i32
    return %arg0, %c0_i32, %c0_i32_0 : i32, i32, i32
  }
  func.func @transform_8(%arg0: i32) -> (i32, i32, i32) {
    %c0_i32 = arith.constant 0 : i32
    %c0_i32_0 = arith.constant 0 : i32
    %c0_i32_1 = arith.constant 0 : i32
    return %arg0, %c0_i32, %c0_i32_0 : i32, i32, i32
  }
}

module attributes {stable_mosaic.version = 11 : i64} {
  func.func @_s4_layer_kernel(%arg0: i32, %arg1: memref<1x32x128xf32, #tpu.memory_space<vmem>>, %arg2: memref<1x1x128xf32, #tpu.memory_space<vmem>>, %arg3: memref<32x1xf32, #tpu.memory_space<vmem>>, %arg4: memref<32x128x128xbf16, #tpu.memory_space<vmem>>, %arg5: memref<32x1xf32, #tpu.memory_space<vmem>>, %arg6: memref<64x32xf32, #tpu.memory_space<vmem>>, %arg7: memref<64x1xf32, #tpu.memory_space<vmem>>, %arg8: memref<1x32x128xf32, #tpu.memory_space<vmem>>, %arg9: memref<1x1x128xf32, #tpu.memory_space<vmem>>) attributes {dimension_semantics = [#tpu.dimension_semantics<parallel>], iteration_bounds = array<i64: 2>, scalar_prefetch = 0 : i64, scratch_operands = 0 : i64, tpu.core_type = #tpu.core_type<tc>, window_params = [{transform_indices = @transform_0, window_bounds = array<i64: 1, 32, 128>}, {transform_indices = @transform_1, window_bounds = array<i64: 1, 1, 128>}, {pipeline_mode = #tpu.pipeline_mode<synchronous>, transform_indices = @transform_2, window_bounds = array<i64: 32, 1>}, {pipeline_mode = #tpu.pipeline_mode<synchronous>, transform_indices = @transform_3, window_bounds = array<i64: 32, 128, 128>}, {pipeline_mode = #tpu.pipeline_mode<synchronous>, transform_indices = @transform_4, window_bounds = array<i64: 32, 1>}, {pipeline_mode = #tpu.pipeline_mode<synchronous>, transform_indices = @transform_5, window_bounds = array<i64: 64, 32>}, {pipeline_mode = #tpu.pipeline_mode<synchronous>, transform_indices = @transform_6, window_bounds = array<i64: 64, 1>}, {transform_indices = @transform_7, window_bounds = array<i64: 1, 32, 128>}, {transform_indices = @transform_8, window_bounds = array<i64: 1, 1, 128>}]} {
    %c0 = arith.constant 0 : index
    %c0_0 = arith.constant 0 : index
    %c0_1 = arith.constant 0 : index
    %0 = vector.load %arg1[%c0, %c0_0, %c0_1] : memref<1x32x128xf32, #tpu.memory_space<vmem>>, vector<1x32x128xf32>
    %1 = vector.shape_cast %0 : vector<1x32x128xf32> to vector<32x128xf32>
    %c0_2 = arith.constant 0 : index
    %c0_3 = arith.constant 0 : index
    %c0_4 = arith.constant 0 : index
    %2 = vector.load %arg2[%c0_2, %c0_3, %c0_4] : memref<1x1x128xf32, #tpu.memory_space<vmem>>, vector<1x1x128xf32>
    %3 = vector.shape_cast %2 : vector<1x1x128xf32> to vector<1x128xf32>
    %4 = vector.broadcast %3 : vector<1x128xf32> to vector<32x128xf32>
    %5 = arith.mulf %1, %4 : vector<32x128xf32>
    %c0_5 = arith.constant 0 : index
    %c0_6 = arith.constant 0 : index
    %6 = vector.load %arg3[%c0_5, %c0_6] : memref<32x1xf32, #tpu.memory_space<vmem>>, vector<32x1xf32>
    %7 = vector.broadcast %6 : vector<32x1xf32> to vector<32x128xf32>
    %8 = arith.mulf %5, %7 : vector<32x128xf32>
    %9 = arith.truncf %8 : vector<32x128xf32> to vector<32x128xbf16>
    %10 = vector.shape_cast %9 : vector<32x128xbf16> to vector<32x1x128xbf16>
    %c0_7 = arith.constant 0 : index
    %c0_8 = arith.constant 0 : index
    %c0_9 = arith.constant 0 : index
    %11 = vector.load %arg4[%c0_7, %c0_8, %c0_9] : memref<32x128x128xbf16, #tpu.memory_space<vmem>>, vector<32x128x128xbf16>
    %cst = arith.constant dense<0.000000e+00> : vector<32x1x128xf32>
    %12 = tpu.matmul %10, %11, %cst {dimension_numbers = #tpu.dot_dimension_numbers<[2], [1], [1], [2], [0, 0, 0, 1, 1, 2], [0], [0]>} : vector<32x1x128xbf16>, vector<32x128x128xbf16>, vector<32x1x128xf32> -> vector<32x1x128xf32>
    %13 = vector.shape_cast %12 : vector<32x1x128xf32> to vector<32x128xf32>
    %c0_10 = arith.constant 0 : index
    %c0_11 = arith.constant 0 : index
    %14 = vector.load %arg5[%c0_10, %c0_11] : memref<32x1xf32, #tpu.memory_space<vmem>>, vector<32x1xf32>
    %15 = vector.broadcast %14 : vector<32x1xf32> to vector<32x128xf32>
    %16 = arith.mulf %8, %15 : vector<32x128xf32>
    %17 = arith.addf %13, %16 : vector<32x128xf32>
    %cst_12 = arith.constant 5.000000e-01 : f32
    %18 = vector.broadcast %cst_12 : f32 to vector<32x128xf32>
    %19 = arith.mulf %18, %17 : vector<32x128xf32>
    %cst_13 = arith.constant 4.471500e-02 : f32
    %20 = vector.broadcast %cst_13 : f32 to vector<32x128xf32>
    %21 = arith.mulf %20, %17 : vector<32x128xf32>
    %22 = arith.mulf %21, %17 : vector<32x128xf32>
    %23 = arith.mulf %22, %17 : vector<32x128xf32>
    %24 = arith.addf %17, %23 : vector<32x128xf32>
    %cst_14 = arith.constant 0.797884583 : f32
    %25 = vector.broadcast %cst_14 : f32 to vector<32x128xf32>
    %26 = arith.mulf %25, %24 : vector<32x128xf32>
    %27 = math.tanh %26 : vector<32x128xf32>
    %cst_15 = arith.constant 1.000000e+00 : f32
    %28 = vector.broadcast %cst_15 : f32 to vector<32x128xf32>
    %29 = arith.addf %28, %27 : vector<32x128xf32>
    %30 = arith.mulf %19, %29 : vector<32x128xf32>
    %c0_16 = arith.constant 0 : index
    %c0_17 = arith.constant 0 : index
    %31 = vector.load %arg6[%c0_16, %c0_17] : memref<64x32xf32, #tpu.memory_space<vmem>>, vector<64x32xf32>
    %32 = arith.truncf %31 : vector<64x32xf32> to vector<64x32xbf16>
    %33 = arith.truncf %30 : vector<32x128xf32> to vector<32x128xbf16>
    %cst_18 = arith.constant dense<0.000000e+00> : vector<64x128xf32>
    %34 = tpu.matmul %32, %33, %cst_18 {dimension_numbers = #tpu.dot_dimension_numbers<[1], [0], [0], [1], [0, 0, 1, 1], [], []>} : vector<64x32xbf16>, vector<32x128xbf16>, vector<64x128xf32> -> vector<64x128xf32>
    %c0_19 = arith.constant 0 : index
    %c0_20 = arith.constant 0 : index
    %35 = vector.load %arg7[%c0_19, %c0_20] : memref<64x1xf32, #tpu.memory_space<vmem>>, vector<64x1xf32>
    %36 = vector.broadcast %35 : vector<64x1xf32> to vector<64x128xf32>
    %37 = arith.addf %34, %36 : vector<64x128xf32>
    %38 = vector.extract_strided_slice %37 {offsets = [0, 0], sizes = [32, 128], strides = [1, 1]} : vector<64x128xf32> to vector<32x128xf32>
    %39 = vector.extract_strided_slice %37 {offsets = [32, 0], sizes = [32, 128], strides = [1, 1]} : vector<64x128xf32> to vector<32x128xf32>
    %40 = arith.negf %39 : vector<32x128xf32>
    %41 = math.exp %40 : vector<32x128xf32>
    %cst_21 = arith.constant 1.000000e+00 : f32
    %42 = vector.broadcast %cst_21 : f32 to vector<32x128xf32>
    %43 = arith.addf %42, %41 : vector<32x128xf32>
    %44 = arith.divf %42, %43 : vector<32x128xf32>
    %45 = arith.mulf %38, %44 : vector<32x128xf32>
    %46 = arith.addf %45, %1 : vector<32x128xf32>
    %c0_22 = arith.constant 0 : index
    %c0_23 = arith.constant 0 : index
    %c0_24 = arith.constant 0 : index
    %47 = vector.load %arg8[%c0_22, %c0_23, %c0_24] : memref<1x32x128xf32, #tpu.memory_space<vmem>>, vector<1x32x128xf32>
    %48 = vector.shape_cast %47 : vector<1x32x128xf32> to vector<32x128xf32>
    %49 = vector.shape_cast %46 : vector<32x128xf32> to vector<1x32x128xf32>
    tpu.vector_store %arg8[%c0_22, %c0_23, %c0_24], %49 {strides = array<i32>} : memref<1x32x128xf32, #tpu.memory_space<vmem>>, vector<1x32x128xf32>,
    %50 = arith.mulf %46, %46 : vector<32x128xf32>
    %cst_25 = arith.constant dense<0.000000e+00> : vector<128xf32>
    %51 = vector.multi_reduction <add>, %50, %cst_25 [0] : vector<32x128xf32> to vector<128xf32>
    %52 = vector.shape_cast %51 : vector<128xf32> to vector<1x128xf32>
    %cst_26 = arith.constant 3.125000e-02 : f32
    %53 = vector.broadcast %cst_26 : f32 to vector<1x128xf32>
    %54 = arith.mulf %52, %53 : vector<1x128xf32>
    %55 = math.sqrt %54 : vector<1x128xf32>
    %cst_27 = arith.constant 9.99999993E-9 : f32
    %56 = vector.broadcast %cst_27 : f32 to vector<1x128xf32>
    %57 = arith.addf %55, %56 : vector<1x128xf32>
    %58 = tpu.reciprocal %57 {approx = true} : vector<1x128xf32> -> vector<1x128xf32>
    %c0_28 = arith.constant 0 : index
    %c0_29 = arith.constant 0 : index
    %c0_30 = arith.constant 0 : index
    %59 = vector.load %arg9[%c0_28, %c0_29, %c0_30] : memref<1x1x128xf32, #tpu.memory_space<vmem>>, vector<1x1x128xf32>
    %60 = vector.shape_cast %59 : vector<1x1x128xf32> to vector<1x128xf32>
    %61 = vector.shape_cast %58 : vector<1x128xf32> to vector<1x1x128xf32>
    tpu.vector_store %arg9[%c0_28, %c0_29, %c0_30], %61 {strides = array<i32>} : memref<1x1x128xf32, #tpu.memory_space<vmem>>, vector<1x1x128xf32>,
    return
  }
  func.func @transform_0(%arg0: i32) -> (i32, i32, i32) {
    %c0_i32 = arith.constant 0 : i32
    %c0_i32_0 = arith.constant 0 : i32
    %c0_i32_1 = arith.constant 0 : i32
    return %arg0, %c0_i32, %c0_i32_0 : i32, i32, i32
  }
  func.func @transform_1(%arg0: i32) -> (i32, i32, i32) {
    %c0_i32 = arith.constant 0 : i32
    %c0_i32_0 = arith.constant 0 : i32
    %c0_i32_1 = arith.constant 0 : i32
    return %arg0, %c0_i32, %c0_i32_0 : i32, i32, i32
  }
  func.func @transform_2(%arg0: i32) -> (i32, i32) {
    %c0_i32 = arith.constant 0 : i32
    %c0_i32_0 = arith.constant 0 : i32
    %c0_i32_1 = arith.constant 0 : i32
    return %c0_i32, %c0_i32_0 : i32, i32
  }
  func.func @transform_3(%arg0: i32) -> (i32, i32, i32) {
    %c0_i32 = arith.constant 0 : i32
    %c0_i32_0 = arith.constant 0 : i32
    %c0_i32_1 = arith.constant 0 : i32
    %c0_i32_2 = arith.constant 0 : i32
    return %c0_i32, %c0_i32_0, %c0_i32_1 : i32, i32, i32
  }
  func.func @transform_4(%arg0: i32) -> (i32, i32) {
    %c0_i32 = arith.constant 0 : i32
    %c0_i32_0 = arith.constant 0 : i32
    %c0_i32_1 = arith.constant 0 : i32
    return %c0_i32, %c0_i32_0 : i32, i32
  }
  func.func @transform_5(%arg0: i32) -> (i32, i32) {
    %c0_i32 = arith.constant 0 : i32
    %c0_i32_0 = arith.constant 0 : i32
    %c0_i32_1 = arith.constant 0 : i32
    return %c0_i32, %c0_i32_0 : i32, i32
  }
  func.func @transform_6(%arg0: i32) -> (i32, i32) {
    %c0_i32 = arith.constant 0 : i32
    %c0_i32_0 = arith.constant 0 : i32
    %c0_i32_1 = arith.constant 0 : i32
    return %c0_i32, %c0_i32_0 : i32, i32
  }
  func.func @transform_7(%arg0: i32) -> (i32, i32, i32) {
    %c0_i32 = arith.constant 0 : i32
    %c0_i32_0 = arith.constant 0 : i32
    %c0_i32_1 = arith.constant 0 : i32
    return %arg0, %c0_i32, %c0_i32_0 : i32, i32, i32
  }
  func.func @transform_8(%arg0: i32) -> (i32, i32, i32) {
    %c0_i32 = arith.constant 0 : i32
    %c0_i32_0 = arith.constant 0 : i32
    %c0_i32_1 = arith.constant 0 : i32
    return %arg0, %c0_i32, %c0_i32_0 : i32, i32, i32
  }
}

module attributes {stable_mosaic.version = 11 : i64} {
  func.func @_pool_decode_kernel(%arg0: i32, %arg1: memref<2x32x128xf32, #tpu.memory_space<vmem>>, %arg2: memref<32x10xf32, #tpu.memory_space<vmem>>, %arg3: memref<1x10xf32, #tpu.memory_space<vmem>>, %arg4: memref<2x10xf32, #tpu.memory_space<vmem>>, %arg5: memref<2x32xf32, #tpu.memory_space<vmem>>) attributes {dimension_semantics = [#tpu.dimension_semantics<arbitrary>], iteration_bounds = array<i64: 1>, scalar_prefetch = 0 : i64, scratch_operands = 1 : i64, tpu.core_type = #tpu.core_type<tc>, window_params = [{transform_indices = @transform_0, window_bounds = array<i64: 2, 32, 128>}, {pipeline_mode = #tpu.pipeline_mode<synchronous>, transform_indices = @transform_1, window_bounds = array<i64: 32, 10>}, {pipeline_mode = #tpu.pipeline_mode<synchronous>, transform_indices = @transform_2, window_bounds = array<i64: 1, 10>}, {pipeline_mode = #tpu.pipeline_mode<synchronous>, transform_indices = @transform_3, window_bounds = array<i64: 2, 10>}]} {
    %c0_i32 = arith.constant 0 : i32
    %0 = arith.cmpi eq, %arg0, %c0_i32 : i32
    %1 = arith.extui %0 : i1 to i32
    %c0_i32_0 = arith.constant 0 : i32
    %2 = arith.cmpi ne, %1, %c0_i32_0 : i32
    scf.if %2 {
      %cst_9 = arith.constant 0.000000e+00 : f32
      %11 = vector.broadcast %cst_9 : f32 to vector<2x32xf32>
      %c0_10 = arith.constant 0 : index
      %c0_11 = arith.constant 0 : index
      %12 = vector.load %arg5[%c0_10, %c0_11] : memref<2x32xf32, #tpu.memory_space<vmem>>, vector<2x32xf32>
      tpu.vector_store %arg5[%c0_10, %c0_11], %11 {strides = array<i32>} : memref<2x32xf32, #tpu.memory_space<vmem>>, vector<2x32xf32>,
    } else {
    }
    %c0 = arith.constant 0 : index
    %c0_1 = arith.constant 0 : index
    %3 = vector.load %arg5[%c0, %c0_1] : memref<2x32xf32, #tpu.memory_space<vmem>>, vector<2x32xf32>
    %c0_2 = arith.constant 0 : index
    %c0_3 = arith.constant 0 : index
    %c0_4 = arith.constant 0 : index
    %4 = vector.load %arg1[%c0_2, %c0_3, %c0_4] : memref<2x32x128xf32, #tpu.memory_space<vmem>>, vector<2x32x128xf32>
    %cst = arith.constant dense<0.000000e+00> : vector<2x32xf32>
    %5 = vector.multi_reduction <add>, %4, %cst [2] : vector<2x32x128xf32> to vector<2x32xf32>
    %6 = arith.addf %3, %5 : vector<2x32xf32>
    %c0_5 = arith.constant 0 : index
    %c0_6 = arith.constant 0 : index
    %7 = vector.load %arg5[%c0_5, %c0_6] : memref<2x32xf32, #tpu.memory_space<vmem>>, vector<2x32xf32>
    tpu.vector_store %arg5[%c0_5, %c0_6], %6 {strides = array<i32>} : memref<2x32xf32, #tpu.memory_space<vmem>>, vector<2x32xf32>,
    %c0_i32_7 = arith.constant 0 : i32
    %8 = arith.cmpi eq, %arg0, %c0_i32_7 : i32
    %9 = arith.extui %8 : i1 to i32
    %c0_i32_8 = arith.constant 0 : i32
    %10 = arith.cmpi ne, %9, %c0_i32_8 : i32
    scf.if %10 {
      %c0_9 = arith.constant 0 : index
      %c0_10 = arith.constant 0 : index
      %11 = vector.load %arg5[%c0_9, %c0_10] : memref<2x32xf32, #tpu.memory_space<vmem>>, vector<2x32xf32>
      %cst_11 = arith.constant 7.812500e-03 : f32
      %12 = vector.broadcast %cst_11 : f32 to vector<2x32xf32>
      %13 = arith.mulf %11, %12 : vector<2x32xf32>
      %c0_12 = arith.constant 0 : index
      %c0_13 = arith.constant 0 : index
      %14 = vector.load %arg2[%c0_12, %c0_13] : memref<32x10xf32, #tpu.memory_space<vmem>>, vector<32x10xf32>
      %cst_14 = arith.constant dense<0.000000e+00> : vector<2x10xf32>
      %15 = tpu.matmul %13, %14, %cst_14 {dimension_numbers = #tpu.dot_dimension_numbers<[1], [0], [0], [1], [0, 0, 1, 1], [], []>} : vector<2x32xf32>, vector<32x10xf32>, vector<2x10xf32> -> vector<2x10xf32>
      %c0_15 = arith.constant 0 : index
      %c0_16 = arith.constant 0 : index
      %16 = vector.load %arg3[%c0_15, %c0_16] : memref<1x10xf32, #tpu.memory_space<vmem>>, vector<1x10xf32>
      %17 = vector.broadcast %16 : vector<1x10xf32> to vector<2x10xf32>
      %18 = arith.addf %15, %17 : vector<2x10xf32>
      %c0_17 = arith.constant 0 : index
      %c0_18 = arith.constant 0 : index
      %19 = vector.load %arg4[%c0_17, %c0_18] : memref<2x10xf32, #tpu.memory_space<vmem>>, vector<2x10xf32>
      tpu.vector_store %arg4[%c0_17, %c0_18], %18 {strides = array<i32>} : memref<2x10xf32, #tpu.memory_space<vmem>>, vector<2x10xf32>,
    } else {
    }
    return
  }
  func.func @transform_0(%arg0: i32) -> (i32, i32, i32) {
    %c0_i32 = arith.constant 0 : i32
    %c0_i32_0 = arith.constant 0 : i32
    %c0_i32_1 = arith.constant 0 : i32
    return %c0_i32, %c0_i32_0, %arg0 : i32, i32, i32
  }
  func.func @transform_1(%arg0: i32) -> (i32, i32) {
    %c0_i32 = arith.constant 0 : i32
    %c0_i32_0 = arith.constant 0 : i32
    %c0_i32_1 = arith.constant 0 : i32
    return %c0_i32, %c0_i32_0 : i32, i32
  }
  func.func @transform_2(%arg0: i32) -> (i32, i32) {
    %c0_i32 = arith.constant 0 : i32
    %c0_i32_0 = arith.constant 0 : i32
    %c0_i32_1 = arith.constant 0 : i32
    return %c0_i32, %c0_i32_0 : i32, i32
  }
  func.func @transform_3(%arg0: i32) -> (i32, i32) {
    %c0_i32 = arith.constant 0 : i32
    %c0_i32_0 = arith.constant 0 : i32
    %c0_i32_1 = arith.constant 0 : i32
    return %c0_i32, %c0_i32_0 : i32, i32
  }
}

</mosaic_0001>

<llo_original>
// kernel: janus_forward.4
$region0: #{janus_forward.4}
  #allocation0 [shape = 'u32[]', space=smem, size = 0x4, offset = 0x4, fixed_abs, tag = 'smem constant byte address 0x4 - core index']
  #allocation1 [shape = 'u32[144,128]{1,0:T(1,128)}', space=vmem, size = 0x12000, scoped, tag = 'internal scratch']
  %s0 = inlined_call_operand.vmem [shape: f32[2,4,128], index: 0, kind: input, shape index: {}]
  %s1 = inlined_call_operand.vmem [shape: f32[32,4], index: 1, kind: input, shape index: {}]
  %s2 = inlined_call_operand.vmem [shape: f32[32,1], index: 2, kind: input, shape index: {}]
  %s3 = inlined_call_operand.vmem [shape: f32[2,32,128], index: 3, kind: output, shape index: {0}]
  %s4 = inlined_call_operand.vmem [shape: f32[2,1,128], index: 4, kind: output, shape index: {1}]
  %5 = xla_tuple %s3, %s4
  %s6 = sld [smem:[#allocation0]]
  $region53: #{janus_forward.4} parent=0
    _
  %s8 = ssub.s32 1, %s6
  %s9 = scalar_select 0, %s8, %s6
  loop: start=0, step=1, limit=4
  $region2: #{janus_forward.4} parent=0 // loop_pre_header
    _
  $region3: #{janus_forward.4} parent=0 // loop_header
    %s11 = sphi 0, %s15
    %p12 = scmp.ge.s32.totalorder %s11, 4
    %s21 = sphi 0, %s23
    %s24 = sphi 0, %s21
    %s25 = sphi 0, %s24
    %s41 = sphi 0, %s25
    %s45 = sphi 0, %s45
    %s47 = sphi 0, %s45
    %s48 = sphi 0, %s47
    %s62 = sphi 0, %s48
    %s66 = sphi 0, %s66
    %s68 = sphi 0, %s66
    %s69 = sphi 0, %s68
    %s83 = sphi 0, %s69
    %s89 = sphi 0, %s91
    %s92 = sphi 0, %s89
    %s93 = sphi 0, %s92
    %s109 = sphi 0, %s93
    %s115 = sphi 0, %s117
    %s118 = sphi 0, %s115
    %s119 = sphi 0, %s118
    %s135 = sphi 0, %s119
  $region4: #{janus_forward.4} parent=0 // loop_header_branch
    %14 = sbr.rel (%p12) target = $region8
  $region5: #{janus_forward.4} parent=0 // loop_body
    %s16 = ssub.s32 %s11, 1
    %s17 = ssub.s32 %s11, 2
    %s18 = sadd.s32 %s11, 1
    %s19 = ssub.s32 %s11, %s18
    %p20 = scmp.eq.s32.totalorder %s19, 0
    %s22 = sadd.s32 %s21, 1
    %s23 = scalar_select %p20, %s21, %s22
    %p26 = pneg %p20
    %p27 = scmp.eq.s32.totalorder %s11, 1
    %p28 = por %p26, %p27
    %p29 = scmp.ne.s32.totalorder %s21, %s24
    %p30 = scmp.eq.s32.totalorder %s11, 0
    %p31 = por %p29, %p30
    %p32 = scmp.ne.s32.totalorder %s21, %s24
    %p33 = scmp.eq.s32.totalorder %s16, 1
    %p34 = por %p32, %p33
    %p35 = scmp.ne.s32.totalorder %s24, %s25
    %p36 = scmp.eq.s32.totalorder %s16, 0
    %p37 = por %p35, %p36
    %p38 = scmp.ne.s32.totalorder %s24, %s25
    %p39 = scmp.eq.s32.totalorder %s17, 1
    %p40 = por %p38, %p39
    %p42 = scmp.ne.s32.totalorder %s25, %s41
    %p43 = scmp.eq.s32.totalorder %s17, 0
    %p44 = por %p42, %p43
    %s46 = sadd.s32 %s45, 1
    %p49 = scmp.eq.s32.totalorder %s11, 1
    %p50 = scmp.ne.s32.totalorder %s45, %s47
    %p51 = scmp.eq.s32.totalorder %s11, 0
    %p52 = por %p50, %p51
    %p53 = scmp.ne.s32.totalorder %s45, %s47
    %p54 = scmp.eq.s32.totalorder %s16, 1
    %p55 = por %p53, %p54
    %p56 = scmp.ne.s32.totalorder %s47, %s48
    %p57 = scmp.eq.s32.totalorder %s16, 0
    %p58 = por %p56, %p57
    %p59 = scmp.ne.s32.totalorder %s47, %s48
    %p60 = scmp.eq.s32.totalorder %s17, 1
    %p61 = por %p59, %p60
    %p63 = scmp.ne.s32.totalorder %s48, %s62
    %p64 = scmp.eq.s32.totalorder %s17, 0
    %p65 = por %p63, %p64
    %s67 = sadd.s32 %s66, 1
    %p70 = scmp.eq.s32.totalorder %s11, 1
    %p71 = scmp.ne.s32.totalorder %s66, %s68
    %p72 = scmp.eq.s32.totalorder %s11, 0
    %p73 = por %p71, %p72
    %p74 = scmp.ne.s32.totalorder %s66, %s68
    %p75 = scmp.eq.s32.totalorder %s16, 1
    %p76 = por %p74, %p75
    %p77 = scmp.ne.s32.totalorder %s68, %s69
    %p78 = scmp.eq.s32.totalorder %s16, 0
    %p79 = por %p77, %p78
    %p80 = scmp.ne.s32.totalorder %s68, %s69
    %p81 = scmp.eq.s32.totalorder %s17, 1
    %p82 = por %p80, %p81
    %p84 = scmp.ne.s32.totalorder %s69, %s83
    %p85 = scmp.eq.s32.totalorder %s17, 0
    %p86 = por %p84, %p85
    %s87 = ssub.s32 %s11, %s18
    %p88 = scmp.eq.s32.totalorder %s87, 0
    %s90 = sadd.s32 %s89, 1
    %s91 = scalar_select %p88, %s89, %s90
    %p94 = pneg %p88
    %p95 = scmp.eq.s32.totalorder %s11, 1
    %p96 = por %p94, %p95
    %p97 = scmp.ne.s32.totalorder %s89, %s92
    %p98 = scmp.eq.s32.totalorder %s11, 0
    %p99 = por %p97, %p98
    %p100 = scmp.ne.s32.totalorder %s89, %s92
    %p101 = scmp.eq.s32.totalorder %s16, 1
    %p102 = por %p100, %p101
    %p103 = scmp.ne.s32.totalorder %s92, %s93
    %p104 = scmp.eq.s32.totalorder %s16, 0
    %p105 = por %p103, %p104
    %p106 = scmp.ne.s32.totalorder %s92, %s93
    %p107 = scmp.eq.s32.totalorder %s17, 1
    %p108 = por %p106, %p107
    %p110 = scmp.ne.s32.totalorder %s93, %s109
    %p111 = scmp.eq.s32.totalorder %s17, 0
    %p112 = por %p110, %p111
    %s113 = ssub.s32 %s11, %s18
    %p114 = scmp.eq.s32.totalorder %s113, 0
    %s116 = sadd.s32 %s115, 1
    %s117 = scalar_select %p114, %s115, %s116
    %p120 = pneg %p114
    %p121 = scmp.eq.s32.totalorder %s11, 1
    %p122 = por %p120, %p121
    %p123 = scmp.ne.s32.totalorder %s115, %s118
    %p124 = scmp.eq.s32.totalorder %s11, 0
    %p125 = por %p123, %p124
    %p126 = scmp.ne.s32.totalorder %s115, %s118
    %p127 = scmp.eq.s32.totalorder %s16, 1
    %p128 = por %p126, %p127
    %p129 = scmp.ne.s32.totalorder %s118, %s119
    %p130 = scmp.eq.s32.totalorder %s16, 0
    %p131 = por %p129, %p130
    %p132 = scmp.ne.s32.totalorder %s118, %s119
    %p133 = scmp.eq.s32.totalorder %s17, 1
    %p134 = por %p132, %p133
    %p136 = scmp.ne.s32.totalorder %s119, %s135
    %p137 = scmp.eq.s32.totalorder %s17, 0
    %p138 = por %p136, %p137
    %p139 = scmp.le.s32.totalorder 1, %s11
    %p140 = scmp.lt.s32.totalorder %s11, 3
    %p141 = pnand %p139, %p140
    %p142 = pneg %p141
    // Predicated region
    $region9: #{janus_forward.4} parent=5 // pred_check
      _
    $region10: #{janus_forward.4} parent=5 // pred_check_branch
      %144 = sbr.rel (%p141) target = $region12
    $region11: #{janus_forward.4} parent=5 // pred_region
      %s145 = ssub.s32 %s11, 1
      // Predicated region
      $region13: #{janus_forward.4} parent=11 // pred_check
        %p146 = pneg %p58
      $region14: #{janus_forward.4} parent=11 // pred_check_branch
        %148 = sbr.rel (%p146) target = $region16
      $region15: #{janus_forward.4} parent=11 // pred_region
        _
      $region16: #{janus_forward.4} parent=11 // pred_fallthru
        _
      // Predicated region
      $region17: #{janus_forward.4} parent=11 // pred_check
        %p149 = pneg %p79
      $region18: #{janus_forward.4} parent=11 // pred_check_branch
        %151 = sbr.rel (%p149) target = $region20
      $region19: #{janus_forward.4} parent=11 // pred_region
        _
      $region20: #{janus_forward.4} parent=11 // pred_fallthru
        _
    $region12: #{janus_forward.4} parent=5 // pred_fallthru
      _
    %p152 = scmp.lt.s32.totalorder %s11, 2
    // Predicated region
    $region21: #{janus_forward.4} parent=5 // pred_check
      %p153 = pneg %p152
    $region22: #{janus_forward.4} parent=5 // pred_check_branch
      %155 = sbr.rel (%p153) target = $region24
    $region23: #{janus_forward.4} parent=5 // pred_region
      // Predicated region
      $region25: #{janus_forward.4} parent=23 // pred_check
        %p156 = pneg %p31
      $region26: #{janus_forward.4} parent=23 // pred_check_branch
        %158 = sbr.rel (%p156) target = $region28
      $region27: #{janus_forward.4} parent=23 // pred_region
        %p159 = scmp.lt.s32.totalorder %s11, 1
        %s160 = scalar_select %p159, %s11, 1
        %s161 = smul.addr %s160, 4
        %s162 = scalar_lea.vmem %s0, %s161
      $region28: #{janus_forward.4} parent=23 // pred_fallthru
        _
    $region24: #{janus_forward.4} parent=5 // pred_fallthru
      _
    %p163 = scmp.le.s32.totalorder 1, %s11
    %p164 = scmp.lt.s32.totalorder %s11, 3
    %p165 = pnand %p163, %p164
    %p166 = pneg %p165
    // Predicated region
    $region29: #{janus_forward.4} parent=5 // pred_check
      _
    $region30: #{janus_forward.4} parent=5 // pred_check_branch
      %168 = sbr.rel (%p165) target = $region32
    $region31: #{janus_forward.4} parent=5 // pred_region
      %s169 = ssub.s32 %s11, 1
      %p170 = scmp.lt.s32.totalorder %s16, 1
      %s171 = scalar_select %p170, %s16, 1
      %s172 = smul.addr %s171, 4
      %s173 = scalar_lea.vmem %s0, %s172
      %p174 = pneg %p37
      %p175 = pneg %p34
      %p176 = pneg %p58
      %p177 = pneg %p55
      %p178 = pneg %p79
      %p179 = pneg %p76
      %p180 = pneg %p105
      %p181 = pneg %p102
      %p182 = scmp.lt.s32.totalorder %s16, 1
      %s183 = scalar_select %p182, %s16, 1
      %s184 = smul.addr %s183, 4
      %s185 = smul.addr %s184, 8
      %s186 = scalar_lea.vmem %s3, %s185
      %p187 = pneg %p131
      %p188 = pneg %p128
      %p189 = scmp.lt.s32.totalorder %s16, 1
      %s190 = scalar_select %p189, %s16, 1
      %s191 = scalar_lea.vmem %s4, %s190
      %p192 = scmp.lt.s32.totalorder %s16, 1
      %s193 = scalar_select %p192, %s16, 1
      %s194 = smul.addr %s193, 4
      %s195 = scalar_lea.vmem %s0, %s194
      %p196 = scmp.lt.s32.totalorder %s16, 1
      %s197 = scalar_select %p196, %s16, 1
      %s198 = smul.addr %s197, 4
      %s199 = smul.addr %s198, 8
      %s200 = scalar_lea.vmem %s3, %s199
      %p201 = scmp.lt.s32.totalorder %s16, 1
      %s202 = scalar_select %p201, %s16, 1
      %s203 = scalar_lea.vmem %s4, %s202
      %v204 = vld [vmem:[%s1] sm:$0xff]
      %v205 = vld [vmem:[%s1 + $0x8] sm:$0xff]
      %v206 = vld [vmem:[%s1 + $0x10] sm:$0xff]
      %v207 = vld [vmem:[%s1 + $0x18] sm:$0xff]
      %v208 = vld [vmem:[%s195] sm:$0xf]
      %v209 = vld [vmem:[%s2] sm:$0xff]
      %v210 = vld [vmem:[%s2 + $0x8] sm:$0xff]
      %v211 = vld [vmem:[%s2 + $0x10] sm:$0xff]
      %v212 = vld [vmem:[%s2 + $0x18] sm:$0xff]
      %214 = vset.pattern.permute.xlu0 0
      %215 = vperm.xlu0 %214, %v209
      %v216 = vpop.permute.xlu0 %215
      %219 = vset.pattern.permute.xlu0 0
      %220 = vperm.xlu0 %219, %v210
      %v221 = vpop.permute.xlu0 %220
      %224 = vset.pattern.permute.xlu0 0
      %225 = vperm.xlu0 %224, %v211
      %v226 = vpop.permute.xlu0 %225
      %229 = vset.pattern.permute.xlu0 0
      %230 = vperm.xlu0 %229, %v212
      %v231 = vpop.permute.xlu0 %230
      %vm233 = vcmask 31744
      %v235 = vsel %vm233, %v204, 0
      %v238 = vsel %vm233, %v205, 0
      %v241 = vsel %vm233, %v206, 0
      %v244 = vsel %vm233, %v207, 0
      %vm246 = vcmask 1043456
      %v248 = vsel %vm246, %v208, 0
      %250 = vmatprep.subr.mxu0 0.0
      %251 = vmatpush1.msra.mxu0 %v248
      %252 = vmatprep.subr.mxu0 0.0
      %253 = vmatpush1.msra.mxu0 0.0
      %254 = vmatprep.subr.mxu0 0.0
      %255 = vmatpush1.msra.mxu0 0.0
      %256 = vmatprep.subr.mxu0 0.0
      %257 = vmatpush1.msra.mxu0 0.0
      %258 = vmatprep.subr.mxu0 0.0
      %259 = vmatpush1.msra.mxu0 0.0
      %260 = vmatprep.subr.mxu0 0.0
      %261 = vmatpush1.msra.mxu0 0.0
      %262 = vmatprep.subr.mxu0 0.0
      %263 = vmatpush1.msra.mxu0 0.0
      %264 = vmatprep.subr.mxu0 0.0
      %265 = vmatpush1.msra.mxu0 0.0
      %266 = vmatprep.subr.mxu0 0.0
      %267 = vmatpush1.msra.mxu0 0.0
      %268 = vmatprep.subr.mxu0 0.0
      %269 = vmatpush1.msra.mxu0 0.0
      %270 = vmatprep.subr.mxu0 0.0
      %271 = vmatpush1.msra.mxu0 0.0
      %272 = vmatprep.subr.mxu0 0.0
      %273 = vmatpush1.msra.mxu0 0.0
      %274 = vmatprep.subr.mxu0 0.0
      %275 = vmatpush1.msra.mxu0 0.0
      %276 = vmatprep.subr.mxu0 0.0
      %277 = vmatpush1.msra.mxu0 0.0
      %278 = vmatprep.subr.mxu0 0.0
      %279 = vmatpush1.msra.mxu0 0.0
      %280 = vmatprep.subr.mxu0 0.0
      %281 = vmatpush1.msra.mxu0 0.0
      %282 = vmatprep.subr.mxu0 0.0
      %283 = vmatpush1.msra.mxu0 0.0
      %284 = vmatprep.subr.mxu0 0.0
      %285 = vmatpush1.msra.mxu0 0.0
      %286 = vmatprep.subr.mxu0 0.0
      %287 = vmatpush1.msra.mxu0 0.0
      %288 = vmatprep.subr.mxu0 0.0
      %289 = vmatpush1.msra.mxu0 0.0
      %290 = vmatprep.subr.mxu0 0.0
      %291 = vmatpush1.msra.mxu0 0.0
      %292 = vmatprep.subr.mxu0 0.0
      %293 = vmatpush1.msra.mxu0 0.0
      %294 = vmatprep.subr.mxu0 0.0
      %295 = vmatpush1.msra.mxu0 0.0
      %296 = vmatprep.subr.mxu0 0.0
      %297 = vmatpush1.msra.mxu0 0.0
      %298 = vmatprep.subr.mxu0 0.0
      %299 = vmatpush1.msra.mxu0 0.0
      %300 = vmatprep.subr.mxu0 0.0
      %301 = vmatpush1.msra.mxu0 0.0
      %302 = vmatprep.subr.mxu0 0.0
      %303 = vmatpush1.msra.mxu0 0.0
      %304 = vmatprep.subr.mxu0 0.0
      %305 = vmatpush1.msra.mxu0 0.0
      %306 = vmatprep.subr.mxu0 0.0
      %307 = vmatpush1.msra.mxu0 0.0
      %308 = vmatprep.subr.mxu0 0.0
      %309 = vmatpush1.msra.mxu0 0.0
      %310 = vmatprep.subr.mxu0 0.0
      %311 = vmatpush1.msra.mxu0 0.0
      %312 = vmatprep.subr.mxu0 0.0
      %313 = vmatpush1.msra.mxu0 0.0
      %314 = vmatprep.mubr.f32.mxu0 0.0
      %315 = vmatmul.mubr.f32.gmra.mrb[0].mxu0 %v235
      %v316 = vpop.f32.mrb[0].mxu0
      %v317 = vadd.f32 %v216, %v316
      %v318 = vpop.f32.mrb[0].mxu0
      %319 = vmatprep.mubr.f32.mxu0 0.0
      %320 = vmatmul.mubr.f32.gmra.mrb[0].mxu0 %v238
      %v321 = vpop.f32.mrb[0].mxu0
      %v322 = vadd.f32 %v221, %v321
      %v323 = vpop.f32.mrb[0].mxu0
      %324 = vmatprep.mubr.f32.mxu0 0.0
      %325 = vmatmul.mubr.f32.gmra.mrb[0].mxu0 %v241
      %v326 = vpop.f32.mrb[0].mxu0
      %v327 = vadd.f32 %v226, %v326
      %v328 = vpop.f32.mrb[0].mxu0
      %329 = vmatprep.mubr.f32.mxu0 0.0
      %330 = vmatmul.mubr.f32.gmra.mrb[0].mxu0 %v244
      %v331 = vpop.f32.mrb[0].mxu0
      %v332 = vadd.f32 %v231, %v331
      %v333 = vpop.f32.mrb[0].mxu0
      %334 = vdwg.mxu0
      %335 = vst [vmem:[%s200] sm:$0xff] %v317
      %336 = vst [vmem:[%s200 + $0x8] sm:$0xff] %v322
      %337 = vst [vmem:[%s200 + $0x10] sm:$0xff] %v327
      %338 = vst [vmem:[%s200 + $0x18] sm:$0xff] %v332
      %v339 = vmul.f32 %v317, %v317
      %v340 = vmul.f32 %v322, %v322
      %v341 = vmul.f32 %v327, %v327
      %v342 = vmul.f32 %v332, %v332
      %v343 = vadd.f32 %v339, %v340
      %v344 = vadd.f32 %v343, %v341
      %v345 = vadd.f32 %v344, %v342
      %v346 = vrot.slane %v345, 4
      %v347 = vadd.f32 %v345, %v346
      %v348 = vrot.slane %v347, 2
      %v349 = vadd.f32 %v347, %v348
      %v350 = vrot.slane %v349, 1
      %v351 = vadd.f32 %v349, %v350
      %v352 = vmul.f32 %v351, 0.03125
      %v353 = vrsqrt.pop %v352
      %v354 = vmul.f32 %v352, %v353
      %vm355 = vcmp.eq.f32.partialorder %v352, inf
      %v356 = vsel %vm355, %v352, %v354
      %vm357 = vcmp.eq.f32.partialorder %v352, 0.0
      %v358 = vand.u32 %v352, 2147483648
      %v359 = vsel %vm357, %v358, %v356
      %v360 = vadd.f32 %v359, 1e-08
      %v361 = vrcp.pop %v360
      %362 = vst [vmem:[%s203] sm:$0x1] %v361
      %p363 = scmp.lt.s32.totalorder %s16, 1
      %s364 = scalar_select %p363, %s16, 1
      %s365 = smul.addr %s364, 4
      %s366 = smul.addr %s365, 8
      %s367 = scalar_lea.vmem %s3, %s366
      %p368 = scmp.lt.s32.totalorder %s16, 1
      %s369 = scalar_select %p368, %s16, 1
      %s370 = scalar_lea.vmem %s4, %s369
      // Predicated region
      $region33: #{janus_forward.4} parent=31 // pred_check
        %p371 = pneg %p102
      $region34: #{janus_forward.4} parent=31 // pred_check_branch
        %373 = sbr.rel (%p371) target = $region36
      $region35: #{janus_forward.4} parent=31 // pred_region
        _
      $region36: #{janus_forward.4} parent=31 // pred_fallthru
        _
      // Predicated region
      $region37: #{janus_forward.4} parent=31 // pred_check
        %p374 = pneg %p128
      $region38: #{janus_forward.4} parent=31 // pred_check_branch
        %376 = sbr.rel (%p374) target = $region40
      $region39: #{janus_forward.4} parent=31 // pred_region
        _
      $region40: #{janus_forward.4} parent=31 // pred_fallthru
        _
    $region32: #{janus_forward.4} parent=5 // pred_fallthru
      _
    %p377 = scmp.le.s32.totalorder 2, %s11
    // Predicated region
    $region41: #{janus_forward.4} parent=5 // pred_check
      %p378 = pneg %p377
    $region42: #{janus_forward.4} parent=5 // pred_check_branch
      %380 = sbr.rel (%p378) target = $region44
    $region43: #{janus_forward.4} parent=5 // pred_region
      %s381 = ssub.s32 %s11, 2
      // Predicated region
      $region45: #{janus_forward.4} parent=43 // pred_check
        %p382 = pneg %p108
      $region46: #{janus_forward.4} parent=43 // pred_check_branch
        %384 = sbr.rel (%p382) target = $region48
      $region47: #{janus_forward.4} parent=43 // pred_region
        %p385 = scmp.lt.s32.totalorder %s17, 1
        %s386 = scalar_select %p385, %s17, 1
        %s387 = smul.addr %s386, 4
        %s388 = smul.addr %s387, 8
        %s389 = scalar_lea.vmem %s3, %s388
      $region48: #{janus_forward.4} parent=43 // pred_fallthru
        _
      // Predicated region
      $region49: #{janus_forward.4} parent=43 // pred_check
        %p390 = pneg %p134
      $region50: #{janus_forward.4} parent=43 // pred_check_branch
        %392 = sbr.rel (%p390) target = $region52
      $region51: #{janus_forward.4} parent=43 // pred_region
        %p393 = scmp.lt.s32.totalorder %s17, 1
        %s394 = scalar_select %p393, %s17, 1
        %s395 = scalar_lea.vmem %s4, %s394
      $region52: #{janus_forward.4} parent=43 // pred_fallthru
        _
    $region44: #{janus_forward.4} parent=5 // pred_fallthru
      _
  $region6: #{janus_forward.4} parent=0 // loop_footer
    %s15 = sadd.s32 1, %s11
  $region7: #{janus_forward.4} parent=0 // loop_footer_branch
    %10 = sbr.rel target = $region3
  $region8: #{janus_forward.4} parent=0 // loop_exit
    _

// kernel: janus_forward.5
$region0: #{janus_forward.5}
  #allocation0 [shape = 'u32[]', space=smem, size = 0x4, offset = 0x4, fixed_abs, tag = 'smem constant byte address 0x4 - core index']
  #allocation1 [shape = 'u32[144,128]{1,0:T(1,128)}', space=vmem, size = 0x12000, scoped, tag = 'internal scratch']
  %s0 = inlined_call_operand.vmem [shape: f32[2,32,128], index: 0, kind: input, shape index: {}]
  %s1 = inlined_call_operand.vmem [shape: f32[2,1,128], index: 1, kind: input, shape index: {}]
  %s2 = inlined_call_operand.vmem [shape: f32[32,1], index: 2, kind: input, shape index: {}]
  %s3 = inlined_call_operand.vmem [shape: bf16[32,128,128], index: 3, kind: input, shape index: {}]
  %s4 = inlined_call_operand.vmem [shape: f32[32,1], index: 4, kind: input, shape index: {}]
  %s5 = inlined_call_operand.vmem [shape: f32[64,32], index: 5, kind: input, shape index: {}]
  %s6 = inlined_call_operand.vmem [shape: f32[64,1], index: 6, kind: input, shape index: {}]
  %s7 = inlined_call_operand.vmem [shape: f32[2,32,128], index: 7, kind: output, shape index: {0}]
  %s8 = inlined_call_operand.vmem [shape: f32[2,1,128], index: 8, kind: output, shape index: {1}]
  %9 = xla_tuple %s7, %s8
  %s10 = sld [smem:[#allocation0]]
  $region69: #{janus_forward.5} parent=0
    _
  %s12 = ssub.s32 1, %s10
  %s13 = scalar_select 0, %s12, %s10
  loop: start=0, step=1, limit=4
  $region2: #{janus_forward.5} parent=0 // loop_pre_header
    _
  $region3: #{janus_forward.5} parent=0 // loop_header
    %s15 = sphi 0, %s19
    %p16 = scmp.ge.s32.totalorder %s15, 4
    %s25 = sphi 0, %s27
    %s28 = sphi 0, %s25
    %s29 = sphi 0, %s28
    %s45 = sphi 0, %s29
    %s51 = sphi 0, %s53
    %s54 = sphi 0, %s51
    %s55 = sphi 0, %s54
    %s71 = sphi 0, %s55
    %s75 = sphi 0, %s75
    %s77 = sphi 0, %s75
    %s78 = sphi 0, %s77
    %s92 = sphi 0, %s78
    %s96 = sphi 0, %s96
    %s98 = sphi 0, %s96
    %s99 = sphi 0, %s98
    %s113 = sphi 0, %s99
    %s117 = sphi 0, %s117
    %s119 = sphi 0, %s117
    %s120 = sphi 0, %s119
    %s134 = sphi 0, %s120
    %s138 = sphi 0, %s138
    %s140 = sphi 0, %s138
    %s141 = sphi 0, %s140
    %s155 = sphi 0, %s141
    %s159 = sphi 0, %s159
    %s161 = sphi 0, %s159
    %s162 = sphi 0, %s161
    %s176 = sphi 0, %s162
    %s182 = sphi 0, %s184
    %s185 = sphi 0, %s182
    %s186 = sphi 0, %s185
    %s202 = sphi 0, %s186
    %s208 = sphi 0, %s210
    %s211 = sphi 0, %s208
    %s212 = sphi 0, %s211
    %s228 = sphi 0, %s212
  $region4: #{janus_forward.5} parent=0 // loop_header_branch
    %18 = sbr.rel (%p16) target = $region8
  $region5: #{janus_forward.5} parent=0 // loop_body
    %s20 = ssub.s32 %s15, 1
    %s21 = ssub.s32 %s15, 2
    %s22 = sadd.s32 %s15, 1
    %s23 = ssub.s32 %s15, %s22
    %p24 = scmp.eq.s32.totalorder %s23, 0
    %s26 = sadd.s32 %s25, 1
    %s27 = scalar_select %p24, %s25, %s26
    %p30 = pneg %p24
    %p31 = scmp.eq.s32.totalorder %s15, 1
    %p32 = por %p30, %p31
    %p33 = scmp.ne.s32.totalorder %s25, %s28
    %p34 = scmp.eq.s32.totalorder %s15, 0
    %p35 = por %p33, %p34
    %p36 = scmp.ne.s32.totalorder %s25, %s28
    %p37 = scmp.eq.s32.totalorder %s20, 1
    %p38 = por %p36, %p37
    %p39 = scmp.ne.s32.totalorder %s28, %s29
    %p40 = scmp.eq.s32.totalorder %s20, 0
    %p41 = por %p39, %p40
    %p42 = scmp.ne.s32.totalorder %s28, %s29
    %p43 = scmp.eq.s32.totalorder %s21, 1
    %p44 = por %p42, %p43
    %p46 = scmp.ne.s32.totalorder %s29, %s45
    %p47 = scmp.eq.s32.totalorder %s21, 0
    %p48 = por %p46, %p47
    %s49 = ssub.s32 %s15, %s22
    %p50 = scmp.eq.s32.totalorder %s49, 0
    %s52 = sadd.s32 %s51, 1
    %s53 = scalar_select %p50, %s51, %s52
    %p56 = pneg %p50
    %p57 = scmp.eq.s32.totalorder %s15, 1
    %p58 = por %p56, %p57
    %p59 = scmp.ne.s32.totalorder %s51, %s54
    %p60 = scmp.eq.s32.totalorder %s15, 0
    %p61 = por %p59, %p60
    %p62 = scmp.ne.s32.totalorder %s51, %s54
    %p63 = scmp.eq.s32.totalorder %s20, 1
    %p64 = por %p62, %p63
    %p65 = scmp.ne.s32.totalorder %s54, %s55
    %p66 = scmp.eq.s32.totalorder %s20, 0
    %p67 = por %p65, %p66
    %p68 = scmp.ne.s32.totalorder %s54, %s55
    %p69 = scmp.eq.s32.totalorder %s21, 1
    %p70 = por %p68, %p69
    %p72 = scmp.ne.s32.totalorder %s55, %s71
    %p73 = scmp.eq.s32.totalorder %s21, 0
    %p74 = por %p72, %p73
    %s76 = sadd.s32 %s75, 1
    %p79 = scmp.eq.s32.totalorder %s15, 1
    %p80 = scmp.ne.s32.totalorder %s75, %s77
    %p81 = scmp.eq.s32.totalorder %s15, 0
    %p82 = por %p80, %p81
    %p83 = scmp.ne.s32.totalorder %s75, %s77
    %p84 = scmp.eq.s32.totalorder %s20, 1
    %p85 = por %p83, %p84
    %p86 = scmp.ne.s32.totalorder %s77, %s78
    %p87 = scmp.eq.s32.totalorder %s20, 0
    %p88 = por %p86, %p87
    %p89 = scmp.ne.s32.totalorder %s77, %s78
    %p90 = scmp.eq.s32.totalorder %s21, 1
    %p91 = por %p89, %p90
    %p93 = scmp.ne.s32.totalorder %s78, %s92
    %p94 = scmp.eq.s32.totalorder %s21, 0
    %p95 = por %p93, %p94
    %s97 = sadd.s32 %s96, 1
    %p100 = scmp.eq.s32.totalorder %s15, 1
    %p101 = scmp.ne.s32.totalorder %s96, %s98
    %p102 = scmp.eq.s32.totalorder %s15, 0
    %p103 = por %p101, %p102
    %p104 = scmp.ne.s32.totalorder %s96, %s98
    %p105 = scmp.eq.s32.totalorder %s20, 1
    %p106 = por %p104, %p105
    %p107 = scmp.ne.s32.totalorder %s98, %s99
    %p108 = scmp.eq.s32.totalorder %s20, 0
    %p109 = por %p107, %p108
    %p110 = scmp.ne.s32.totalorder %s98, %s99
    %p111 = scmp.eq.s32.totalorder %s21, 1
    %p112 = por %p110, %p111
    %p114 = scmp.ne.s32.totalorder %s99, %s113
    %p115 = scmp.eq.s32.totalorder %s21, 0
    %p116 = por %p114, %p115
    %s118 = sadd.s32 %s117, 1
    %p121 = scmp.eq.s32.totalorder %s15, 1
    %p122 = scmp.ne.s32.totalorder %s117, %s119
    %p123 = scmp.eq.s32.totalorder %s15, 0
    %p124 = por %p122, %p123
    %p125 = scmp.ne.s32.totalorder %s117, %s119
    %p126 = scmp.eq.s32.totalorder %s20, 1
    %p127 = por %p125, %p126
    %p128 = scmp.ne.s32.totalorder %s119, %s120
    %p129 = scmp.eq.s32.totalorder %s20, 0
    %p130 = por %p128, %p129
    %p131 = scmp.ne.s32.totalorder %s119, %s120
    %p132 = scmp.eq.s32.totalorder %s21, 1
    %p133 = por %p131, %p132
    %p135 = scmp.ne.s32.totalorder %s120, %s134
    %p136 = scmp.eq.s32.totalorder %s21, 0
    %p137 = por %p135, %p136
    %s139 = sadd.s32 %s138, 1
    %p142 = scmp.eq.s32.totalorder %s15, 1
    %p143 = scmp.ne.s32.totalorder %s138, %s140
    %p144 = scmp.eq.s32.totalorder %s15, 0
    %p145 = por %p143, %p144
    %p146 = scmp.ne.s32.totalorder %s138, %s140
    %p147 = scmp.eq.s32.totalorder %s20, 1
    %p148 = por %p146, %p147
    %p149 = scmp.ne.s32.totalorder %s140, %s141
    %p150 = scmp.eq.s32.totalorder %s20, 0
    %p151 = por %p149, %p150
    %p152 = scmp.ne.s32.totalorder %s140, %s141
    %p153 = scmp.eq.s32.totalorder %s21, 1
    %p154 = por %p152, %p153
    %p156 = scmp.ne.s32.totalorder %s141, %s155
    %p157 = scmp.eq.s32.totalorder %s21, 0
    %p158 = por %p156, %p157
    %s160 = sadd.s32 %s159, 1
    %p163 = scmp.eq.s32.totalorder %s15, 1
    %p164 = scmp.ne.s32.totalorder %s159, %s161
    %p165 = scmp.eq.s32.totalorder %s15, 0
    %p166 = por %p164, %p165
    %p167 = scmp.ne.s32.totalorder %s159, %s161
    %p168 = scmp.eq.s32.totalorder %s20, 1
    %p169 = por %p167, %p168
    %p170 = scmp.ne.s32.totalorder %s161, %s162
    %p171 = scmp.eq.s32.totalorder %s20, 0
    %p172 = por %p170, %p171
    %p173 = scmp.ne.s32.totalorder %s161, %s162
    %p174 = scmp.eq.s32.totalorder %s21, 1
    %p175 = por %p173, %p174
    %p177 = scmp.ne.s32.totalorder %s162, %s176
    %p178 = scmp.eq.s32.totalorder %s21, 0
    %p179 = por %p177, %p178
    %s180 = ssub.s32 %s15, %s22
    %p181 = scmp.eq.s32.totalorder %s180, 0
    %s183 = sadd.s32 %s182, 1
    %s184 = scalar_select %p181, %s182, %s183
    %p187 = pneg %p181
    %p188 = scmp.eq.s32.totalorder %s15, 1
    %p189 = por %p187, %p188
    %p190 = scmp.ne.s32.totalorder %s182, %s185
    %p191 = scmp.eq.s32.totalorder %s15, 0
    %p192 = por %p190, %p191
    %p193 = scmp.ne.s32.totalorder %s182, %s185
    %p194 = scmp.eq.s32.totalorder %s20, 1
    %p195 = por %p193, %p194
    %p196 = scmp.ne.s32.totalorder %s185, %s186
    %p197 = scmp.eq.s32.totalorder %s20, 0
    %p198 = por %p196, %p197
    %p199 = scmp.ne.s32.totalorder %s185, %s186
    %p200 = scmp.eq.s32.totalorder %s21, 1
    %p201 = por %p199, %p200
    %p203 = scmp.ne.s32.totalorder %s186, %s202
    %p204 = scmp.eq.s32.totalorder %s21, 0
    %p205 = por %p203, %p204
    %s206 = ssub.s32 %s15, %s22
    %p207 = scmp.eq.s32.totalorder %s206, 0
    %s209 = sadd.s32 %s208, 1
    %s210 = scalar_select %p207, %s208, %s209
    %p213 = pneg %p207
    %p214 = scmp.eq.s32.totalorder %s15, 1
    %p215 = por %p213, %p214
    %p216 = scmp.ne.s32.totalorder %s208, %s211
    %p217 = scmp.eq.s32.totalorder %s15, 0
    %p218 = por %p216, %p217
    %p219 = scmp.ne.s32.totalorder %s208, %s211
    %p220 = scmp.eq.s32.totalorder %s20, 1
    %p221 = por %p219, %p220
    %p222 = scmp.ne.s32.totalorder %s211, %s212
    %p223 = scmp.eq.s32.totalorder %s20, 0
    %p224 = por %p222, %p223
    %p225 = scmp.ne.s32.totalorder %s211, %s212
    %p226 = scmp.eq.s32.totalorder %s21, 1
    %p227 = por %p225, %p226
    %p229 = scmp.ne.s32.totalorder %s212, %s228
    %p230 = scmp.eq.s32.totalorder %s21, 0
    %p231 = por %p229, %p230
    %p232 = scmp.le.s32.totalorder 1, %s15
    %p233 = scmp.lt.s32.totalorder %s15, 3
    %p234 = pnand %p232, %p233
    %p235 = pneg %p234
    // Predicated region
    $region9: #{janus_forward.5} parent=5 // pred_check
      _
    $region10: #{janus_forward.5} parent=5 // pred_check_branch
      %237 = sbr.rel (%p234) target = $region12
    $region11: #{janus_forward.5} parent=5 // pred_region
      %s238 = ssub.s32 %s15, 1
      // Predicated region
      $region13: #{janus_forward.5} parent=11 // pred_check
        %p239 = pneg %p88
      $region14: #{janus_forward.5} parent=11 // pred_check_branch
        %241 = sbr.rel (%p239) target = $region16
      $region15: #{janus_forward.5} parent=11 // pred_region
        _
      $region16: #{janus_forward.5} parent=11 // pred_fallthru
        _
      // Predicated region
      $region17: #{janus_forward.5} parent=11 // pred_check
        %p242 = pneg %p109
      $region18: #{janus_forward.5} parent=11 // pred_check_branch
        %244 = sbr.rel (%p242) target = $region20
      $region19: #{janus_forward.5} parent=11 // pred_region
        _
      $region20: #{janus_forward.5} parent=11 // pred_fallthru
        _
      // Predicated region
      $region21: #{janus_forward.5} parent=11 // pred_check
        %p245 = pneg %p130
      $region22: #{janus_forward.5} parent=11 // pred_check_branch
        %247 = sbr.rel (%p245) target = $region24
      $region23: #{janus_forward.5} parent=11 // pred_region
        _
      $region24: #{janus_forward.5} parent=11 // pred_fallthru
        _
      // Predicated region
      $region25: #{janus_forward.5} parent=11 // pred_check
        %p248 = pneg %p151
      $region26: #{janus_forward.5} parent=11 // pred_check_branch
        %250 = sbr.rel (%p248) target = $region28
      $region27: #{janus_forward.5} parent=11 // pred_region
        _
      $region28: #{janus_forward.5} parent=11 // pred_fallthru
        _
      // Predicated region
      $region29: #{janus_forward.5} parent=11 // pred_check
        %p251 = pneg %p172
      $region30: #{janus_forward.5} parent=11 // pred_check_branch
        %253 = sbr.rel (%p251) target = $region32
      $region31: #{janus_forward.5} parent=11 // pred_region
        _
      $region32: #{janus_forward.5} parent=11 // pred_fallthru
        _
    $region12: #{janus_forward.5} parent=5 // pred_fallthru
      _
    %p254 = scmp.lt.s32.totalorder %s15, 2
    // Predicated region
    $region33: #{janus_forward.5} parent=5 // pred_check
      %p255 = pneg %p254
    $region34: #{janus_forward.5} parent=5 // pred_check_branch
      %257 = sbr.rel (%p255) target = $region36
    $region35: #{janus_forward.5} parent=5 // pred_region
      // Predicated region
      $region37: #{janus_forward.5} parent=35 // pred_check
        %p258 = pneg %p35
      $region38: #{janus_forward.5} parent=35 // pred_check_branch
        %260 = sbr.rel (%p258) target = $region40
      $region39: #{janus_forward.5} parent=35 // pred_region
        %p261 = scmp.lt.s32.totalorder %s15, 1
        %s262 = scalar_select %p261, %s15, 1
        %s263 = smul.addr %s262, 4
        %s264 = smul.addr %s263, 8
        %s265 = scalar_lea.vmem %s0, %s264
      $region40: #{janus_forward.5} parent=35 // pred_fallthru
        _
      // Predicated region
      $region41: #{janus_forward.5} parent=35 // pred_check
        %p266 = pneg %p61
      $region42: #{janus_forward.5} parent=35 // pred_check_branch
        %268 = sbr.rel (%p266) target = $region44
      $region43: #{janus_forward.5} parent=35 // pred_region
        %p269 = scmp.lt.s32.totalorder %s15, 1
        %s270 = scalar_select %p269, %s15, 1
        %s271 = scalar_lea.vmem %s1, %s270
      $region44: #{janus_forward.5} parent=35 // pred_fallthru
        _
    $region36: #{janus_forward.5} parent=5 // pred_fallthru
      _
    %p272 = scmp.le.s32.totalorder 1, %s15
    %p273 = scmp.lt.s32.totalorder %s15, 3
    %p274 = pnand %p272, %p273
    %p275 = pneg %p274
    // Predicated region
    $region45: #{janus_forward.5} parent=5 // pred_check
      _
    $region46: #{janus_forward.5} parent=5 // pred_check_branch
      %277 = sbr.rel (%p274) target = $region48
    $region47: #{janus_forward.5} parent=5 // pred_region
      %s278 = ssub.s32 %s15, 1
      %p279 = scmp.lt.s32.totalorder %s20, 1
      %s280 = scalar_select %p279, %s20, 1
      %s281 = smul.addr %s280, 4
      %s282 = smul.addr %s281, 8
      %s283 = scalar_lea.vmem %s0, %s282
      %p284 = pneg %p41
      %p285 = pneg %p38
      %p286 = scmp.lt.s32.totalorder %s20, 1
      %s287 = scalar_select %p286, %s20, 1
      %s288 = scalar_lea.vmem %s1, %s287
      %p289 = pneg %p67
      %p290 = pneg %p64
      %p291 = pneg %p88
      %p292 = pneg %p85
      %p293 = pneg %p109
      %p294 = pneg %p106
      %p295 = pneg %p130
      %p296 = pneg %p127
      %p297 = pneg %p151
      %p298 = pneg %p148
      %p299 = pneg %p172
      %p300 = pneg %p169
      %p301 = pneg %p198
      %p302 = pneg %p195
      %p303 = scmp.lt.s32.totalorder %s20, 1
      %s304 = scalar_select %p303, %s20, 1
      %s305 = smul.addr %s304, 4
      %s306 = smul.addr %s305, 8
      %s307 = scalar_lea.vmem %s7, %s306
      %p308 = pneg %p224
      %p309 = pneg %p221
      %p310 = scmp.lt.s32.totalorder %s20, 1
      %s311 = scalar_select %p310, %s20, 1
      %s312 = scalar_lea.vmem %s8, %s311
      %p313 = scmp.lt.s32.totalorder %s20, 1
      %s314 = scalar_select %p313, %s20, 1
      %s315 = smul.addr %s314, 4
      %s316 = smul.addr %s315, 8
      %s317 = scalar_lea.vmem %s0, %s316
      %p318 = scmp.lt.s32.totalorder %s20, 1
      %s319 = scalar_select %p318, %s20, 1
      %s320 = scalar_lea.vmem %s1, %s319
      %p321 = scmp.lt.s32.totalorder %s20, 1
      %s322 = scalar_select %p321, %s20, 1
      %s323 = smul.addr %s322, 4
      %s324 = smul.addr %s323, 8
      %s325 = scalar_lea.vmem %s7, %s324
      %p326 = scmp.lt.s32.totalorder %s20, 1
      %s327 = scalar_select %p326, %s20, 1
      %s328 = scalar_lea.vmem %s8, %s327
      %v330 = vld [vmem:[%s317] sm:$0xff]
      %v331 = vld [vmem:[%s317 + $0x8] sm:$0xff]
      %v332 = vld [vmem:[%s317 + $0x10] sm:$0xff]
      %v333 = vld [vmem:[%s317 + $0x18] sm:$0xff]
      %v334 = vld [vmem:[%s320] sm:$0x1]
      %v336 = vlaneseq
      %v337 = vshrl.u32 %v336, 7
      %v338 = vsub.s32 0, %v337
      %v339 = vrot.slane %v334, %v338
      %v341 = vmul.f32 %v330, %v339
      %v342 = vmul.f32 %v331, %v339
      %v343 = vmul.f32 %v332, %v339
      %v344 = vmul.f32 %v333, %v339
      %v345 = vld [vmem:[%s2] sm:$0xff]
      %v346 = vld [vmem:[%s2 + $0x8] sm:$0xff]
      %v347 = vld [vmem:[%s2 + $0x10] sm:$0xff]
      %v348 = vld [vmem:[%s2 + $0x18] sm:$0xff]
      %350 = vset.pattern.permute.xlu0 0
      %351 = vperm.xlu0 %350, %v345
      %v352 = vpop.permute.xlu0 %351
      %355 = vset.pattern.permute.xlu0 0
      %356 = vperm.xlu0 %355, %v346
      %v357 = vpop.permute.xlu0 %356
      %360 = vset.pattern.permute.xlu0 0
      %361 = vperm.xlu0 %360, %v347
      %v362 = vpop.permute.xlu0 %361
      %365 = vset.pattern.permute.xlu0 0
      %366 = vperm.xlu0 %365, %v348
      %v367 = vpop.permute.xlu0 %366
      %v369 = vmul.f32 %v341, %v352
      %v370 = vmul.f32 %v342, %v357
      %v371 = vmul.f32 %v343, %v362
      %v372 = vmul.f32 %v344, %v367
      %v373 = vpack.c.bf16 %v370, %v369
      %v374 = vpack.c.bf16 %v372, %v371
      %v377 = vcombine.high %v373, %v373
      %v379 = vunpack.c.l.s4 1966171168
      %v380 = vunpack.c.0.s8 %v379
      %v381 = vlaneseq
      %v382 = vshrl.u32 %v381, 7
      %v383 = vsub.s32 %v380, %v382
      %v384 = vrot.slane %v373, %v383
      %v386 = vunpack.c.l.s4 1966171168
      %v387 = vunpack.c.0.s8 %v386
      %v388 = vlaneseq
      %v389 = vshrl.u32 %v388, 7
      %v390 = vsub.s32 %v387, %v389
      %v391 = vrot.slane %v377, %v390
      %v392 = vcombine.high %v384, %v384
      %v393 = vcombine.high %v391, %v391
      %v395 = vunpack.c.l.s4 1966171168
      %v396 = vunpack.c.0.s8 %v395
      %v397 = vlaneseq
      %v398 = vshrl.u32 %v397, 7
      %v399 = vsub.s32 %v396, %v398
      %v400 = vrot.slane %v384, %v399
      %v402 = vunpack.c.l.s4 1966171168
      %v403 = vunpack.c.0.s8 %v402
      %v404 = vlaneseq
      %v405 = vshrl.u32 %v404, 7
      %v406 = vsub.s32 %v403, %v405
      %v407 = vrot.slane %v391, %v406
      %v409 = vunpack.c.l.s4 1966171168
      %v410 = vunpack.c.0.s8 %v409
      %v411 = vlaneseq
      %v412 = vshrl.u32 %v411, 7
      %v413 = vsub.s32 %v410, %v412
      %v414 = vrot.slane %v392, %v413
      %v416 = vunpack.c.l.s4 1966171168
      %v417 = vunpack.c.0.s8 %v416
      %v418 = vlaneseq
      %v419 = vshrl.u32 %v418, 7
      %v420 = vsub.s32 %v417, %v419
      %v421 = vrot.slane %v393, %v420
      %v422 = vcombine.high %v400, %v400
      %v423 = vcombine.high %v407, %v407
      %v424 = vcombine.high %v414, %v414
      %v425 = vcombine.high %v421, %v421
      %v426 = vcombine.high %v374, %v374
      %v428 = vunpack.c.l.s4 1966171168
      %v429 = vunpack.c.0.s8 %v428
      %v430 = vlaneseq
      %v431 = vshrl.u32 %v430, 7
      %v432 = vsub.s32 %v429, %v431
      %v433 = vrot.slane %v374, %v432
      %v435 = vunpack.c.l.s4 1966171168
      %v436 = vunpack.c.0.s8 %v435
      %v437 = vlaneseq
      %v438 = vshrl.u32 %v437, 7
      %v439 = vsub.s32 %v436, %v438
      %v440 = vrot.slane %v426, %v439
      %v441 = vcombine.high %v433, %v433
      %v442 = vcombine.high %v440, %v440
      %v444 = vunpack.c.l.s4 1966171168
      %v445 = vunpack.c.0.s8 %v444
      %v446 = vlaneseq
      %v447 = vshrl.u32 %v446, 7
      %v448 = vsub.s32 %v445, %v447
      %v449 = vrot.slane %v433, %v448
      %v451 = vunpack.c.l.s4 1966171168
      %v452 = vunpack.c.0.s8 %v451
      %v453 = vlaneseq
      %v454 = vshrl.u32 %v453, 7
      %v455 = vsub.s32 %v452, %v454
      %v456 = vrot.slane %v440, %v455
      %v458 = vunpack.c.l.s4 1966171168
      %v459 = vunpack.c.0.s8 %v458
      %v460 = vlaneseq
      %v461 = vshrl.u32 %v460, 7
      %v462 = vsub.s32 %v459, %v461
      %v463 = vrot.slane %v441, %v462
      %v465 = vunpack.c.l.s4 1966171168
      %v466 = vunpack.c.0.s8 %v465
      %v467 = vlaneseq
      %v468 = vshrl.u32 %v467, 7
      %v469 = vsub.s32 %v466, %v468
      %v470 = vrot.slane %v442, %v469
      %v471 = vcombine.high %v449, %v449
      %v472 = vcombine.high %v456, %v456
      %v473 = vcombine.high %v463, %v463
      %v474 = vcombine.high %v470, %v470
      %v475 = vunpack.i.l.s16 %v400
      %v476 = vunpack.i.h.s16 %v400
      %v477 = vunpack.i.l.s16 %v414
      %v478 = vunpack.i.h.s16 %v414
      %v479 = vunpack.i.l.s16 %v422
      %v480 = vunpack.i.h.s16 %v422
      %v481 = vunpack.i.l.s16 %v424
      %v482 = vunpack.i.h.s16 %v424
      %v483 = vunpack.i.l.s16 %v407
      %v484 = vunpack.i.h.s16 %v407
      %v485 = vunpack.i.l.s16 %v421
      %v486 = vunpack.i.h.s16 %v421
      %v487 = vunpack.i.l.s16 %v423
      %v488 = vunpack.i.h.s16 %v423
      %v489 = vunpack.i.l.s16 %v425
      %v490 = vunpack.i.h.s16 %v425
      %v491 = vunpack.i.l.s16 %v449
      %v492 = vunpack.i.h.s16 %v449
      %v493 = vunpack.i.l.s16 %v463
      %v494 = vunpack.i.h.s16 %v463
      %v495 = vunpack.i.l.s16 %v471
      %v496 = vunpack.i.h.s16 %v471
      %v497 = vunpack.i.l.s16 %v473
      %v498 = vunpack.i.h.s16 %v473
      %v499 = vunpack.i.l.s16 %v456
      %v500 = vunpack.i.h.s16 %v456
      %v501 = vunpack.i.l.s16 %v470
      %v502 = vunpack.i.h.s16 %v470
      %v503 = vunpack.i.l.s16 %v472
      %v504 = vunpack.i.h.s16 %v472
      %v505 = vunpack.i.l.s16 %v474
      %v506 = vunpack.i.h.s16 %v474
      %v507 = vld [vmem:[%s3] sm:$0xf]
      %v508 = vld [vmem:[%s3 + $0x4] sm:$0xf]
      %v509 = vld [vmem:[%s3 + $0x8] sm:$0xf]
      %v510 = vld [vmem:[%s3 + $0xc] sm:$0xf]
      %v511 = vld [vmem:[%s3 + $0x10] sm:$0xf]
      %v512 = vld [vmem:[%s3 + $0x14] sm:$0xf]
      %v513 = vld [vmem:[%s3 + $0x18] sm:$0xf]
      %v514 = vld [vmem:[%s3 + $0x1c] sm:$0xf]
      %v515 = vld [vmem:[%s3 + $0x20] sm:$0xf]
      %v516 = vld [vmem:[%s3 + $0x24] sm:$0xf]
      %v517 = vld [vmem:[%s3 + $0x28] sm:$0xf]
      %v518 = vld [vmem:[%s3 + $0x2c] sm:$0xf]
      %v519 = vld [vmem:[%s3 + $0x30] sm:$0xf]
      %v520 = vld [vmem:[%s3 + $0x34] sm:$0xf]
      %v521 = vld [vmem:[%s3 + $0x38] sm:$0xf]
      %v522 = vld [vmem:[%s3 + $0x3c] sm:$0xf]
      %v523 = vld [vmem:[%s3 + $0x40] sm:$0xf]
      %v524 = vld [vmem:[%s3 + $0x44] sm:$0xf]
      %v525 = vld [vmem:[%s3 + $0x48] sm:$0xf]
      %v526 = vld [vmem:[%s3 + $0x4c] sm:$0xf]
      %v527 = vld [vmem:[%s3 + $0x50] sm:$0xf]
      %v528 = vld [vmem:[%s3 + $0x54] sm:$0xf]
      %v529 = vld [vmem:[%s3 + $0x58] sm:$0xf]
      %v530 = vld [vmem:[%s3 + $0x5c] sm:$0xf]
      %v531 = vld [vmem:[%s3 + $0x60] sm:$0xf]
      %v532 = vld [vmem:[%s3 + $0x64] sm:$0xf]
      %v533 = vld [vmem:[%s3 + $0x68] sm:$0xf]
      %v534 = vld [vmem:[%s3 + $0x6c] sm:$0xf]
      %v535 = vld [vmem:[%s3 + $0x70] sm:$0xf]
      %v536 = vld [vmem:[%s3 + $0x74] sm:$0xf]
      %v537 = vld [vmem:[%s3 + $0x78] sm:$0xf]
      %v538 = vld [vmem:[%s3 + $0x7c] sm:$0xf]
      %v539 = vld [vmem:[%s3 + $0x80] sm:$0xf]
      %v540 = vld [vmem:[%s3 + $0x84] sm:$0xf]
      %v541 = vld [vmem:[%s3 + $0x88] sm:$0xf]
      %v542 = vld [vmem:[%s3 + $0x8c] sm:$0xf]
      %v543 = vld [vmem:[%s3 + $0x90] sm:$0xf]
      %v544 = vld [vmem:[%s3 + $0x94] sm:$0xf]
      %v545 = vld [vmem:[%s3 + $0x98] sm:$0xf]
      %v546 = vld [vmem:[%s3 + $0x9c] sm:$0xf]
      %v547 = vld [vmem:[%s3 + $0xa0] sm:$0xf]
      %v548 = vld [vmem:[%s3 + $0xa4] sm:$0xf]
      %v549 = vld [vmem:[%s3 + $0xa8] sm:$0xf]
      %v550 = vld [vmem:[%s3 + $0xac] sm:$0xf]
      %v551 = vld [vmem:[%s3 + $0xb0] sm:$0xf]
      %v552 = vld [vmem:[%s3 + $0xb4] sm:$0xf]
      %v553 = vld [vmem:[%s3 + $0xb8] sm:$0xf]
      %v554 = vld [vmem:[%s3 + $0xbc] sm:$0xf]
      %v555 = vld [vmem:[%s3 + $0xc0] sm:$0xf]
      %v556 = vld [vmem:[%s3 + $0xc4] sm:$0xf]
      %v557 = vld [vmem:[%s3 + $0xc8] sm:$0xf]
      %v558 = vld [vmem:[%s3 + $0xcc] sm:$0xf]
      %v559 = vld [vmem:[%s3 + $0xd0] sm:$0xf]
      %v560 = vld [vmem:[%s3 + $0xd4] sm:$0xf]
      %v561 = vld [vmem:[%s3 + $0xd8] sm:$0xf]
      %v562 = vld [vmem:[%s3 + $0xdc] sm:$0xf]
      %v563 = vld [vmem:[%s3 + $0xe0] sm:$0xf]
      %v564 = vld [vmem:[%s3 + $0xe4] sm:$0xf]
      %v565 = vld [vmem:[%s3 + $0xe8] sm:$0xf]
      %v566 = vld [vmem:[%s3 + $0xec] sm:$0xf]
      %v567 = vld [vmem:[%s3 + $0xf0] sm:$0xf]
      %v568 = vld [vmem:[%s3 + $0xf4] sm:$0xf]
      %v569 = vld [vmem:[%s3 + $0xf8] sm:$0xf]
      %v570 = vld [vmem:[%s3 + $0xfc] sm:$0xf]
      %v571 = vld [vmem:[%s3 + $0x100] sm:$0xf]
      %v572 = vld [vmem:[%s3 + $0x104] sm:$0xf]
      %v573 = vld [vmem:[%s3 + $0x108] sm:$0xf]
      %v574 = vld [vmem:[%s3 + $0x10c] sm:$0xf]
      %v575 = vld [vmem:[%s3 + $0x110] sm:$0xf]
      %v576 = vld [vmem:[%s3 + $0x114] sm:$0xf]
      %v577 = vld [vmem:[%s3 + $0x118] sm:$0xf]
      %v578 = vld [vmem:[%s3 + $0x11c] sm:$0xf]
      %v579 = vld [vmem:[%s3 + $0x120] sm:$0xf]
      %v580 = vld [vmem:[%s3 + $0x124] sm:$0xf]
      %v581 = vld [vmem:[%s3 + $0x128] sm:$0xf]
      %v582 = vld [vmem:[%s3 + $0x12c] sm:$0xf]
      %v583 = vld [vmem:[%s3 + $0x130] sm:$0xf]
      %v584 = vld [vmem:[%s3 + $0x134] sm:$0xf]
      %v585 = vld [vmem:[%s3 + $0x138] sm:$0xf]
      %v586 = vld [vmem:[%s3 + $0x13c] sm:$0xf]
      %v587 = vld [vmem:[%s3 + $0x140] sm:$0xf]
      %v588 = vld [vmem:[%s3 + $0x144] sm:$0xf]
      %v589 = vld [vmem:[%s3 + $0x148] sm:$0xf]
      %v590 = vld [vmem:[%s3 + $0x14c] sm:$0xf]
      %v591 = vld [vmem:[%s3 + $0x150] sm:$0xf]
      %v592 = vld [vmem:[%s3 + $0x154] sm:$0xf]
      %v593 = vld [vmem:[%s3 + $0x158] sm:$0xf]
      %v594 = vld [vmem:[%s3 + $0x15c] sm:$0xf]
      %v595 = vld [vmem:[%s3 + $0x160] sm:$0xf]
      %v596 = vld [vmem:[%s3 + $0x164] sm:$0xf]
      %v597 = vld [vmem:[%s3 + $0x168] sm:$0xf]
      %v598 = vld [vmem:[%s3 + $0x16c] sm:$0xf]
      %v599 = vld [vmem:[%s3 + $0x170] sm:$0xf]
      %v600 = vld [vmem:[%s3 + $0x174] sm:$0xf]
      %v601 = vld [vmem:[%s3 + $0x178] sm:$0xf]
      %v602 = vld [vmem:[%s3 + $0x17c] sm:$0xf]
      %v603 = vld [vmem:[%s3 + $0x180] sm:$0xf]
      %v604 = vld [vmem:[%s3 + $0x184] sm:$0xf]
      %v605 = vld [vmem:[%s3 + $0x188] sm:$0xf]
      %v606 = vld [vmem:[%s3 + $0x18c] sm:$0xf]
      %v607 = vld [vmem:[%s3 + $0x190] sm:$0xf]
      %v608 = vld [vmem:[%s3 + $0x194] sm:$0xf]
      %v609 = vld [vmem:[%s3 + $0x198] sm:$0xf]
      %v610 = vld [vmem:[%s3 + $0x19c] sm:$0xf]
      %v611 = vld [vmem:[%s3 + $0x1a0] sm:$0xf]
      %v612 = vld [vmem:[%s3 + $0x1a4] sm:$0xf]
      %v613 = vld [vmem:[%s3 + $0x1a8] sm:$0xf]
      %v614 = vld [vmem:[%s3 + $0x1ac] sm:$0xf]
      %v615 = vld [vmem:[%s3 + $0x1b0] sm:$0xf]
      %v616 = vld [vmem:[%s3 + $0x1b4] sm:$0xf]
      %v617 = vld [vmem:[%s3 + $0x1b8] sm:$0xf]
      %v618 = vld [vmem:[%s3 + $0x1bc] sm:$0xf]
      %v619 = vld [vmem:[%s3 + $0x1c0] sm:$0xf]
      %v620 = vld [vmem:[%s3 + $0x1c4] sm:$0xf]
      %v621 = vld [vmem:[%s3 + $0x1c8] sm:$0xf]
      %v622 = vld [vmem:[%s3 + $0x1cc] sm:$0xf]
      %v623 = vld [vmem:[%s3 + $0x1d0] sm:$0xf]
      %v624 = vld [vmem:[%s3 + $0x1d4] sm:$0xf]
      %v625 = vld [vmem:[%s3 + $0x1d8] sm:$0xf]
      %v626 = vld [vmem:[%s3 + $0x1dc] sm:$0xf]
      %v627 = vld [vmem:[%s3 + $0x1e0] sm:$0xf]
      %v628 = vld [vmem:[%s3 + $0x1e4] sm:$0xf]
      %v629 = vld [vmem:[%s3 + $0x1e8] sm:$0xf]
      %v630 = vld [vmem:[%s3 + $0x1ec] sm:$0xf]
      %v631 = vld [vmem:[%s3 + $0x1f0] sm:$0xf]
      %v632 = vld [vmem:[%s3 + $0x1f4] sm:$0xf]
      %v633 = vld [vmem:[%s3 + $0x1f8] sm:$0xf]
      %v634 = vld [vmem:[%s3 + $0x1fc] sm:$0xf]
      %v635 = vld [vmem:[%s3 + $0x200] sm:$0xf]
      %v636 = vld [vmem:[%s3 + $0x204] sm:$0xf]
      %v637 = vld [vmem:[%s3 + $0x208] sm:$0xf]
      %v638 = vld [vmem:[%s3 + $0x20c] sm:$0xf]
      %v639 = vld [vmem:[%s3 + $0x210] sm:$0xf]
      %v640 = vld [vmem:[%s3 + $0x214] sm:$0xf]
      %v641 = vld [vmem:[%s3 + $0x218] sm:$0xf]
      %v642 = vld [vmem:[%s3 + $0x21c] sm:$0xf]
      %v643 = vld [vmem:[%s3 + $0x220] sm:$0xf]
      %v644 = vld [vmem:[%s3 + $0x224] sm:$0xf]
      %v645 = vld [vmem:[%s3 + $0x228] sm:$0xf]
      %v646 = vld [vmem:[%s3 + $0x22c] sm:$0xf]
      %v647 = vld [vmem:[%s3 + $0x230] sm:$0xf]
      %v648 = vld [vmem:[%s3 + $0x234] sm:$0xf]
      %v649 = vld [vmem:[%s3 + $0x238] sm:$0xf]
      %v650 = vld [vmem:[%s3 + $0x23c] sm:$0xf]
      %v651 = vld [vmem:[%s3 + $0x240] sm:$0xf]
      %v652 = vld [vmem:[%s3 + $0x244] sm:$0xf]
      %v653 = vld [vmem:[%s3 + $0x248] sm:$0xf]
      %v654 = vld [vmem:[%s3 + $0x24c] sm:$0xf]
      %v655 = vld [vmem:[%s3 + $0x250] sm:$0xf]
      %v656 = vld [vmem:[%s3 + $0x254] sm:$0xf]
      %v657 = vld [vmem:[%s3 + $0x258] sm:$0xf]
      %v658 = vld [vmem:[%s3 + $0x25c] sm:$0xf]
      %v659 = vld [vmem:[%s3 + $0x260] sm:$0xf]
      %v660 = vld [vmem:[%s3 + $0x264] sm:$0xf]
      %v661 = vld [vmem:[%s3 + $0x268] sm:$0xf]
      %v662 = vld [vmem:[%s3 + $0x26c] sm:$0xf]
      %v663 = vld [vmem:[%s3 + $0x270] sm:$0xf]
      %v664 = vld [vmem:[%s3 + $0x274] sm:$0xf]
      %v665 = vld [vmem:[%s3 + $0x278] sm:$0xf]
      %v666 = vld [vmem:[%s3 + $0x27c] sm:$0xf]
      %v667 = vld [vmem:[%s3 + $0x280] sm:$0xf]
      %v668 = vld [vmem:[%s3 + $0x284] sm:$0xf]
      %v669 = vld [vmem:[%s3 + $0x288] sm:$0xf]
      %v670 = vld [vmem:[%s3 + $0x28c] sm:$0xf]
      %v671 = vld [vmem:[%s3 + $0x290] sm:$0xf]
      %v672 = vld [vmem:[%s3 + $0x294] sm:$0xf]
      %v673 = vld [vmem:[%s3 + $0x298] sm:$0xf]
      %v674 = vld [vmem:[%s3 + $0x29c] sm:$0xf]
      %v675 = vld [vmem:[%s3 + $0x2a0] sm:$0xf]
      %v676 = vld [vmem:[%s3 + $0x2a4] sm:$0xf]
      %v677 = vld [vmem:[%s3 + $0x2a8] sm:$0xf]
      %v678 = vld [vmem:[%s3 + $0x2ac] sm:$0xf]
      %v679 = vld [vmem:[%s3 + $0x2b0] sm:$0xf]
      %v680 = vld [vmem:[%s3 + $0x2b4] sm:$0xf]
      %v681 = vld [vmem:[%s3 + $0x2b8] sm:$0xf]
      %v682 = vld [vmem:[%s3 + $0x2bc] sm:$0xf]
      %v683 = vld [vmem:[%s3 + $0x2c0] sm:$0xf]
      %v684 = vld [vmem:[%s3 + $0x2c4] sm:$0xf]
      %v685 = vld [vmem:[%s3 + $0x2c8] sm:$0xf]
      %v686 = vld [vmem:[%s3 + $0x2cc] sm:$0xf]
      %v687 = vld [vmem:[%s3 + $0x2d0] sm:$0xf]
      %v688 = vld [vmem:[%s3 + $0x2d4] sm:$0xf]
      %v689 = vld [vmem:[%s3 + $0x2d8] sm:$0xf]
      %v690 = vld [vmem:[%s3 + $0x2dc] sm:$0xf]
      %v691 = vld [vmem:[%s3 + $0x2e0] sm:$0xf]
      %v692 = vld [vmem:[%s3 + $0x2e4] sm:$0xf]
      %v693 = vld [vmem:[%s3 + $0x2e8] sm:$0xf]
      %v694 = vld [vmem:[%s3 + $0x2ec] sm:$0xf]
      %v695 = vld [vmem:[%s3 + $0x2f0] sm:$0xf]
      %v696 = vld [vmem:[%s3 + $0x2f4] sm:$0xf]
      %v697 = vld [vmem:[%s3 + $0x2f8] sm:$0xf]
      %v698 = vld [vmem:[%s3 + $0x2fc] sm:$0xf]
      %v699 = vld [vmem:[%s3 + $0x300] sm:$0xf]
      %v700 = vld [vmem:[%s3 + $0x304] sm:$0xf]
      %v701 = vld [vmem:[%s3 + $0x308] sm:$0xf]
      %v702 = vld [vmem:[%s3 + $0x30c] sm:$0xf]
      %v703 = vld [vmem:[%s3 + $0x310] sm:$0xf]
      %v704 = vld [vmem:[%s3 + $0x314] sm:$0xf]
      %v705 = vld [vmem:[%s3 + $0x318] sm:$0xf]
      %v706 = vld [vmem:[%s3 + $0x31c] sm:$0xf]
      %v707 = vld [vmem:[%s3 + $0x320] sm:$0xf]
      %v708 = vld [vmem:[%s3 + $0x324] sm:$0xf]
      %v709 = vld [vmem:[%s3 + $0x328] sm:$0xf]
      %v710 = vld [vmem:[%s3 + $0x32c] sm:$0xf]
      %v711 = vld [vmem:[%s3 + $0x330] sm:$0xf]
      %v712 = vld [vmem:[%s3 + $0x334] sm:$0xf]
      %v713 = vld [vmem:[%s3 + $0x338] sm:$0xf]
      %v714 = vld [vmem:[%s3 + $0x33c] sm:$0xf]
      %v715 = vld [vmem:[%s3 + $0x340] sm:$0xf]
      %v716 = vld [vmem:[%s3 + $0x344] sm:$0xf]
      %v717 = vld [vmem:[%s3 + $0x348] sm:$0xf]
      %v718 = vld [vmem:[%s3 + $0x34c] sm:$0xf]
      %v719 = vld [vmem:[%s3 + $0x350] sm:$0xf]
      %v720 = vld [vmem:[%s3 + $0x354] sm:$0xf]
      %v721 = vld [vmem:[%s3 + $0x358] sm:$0xf]
      %v722 = vld [vmem:[%s3 + $0x35c] sm:$0xf]
      %v723 = vld [vmem:[%s3 + $0x360] sm:$0xf]
      %v724 = vld [vmem:[%s3 + $0x364] sm:$0xf]
      %v725 = vld [vmem:[%s3 + $0x368] sm:$0xf]
      %v726 = vld [vmem:[%s3 + $0x36c] sm:$0xf]
      %v727 = vld [vmem:[%s3 + $0x370] sm:$0xf]
      %v728 = vld [vmem:[%s3 + $0x374] sm:$0xf]
      %v729 = vld [vmem:[%s3 + $0x378] sm:$0xf]
      %v730 = vld [vmem:[%s3 + $0x37c] sm:$0xf]
      %v731 = vld [vmem:[%s3 + $0x380] sm:$0xf]
      %v732 = vld [vmem:[%s3 + $0x384] sm:$0xf]
      %v733 = vld [vmem:[%s3 + $0x388] sm:$0xf]
      %v734 = vld [vmem:[%s3 + $0x38c] sm:$0xf]
      %v735 = vld [vmem:[%s3 + $0x390] sm:$0xf]
      %v736 = vld [vmem:[%s3 + $0x394] sm:$0xf]
      %v737 = vld [vmem:[%s3 + $0x398] sm:$0xf]
      %v738 = vld [vmem:[%s3 + $0x39c] sm:$0xf]
      %v739 = vld [vmem:[%s3 + $0x3a0] sm:$0xf]
      %v740 = vld [vmem:[%s3 + $0x3a4] sm:$0xf]
      %v741 = vld [vmem:[%s3 + $0x3a8] sm:$0xf]
      %v742 = vld [vmem:[%s3 + $0x3ac] sm:$0xf]
      %v743 = vld [vmem:[%s3 + $0x3b0] sm:$0xf]
      %v744 = vld [vmem:[%s3 + $0x3b4] sm:$0xf]
      %v745 = vld [vmem:[%s3 + $0x3b8] sm:$0xf]
      %v746 = vld [vmem:[%s3 + $0x3bc] sm:$0xf]
      %v747 = vld [vmem:[%s3 + $0x3c0] sm:$0xf]
      %v748 = vld [vmem:[%s3 + $0x3c4] sm:$0xf]
      %v749 = vld [vmem:[%s3 + $0x3c8] sm:$0xf]
      %v750 = vld [vmem:[%s3 + $0x3cc] sm:$0xf]
      %v751 = vld [vmem:[%s3 + $0x3d0] sm:$0xf]
      %v752 = vld [vmem:[%s3 + $0x3d4] sm:$0xf]
      %v753 = vld [vmem:[%s3 + $0x3d8] sm:$0xf]
      %v754 = vld [vmem:[%s3 + $0x3dc] sm:$0xf]
      %v755 = vld [vmem:[%s3 + $0x3e0] sm:$0xf]
      %v756 = vld [vmem:[%s3 + $0x3e4] sm:$0xf]
      %v757 = vld [vmem:[%s3 + $0x3e8] sm:$0xf]
      %v758 = vld [vmem:[%s3 + $0x3ec] sm:$0xf]
      %v759 = vld [vmem:[%s3 + $0x3f0] sm:$0xf]
      %v760 = vld [vmem:[%s3 + $0x3f4] sm:$0xf]
      %v761 = vld [vmem:[%s3 + $0x3f8] sm:$0xf]
      %v762 = vld [vmem:[%s3 + $0x3fc] sm:$0xf]
      %v763 = vld [vmem:[%s3 + $0x400] sm:$0xf]
      %v764 = vld [vmem:[%s3 + $0x404] sm:$0xf]
      %v765 = vld [vmem:[%s3 + $0x408] sm:$0xf]
      %v766 = vld [vmem:[%s3 + $0x40c] sm:$0xf]
      %v767 = vld [vmem:[%s3 + $0x410] sm:$0xf]
      %v768 = vld [vmem:[%s3 + $0x414] sm:$0xf]
      %v769 = vld [vmem:[%s3 + $0x418] sm:$0xf]
      %v770 = vld [vmem:[%s3 + $0x41c] sm:$0xf]
      %v771 = vld [vmem:[%s3 + $0x420] sm:$0xf]
      %v772 = vld [vmem:[%s3 + $0x424] sm:$0xf]
      %v773 = vld [vmem:[%s3 + $0x428] sm:$0xf]
      %v774 = vld [vmem:[%s3 + $0x42c] sm:$0xf]
      %v775 = vld [vmem:[%s3 + $0x430] sm:$0xf]
      %v776 = vld [vmem:[%s3 + $0x434] sm:$0xf]
      %v777 = vld [vmem:[%s3 + $0x438] sm:$0xf]
      %v778 = vld [vmem:[%s3 + $0x43c] sm:$0xf]
      %v779 = vld [vmem:[%s3 + $0x440] sm:$0xf]
      %v780 = vld [vmem:[%s3 + $0x444] sm:$0xf]
      %v781 = vld [vmem:[%s3 + $0x448] sm:$0xf]
      %v782 = vld [vmem:[%s3 + $0x44c] sm:$0xf]
      %v783 = vld [vmem:[%s3 + $0x450] sm:$0xf]
      %v784 = vld [vmem:[%s3 + $0x454] sm:$0xf]
      %v785 = vld [vmem:[%s3 + $0x458] sm:$0xf]
      %v786 = vld [vmem:[%s3 + $0x45c] sm:$0xf]
      %v787 = vld [vmem:[%s3 + $0x460] sm:$0xf]
      %v788 = vld [vmem:[%s3 + $0x464] sm:$0xf]
      %v789 = vld [vmem:[%s3 + $0x468] sm:$0xf]
      %v790 = vld [vmem:[%s3 + $0x46c] sm:$0xf]
      %v791 = vld [vmem:[%s3 + $0x470] sm:$0xf]
      %v792 = vld [vmem:[%s3 + $0x474] sm:$0xf]
      %v793 = vld [vmem:[%s3 + $0x478] sm:$0xf]
      %v794 = vld [vmem:[%s3 + $0x47c] sm:$0xf]
      %v795 = vld [vmem:[%s3 + $0x480] sm:$0xf]
      %v796 = vld [vmem:[%s3 + $0x484] sm:$0xf]
      %v797 = vld [vmem:[%s3 + $0x488] sm:$0xf]
      %v798 = vld [vmem:[%s3 + $0x48c] sm:$0xf]
      %v799 = vld [vmem:[%s3 + $0x490] sm:$0xf]
      %v800 = vld [vmem:[%s3 + $0x494] sm:$0xf]
      %v801 = vld [vmem:[%s3 + $0x498] sm:$0xf]
      %v802 = vld [vmem:[%s3 + $0x49c] sm:$0xf]
      %v803 = vld [vmem:[%s3 + $0x4a0] sm:$0xf]
      %v804 = vld [vmem:[%s3 + $0x4a4] sm:$0xf]
      %v805 = vld [vmem:[%s3 + $0x4a8] sm:$0xf]
      %v806 = vld [vmem:[%s3 + $0x4ac] sm:$0xf]
      %v807 = vld [vmem:[%s3 + $0x4b0] sm:$0xf]
      %v808 = vld [vmem:[%s3 + $0x4b4] sm:$0xf]
      %v809 = vld [vmem:[%s3 + $0x4b8] sm:$0xf]
      %v810 = vld [vmem:[%s3 + $0x4bc] sm:$0xf]
      %v811 = vld [vmem:[%s3 + $0x4c0] sm:$0xf]
      %v812 = vld [vmem:[%s3 + $0x4c4] sm:$0xf]
      %v813 = vld [vmem:[%s3 + $0x4c8] sm:$0xf]
      %v814 = vld [vmem:[%s3 + $0x4cc] sm:$0xf]
      %v815 = vld [vmem:[%s3 + $0x4d0] sm:$0xf]
      %v816 = vld [vmem:[%s3 + $0x4d4] sm:$0xf]
      %v817 = vld [vmem:[%s3 + $0x4d8] sm:$0xf]
      %v818 = vld [vmem:[%s3 + $0x4dc] sm:$0xf]
      %v819 = vld [vmem:[%s3 + $0x4e0] sm:$0xf]
      %v820 = vld [vmem:[%s3 + $0x4e4] sm:$0xf]
      %v821 = vld [vmem:[%s3 + $0x4e8] sm:$0xf]
      %v822 = vld [vmem:[%s3 + $0x4ec] sm:$0xf]
      %v823 = vld [vmem:[%s3 + $0x4f0] sm:$0xf]
      %v824 = vld [vmem:[%s3 + $0x4f4] sm:$0xf]
      %v825 = vld [vmem:[%s3 + $0x4f8] sm:$0xf]
      %v826 = vld [vmem:[%s3 + $0x4fc] sm:$0xf]
      %v827 = vld [vmem:[%s3 + $0x500] sm:$0xf]
      %v828 = vld [vmem:[%s3 + $0x504] sm:$0xf]
      %v829 = vld [vmem:[%s3 + $0x508] sm:$0xf]
      %v830 = vld [vmem:[%s3 + $0x50c] sm:$0xf]
      %v831 = vld [vmem:[%s3 + $0x510] sm:$0xf]
      %v832 = vld [vmem:[%s3 + $0x514] sm:$0xf]
      %v833 = vld [vmem:[%s3 + $0x518] sm:$0xf]
      %v834 = vld [vmem:[%s3 + $0x51c] sm:$0xf]
      %v835 = vld [vmem:[%s3 + $0x520] sm:$0xf]
      %v836 = vld [vmem:[%s3 + $0x524] sm:$0xf]
      %v837 = vld [vmem:[%s3 + $0x528] sm:$0xf]
      %v838 = vld [vmem:[%s3 + $0x52c] sm:$0xf]
      %v839 = vld [vmem:[%s3 + $0x530] sm:$0xf]
      %v840 = vld [vmem:[%s3 + $0x534] sm:$0xf]
      %v841 = vld [vmem:[%s3 + $0x538] sm:$0xf]
      %v842 = vld [vmem:[%s3 + $0x53c] sm:$0xf]
      %v843 = vld [vmem:[%s3 + $0x540] sm:$0xf]
      %v844 = vld [vmem:[%s3 + $0x544] sm:$0xf]
      %v845 = vld [vmem:[%s3 + $0x548] sm:$0xf]
      %v846 = vld [vmem:[%s3 + $0x54c] sm:$0xf]
      %v847 = vld [vmem:[%s3 + $0x550] sm:$0xf]
      %v848 = vld [vmem:[%s3 + $0x554] sm:$0xf]
      %v849 = vld [vmem:[%s3 + $0x558] sm:$0xf]
      %v850 = vld [vmem:[%s3 + $0x55c] sm:$0xf]
      %v851 = vld [vmem:[%s3 + $0x560] sm:$0xf]
      %v852 = vld [vmem:[%s3 + $0x564] sm:$0xf]
      %v853 = vld [vmem:[%s3 + $0x568] sm:$0xf]
      %v854 = vld [vmem:[%s3 + $0x56c] sm:$0xf]
      %v855 = vld [vmem:[%s3 + $0x570] sm:$0xf]
      %v856 = vld [vmem:[%s3 + $0x574] sm:$0xf]
      %v857 = vld [vmem:[%s3 + $0x578] sm:$0xf]
      %v858 = vld [vmem:[%s3 + $0x57c] sm:$0xf]
      %v859 = vld [vmem:[%s3 + $0x580] sm:$0xf]
      %v860 = vld [vmem:[%s3 + $0x584] sm:$0xf]
      %v861 = vld [vmem:[%s3 + $0x588] sm:$0xf]
      %v862 = vld [vmem:[%s3 + $0x58c] sm:$0xf]
      %v863 = vld [vmem:[%s3 + $0x590] sm:$0xf]
      %v864 = vld [vmem:[%s3 + $0x594] sm:$0xf]
      %v865 = vld [vmem:[%s3 + $0x598] sm:$0xf]
      %v866 = vld [vmem:[%s3 + $0x59c] sm:$0xf]
      %v867 = vld [vmem:[%s3 + $0x5a0] sm:$0xf]
      %v868 = vld [vmem:[%s3 + $0x5a4] sm:$0xf]
      %v869 = vld [vmem:[%s3 + $0x5a8] sm:$0xf]
      %v870 = vld [vmem:[%s3 + $0x5ac] sm:$0xf]
      %v871 = vld [vmem:[%s3 + $0x5b0] sm:$0xf]
      %v872 = vld [vmem:[%s3 + $0x5b4] sm:$0xf]
      %v873 = vld [vmem:[%s3 + $0x5b8] sm:$0xf]
      %v874 = vld [vmem:[%s3 + $0x5bc] sm:$0xf]
      %v875 = vld [vmem:[%s3 + $0x5c0] sm:$0xf]
      %v876 = vld [vmem:[%s3 + $0x5c4] sm:$0xf]
      %v877 = vld [vmem:[%s3 + $0x5c8] sm:$0xf]
      %v878 = vld [vmem:[%s3 + $0x5cc] sm:$0xf]
      %v879 = vld [vmem:[%s3 + $0x5d0] sm:$0xf]
      %v880 = vld [vmem:[%s3 + $0x5d4] sm:$0xf]
      %v881 = vld [vmem:[%s3 + $0x5d8] sm:$0xf]
      %v882 = vld [vmem:[%s3 + $0x5dc] sm:$0xf]
      %v883 = vld [vmem:[%s3 + $0x5e0] sm:$0xf]
      %v884 = vld [vmem:[%s3 + $0x5e4] sm:$0xf]
      %v885 = vld [vmem:[%s3 + $0x5e8] sm:$0xf]
      %v886 = vld [vmem:[%s3 + $0x5ec] sm:$0xf]
      %v887 = vld [vmem:[%s3 + $0x5f0] sm:$0xf]
      %v888 = vld [vmem:[%s3 + $0x5f4] sm:$0xf]
      %v889 = vld [vmem:[%s3 + $0x5f8] sm:$0xf]
      %v890 = vld [vmem:[%s3 + $0x5fc] sm:$0xf]
      %v891 = vld [vmem:[%s3 + $0x600] sm:$0xf]
      %v892 = vld [vmem:[%s3 + $0x604] sm:$0xf]
      %v893 = vld [vmem:[%s3 + $0x608] sm:$0xf]
      %v894 = vld [vmem:[%s3 + $0x60c] sm:$0xf]
      %v895 = vld [vmem:[%s3 + $0x610] sm:$0xf]
      %v896 = vld [vmem:[%s3 + $0x614] sm:$0xf]
      %v897 = vld [vmem:[%s3 + $0x618] sm:$0xf]
      %v898 = vld [vmem:[%s3 + $0x61c] sm:$0xf]
      %v899 = vld [vmem:[%s3 + $0x620] sm:$0xf]
      %v900 = vld [vmem:[%s3 + $0x624] sm:$0xf]
      %v901 = vld [vmem:[%s3 + $0x628] sm:$0xf]
      %v902 = vld [vmem:[%s3 + $0x62c] sm:$0xf]
      %v903 = vld [vmem:[%s3 + $0x630] sm:$0xf]
      %v904 = vld [vmem:[%s3 + $0x634] sm:$0xf]
      %v905 = vld [vmem:[%s3 + $0x638] sm:$0xf]
      %v906 = vld [vmem:[%s3 + $0x63c] sm:$0xf]
      %v907 = vld [vmem:[%s3 + $0x640] sm:$0xf]
      %v908 = vld [vmem:[%s3 + $0x644] sm:$0xf]
      %v909 = vld [vmem:[%s3 + $0x648] sm:$0xf]
      %v910 = vld [vmem:[%s3 + $0x64c] sm:$0xf]
      %v911 = vld [vmem:[%s3 + $0x650] sm:$0xf]
      %v912 = vld [vmem:[%s3 + $0x654] sm:$0xf]
      %v913 = vld [vmem:[%s3 + $0x658] sm:$0xf]
      %v914 = vld [vmem:[%s3 + $0x65c] sm:$0xf]
      %v915 = vld [vmem:[%s3 + $0x660] sm:$0xf]
      %v916 = vld [vmem:[%s3 + $0x664] sm:$0xf]
      %v917 = vld [vmem:[%s3 + $0x668] sm:$0xf]
      %v918 = vld [vmem:[%s3 + $0x66c] sm:$0xf]
      %v919 = vld [vmem:[%s3 + $0x670] sm:$0xf]
      %v920 = vld [vmem:[%s3 + $0x674] sm:$0xf]
      %v921 = vld [vmem:[%s3 + $0x678] sm:$0xf]
      %v922 = vld [vmem:[%s3 + $0x67c] sm:$0xf]
      %v923 = vld [vmem:[%s3 + $0x680] sm:$0xf]
      %v924 = vld [vmem:[%s3 + $0x684] sm:$0xf]
      %v925 = vld [vmem:[%s3 + $0x688] sm:$0xf]
      %v926 = vld [vmem:[%s3 + $0x68c] sm:$0xf]
      %v927 = vld [vmem:[%s3 + $0x690] sm:$0xf]
      %v928 = vld [vmem:[%s3 + $0x694] sm:$0xf]
      %v929 = vld [vmem:[%s3 + $0x698] sm:$0xf]
      %v930 = vld [vmem:[%s3 + $0x69c] sm:$0xf]
      %v931 = vld [vmem:[%s3 + $0x6a0] sm:$0xf]
      %v932 = vld [vmem:[%s3 + $0x6a4] sm:$0xf]
      %v933 = vld [vmem:[%s3 + $0x6a8] sm:$0xf]
      %v934 = vld [vmem:[%s3 + $0x6ac] sm:$0xf]
      %v935 = vld [vmem:[%s3 + $0x6b0] sm:$0xf]
      %v936 = vld [vmem:[%s3 + $0x6b4] sm:$0xf]
      %v937 = vld [vmem:[%s3 + $0x6b8] sm:$0xf]
      %v938 = vld [vmem:[%s3 + $0x6bc] sm:$0xf]
      %v939 = vld [vmem:[%s3 + $0x6c0] sm:$0xf]
      %v940 = vld [vmem:[%s3 + $0x6c4] sm:$0xf]
      %v941 = vld [vmem:[%s3 + $0x6c8] sm:$0xf]
      %v942 = vld [vmem:[%s3 + $0x6cc] sm:$0xf]
      %v943 = vld [vmem:[%s3 + $0x6d0] sm:$0xf]
      %v944 = vld [vmem:[%s3 + $0x6d4] sm:$0xf]
      %v945 = vld [vmem:[%s3 + $0x6d8] sm:$0xf]
      %v946 = vld [vmem:[%s3 + $0x6dc] sm:$0xf]
      %v947 = vld [vmem:[%s3 + $0x6e0] sm:$0xf]
      %v948 = vld [vmem:[%s3 + $0x6e4] sm:$0xf]
      %v949 = vld [vmem:[%s3 + $0x6e8] sm:$0xf]
      %v950 = vld [vmem:[%s3 + $0x6ec] sm:$0xf]
      %v951 = vld [vmem:[%s3 + $0x6f0] sm:$0xf]
      %v952 = vld [vmem:[%s3 + $0x6f4] sm:$0xf]
      %v953 = vld [vmem:[%s3 + $0x6f8] sm:$0xf]
      %v954 = vld [vmem:[%s3 + $0x6fc] sm:$0xf]
      %v955 = vld [vmem:[%s3 + $0x700] sm:$0xf]
      %v956 = vld [vmem:[%s3 + $0x704] sm:$0xf]
      %v957 = vld [vmem:[%s3 + $0x708] sm:$0xf]
      %v958 = vld [vmem:[%s3 + $0x70c] sm:$0xf]
      %v959 = vld [vmem:[%s3 + $0x710] sm:$0xf]
      %v960 = vld [vmem:[%s3 + $0x714] sm:$0xf]
      %v961 = vld [vmem:[%s3 + $0x718] sm:$0xf]
      %v962 = vld [vmem:[%s3 + $0x71c] sm:$0xf]
      %v963 = vld [vmem:[%s3 + $0x720] sm:$0xf]
      %v964 = vld [vmem:[%s3 + $0x724] sm:$0xf]
      %v965 = vld [vmem:[%s3 + $0x728] sm:$0xf]
      %v966 = vld [vmem:[%s3 + $0x72c] sm:$0xf]
      %v967 = vld [vmem:[%s3 + $0x730] sm:$0xf]
      %v968 = vld [vmem:[%s3 + $0x734] sm:$0xf]
      %v969 = vld [vmem:[%s3 + $0x738] sm:$0xf]
      %v970 = vld [vmem:[%s3 + $0x73c] sm:$0xf]
      %v971 = vld [vmem:[%s3 + $0x740] sm:$0xf]
      %v972 = vld [vmem:[%s3 + $0x744] sm:$0xf]
      %v973 = vld [vmem:[%s3 + $0x748] sm:$0xf]
      %v974 = vld [vmem:[%s3 + $0x74c] sm:$0xf]
      %v975 = vld [vmem:[%s3 + $0x750] sm:$0xf]
      %v976 = vld [vmem:[%s3 + $0x754] sm:$0xf]
      %v977 = vld [vmem:[%s3 + $0x758] sm:$0xf]
      %v978 = vld [vmem:[%s3 + $0x75c] sm:$0xf]
      %v979 = vld [vmem:[%s3 + $0x760] sm:$0xf]
      %v980 = vld [vmem:[%s3 + $0x764] sm:$0xf]
      %v981 = vld [vmem:[%s3 + $0x768] sm:$0xf]
      %v982 = vld [vmem:[%s3 + $0x76c] sm:$0xf]
      %v983 = vld [vmem:[%s3 + $0x770] sm:$0xf]
      %v984 = vld [vmem:[%s3 + $0x774] sm:$0xf]
      %v985 = vld [vmem:[%s3 + $0x778] sm:$0xf]
      %v986 = vld [vmem:[%s3 + $0x77c] sm:$0xf]
      %v987 = vld [vmem:[%s3 + $0x780] sm:$0xf]
      %v988 = vld [vmem:[%s3 + $0x784] sm:$0xf]
      %v989 = vld [vmem:[%s3 + $0x788] sm:$0xf]
      %v990 = vld [vmem:[%s3 + $0x78c] sm:$0xf]
      %v991 = vld [vmem:[%s3 + $0x790] sm:$0xf]
      %v992 = vld [vmem:[%s3 + $0x794] sm:$0xf]
      %v993 = vld [vmem:[%s3 + $0x798] sm:$0xf]
      %v994 = vld [vmem:[%s3 + $0x79c] sm:$0xf]
      %v995 = vld [vmem:[%s3 + $0x7a0] sm:$0xf]
      %v996 = vld [vmem:[%s3 + $0x7a4] sm:$0xf]
      %v997 = vld [vmem:[%s3 + $0x7a8] sm:$0xf]
      %v998 = vld [vmem:[%s3 + $0x7ac] sm:$0xf]
      %v999 = vld [vmem:[%s3 + $0x7b0] sm:$0xf]
      %v1000 = vld [vmem:[%s3 + $0x7b4] sm:$0xf]
      %v1001 = vld [vmem:[%s3 + $0x7b8] sm:$0xf]
      %v1002 = vld [vmem:[%s3 + $0x7bc] sm:$0xf]
      %v1003 = vld [vmem:[%s3 + $0x7c0] sm:$0xf]
      %v1004 = vld [vmem:[%s3 + $0x7c4] sm:$0xf]
      %v1005 = vld [vmem:[%s3 + $0x7c8] sm:$0xf]
      %v1006 = vld [vmem:[%s3 + $0x7cc] sm:$0xf]
      %v1007 = vld [vmem:[%s3 + $0x7d0] sm:$0xf]
      %v1008 = vld [vmem:[%s3 + $0x7d4] sm:$0xf]
      %v1009 = vld [vmem:[%s3 + $0x7d8] sm:$0xf]
      %v1010 = vld [vmem:[%s3 + $0x7dc] sm:$0xf]
      %v1011 = vld [vmem:[%s3 + $0x7e0] sm:$0xf]
      %v1012 = vld [vmem:[%s3 + $0x7e4] sm:$0xf]
      %v1013 = vld [vmem:[%s3 + $0x7e8] sm:$0xf]
      %v1014 = vld [vmem:[%s3 + $0x7ec] sm:$0xf]
      %v1015 = vld [vmem:[%s3 + $0x7f0] sm:$0xf]
      %v1016 = vld [vmem:[%s3 + $0x7f4] sm:$0xf]
      %v1017 = vld [vmem:[%s3 + $0x7f8] sm:$0xf]
      %v1018 = vld [vmem:[%s3 + $0x7fc] sm:$0xf]
      %v1019 = vpack.i.b16 %v475, %v475
      %v1020 = vlaneseq
      %v1021 = vshrl.u32 %v1020, 7
      %v1022 = vsub.s32 0, %v1021
      %v1023 = vrot.slane %v1019, %v1022
      %v1041 = vunpack.c.l.b16 %v507
      %v1042 = vunpack.c.l.b16 %v508
      %v1043 = vunpack.c.l.b16 %v509
      %v1044 = vunpack.c.l.b16 %v510
      %v1045 = vunpack.c.l.b16 %v511
      %v1046 = vunpack.c.l.b16 %v512
      %v1047 = vunpack.c.l.b16 %v513
      %v1048 = vunpack.c.l.b16 %v514
      %v1049 = vunpack.c.l.b16 %v515
      %v1050 = vunpack.c.l.b16 %v516
      %v1051 = vunpack.c.l.b16 %v517
      %v1052 = vunpack.c.l.b16 %v518
      %v1053 = vunpack.c.l.b16 %v519
      %v1054 = vunpack.c.l.b16 %v520
      %v1055 = vunpack.c.l.b16 %v521
      %v1056 = vunpack.c.l.b16 %v522
      %v1057 = vpack.c.b16 %v1042, %v1041
      %v1058 = vpack.c.b16 %v1044, %v1043
      %v1059 = vpack.c.b16 %v1046, %v1045
      %v1060 = vpack.c.b16 %v1048, %v1047
      %v1061 = vpack.c.b16 %v1050, %v1049
      %v1062 = vpack.c.b16 %v1052, %v1051
      %v1063 = vpack.c.b16 %v1054, %v1053
      %v1064 = vpack.c.b16 %v1056, %v1055
      %1073 = vmatprep.subr.bf16.mxu0 0
      %1074 = vmatpush1.bf16.msra.mxu0 %v1057
      %1075 = vmatprep.subr.bf16.mxu0 0
      %1076 = vmatpush1.bf16.msra.mxu0 %v1058
      %1077 = vmatprep.subr.bf16.mxu0 0
      %1078 = vmatpush1.bf16.msra.mxu0 %v1059
      %1079 = vmatprep.subr.bf16.mxu0 0
      %1080 = vmatpush1.bf16.msra.mxu0 %v1060
      %1081 = vmatprep.subr.bf16.mxu0 0
      %1082 = vmatpush1.bf16.msra.mxu0 %v1061
      %1083 = vmatprep.subr.bf16.mxu0 0
      %1084 = vmatpush1.bf16.msra.mxu0 %v1062
      %1085 = vmatprep.subr.bf16.mxu0 0
      %1086 = vmatpush1.bf16.msra.mxu0 %v1063
      %1087 = vmatprep.subr.bf16.mxu0 0
      %1088 = vmatpush1.bf16.msra.mxu0 %v1064
      %1089 = vmatprep.subr.bf16.mxu0 0
      %1090 = vmatpush1.bf16.msra.mxu0 0
      %1091 = vmatprep.subr.bf16.mxu0 0
      %1092 = vmatpush1.bf16.msra.mxu0 0
      %1093 = vmatprep.subr.bf16.mxu0 0
      %1094 = vmatpush1.bf16.msra.mxu0 0
      %1095 = vmatprep.subr.bf16.mxu0 0
      %1096 = vmatpush1.bf16.msra.mxu0 0
      %1097 = vmatprep.subr.bf16.mxu0 0
      %1098 = vmatpush1.bf16.msra.mxu0 0
      %1099 = vmatprep.subr.bf16.mxu0 0
      %1100 = vmatpush1.bf16.msra.mxu0 0
      %1101 = vmatprep.subr.bf16.mxu0 0
      %1102 = vmatpush1.bf16.msra.mxu0 0
      %1103 = vmatprep.subr.bf16.mxu0 0
      %1104 = vmatpush1.bf16.msra.mxu0 0
      %1105 = vmatprep.mubr.bf16.mxu0 0
      %1106 = vmatmul.mubr.bf16.gmra.mrb[0].mxu0 %v1023
      %v1107 = vpop.f32.mrb[0].mxu0
      %v1108 = vadd.f32 0.0, %v1107
      %v1109 = vpop.f32.mrb[0].mxu0
      %v1110 = vpop.f32.mrb[0].mxu0
      %v1111 = vpop.f32.mrb[0].mxu0
      %1112 = vdwg.mxu0
      %v1113 = vpack.i.b16 %v476, %v476
      %v1114 = vlaneseq
      %v1115 = vshrl.u32 %v1114, 7
      %v1116 = vsub.s32 0, %v1115
      %v1117 = vrot.slane %v1113, %v1116
      %v1135 = vunpack.c.l.b16 %v523
      %v1136 = vunpack.c.l.b16 %v524
      %v1137 = vunpack.c.l.b16 %v525
      %v1138 = vunpack.c.l.b16 %v526
      %v1139 = vunpack.c.l.b16 %v527
      %v1140 = vunpack.c.l.b16 %v528
      %v1141 = vunpack.c.l.b16 %v529
      %v1142 = vunpack.c.l.b16 %v530
      %v1143 = vunpack.c.l.b16 %v531
      %v1144 = vunpack.c.l.b16 %v532
      %v1145 = vunpack.c.l.b16 %v533
      %v1146 = vunpack.c.l.b16 %v534
      %v1147 = vunpack.c.l.b16 %v535
      %v1148 = vunpack.c.l.b16 %v536
      %v1149 = vunpack.c.l.b16 %v537
      %v1150 = vunpack.c.l.b16 %v538
      %v1151 = vpack.c.b16 %v1136, %v1135
      %v1152 = vpack.c.b16 %v1138, %v1137
      %v1153 = vpack.c.b16 %v1140, %v1139
      %v1154 = vpack.c.b16 %v1142, %v1141
      %v1155 = vpack.c.b16 %v1144, %v1143
      %v1156 = vpack.c.b16 %v1146, %v1145
      %v1157 = vpack.c.b16 %v1148, %v1147
      %v1158 = vpack.c.b16 %v1150, %v1149
      %1167 = vmatprep.subr.bf16.mxu0 0
      %1168 = vmatpush1.bf16.msra.mxu0 %v1151
      %1169 = vmatprep.subr.bf16.mxu0 0
      %1170 = vmatpush1.bf16.msra.mxu0 %v1152
      %1171 = vmatprep.subr.bf16.mxu0 0
      %1172 = vmatpush1.bf16.msra.mxu0 %v1153
      %1173 = vmatprep.subr.bf16.mxu0 0
      %1174 = vmatpush1.bf16.msra.mxu0 %v1154
      %1175 = vmatprep.subr.bf16.mxu0 0
      %1176 = vmatpush1.bf16.msra.mxu0 %v1155
      %1177 = vmatprep.subr.bf16.mxu0 0
      %1178 = vmatpush1.bf16.msra.mxu0 %v1156
      %1179 = vmatprep.subr.bf16.mxu0 0
      %1180 = vmatpush1.bf16.msra.mxu0 %v1157
      %1181 = vmatprep.subr.bf16.mxu0 0
      %1182 = vmatpush1.bf16.msra.mxu0 %v1158
      %1183 = vmatprep.subr.bf16.mxu0 0
      %1184 = vmatpush1.bf16.msra.mxu0 0
      %1185 = vmatprep.subr.bf16.mxu0 0
      %1186 = vmatpush1.bf16.msra.mxu0 0
      %1187 = vmatprep.subr.bf16.mxu0 0
      %1188 = vmatpush1.bf16.msra.mxu0 0
      %1189 = vmatprep.subr.bf16.mxu0 0
      %1190 = vmatpush1.bf16.msra.mxu0 0
      %1191 = vmatprep.subr.bf16.mxu0 0
      %1192 = vmatpush1.bf16.msra.mxu0 0
      %1193 = vmatprep.subr.bf16.mxu0 0
      %1194 = vmatpush1.bf16.msra.mxu0 0
      %1195 = vmatprep.subr.bf16.mxu0 0
      %1196 = vmatpush1.bf16.msra.mxu0 0
      %1197 = vmatprep.subr.bf16.mxu0 0
      %1198 = vmatpush1.bf16.msra.mxu0 0
      %1199 = vmatprep.mubr.bf16.mxu0 0
      %1200 = vmatmul.mubr.bf16.gmra.mrb[0].mxu0 %v1117
      %v1201 = vpop.f32.mrb[0].mxu0
      %v1202 = vadd.f32 0.0, %v1201
      %v1203 = vpop.f32.mrb[0].mxu0
      %v1204 = vpop.f32.mrb[0].mxu0
      %v1205 = vpop.f32.mrb[0].mxu0
      %1206 = vdwg.mxu0
      %v1207 = vpack.i.b16 %v477, %v477
      %v1208 = vlaneseq
      %v1209 = vshrl.u32 %v1208, 7
      %v1210 = vsub.s32 0, %v1209
      %v1211 = vrot.slane %v1207, %v1210
      %v1229 = vunpack.c.l.b16 %v539
      %v1230 = vunpack.c.l.b16 %v540
      %v1231 = vunpack.c.l.b16 %v541
      %v1232 = vunpack.c.l.b16 %v542
      %v1233 = vunpack.c.l.b16 %v543
      %v1234 = vunpack.c.l.b16 %v544
      %v1235 = vunpack.c.l.b16 %v545
      %v1236 = vunpack.c.l.b16 %v546
      %v1237 = vunpack.c.l.b16 %v547
      %v1238 = vunpack.c.l.b16 %v548
      %v1239 = vunpack.c.l.b16 %v549
      %v1240 = vunpack.c.l.b16 %v550
      %v1241 = vunpack.c.l.b16 %v551
      %v1242 = vunpack.c.l.b16 %v552
      %v1243 = vunpack.c.l.b16 %v553
      %v1244 = vunpack.c.l.b16 %v554
      %v1245 = vpack.c.b16 %v1230, %v1229
      %v1246 = vpack.c.b16 %v1232, %v1231
      %v1247 = vpack.c.b16 %v1234, %v1233
      %v1248 = vpack.c.b16 %v1236, %v1235
      %v1249 = vpack.c.b16 %v1238, %v1237
      %v1250 = vpack.c.b16 %v1240, %v1239
      %v1251 = vpack.c.b16 %v1242, %v1241
      %v1252 = vpack.c.b16 %v1244, %v1243
      %1261 = vmatprep.subr.bf16.mxu0 0
      %1262 = vmatpush1.bf16.msra.mxu0 %v1245
      %1263 = vmatprep.subr.bf16.mxu0 0
      %1264 = vmatpush1.bf16.msra.mxu0 %v1246
      %1265 = vmatprep.subr.bf16.mxu0 0
      %1266 = vmatpush1.bf16.msra.mxu0 %v1247
      %1267 = vmatprep.subr.bf16.mxu0 0
      %1268 = vmatpush1.bf16.msra.mxu0 %v1248
      %1269 = vmatprep.subr.bf16.mxu0 0
      %1270 = vmatpush1.bf16.msra.mxu0 %v1249
      %1271 = vmatprep.subr.bf16.mxu0 0
      %1272 = vmatpush1.bf16.msra.mxu0 %v1250
      %1273 = vmatprep.subr.bf16.mxu0 0
      %1274 = vmatpush1.bf16.msra.mxu0 %v1251
      %1275 = vmatprep.subr.bf16.mxu0 0
      %1276 = vmatpush1.bf16.msra.mxu0 %v1252
      %1277 = vmatprep.subr.bf16.mxu0 0
      %1278 = vmatpush1.bf16.msra.mxu0 0
      %1279 = vmatprep.subr.bf16.mxu0 0
      %1280 = vmatpush1.bf16.msra.mxu0 0
      %1281 = vmatprep.subr.bf16.mxu0 0
      %1282 = vmatpush1.bf16.msra.mxu0 0
      %1283 = vmatprep.subr.bf16.mxu0 0
      %1284 = vmatpush1.bf16.msra.mxu0 0
      %1285 = vmatprep.subr.bf16.mxu0 0
      %1286 = vmatpush1.bf16.msra.mxu0 0
      %1287 = vmatprep.subr.bf16.mxu0 0
      %1288 = vmatpush1.bf16.msra.mxu0 0
      %1289 = vmatprep.subr.bf16.mxu0 0
      %1290 = vmatpush1.bf16.msra.mxu0 0
      %1291 = vmatprep.subr.bf16.mxu0 0
      %1292 = vmatpush1.bf16.msra.mxu0 0
      %1293 = vmatprep.mubr.bf16.mxu0 0
      %1294 = vmatmul.mubr.bf16.gmra.mrb[0].mxu0 %v1211
      %v1295 = vpop.f32.mrb[0].mxu0
      %v1296 = vadd.f32 0.0, %v1295
      %v1297 = vpop.f32.mrb[0].mxu0
      %v1298 = vpop.f32.mrb[0].mxu0
      %v1299 = vpop.f32.mrb[0].mxu0
      %1300 = vdwg.mxu0
      %v1301 = vpack.i.b16 %v478, %v478
      %v1302 = vlaneseq
      %v1303 = vshrl.u32 %v1302, 7
      %v1304 = vsub.s32 0, %v1303
      %v1305 = vrot.slane %v1301, %v1304
      %v1323 = vunpack.c.l.b16 %v555
      %v1324 = vunpack.c.l.b16 %v556
      %v1325 = vunpack.c.l.b16 %v557
      %v1326 = vunpack.c.l.b16 %v558
      %v1327 = vunpack.c.l.b16 %v559
      %v1328 = vunpack.c.l.b16 %v560
      %v1329 = vunpack.c.l.b16 %v561
      %v1330 = vunpack.c.l.b16 %v562
      %v1331 = vunpack.c.l.b16 %v563
      %v1332 = vunpack.c.l.b16 %v564
      %v1333 = vunpack.c.l.b16 %v565
      %v1334 = vunpack.c.l.b16 %v566
      %v1335 = vunpack.c.l.b16 %v567
      %v1336 = vunpack.c.l.b16 %v568
      %v1337 = vunpack.c.l.b16 %v569
      %v1338 = vunpack.c.l.b16 %v570
      %v1339 = vpack.c.b16 %v1324, %v1323
      %v1340 = vpack.c.b16 %v1326, %v1325
      %v1341 = vpack.c.b16 %v1328, %v1327
      %v1342 = vpack.c.b16 %v1330, %v1329
      %v1343 = vpack.c.b16 %v1332, %v1331
      %v1344 = vpack.c.b16 %v1334, %v1333
      %v1345 = vpack.c.b16 %v1336, %v1335
      %v1346 = vpack.c.b16 %v1338, %v1337
      %1355 = vmatprep.subr.bf16.mxu0 0
      %1356 = vmatpush1.bf16.msra.mxu0 %v1339
      %1357 = vmatprep.subr.bf16.mxu0 0
      %1358 = vmatpush1.bf16.msra.mxu0 %v1340
      %1359 = vmatprep.subr.bf16.mxu0 0
      %1360 = vmatpush1.bf16.msra.mxu0 %v1341
      %1361 = vmatprep.subr.bf16.mxu0 0
      %1362 = vmatpush1.bf16.msra.mxu0 %v1342
      %1363 = vmatprep.subr.bf16.mxu0 0
      %1364 = vmatpush1.bf16.msra.mxu0 %v1343
      %1365 = vmatprep.subr.bf16.mxu0 0
      %1366 = vmatpush1.bf16.msra.mxu0 %v1344
      %1367 = vmatprep.subr.bf16.mxu0 0
      %1368 = vmatpush1.bf16.msra.mxu0 %v1345
      %1369 = vmatprep.subr.bf16.mxu0 0
      %1370 = vmatpush1.bf16.msra.mxu0 %v1346
      %1371 = vmatprep.subr.bf16.mxu0 0
      %1372 = vmatpush1.bf16.msra.mxu0 0
      %1373 = vmatprep.subr.bf16.mxu0 0
      %1374 = vmatpush1.bf16.msra.mxu0 0
      %1375 = vmatprep.subr.bf16.mxu0 0
      %1376 = vmatpush1.bf16.msra.mxu0 0
      %1377 = vmatprep.subr.bf16.mxu0 0
      %1378 = vmatpush1.bf16.msra.mxu0 0
      %1379 = vmatprep.subr.bf16.mxu0 0
      %1380 = vmatpush1.bf16.msra.mxu0 0
      %1381 = vmatprep.subr.bf16.mxu0 0
      %1382 = vmatpush1.bf16.msra.mxu0 0
      %1383 = vmatprep.subr.bf16.mxu0 0
      %1384 = vmatpush1.bf16.msra.mxu0 0
      %1385 = vmatprep.subr.bf16.mxu0 0
      %1386 = vmatpush1.bf16.msra.mxu0 0
      %1387 = vmatprep.mubr.bf16.mxu0 0
      %1388 = vmatmul.mubr.bf16.gmra.mrb[0].mxu0 %v1305
      %v1389 = vpop.f32.mrb[0].mxu0
      %v1390 = vadd.f32 0.0, %v1389
      %v1391 = vpop.f32.mrb[0].mxu0
      %v1392 = vpop.f32.mrb[0].mxu0
      %v1393 = vpop.f32.mrb[0].mxu0
      %1394 = vdwg.mxu0
      %v1395 = vpack.i.b16 %v479, %v479
      %v1396 = vlaneseq
      %v1397 = vshrl.u32 %v1396, 7
      %v1398 = vsub.s32 0, %v1397
      %v1399 = vrot.slane %v1395, %v1398
      %v1417 = vunpack.c.l.b16 %v571
      %v1418 = vunpack.c.l.b16 %v572
      %v1419 = vunpack.c.l.b16 %v573
      %v1420 = vunpack.c.l.b16 %v574
      %v1421 = vunpack.c.l.b16 %v575
      %v1422 = vunpack.c.l.b16 %v576
      %v1423 = vunpack.c.l.b16 %v577
      %v1424 = vunpack.c.l.b16 %v578
      %v1425 = vunpack.c.l.b16 %v579
      %v1426 = vunpack.c.l.b16 %v580
      %v1427 = vunpack.c.l.b16 %v581
      %v1428 = vunpack.c.l.b16 %v582
      %v1429 = vunpack.c.l.b16 %v583
      %v1430 = vunpack.c.l.b16 %v584
      %v1431 = vunpack.c.l.b16 %v585
      %v1432 = vunpack.c.l.b16 %v586
      %v1433 = vpack.c.b16 %v1418, %v1417
      %v1434 = vpack.c.b16 %v1420, %v1419
      %v1435 = vpack.c.b16 %v1422, %v1421
      %v1436 = vpack.c.b16 %v1424, %v1423
      %v1437 = vpack.c.b16 %v1426, %v1425
      %v1438 = vpack.c.b16 %v1428, %v1427
      %v1439 = vpack.c.b16 %v1430, %v1429
      %v1440 = vpack.c.b16 %v1432, %v1431
      %1449 = vmatprep.subr.bf16.mxu0 0
      %1450 = vmatpush1.bf16.msra.mxu0 %v1433
      %1451 = vmatprep.subr.bf16.mxu0 0
      %1452 = vmatpush1.bf16.msra.mxu0 %v1434
      %1453 = vmatprep.subr.bf16.mxu0 0
      %1454 = vmatpush1.bf16.msra.mxu0 %v1435
      %1455 = vmatprep.subr.bf16.mxu0 0
      %1456 = vmatpush1.bf16.msra.mxu0 %v1436
      %1457 = vmatprep.subr.bf16.mxu0 0
      %1458 = vmatpush1.bf16.msra.mxu0 %v1437
      %1459 = vmatprep.subr.bf16.mxu0 0
      %1460 = vmatpush1.bf16.msra.mxu0 %v1438
      %1461 = vmatprep.subr.bf16.mxu0 0
      %1462 = vmatpush1.bf16.msra.mxu0 %v1439
      %1463 = vmatprep.subr.bf16.mxu0 0
      %1464 = vmatpush1.bf16.msra.mxu0 %v1440
      %1465 = vmatprep.subr.bf16.mxu0 0
      %1466 = vmatpush1.bf16.msra.mxu0 0
      %1467 = vmatprep.subr.bf16.mxu0 0
      %1468 = vmatpush1.bf16.msra.mxu0 0
      %1469 = vmatprep.subr.bf16.mxu0 0
      %1470 = vmatpush1.bf16.msra.mxu0 0
      %1471 = vmatprep.subr.bf16.mxu0 0
      %1472 = vmatpush1.bf16.msra.mxu0 0
      %1473 = vmatprep.subr.bf16.mxu0 0
      %1474 = vmatpush1.bf16.msra.mxu0 0
      %1475 = vmatprep.subr.bf16.mxu0 0
      %1476 = vmatpush1.bf16.msra.mxu0 0
      %1477 = vmatprep.subr.bf16.mxu0 0
      %1478 = vmatpush1.bf16.msra.mxu0 0
      %1479 = vmatprep.subr.bf16.mxu0 0
      %1480 = vmatpush1.bf16.msra.mxu0 0
      %1481 = vmatprep.mubr.bf16.mxu0 0
      %1482 = vmatmul.mubr.bf16.gmra.mrb[0].mxu0 %v1399
      %v1483 = vpop.f32.mrb[0].mxu0
      %v1484 = vadd.f32 0.0, %v1483
      %v1485 = vpop.f32.mrb[0].mxu0
      %v1486 = vpop.f32.mrb[0].mxu0
      %v1487 = vpop.f32.mrb[0].mxu0
      %1488 = vdwg.mxu0
      %v1489 = vpack.i.b16 %v480, %v480
      %v1490 = vlaneseq
      %v1491 = vshrl.u32 %v1490, 7
      %v1492 = vsub.s32 0, %v1491
      %v1493 = vrot.slane %v1489, %v1492
      %v1511 = vunpack.c.l.b16 %v587
      %v1512 = vunpack.c.l.b16 %v588
      %v1513 = vunpack.c.l.b16 %v589
      %v1514 = vunpack.c.l.b16 %v590
      %v1515 = vunpack.c.l.b16 %v591
      %v1516 = vunpack.c.l.b16 %v592
      %v1517 = vunpack.c.l.b16 %v593
      %v1518 = vunpack.c.l.b16 %v594
      %v1519 = vunpack.c.l.b16 %v595
      %v1520 = vunpack.c.l.b16 %v596
      %v1521 = vunpack.c.l.b16 %v597
      %v1522 = vunpack.c.l.b16 %v598
      %v1523 = vunpack.c.l.b16 %v599
      %v1524 = vunpack.c.l.b16 %v600
      %v1525 = vunpack.c.l.b16 %v601
      %v1526 = vunpack.c.l.b16 %v602
      %v1527 = vpack.c.b16 %v1512, %v1511
      %v1528 = vpack.c.b16 %v1514, %v1513
      %v1529 = vpack.c.b16 %v1516, %v1515
      %v1530 = vpack.c.b16 %v1518, %v1517
      %v1531 = vpack.c.b16 %v1520, %v1519
      %v1532 = vpack.c.b16 %v1522, %v1521
      %v1533 = vpack.c.b16 %v1524, %v1523
      %v1534 = vpack.c.b16 %v1526, %v1525
      %1543 = vmatprep.subr.bf16.mxu0 0
      %1544 = vmatpush1.bf16.msra.mxu0 %v1527
      %1545 = vmatprep.subr.bf16.mxu0 0
      %1546 = vmatpush1.bf16.msra.mxu0 %v1528
      %1547 = vmatprep.subr.bf16.mxu0 0
      %1548 = vmatpush1.bf16.msra.mxu0 %v1529
      %1549 = vmatprep.subr.bf16.mxu0 0
      %1550 = vmatpush1.bf16.msra.mxu0 %v1530
      %1551 = vmatprep.subr.bf16.mxu0 0
      %1552 = vmatpush1.bf16.msra.mxu0 %v1531
      %1553 = vmatprep.subr.bf16.mxu0 0
      %1554 = vmatpush1.bf16.msra.mxu0 %v1532
      %1555 = vmatprep.subr.bf16.mxu0 0
      %1556 = vmatpush1.bf16.msra.mxu0 %v1533
      %1557 = vmatprep.subr.bf16.mxu0 0
      %1558 = vmatpush1.bf16.msra.mxu0 %v1534
      %1559 = vmatprep.subr.bf16.mxu0 0
      %1560 = vmatpush1.bf16.msra.mxu0 0
      %1561 = vmatprep.subr.bf16.mxu0 0
      %1562 = vmatpush1.bf16.msra.mxu0 0
      %1563 = vmatprep.subr.bf16.mxu0 0
      %1564 = vmatpush1.bf16.msra.mxu0 0
      %1565 = vmatprep.subr.bf16.mxu0 0
      %1566 = vmatpush1.bf16.msra.mxu0 0
      %1567 = vmatprep.subr.bf16.mxu0 0
      %1568 = vmatpush1.bf16.msra.mxu0 0
      %1569 = vmatprep.subr.bf16.mxu0 0
      %1570 = vmatpush1.bf16.msra.mxu0 0
      %1571 = vmatprep.subr.bf16.mxu0 0
      %1572 = vmatpush1.bf16.msra.mxu0 0
      %1573 = vmatprep.subr.bf16.mxu0 0
      %1574 = vmatpush1.bf16.msra.mxu0 0
      %1575 = vmatprep.mubr.bf16.mxu0 0
      %1576 = vmatmul.mubr.bf16.gmra.mrb[0].mxu0 %v1493
      %v1577 = vpop.f32.mrb[0].mxu0
      %v1578 = vadd.f32 0.0, %v1577
      %v1579 = vpop.f32.mrb[0].mxu0
      %v1580 = vpop.f32.mrb[0].mxu0
      %v1581 = vpop.f32.mrb[0].mxu0
      %1582 = vdwg.mxu0
      %v1583 = vpack.i.b16 %v481, %v481
      %v1584 = vlaneseq
      %v1585 = vshrl.u32 %v1584, 7
      %v1586 = vsub.s32 0, %v1585
      %v1587 = vrot.slane %v1583, %v1586
      %v1605 = vunpack.c.l.b16 %v603
      %v1606 = vunpack.c.l.b16 %v604
      %v1607 = vunpack.c.l.b16 %v605
      %v1608 = vunpack.c.l.b16 %v606
      %v1609 = vunpack.c.l.b16 %v607
      %v1610 = vunpack.c.l.b16 %v608
      %v1611 = vunpack.c.l.b16 %v609
      %v1612 = vunpack.c.l.b16 %v610
      %v1613 = vunpack.c.l.b16 %v611
      %v1614 = vunpack.c.l.b16 %v612
      %v1615 = vunpack.c.l.b16 %v613
      %v1616 = vunpack.c.l.b16 %v614
      %v1617 = vunpack.c.l.b16 %v615
      %v1618 = vunpack.c.l.b16 %v616
      %v1619 = vunpack.c.l.b16 %v617
      %v1620 = vunpack.c.l.b16 %v618
      %v1621 = vpack.c.b16 %v1606, %v1605
      %v1622 = vpack.c.b16 %v1608, %v1607
      %v1623 = vpack.c.b16 %v1610, %v1609
      %v1624 = vpack.c.b16 %v1612, %v1611
      %v1625 = vpack.c.b16 %v1614, %v1613
      %v1626 = vpack.c.b16 %v1616, %v1615
      %v1627 = vpack.c.b16 %v1618, %v1617
      %v1628 = vpack.c.b16 %v1620, %v1619
      %1637 = vmatprep.subr.bf16.mxu0 0
      %1638 = vmatpush1.bf16.msra.mxu0 %v1621
      %1639 = vmatprep.subr.bf16.mxu0 0
      %1640 = vmatpush1.bf16.msra.mxu0 %v1622
      %1641 = vmatprep.subr.bf16.mxu0 0
      %1642 = vmatpush1.bf16.msra.mxu0 %v1623
      %1643 = vmatprep.subr.bf16.mxu0 0
      %1644 = vmatpush1.bf16.msra.mxu0 %v1624
      %1645 = vmatprep.subr.bf16.mxu0 0
      %1646 = vmatpush1.bf16.msra.mxu0 %v1625
      %1647 = vmatprep.subr.bf16.mxu0 0
      %1648 = vmatpush1.bf16.msra.mxu0 %v1626
      %1649 = vmatprep.subr.bf16.mxu0 0
      %1650 = vmatpush1.bf16.msra.mxu0 %v1627
      %1651 = vmatprep.subr.bf16.mxu0 0
      %1652 = vmatpush1.bf16.msra.mxu0 %v1628
      %1653 = vmatprep.subr.bf16.mxu0 0
      %1654 = vmatpush1.bf16.msra.mxu0 0
      %1655 = vmatprep.subr.bf16.mxu0 0
      %1656 = vmatpush1.bf16.msra.mxu0 0
      %1657 = vmatprep.subr.bf16.mxu0 0
      %1658 = vmatpush1.bf16.msra.mxu0 0
      %1659 = vmatprep.subr.bf16.mxu0 0
      %1660 = vmatpush1.bf16.msra.mxu0 0
      %1661 = vmatprep.subr.bf16.mxu0 0
      %1662 = vmatpush1.bf16.msra.mxu0 0
      %1663 = vmatprep.subr.bf16.mxu0 0
      %1664 = vmatpush1.bf16.msra.mxu0 0
      %1665 = vmatprep.subr.bf16.mxu0 0
      %1666 = vmatpush1.bf16.msra.mxu0 0
      %1667 = vmatprep.subr.bf16.mxu0 0
      %1668 = vmatpush1.bf16.msra.mxu0 0
      %1669 = vmatprep.mubr.bf16.mxu0 0
      %1670 = vmatmul.mubr.bf16.gmra.mrb[0].mxu0 %v1587
      %v1671 = vpop.f32.mrb[0].mxu0
      %v1672 = vadd.f32 0.0, %v1671
      %v1673 = vpop.f32.mrb[0].mxu0
      %v1674 = vpop.f32.mrb[0].mxu0
      %v1675 = vpop.f32.mrb[0].mxu0
      %1676 = vdwg.mxu0
      %v1677 = vpack.i.b16 %v482, %v482
      %v1678 = vlaneseq
      %v1679 = vshrl.u32 %v1678, 7
      %v1680 = vsub.s32 0, %v1679
      %v1681 = vrot.slane %v1677, %v1680
      %v1699 = vunpack.c.l.b16 %v619
      %v1700 = vunpack.c.l.b16 %v620
      %v1701 = vunpack.c.l.b16 %v621
      %v1702 = vunpack.c.l.b16 %v622
      %v1703 = vunpack.c.l.b16 %v623
      %v1704 = vunpack.c.l.b16 %v624
      %v1705 = vunpack.c.l.b16 %v625
      %v1706 = vunpack.c.l.b16 %v626
      %v1707 = vunpack.c.l.b16 %v627
      %v1708 = vunpack.c.l.b16 %v628
      %v1709 = vunpack.c.l.b16 %v629
      %v1710 = vunpack.c.l.b16 %v630
      %v1711 = vunpack.c.l.b16 %v631
      %v1712 = vunpack.c.l.b16 %v632
      %v1713 = vunpack.c.l.b16 %v633
      %v1714 = vunpack.c.l.b16 %v634
      %v1715 = vpack.c.b16 %v1700, %v1699
      %v1716 = vpack.c.b16 %v1702, %v1701
      %v1717 = vpack.c.b16 %v1704, %v1703
      %v1718 = vpack.c.b16 %v1706, %v1705
      %v1719 = vpack.c.b16 %v1708, %v1707
      %v1720 = vpack.c.b16 %v1710, %v1709
      %v1721 = vpack.c.b16 %v1712, %v1711
      %v1722 = vpack.c.b16 %v1714, %v1713
      %1731 = vmatprep.subr.bf16.mxu0 0
      %1732 = vmatpush1.bf16.msra.mxu0 %v1715
      %1733 = vmatprep.subr.bf16.mxu0 0
      %1734 = vmatpush1.bf16.msra.mxu0 %v1716
      %1735 = vmatprep.subr.bf16.mxu0 0
      %1736 = vmatpush1.bf16.msra.mxu0 %v1717
      %1737 = vmatprep.subr.bf16.mxu0 0
      %1738 = vmatpush1.bf16.msra.mxu0 %v1718
      %1739 = vmatprep.subr.bf16.mxu0 0
      %1740 = vmatpush1.bf16.msra.mxu0 %v1719
      %1741 = vmatprep.subr.bf16.mxu0 0
      %1742 = vmatpush1.bf16.msra.mxu0 %v1720
      %1743 = vmatprep.subr.bf16.mxu0 0
      %1744 = vmatpush1.bf16.msra.mxu0 %v1721
      %1745 = vmatprep.subr.bf16.mxu0 0
      %1746 = vmatpush1.bf16.msra.mxu0 %v1722
      %1747 = vmatprep.subr.bf16.mxu0 0
      %1748 = vmatpush1.bf16.msra.mxu0 0
      %1749 = vmatprep.subr.bf16.mxu0 0
      %1750 = vmatpush1.bf16.msra.mxu0 0
      %1751 = vmatprep.subr.bf16.mxu0 0
      %1752 = vmatpush1.bf16.msra.mxu0 0
      %1753 = vmatprep.subr.bf16.mxu0 0
      %1754 = vmatpush1.bf16.msra.mxu0 0
      %1755 = vmatprep.subr.bf16.mxu0 0
      %1756 = vmatpush1.bf16.msra.mxu0 0
      %1757 = vmatprep.subr.bf16.mxu0 0
      %1758 = vmatpush1.bf16.msra.mxu0 0
      %1759 = vmatprep.subr.bf16.mxu0 0
      %1760 = vmatpush1.bf16.msra.mxu0 0
      %1761 = vmatprep.subr.bf16.mxu0 0
      %1762 = vmatpush1.bf16.msra.mxu0 0
      %1763 = vmatprep.mubr.bf16.mxu0 0
      %1764 = vmatmul.mubr.bf16.gmra.mrb[0].mxu0 %v1681
      %v1765 = vpop.f32.mrb[0].mxu0
      %v1766 = vadd.f32 0.0, %v1765
      %v1767 = vpop.f32.mrb[0].mxu0
      %v1768 = vpop.f32.mrb[0].mxu0
      %v1769 = vpop.f32.mrb[0].mxu0
      %1770 = vdwg.mxu0
      %v1771 = vpack.i.b16 %v483, %v483
      %v1772 = vlaneseq
      %v1773 = vshrl.u32 %v1772, 7
      %v1774 = vsub.s32 0, %v1773
      %v1775 = vrot.slane %v1771, %v1774
      %v1793 = vunpack.c.l.b16 %v635
      %v1794 = vunpack.c.l.b16 %v636
      %v1795 = vunpack.c.l.b16 %v637
      %v1796 = vunpack.c.l.b16 %v638
      %v1797 = vunpack.c.l.b16 %v639
      %v1798 = vunpack.c.l.b16 %v640
      %v1799 = vunpack.c.l.b16 %v641
      %v1800 = vunpack.c.l.b16 %v642
      %v1801 = vunpack.c.l.b16 %v643
      %v1802 = vunpack.c.l.b16 %v644
      %v1803 = vunpack.c.l.b16 %v645
      %v1804 = vunpack.c.l.b16 %v646
      %v1805 = vunpack.c.l.b16 %v647
      %v1806 = vunpack.c.l.b16 %v648
      %v1807 = vunpack.c.l.b16 %v649
      %v1808 = vunpack.c.l.b16 %v650
      %v1809 = vpack.c.b16 %v1794, %v1793
      %v1810 = vpack.c.b16 %v1796, %v1795
      %v1811 = vpack.c.b16 %v1798, %v1797
      %v1812 = vpack.c.b16 %v1800, %v1799
      %v1813 = vpack.c.b16 %v1802, %v1801
      %v1814 = vpack.c.b16 %v1804, %v1803
      %v1815 = vpack.c.b16 %v1806, %v1805
      %v1816 = vpack.c.b16 %v1808, %v1807
      %1825 = vmatprep.subr.bf16.mxu0 0
      %1826 = vmatpush1.bf16.msra.mxu0 %v1809
      %1827 = vmatprep.subr.bf16.mxu0 0
      %1828 = vmatpush1.bf16.msra.mxu0 %v1810
      %1829 = vmatprep.subr.bf16.mxu0 0
      %1830 = vmatpush1.bf16.msra.mxu0 %v1811
      %1831 = vmatprep.subr.bf16.mxu0 0
      %1832 = vmatpush1.bf16.msra.mxu0 %v1812
      %1833 = vmatprep.subr.bf16.mxu0 0
      %1834 = vmatpush1.bf16.msra.mxu0 %v1813
      %1835 = vmatprep.subr.bf16.mxu0 0
      %1836 = vmatpush1.bf16.msra.mxu0 %v1814
      %1837 = vmatprep.subr.bf16.mxu0 0
      %1838 = vmatpush1.bf16.msra.mxu0 %v1815
      %1839 = vmatprep.subr.bf16.mxu0 0
      %1840 = vmatpush1.bf16.msra.mxu0 %v1816
      %1841 = vmatprep.subr.bf16.mxu0 0
      %1842 = vmatpush1.bf16.msra.mxu0 0
      %1843 = vmatprep.subr.bf16.mxu0 0
      %1844 = vmatpush1.bf16.msra.mxu0 0
      %1845 = vmatprep.subr.bf16.mxu0 0
      %1846 = vmatpush1.bf16.msra.mxu0 0
      %1847 = vmatprep.subr.bf16.mxu0 0
      %1848 = vmatpush1.bf16.msra.mxu0 0
      %1849 = vmatprep.subr.bf16.mxu0 0
      %1850 = vmatpush1.bf16.msra.mxu0 0
      %1851 = vmatprep.subr.bf16.mxu0 0
      %1852 = vmatpush1.bf16.msra.mxu0 0
      %1853 = vmatprep.subr.bf16.mxu0 0
      %1854 = vmatpush1.bf16.msra.mxu0 0
      %1855 = vmatprep.subr.bf16.mxu0 0
      %1856 = vmatpush1.bf16.msra.mxu0 0
      %1857 = vmatprep.mubr.bf16.mxu0 0
      %1858 = vmatmul.mubr.bf16.gmra.mrb[0].mxu0 %v1775
      %v1859 = vpop.f32.mrb[0].mxu0
      %v1860 = vadd.f32 0.0, %v1859
      %v1861 = vpop.f32.mrb[0].mxu0
      %v1862 = vpop.f32.mrb[0].mxu0
      %v1863 = vpop.f32.mrb[0].mxu0
      %1864 = vdwg.mxu0
      %v1865 = vpack.i.b16 %v484, %v484
      %v1866 = vlaneseq
      %v1867 = vshrl.u32 %v1866, 7
      %v1868 = vsub.s32 0, %v1867
      %v1869 = vrot.slane %v1865, %v1868
      %v1887 = vunpack.c.l.b16 %v651
      %v1888 = vunpack.c.l.b16 %v652
      %v1889 = vunpack.c.l.b16 %v653
      %v1890 = vunpack.c.l.b16 %v654
      %v1891 = vunpack.c.l.b16 %v655
      %v1892 = vunpack.c.l.b16 %v656
      %v1893 = vunpack.c.l.b16 %v657
      %v1894 = vunpack.c.l.b16 %v658
      %v1895 = vunpack.c.l.b16 %v659
      %v1896 = vunpack.c.l.b16 %v660
      %v1897 = vunpack.c.l.b16 %v661
      %v1898 = vunpack.c.l.b16 %v662
      %v1899 = vunpack.c.l.b16 %v663
      %v1900 = vunpack.c.l.b16 %v664
      %v1901 = vunpack.c.l.b16 %v665
      %v1902 = vunpack.c.l.b16 %v666
      %v1903 = vpack.c.b16 %v1888, %v1887
      %v1904 = vpack.c.b16 %v1890, %v1889
      %v1905 = vpack.c.b16 %v1892, %v1891
      %v1906 = vpack.c.b16 %v1894, %v1893
      %v1907 = vpack.c.b16 %v1896, %v1895
      %v1908 = vpack.c.b16 %v1898, %v1897
      %v1909 = vpack.c.b16 %v1900, %v1899
      %v1910 = vpack.c.b16 %v1902, %v1901
      %1919 = vmatprep.subr.bf16.mxu0 0
      %1920 = vmatpush1.bf16.msra.mxu0 %v1903
      %1921 = vmatprep.subr.bf16.mxu0 0
      %1922 = vmatpush1.bf16.msra.mxu0 %v1904
      %1923 = vmatprep.subr.bf16.mxu0 0
      %1924 = vmatpush1.bf16.msra.mxu0 %v1905
      %1925 = vmatprep.subr.bf16.mxu0 0
      %1926 = vmatpush1.bf16.msra.mxu0 %v1906
      %1927 = vmatprep.subr.bf16.mxu0 0
      %1928 = vmatpush1.bf16.msra.mxu0 %v1907
      %1929 = vmatprep.subr.bf16.mxu0 0
      %1930 = vmatpush1.bf16.msra.mxu0 %v1908
      %1931 = vmatprep.subr.bf16.mxu0 0
      %1932 = vmatpush1.bf16.msra.mxu0 %v1909
      %1933 = vmatprep.subr.bf16.mxu0 0
      %1934 = vmatpush1.bf16.msra.mxu0 %v1910
      %1935 = vmatprep.subr.bf16.mxu0 0
      %1936 = vmatpush1.bf16.msra.mxu0 0
      %1937 = vmatprep.subr.bf16.mxu0 0
      %1938 = vmatpush1.bf16.msra.mxu0 0
      %1939 = vmatprep.subr.bf16.mxu0 0
      %1940 = vmatpush1.bf16.msra.mxu0 0
      %1941 = vmatprep.subr.bf16.mxu0 0
      %1942 = vmatpush1.bf16.msra.mxu0 0
      %1943 = vmatprep.subr.bf16.mxu0 0
      %1944 = vmatpush1.bf16.msra.mxu0 0
      %1945 = vmatprep.subr.bf16.mxu0 0
      %1946 = vmatpush1.bf16.msra.mxu0 0
      %1947 = vmatprep.subr.bf16.mxu0 0
      %1948 = vmatpush1.bf16.msra.mxu0 0
      %1949 = vmatprep.subr.bf16.mxu0 0
      %1950 = vmatpush1.bf16.msra.mxu0 0
      %1951 = vmatprep.mubr.bf16.mxu0 0
      %1952 = vmatmul.mubr.bf16.gmra.mrb[0].mxu0 %v1869
      %v1953 = vpop.f32.mrb[0].mxu0
      %v1954 = vadd.f32 0.0, %v1953
      %v1955 = vpop.f32.mrb[0].mxu0
      %v1956 = vpop.f32.mrb[0].mxu0
      %v1957 = vpop.f32.mrb[0].mxu0
      %1958 = vdwg.mxu0
      %v1959 = vpack.i.b16 %v485, %v485
      %v1960 = vlaneseq
      %v1961 = vshrl.u32 %v1960, 7
      %v1962 = vsub.s32 0, %v1961
      %v1963 = vrot.slane %v1959, %v1962
      %v1981 = vunpack.c.l.b16 %v667
      %v1982 = vunpack.c.l.b16 %v668
      %v1983 = vunpack.c.l.b16 %v669
      %v1984 = vunpack.c.l.b16 %v670
      %v1985 = vunpack.c.l.b16 %v671
      %v1986 = vunpack.c.l.b16 %v672
      %v1987 = vunpack.c.l.b16 %v673
      %v1988 = vunpack.c.l.b16 %v674
      %v1989 = vunpack.c.l.b16 %v675
      %v1990 = vunpack.c.l.b16 %v676
      %v1991 = vunpack.c.l.b16 %v677
      %v1992 = vunpack.c.l.b16 %v678
      %v1993 = vunpack.c.l.b16 %v679
      %v1994 = vunpack.c.l.b16 %v680
      %v1995 = vunpack.c.l.b16 %v681
      %v1996 = vunpack.c.l.b16 %v682
      %v1997 = vpack.c.b16 %v1982, %v1981
      %v1998 = vpack.c.b16 %v1984, %v1983
      %v1999 = vpack.c.b16 %v1986, %v1985
      %v2000 = vpack.c.b16 %v1988, %v1987
      %v2001 = vpack.c.b16 %v1990, %v1989
      %v2002 = vpack.c.b16 %v1992, %v1991
      %v2003 = vpack.c.b16 %v1994, %v1993
      %v2004 = vpack.c.b16 %v1996, %v1995
      %2013 = vmatprep.subr.bf16.mxu0 0
      %2014 = vmatpush1.bf16.msra.mxu0 %v1997
      %2015 = vmatprep.subr.bf16.mxu0 0
      %2016 = vmatpush1.bf16.msra.mxu0 %v1998
      %2017 = vmatprep.subr.bf16.mxu0 0
      %2018 = vmatpush1.bf16.msra.mxu0 %v1999
      %2019 = vmatprep.subr.bf16.mxu0 0
      %2020 = vmatpush1.bf16.msra.mxu0 %v2000
      %2021 = vmatprep.subr.bf16.mxu0 0
      %2022 = vmatpush1.bf16.msra.mxu0 %v2001
      %2023 = vmatprep.subr.bf16.mxu0 0
      %2024 = vmatpush1.bf16.msra.mxu0 %v2002
      %2025 = vmatprep.subr.bf16.mxu0 0
      %2026 = vmatpush1.bf16.msra.mxu0 %v2003
      %2027 = vmatprep.subr.bf16.mxu0 0
      %2028 = vmatpush1.bf16.msra.mxu0 %v2004
      %2029 = vmatprep.subr.bf16.mxu0 0
      %2030 = vmatpush1.bf16.msra.mxu0 0
      %2031 = vmatprep.subr.bf16.mxu0 0
      %2032 = vmatpush1.bf16.msra.mxu0 0
      %2033 = vmatprep.subr.bf16.mxu0 0
      %2034 = vmatpush1.bf16.msra.mxu0 0
      %2035 = vmatprep.subr.bf16.mxu0 0
      %2036 = vmatpush1.bf16.msra.mxu0 0
      %2037 = vmatprep.subr.bf16.mxu0 0
      %2038 = vmatpush1.bf16.msra.mxu0 0
      %2039 = vmatprep.subr.bf16.mxu0 0
      %2040 = vmatpush1.bf16.msra.mxu0 0
      %2041 = vmatprep.subr.bf16.mxu0 0
      %2042 = vmatpush1.bf16.msra.mxu0 0
      %2043 = vmatprep.subr.bf16.mxu0 0
      %2044 = vmatpush1.bf16.msra.mxu0 0
      %2045 = vmatprep.mubr.bf16.mxu0 0
      %2046 = vmatmul.mubr.bf16.gmra.mrb[0].mxu0 %v1963
      %v2047 = vpop.f32.mrb[0].mxu0
      %v2048 = vadd.f32 0.0, %v2047
      %v2049 = vpop.f32.mrb[0].mxu0
      %v2050 = vpop.f32.mrb[0].mxu0
      %v2051 = vpop.f32.mrb[0].mxu0
      %2052 = vdwg.mxu0
      %v2053 = vpack.i.b16 %v486, %v486
      %v2054 = vlaneseq
      %v2055 = vshrl.u32 %v2054, 7
      %v2056 = vsub.s32 0, %v2055
      %v2057 = vrot.slane %v2053, %v2056
      %v2075 = vunpack.c.l.b16 %v683
      %v2076 = vunpack.c.l.b16 %v684
      %v2077 = vunpack.c.l.b16 %v685
      %v2078 = vunpack.c.l.b16 %v686
      %v2079 = vunpack.c.l.b16 %v687
      %v2080 = vunpack.c.l.b16 %v688
      %v2081 = vunpack.c.l.b16 %v689
      %v2082 = vunpack.c.l.b16 %v690
      %v2083 = vunpack.c.l.b16 %v691
      %v2084 = vunpack.c.l.b16 %v692
      %v2085 = vunpack.c.l.b16 %v693
      %v2086 = vunpack.c.l.b16 %v694
      %v2087 = vunpack.c.l.b16 %v695
      %v2088 = vunpack.c.l.b16 %v696
      %v2089 = vunpack.c.l.b16 %v697
      %v2090 = vunpack.c.l.b16 %v698
      %v2091 = vpack.c.b16 %v2076, %v2075
      %v2092 = vpack.c.b16 %v2078, %v2077
      %v2093 = vpack.c.b16 %v2080, %v2079
      %v2094 = vpack.c.b16 %v2082, %v2081
      %v2095 = vpack.c.b16 %v2084, %v2083
      %v2096 = vpack.c.b16 %v2086, %v2085
      %v2097 = vpack.c.b16 %v2088, %v2087
      %v2098 = vpack.c.b16 %v2090, %v2089
      %2107 = vmatprep.subr.bf16.mxu0 0
      %2108 = vmatpush1.bf16.msra.mxu0 %v2091
      %2109 = vmatprep.subr.bf16.mxu0 0
      %2110 = vmatpush1.bf16.msra.mxu0 %v2092
      %2111 = vmatprep.subr.bf16.mxu0 0
      %2112 = vmatpush1.bf16.msra.mxu0 %v2093
      %2113 = vmatprep.subr.bf16.mxu0 0
      %2114 = vmatpush1.bf16.msra.mxu0 %v2094
      %2115 = vmatprep.subr.bf16.mxu0 0
      %2116 = vmatpush1.bf16.msra.mxu0 %v2095
      %2117 = vmatprep.subr.bf16.mxu0 0
      %2118 = vmatpush1.bf16.msra.mxu0 %v2096
      %2119 = vmatprep.subr.bf16.mxu0 0
      %2120 = vmatpush1.bf16.msra.mxu0 %v2097
      %2121 = vmatprep.subr.bf16.mxu0 0
      %2122 = vmatpush1.bf16.msra.mxu0 %v2098
      %2123 = vmatprep.subr.bf16.mxu0 0
      %2124 = vmatpush1.bf16.msra.mxu0 0
      %2125 = vmatprep.subr.bf16.mxu0 0
      %2126 = vmatpush1.bf16.msra.mxu0 0
      %2127 = vmatprep.subr.bf16.mxu0 0
      %2128 = vmatpush1.bf16.msra.mxu0 0
      %2129 = vmatprep.subr.bf16.mxu0 0
      %2130 = vmatpush1.bf16.msra.mxu0 0
      %2131 = vmatprep.subr.bf16.mxu0 0
      %2132 = vmatpush1.bf16.msra.mxu0 0
      %2133 = vmatprep.subr.bf16.mxu0 0
      %2134 = vmatpush1.bf16.msra.mxu0 0
      %2135 = vmatprep.subr.bf16.mxu0 0
      %2136 = vmatpush1.bf16.msra.mxu0 0
      %2137 = vmatprep.subr.bf16.mxu0 0
      %2138 = vmatpush1.bf16.msra.mxu0 0
      %2139 = vmatprep.mubr.bf16.mxu0 0
      %2140 = vmatmul.mubr.bf16.gmra.mrb[0].mxu0 %v2057
      %v2141 = vpop.f32.mrb[0].mxu0
      %v2142 = vadd.f32 0.0, %v2141
      %v2143 = vpop.f32.mrb[0].mxu0
      %v2144 = vpop.f32.mrb[0].mxu0
      %v2145 = vpop.f32.mrb[0].mxu0
      %2146 = vdwg.mxu0
      %v2147 = vpack.i.b16 %v487, %v487
      %v2148 = vlaneseq
      %v2149 = vshrl.u32 %v2148, 7
      %v2150 = vsub.s32 0, %v2149
      %v2151 = vrot.slane %v2147, %v2150
      %v2169 = vunpack.c.l.b16 %v699
      %v2170 = vunpack.c.l.b16 %v700
      %v2171 = vunpack.c.l.b16 %v701
      %v2172 = vunpack.c.l.b16 %v702
      %v2173 = vunpack.c.l.b16 %v703
      %v2174 = vunpack.c.l.b16 %v704
      %v2175 = vunpack.c.l.b16 %v705
      %v2176 = vunpack.c.l.b16 %v706
      %v2177 = vunpack.c.l.b16 %v707
      %v2178 = vunpack.c.l.b16 %v708
      %v2179 = vunpack.c.l.b16 %v709
      %v2180 = vunpack.c.l.b16 %v710
      %v2181 = vunpack.c.l.b16 %v711
      %v2182 = vunpack.c.l.b16 %v712
      %v2183 = vunpack.c.l.b16 %v713
      %v2184 = vunpack.c.l.b16 %v714
      %v2185 = vpack.c.b16 %v2170, %v2169
      %v2186 = vpack.c.b16 %v2172, %v2171
      %v2187 = vpack.c.b16 %v2174, %v2173
      %v2188 = vpack.c.b16 %v2176, %v2175
      %v2189 = vpack.c.b16 %v2178, %v2177
      %v2190 = vpack.c.b16 %v2180, %v2179
      %v2191 = vpack.c.b16 %v2182, %v2181
      %v2192 = vpack.c.b16 %v2184, %v2183
      %2201 = vmatprep.subr.bf16.mxu0 0
      %2202 = vmatpush1.bf16.msra.mxu0 %v2185
      %2203 = vmatprep.subr.bf16.mxu0 0
      %2204 = vmatpush1.bf16.msra.mxu0 %v2186
      %2205 = vmatprep.subr.bf16.mxu0 0
      %2206 = vmatpush1.bf16.msra.mxu0 %v2187
      %2207 = vmatprep.subr.bf16.mxu0 0
      %2208 = vmatpush1.bf16.msra.mxu0 %v2188
      %2209 = vmatprep.subr.bf16.mxu0 0
      %2210 = vmatpush1.bf16.msra.mxu0 %v2189
      %2211 = vmatprep.subr.bf16.mxu0 0
      %2212 = vmatpush1.bf16.msra.mxu0 %v2190
      %2213 = vmatprep.subr.bf16.mxu0 0
      %2214 = vmatpush1.bf16.msra.mxu0 %v2191
      %2215 = vmatprep.subr.bf16.mxu0 0
      %2216 = vmatpush1.bf16.msra.mxu0 %v2192
      %2217 = vmatprep.subr.bf16.mxu0 0
      %2218 = vmatpush1.bf16.msra.mxu0 0
      %2219 = vmatprep.subr.bf16.mxu0 0
      %2220 = vmatpush1.bf16.msra.mxu0 0
      %2221 = vmatprep.subr.bf16.mxu0 0
      %2222 = vmatpush1.bf16.msra.mxu0 0
      %2223 = vmatprep.subr.bf16.mxu0 0
      %2224 = vmatpush1.bf16.msra.mxu0 0
      %2225 = vmatprep.subr.bf16.mxu0 0
      %2226 = vmatpush1.bf16.msra.mxu0 0
      %2227 = vmatprep.subr.bf16.mxu0 0
      %2228 = vmatpush1.bf16.msra.mxu0 0
      %2229 = vmatprep.subr.bf16.mxu0 0
      %2230 = vmatpush1.bf16.msra.mxu0 0
      %2231 = vmatprep.subr.bf16.mxu0 0
      %2232 = vmatpush1.bf16.msra.mxu0 0
      %2233 = vmatprep.mubr.bf16.mxu0 0
      %2234 = vmatmul.mubr.bf16.gmra.mrb[0].mxu0 %v2151
      %v2235 = vpop.f32.mrb[0].mxu0
      %v2236 = vadd.f32 0.0, %v2235
      %v2237 = vpop.f32.mrb[0].mxu0
      %v2238 = vpop.f32.mrb[0].mxu0
      %v2239 = vpop.f32.mrb[0].mxu0
      %2240 = vdwg.mxu0
      %v2241 = vpack.i.b16 %v488, %v488
      %v2242 = vlaneseq
      %v2243 = vshrl.u32 %v2242, 7
      %v2244 = vsub.s32 0, %v2243
      %v2245 = vrot.slane %v2241, %v2244
      %v2263 = vunpack.c.l.b16 %v715
      %v2264 = vunpack.c.l.b16 %v716
      %v2265 = vunpack.c.l.b16 %v717
      %v2266 = vunpack.c.l.b16 %v718
      %v2267 = vunpack.c.l.b16 %v719
      %v2268 = vunpack.c.l.b16 %v720
      %v2269 = vunpack.c.l.b16 %v721
      %v2270 = vunpack.c.l.b16 %v722
      %v2271 = vunpack.c.l.b16 %v723
      %v2272 = vunpack.c.l.b16 %v724
      %v2273 = vunpack.c.l.b16 %v725
      %v2274 = vunpack.c.l.b16 %v726
      %v2275 = vunpack.c.l.b16 %v727
      %v2276 = vunpack.c.l.b16 %v728
      %v2277 = vunpack.c.l.b16 %v729
      %v2278 = vunpack.c.l.b16 %v730
      %v2279 = vpack.c.b16 %v2264, %v2263
      %v2280 = vpack.c.b16 %v2266, %v2265
      %v2281 = vpack.c.b16 %v2268, %v2267
      %v2282 = vpack.c.b16 %v2270, %v2269
      %v2283 = vpack.c.b16 %v2272, %v2271
      %v2284 = vpack.c.b16 %v2274, %v2273
      %v2285 = vpack.c.b16 %v2276, %v2275
      %v2286 = vpack.c.b16 %v2278, %v2277
      %2295 = vmatprep.subr.bf16.mxu0 0
      %2296 = vmatpush1.bf16.msra.mxu0 %v2279
      %2297 = vmatprep.subr.bf16.mxu0 0
      %2298 = vmatpush1.bf16.msra.mxu0 %v2280
      %2299 = vmatprep.subr.bf16.mxu0 0
      %2300 = vmatpush1.bf16.msra.mxu0 %v2281
      %2301 = vmatprep.subr.bf16.mxu0 0
      %2302 = vmatpush1.bf16.msra.mxu0 %v2282
      %2303 = vmatprep.subr.bf16.mxu0 0
      %2304 = vmatpush1.bf16.msra.mxu0 %v2283
      %2305 = vmatprep.subr.bf16.mxu0 0
      %2306 = vmatpush1.bf16.msra.mxu0 %v2284
      %2307 = vmatprep.subr.bf16.mxu0 0
      %2308 = vmatpush1.bf16.msra.mxu0 %v2285
      %2309 = vmatprep.subr.bf16.mxu0 0
      %2310 = vmatpush1.bf16.msra.mxu0 %v2286
      %2311 = vmatprep.subr.bf16.mxu0 0
      %2312 = vmatpush1.bf16.msra.mxu0 0
      %2313 = vmatprep.subr.bf16.mxu0 0
      %2314 = vmatpush1.bf16.msra.mxu0 0
      %2315 = vmatprep.subr.bf16.mxu0 0
      %2316 = vmatpush1.bf16.msra.mxu0 0
      %2317 = vmatprep.subr.bf16.mxu0 0
      %2318 = vmatpush1.bf16.msra.mxu0 0
      %2319 = vmatprep.subr.bf16.mxu0 0
      %2320 = vmatpush1.bf16.msra.mxu0 0
      %2321 = vmatprep.subr.bf16.mxu0 0
      %2322 = vmatpush1.bf16.msra.mxu0 0
      %2323 = vmatprep.subr.bf16.mxu0 0
      %2324 = vmatpush1.bf16.msra.mxu0 0
      %2325 = vmatprep.subr.bf16.mxu0 0
      %2326 = vmatpush1.bf16.msra.mxu0 0
      %2327 = vmatprep.mubr.bf16.mxu0 0
      %2328 = vmatmul.mubr.bf16.gmra.mrb[0].mxu0 %v2245
      %v2329 = vpop.f32.mrb[0].mxu0
      %v2330 = vadd.f32 0.0, %v2329
      %v2331 = vpop.f32.mrb[0].mxu0
      %v2332 = vpop.f32.mrb[0].mxu0
      %v2333 = vpop.f32.mrb[0].mxu0
      %2334 = vdwg.mxu0
      %v2335 = vpack.i.b16 %v489, %v489
      %v2336 = vlaneseq
      %v2337 = vshrl.u32 %v2336, 7
      %v2338 = vsub.s32 0, %v2337
      %v2339 = vrot.slane %v2335, %v2338
      %v2357 = vunpack.c.l.b16 %v731
      %v2358 = vunpack.c.l.b16 %v732
      %v2359 = vunpack.c.l.b16 %v733
      %v2360 = vunpack.c.l.b16 %v734
      %v2361 = vunpack.c.l.b16 %v735
      %v2362 = vunpack.c.l.b16 %v736
      %v2363 = vunpack.c.l.b16 %v737
      %v2364 = vunpack.c.l.b16 %v738
      %v2365 = vunpack.c.l.b16 %v739
      %v2366 = vunpack.c.l.b16 %v740
      %v2367 = vunpack.c.l.b16 %v741
      %v2368 = vunpack.c.l.b16 %v742
      %v2369 = vunpack.c.l.b16 %v743
      %v2370 = vunpack.c.l.b16 %v744
      %v2371 = vunpack.c.l.b16 %v745
      %v2372 = vunpack.c.l.b16 %v746
      %v2373 = vpack.c.b16 %v2358, %v2357
      %v2374 = vpack.c.b16 %v2360, %v2359
      %v2375 = vpack.c.b16 %v2362, %v2361
      %v2376 = vpack.c.b16 %v2364, %v2363
      %v2377 = vpack.c.b16 %v2366, %v2365
      %v2378 = vpack.c.b16 %v2368, %v2367
      %v2379 = vpack.c.b16 %v2370, %v2369
      %v2380 = vpack.c.b16 %v2372, %v2371
      %2389 = vmatprep.subr.bf16.mxu0 0
      %2390 = vmatpush1.bf16.msra.mxu0 %v2373
      %2391 = vmatprep.subr.bf16.mxu0 0
      %2392 = vmatpush1.bf16.msra.mxu0 %v2374
      %2393 = vmatprep.subr.bf16.mxu0 0
      %2394 = vmatpush1.bf16.msra.mxu0 %v2375
      %2395 = vmatprep.subr.bf16.mxu0 0
      %2396 = vmatpush1.bf16.msra.mxu0 %v2376
      %2397 = vmatprep.subr.bf16.mxu0 0
      %2398 = vmatpush1.bf16.msra.mxu0 %v2377
      %2399 = vmatprep.subr.bf16.mxu0 0
      %2400 = vmatpush1.bf16.msra.mxu0 %v2378
      %2401 = vmatprep.subr.bf16.mxu0 0
      %2402 = vmatpush1.bf16.msra.mxu0 %v2379
      %2403 = vmatprep.subr.bf16.mxu0 0
      %2404 = vmatpush1.bf16.msra.mxu0 %v2380
      %2405 = vmatprep.subr.bf16.mxu0 0
      %2406 = vmatpush1.bf16.msra.mxu0 0
      %2407 = vmatprep.subr.bf16.mxu0 0
      %2408 = vmatpush1.bf16.msra.mxu0 0
      %2409 = vmatprep.subr.bf16.mxu0 0
      %2410 = vmatpush1.bf16.msra.mxu0 0
      %2411 = vmatprep.subr.bf16.mxu0 0
      %2412 = vmatpush1.bf16.msra.mxu0 0
      %2413 = vmatprep.subr.bf16.mxu0 0
      %2414 = vmatpush1.bf16.msra.mxu0 0
      %2415 = vmatprep.subr.bf16.mxu0 0
      %2416 = vmatpush1.bf16.msra.mxu0 0
      %2417 = vmatprep.subr.bf16.mxu0 0
      %2418 = vmatpush1.bf16.msra.mxu0 0
      %2419 = vmatprep.subr.bf16.mxu0 0
      %2420 = vmatpush1.bf16.msra.mxu0 0
      %2421 = vmatprep.mubr.bf16.mxu0 0
      %2422 = vmatmul.mubr.bf16.gmra.mrb[0].mxu0 %v2339
      %v2423 = vpop.f32.mrb[0].mxu0
      %v2424 = vadd.f32 0.0, %v2423
      %v2425 = vpop.f32.mrb[0].mxu0
      %v2426 = vpop.f32.mrb[0].mxu0
      %v2427 = vpop.f32.mrb[0].mxu0
      %2428 = vdwg.mxu0
      %v2429 = vpack.i.b16 %v490, %v490
      %v2430 = vlaneseq
      %v2431 = vshrl.u32 %v2430, 7
      %v2432 = vsub.s32 0, %v2431
      %v2433 = vrot.slane %v2429, %v2432
      %v2451 = vunpack.c.l.b16 %v747
      %v2452 = vunpack.c.l.b16 %v748
      %v2453 = vunpack.c.l.b16 %v749
      %v2454 = vunpack.c.l.b16 %v750
      %v2455 = vunpack.c.l.b16 %v751
      %v2456 = vunpack.c.l.b16 %v752
      %v2457 = vunpack.c.l.b16 %v753
      %v2458 = vunpack.c.l.b16 %v754
      %v2459 = vunpack.c.l.b16 %v755
      %v2460 = vunpack.c.l.b16 %v756
      %v2461 = vunpack.c.l.b16 %v757
      %v2462 = vunpack.c.l.b16 %v758
      %v2463 = vunpack.c.l.b16 %v759
      %v2464 = vunpack.c.l.b16 %v760
      %v2465 = vunpack.c.l.b16 %v761
      %v2466 = vunpack.c.l.b16 %v762
      %v2467 = vpack.c.b16 %v2452, %v2451
      %v2468 = vpack.c.b16 %v2454, %v2453
      %v2469 = vpack.c.b16 %v2456, %v2455
      %v2470 = vpack.c.b16 %v2458, %v2457
      %v2471 = vpack.c.b16 %v2460, %v2459
      %v2472 = vpack.c.b16 %v2462, %v2461
      %v2473 = vpack.c.b16 %v2464, %v2463
      %v2474 = vpack.c.b16 %v2466, %v2465
      %2483 = vmatprep.subr.bf16.mxu0 0
      %2484 = vmatpush1.bf16.msra.mxu0 %v2467
      %2485 = vmatprep.subr.bf16.mxu0 0
      %2486 = vmatpush1.bf16.msra.mxu0 %v2468
      %2487 = vmatprep.subr.bf16.mxu0 0
      %2488 = vmatpush1.bf16.msra.mxu0 %v2469
      %2489 = vmatprep.subr.bf16.mxu0 0
      %2490 = vmatpush1.bf16.msra.mxu0 %v2470
      %2491 = vmatprep.subr.bf16.mxu0 0
      %2492 = vmatpush1.bf16.msra.mxu0 %v2471
      %2493 = vmatprep.subr.bf16.mxu0 0
      %2494 = vmatpush1.bf16.msra.mxu0 %v2472
      %2495 = vmatprep.subr.bf16.mxu0 0
      %2496 = vmatpush1.bf16.msra.mxu0 %v2473
      %2497 = vmatprep.subr.bf16.mxu0 0
      %2498 = vmatpush1.bf16.msra.mxu0 %v2474
      %2499 = vmatprep.subr.bf16.mxu0 0
      %2500 = vmatpush1.bf16.msra.mxu0 0
      %2501 = vmatprep.subr.bf16.mxu0 0
      %2502 = vmatpush1.bf16.msra.mxu0 0
      %2503 = vmatprep.subr.bf16.mxu0 0
      %2504 = vmatpush1.bf16.msra.mxu0 0
      %2505 = vmatprep.subr.bf16.mxu0 0
      %2506 = vmatpush1.bf16.msra.mxu0 0
      %2507 = vmatprep.subr.bf16.mxu0 0
      %2508 = vmatpush1.bf16.msra.mxu0 0
      %2509 = vmatprep.subr.bf16.mxu0 0
      %2510 = vmatpush1.bf16.msra.mxu0 0
      %2511 = vmatprep.subr.bf16.mxu0 0
      %2512 = vmatpush1.bf16.msra.mxu0 0
      %2513 = vmatprep.subr.bf16.mxu0 0
      %2514 = vmatpush1.bf16.msra.mxu0 0
      %2515 = vmatprep.mubr.bf16.mxu0 0
      %2516 = vmatmul.mubr.bf16.gmra.mrb[0].mxu0 %v2433
      %v2517 = vpop.f32.mrb[0].mxu0
      %v2518 = vadd.f32 0.0, %v2517
      %v2519 = vpop.f32.mrb[0].mxu0
      %v2520 = vpop.f32.mrb[0].mxu0
      %v2521 = vpop.f32.mrb[0].mxu0
      %2522 = vdwg.mxu0
      %v2523 = vpack.i.b16 %v491, %v491
      %v2524 = vlaneseq
      %v2525 = vshrl.u32 %v2524, 7
      %v2526 = vsub.s32 0, %v2525
      %v2527 = vrot.slane %v2523, %v2526
      %v2545 = vunpack.c.l.b16 %v763
      %v2546 = vunpack.c.l.b16 %v764
      %v2547 = vunpack.c.l.b16 %v765
      %v2548 = vunpack.c.l.b16 %v766
      %v2549 = vunpack.c.l.b16 %v767
      %v2550 = vunpack.c.l.b16 %v768
      %v2551 = vunpack.c.l.b16 %v769
      %v2552 = vunpack.c.l.b16 %v770
      %v2553 = vunpack.c.l.b16 %v771
      %v2554 = vunpack.c.l.b16 %v772
      %v2555 = vunpack.c.l.b16 %v773
      %v2556 = vunpack.c.l.b16 %v774
      %v2557 = vunpack.c.l.b16 %v775
      %v2558 = vunpack.c.l.b16 %v776
      %v2559 = vunpack.c.l.b16 %v777
      %v2560 = vunpack.c.l.b16 %v778
      %v2561 = vpack.c.b16 %v2546, %v2545
      %v2562 = vpack.c.b16 %v2548, %v2547
      %v2563 = vpack.c.b16 %v2550, %v2549
      %v2564 = vpack.c.b16 %v2552, %v2551
      %v2565 = vpack.c.b16 %v2554, %v2553
      %v2566 = vpack.c.b16 %v2556, %v2555
      %v2567 = vpack.c.b16 %v2558, %v2557
      %v2568 = vpack.c.b16 %v2560, %v2559
      %2577 = vmatprep.subr.bf16.mxu0 0
      %2578 = vmatpush1.bf16.msra.mxu0 %v2561
      %2579 = vmatprep.subr.bf16.mxu0 0
      %2580 = vmatpush1.bf16.msra.mxu0 %v2562
      %2581 = vmatprep.subr.bf16.mxu0 0
      %2582 = vmatpush1.bf16.msra.mxu0 %v2563
      %2583 = vmatprep.subr.bf16.mxu0 0
      %2584 = vmatpush1.bf16.msra.mxu0 %v2564
      %2585 = vmatprep.subr.bf16.mxu0 0
      %2586 = vmatpush1.bf16.msra.mxu0 %v2565
      %2587 = vmatprep.subr.bf16.mxu0 0
      %2588 = vmatpush1.bf16.msra.mxu0 %v2566
      %2589 = vmatprep.subr.bf16.mxu0 0
      %2590 = vmatpush1.bf16.msra.mxu0 %v2567
      %2591 = vmatprep.subr.bf16.mxu0 0
      %2592 = vmatpush1.bf16.msra.mxu0 %v2568
      %2593 = vmatprep.subr.bf16.mxu0 0
      %2594 = vmatpush1.bf16.msra.mxu0 0
      %2595 = vmatprep.subr.bf16.mxu0 0
      %2596 = vmatpush1.bf16.msra.mxu0 0
      %2597 = vmatprep.subr.bf16.mxu0 0
      %2598 = vmatpush1.bf16.msra.mxu0 0
      %2599 = vmatprep.subr.bf16.mxu0 0
      %2600 = vmatpush1.bf16.msra.mxu0 0
      %2601 = vmatprep.subr.bf16.mxu0 0
      %2602 = vmatpush1.bf16.msra.mxu0 0
      %2603 = vmatprep.subr.bf16.mxu0 0
      %2604 = vmatpush1.bf16.msra.mxu0 0
      %2605 = vmatprep.subr.bf16.mxu0 0
      %2606 = vmatpush1.bf16.msra.mxu0 0
      %2607 = vmatprep.subr.bf16.mxu0 0
      %2608 = vmatpush1.bf16.msra.mxu0 0
      %2609 = vmatprep.mubr.bf16.mxu0 0
      %2610 = vmatmul.mubr.bf16.gmra.mrb[0].mxu0 %v2527
      %v2611 = vpop.f32.mrb[0].mxu0
      %v2612 = vadd.f32 0.0, %v2611
      %v2613 = vpop.f32.mrb[0].mxu0
      %v2614 = vpop.f32.mrb[0].mxu0
      %v2615 = vpop.f32.mrb[0].mxu0
      %2616 = vdwg.mxu0
      %v2617 = vpack.i.b16 %v492, %v492
      %v2618 = vlaneseq
      %v2619 = vshrl.u32 %v2618, 7
      %v2620 = vsub.s32 0, %v2619
      %v2621 = vrot.slane %v2617, %v2620
      %v2639 = vunpack.c.l.b16 %v779
      %v2640 = vunpack.c.l.b16 %v780
      %v2641 = vunpack.c.l.b16 %v781
      %v2642 = vunpack.c.l.b16 %v782
      %v2643 = vunpack.c.l.b16 %v783
      %v2644 = vunpack.c.l.b16 %v784
      %v2645 = vunpack.c.l.b16 %v785
      %v2646 = vunpack.c.l.b16 %v786
      %v2647 = vunpack.c.l.b16 %v787
      %v2648 = vunpack.c.l.b16 %v788
      %v2649 = vunpack.c.l.b16 %v789
      %v2650 = vunpack.c.l.b16 %v790
      %v2651 = vunpack.c.l.b16 %v791
      %v2652 = vunpack.c.l.b16 %v792
      %v2653 = vunpack.c.l.b16 %v793
      %v2654 = vunpack.c.l.b16 %v794
      %v2655 = vpack.c.b16 %v2640, %v2639
      %v2656 = vpack.c.b16 %v2642, %v2641
      %v2657 = vpack.c.b16 %v2644, %v2643
      %v2658 = vpack.c.b16 %v2646, %v2645
      %v2659 = vpack.c.b16 %v2648, %v2647
      %v2660 = vpack.c.b16 %v2650, %v2649
      %v2661 = vpack.c.b16 %v2652, %v2651
      %v2662 = vpack.c.b16 %v2654, %v2653
      %2671 = vmatprep.subr.bf16.mxu0 0
      %2672 = vmatpush1.bf16.msra.mxu0 %v2655
      %2673 = vmatprep.subr.bf16.mxu0 0
      %2674 = vmatpush1.bf16.msra.mxu0 %v2656
      %2675 = vmatprep.subr.bf16.mxu0 0
      %2676 = vmatpush1.bf16.msra.mxu0 %v2657
      %2677 = vmatprep.subr.bf16.mxu0 0
      %2678 = vmatpush1.bf16.msra.mxu0 %v2658
      %2679 = vmatprep.subr.bf16.mxu0 0
      %2680 = vmatpush1.bf16.msra.mxu0 %v2659
      %2681 = vmatprep.subr.bf16.mxu0 0
      %2682 = vmatpush1.bf16.msra.mxu0 %v2660
      %2683 = vmatprep.subr.bf16.mxu0 0
      %2684 = vmatpush1.bf16.msra.mxu0 %v2661
      %2685 = vmatprep.subr.bf16.mxu0 0
      %2686 = vmatpush1.bf16.msra.mxu0 %v2662
      %2687 = vmatprep.subr.bf16.mxu0 0
      %2688 = vmatpush1.bf16.msra.mxu0 0
      %2689 = vmatprep.subr.bf16.mxu0 0
      %2690 = vmatpush1.bf16.msra.mxu0 0
      %2691 = vmatprep.subr.bf16.mxu0 0
      %2692 = vmatpush1.bf16.msra.mxu0 0
      %2693 = vmatprep.subr.bf16.mxu0 0
      %2694 = vmatpush1.bf16.msra.mxu0 0
      %2695 = vmatprep.subr.bf16.mxu0 0
      %2696 = vmatpush1.bf16.msra.mxu0 0
      %2697 = vmatprep.subr.bf16.mxu0 0
      %2698 = vmatpush1.bf16.msra.mxu0 0
      %2699 = vmatprep.subr.bf16.mxu0 0
      %2700 = vmatpush1.bf16.msra.mxu0 0
      %2701 = vmatprep.subr.bf16.mxu0 0
      %2702 = vmatpush1.bf16.msra.mxu0 0
      %2703 = vmatprep.mubr.bf16.mxu0 0
      %2704 = vmatmul.mubr.bf16.gmra.mrb[0].mxu0 %v2621
      %v2705 = vpop.f32.mrb[0].mxu0
      %v2706 = vadd.f32 0.0, %v2705
      %v2707 = vpop.f32.mrb[0].mxu0
      %v2708 = vpop.f32.mrb[0].mxu0
      %v2709 = vpop.f32.mrb[0].mxu0
      %2710 = vdwg.mxu0
      %v2711 = vpack.i.b16 %v493, %v493
      %v2712 = vlaneseq
      %v2713 = vshrl.u32 %v2712, 7
      %v2714 = vsub.s32 0, %v2713
      %v2715 = vrot.slane %v2711, %v2714
      %v2733 = vunpack.c.l.b16 %v795
      %v2734 = vunpack.c.l.b16 %v796
      %v2735 = vunpack.c.l.b16 %v797
      %v2736 = vunpack.c.l.b16 %v798
      %v2737 = vunpack.c.l.b16 %v799
      %v2738 = vunpack.c.l.b16 %v800
      %v2739 = vunpack.c.l.b16 %v801
      %v2740 = vunpack.c.l.b16 %v802
      %v2741 = vunpack.c.l.b16 %v803
      %v2742 = vunpack.c.l.b16 %v804
      %v2743 = vunpack.c.l.b16 %v805
      %v2744 = vunpack.c.l.b16 %v806
      %v2745 = vunpack.c.l.b16 %v807
      %v2746 = vunpack.c.l.b16 %v808
      %v2747 = vunpack.c.l.b16 %v809
      %v2748 = vunpack.c.l.b16 %v810
      %v2749 = vpack.c.b16 %v2734, %v2733
      %v2750 = vpack.c.b16 %v2736, %v2735
      %v2751 = vpack.c.b16 %v2738, %v2737
      %v2752 = vpack.c.b16 %v2740, %v2739
      %v2753 = vpack.c.b16 %v2742, %v2741
      %v2754 = vpack.c.b16 %v2744, %v2743
      %v2755 = vpack.c.b16 %v2746, %v2745
      %v2756 = vpack.c.b16 %v2748, %v2747
      %2765 = vmatprep.subr.bf16.mxu0 0
      %2766 = vmatpush1.bf16.msra.mxu0 %v2749
      %2767 = vmatprep.subr.bf16.mxu0 0
      %2768 = vmatpush1.bf16.msra.mxu0 %v2750
      %2769 = vmatprep.subr.bf16.mxu0 0
      %2770 = vmatpush1.bf16.msra.mxu0 %v2751
      %2771 = vmatprep.subr.bf16.mxu0 0
      %2772 = vmatpush1.bf16.msra.mxu0 %v2752
      %2773 = vmatprep.subr.bf16.mxu0 0
      %2774 = vmatpush1.bf16.msra.mxu0 %v2753
      %2775 = vmatprep.subr.bf16.mxu0 0
      %2776 = vmatpush1.bf16.msra.mxu0 %v2754
      %2777 = vmatprep.subr.bf16.mxu0 0
      %2778 = vmatpush1.bf16.msra.mxu0 %v2755
      %2779 = vmatprep.subr.bf16.mxu0 0
      %2780 = vmatpush1.bf16.msra.mxu0 %v2756
      %2781 = vmatprep.subr.bf16.mxu0 0
      %2782 = vmatpush1.bf16.msra.mxu0 0
      %2783 = vmatprep.subr.bf16.mxu0 0
      %2784 = vmatpush1.bf16.msra.mxu0 0
      %2785 = vmatprep.subr.bf16.mxu0 0
      %2786 = vmatpush1.bf16.msra.mxu0 0
      %2787 = vmatprep.subr.bf16.mxu0 0
      %2788 = vmatpush1.bf16.msra.mxu0 0
      %2789 = vmatprep.subr.bf16.mxu0 0
      %2790 = vmatpush1.bf16.msra.mxu0 0
      %2791 = vmatprep.subr.bf16.mxu0 0
      %2792 = vmatpush1.bf16.msra.mxu0 0
      %2793 = vmatprep.subr.bf16.mxu0 0
      %2794 = vmatpush1.bf16.msra.mxu0 0
      %2795 = vmatprep.subr.bf16.mxu0 0
      %2796 = vmatpush1.bf16.msra.mxu0 0
      %2797 = vmatprep.mubr.bf16.mxu0 0
      %2798 = vmatmul.mubr.bf16.gmra.mrb[0].mxu0 %v2715
      %v2799 = vpop.f32.mrb[0].mxu0
      %v2800 = vadd.f32 0.0, %v2799
      %v2801 = vpop.f32.mrb[0].mxu0
      %v2802 = vpop.f32.mrb[0].mxu0
      %v2803 = vpop.f32.mrb[0].mxu0
      %2804 = vdwg.mxu0
      %v2805 = vpack.i.b16 %v494, %v494
      %v2806 = vlaneseq
      %v2807 = vshrl.u32 %v2806, 7
      %v2808 = vsub.s32 0, %v2807
      %v2809 = vrot.slane %v2805, %v2808
      %v2827 = vunpack.c.l.b16 %v811
      %v2828 = vunpack.c.l.b16 %v812
      %v2829 = vunpack.c.l.b16 %v813
      %v2830 = vunpack.c.l.b16 %v814
      %v2831 = vunpack.c.l.b16 %v815
      %v2832 = vunpack.c.l.b16 %v816
      %v2833 = vunpack.c.l.b16 %v817
      %v2834 = vunpack.c.l.b16 %v818
      %v2835 = vunpack.c.l.b16 %v819
      %v2836 = vunpack.c.l.b16 %v820
      %v2837 = vunpack.c.l.b16 %v821
      %v2838 = vunpack.c.l.b16 %v822
      %v2839 = vunpack.c.l.b16 %v823
      %v2840 = vunpack.c.l.b16 %v824
      %v2841 = vunpack.c.l.b16 %v825
      %v2842 = vunpack.c.l.b16 %v826
      %v2843 = vpack.c.b16 %v2828, %v2827
      %v2844 = vpack.c.b16 %v2830, %v2829
      %v2845 = vpack.c.b16 %v2832, %v2831
      %v2846 = vpack.c.b16 %v2834, %v2833
      %v2847 = vpack.c.b16 %v2836, %v2835
      %v2848 = vpack.c.b16 %v2838, %v2837
      %v2849 = vpack.c.b16 %v2840, %v2839
      %v2850 = vpack.c.b16 %v2842, %v2841
      %2859 = vmatprep.subr.bf16.mxu0 0
      %2860 = vmatpush1.bf16.msra.mxu0 %v2843
      %2861 = vmatprep.subr.bf16.mxu0 0
      %2862 = vmatpush1.bf16.msra.mxu0 %v2844
      %2863 = vmatprep.subr.bf16.mxu0 0
      %2864 = vmatpush1.bf16.msra.mxu0 %v2845
      %2865 = vmatprep.subr.bf16.mxu0 0
      %2866 = vmatpush1.bf16.msra.mxu0 %v2846
      %2867 = vmatprep.subr.bf16.mxu0 0
      %2868 = vmatpush1.bf16.msra.mxu0 %v2847
      %2869 = vmatprep.subr.bf16.mxu0 0
      %2870 = vmatpush1.bf16.msra.mxu0 %v2848
      %2871 = vmatprep.subr.bf16.mxu0 0
      %2872 = vmatpush1.bf16.msra.mxu0 %v2849
      %2873 = vmatprep.subr.bf16.mxu0 0
      %2874 = vmatpush1.bf16.msra.mxu0 %v2850
      %2875 = vmatprep.subr.bf16.mxu0 0
      %2876 = vmatpush1.bf16.msra.mxu0 0
      %2877 = vmatprep.subr.bf16.mxu0 0
      %2878 = vmatpush1.bf16.msra.mxu0 0
      %2879 = vmatprep.subr.bf16.mxu0 0
      %2880 = vmatpush1.bf16.msra.mxu0 0
      %2881 = vmatprep.subr.bf16.mxu0 0
      %2882 = vmatpush1.bf16.msra.mxu0 0
      %2883 = vmatprep.subr.bf16.mxu0 0
      %2884 = vmatpush1.bf16.msra.mxu0 0
      %2885 = vmatprep.subr.bf16.mxu0 0
      %2886 = vmatpush1.bf16.msra.mxu0 0
      %2887 = vmatprep.subr.bf16.mxu0 0
      %2888 = vmatpush1.bf16.msra.mxu0 0
      %2889 = vmatprep.subr.bf16.mxu0 0
      %2890 = vmatpush1.bf16.msra.mxu0 0
      %2891 = vmatprep.mubr.bf16.mxu0 0
      %2892 = vmatmul.mubr.bf16.gmra.mrb[0].mxu0 %v2809
      %v2893 = vpop.f32.mrb[0].mxu0
      %v2894 = vadd.f32 0.0, %v2893
      %v2895 = vpop.f32.mrb[0].mxu0
      %v2896 = vpop.f32.mrb[0].mxu0
      %v2897 = vpop.f32.mrb[0].mxu0
      %2898 = vdwg.mxu0
      %v2899 = vpack.i.b16 %v495, %v495
      %v2900 = vlaneseq
      %v2901 = vshrl.u32 %v2900, 7
      %v2902 = vsub.s32 0, %v2901
      %v2903 = vrot.slane %v2899, %v2902
      %v2921 = vunpack.c.l.b16 %v827
      %v2922 = vunpack.c.l.b16 %v828
      %v2923 = vunpack.c.l.b16 %v829
      %v2924 = vunpack.c.l.b16 %v830
      %v2925 = vunpack.c.l.b16 %v831
      %v2926 = vunpack.c.l.b16 %v832
      %v2927 = vunpack.c.l.b16 %v833
      %v2928 = vunpack.c.l.b16 %v834
      %v2929 = vunpack.c.l.b16 %v835
      %v2930 = vunpack.c.l.b16 %v836
      %v2931 = vunpack.c.l.b16 %v837
      %v2932 = vunpack.c.l.b16 %v838
      %v2933 = vunpack.c.l.b16 %v839
      %v2934 = vunpack.c.l.b16 %v840
      %v2935 = vunpack.c.l.b16 %v841
      %v2936 = vunpack.c.l.b16 %v842
      %v2937 = vpack.c.b16 %v2922, %v2921
      %v2938 = vpack.c.b16 %v2924, %v2923
      %v2939 = vpack.c.b16 %v2926, %v2925
      %v2940 = vpack.c.b16 %v2928, %v2927
      %v2941 = vpack.c.b16 %v2930, %v2929
      %v2942 = vpack.c.b16 %v2932, %v2931
      %v2943 = vpack.c.b16 %v2934, %v2933
      %v2944 = vpack.c.b16 %v2936, %v2935
      %2953 = vmatprep.subr.bf16.mxu0 0
      %2954 = vmatpush1.bf16.msra.mxu0 %v2937
      %2955 = vmatprep.subr.bf16.mxu0 0
      %2956 = vmatpush1.bf16.msra.mxu0 %v2938
      %2957 = vmatprep.subr.bf16.mxu0 0
      %2958 = vmatpush1.bf16.msra.mxu0 %v2939
      %2959 = vmatprep.subr.bf16.mxu0 0
      %2960 = vmatpush1.bf16.msra.mxu0 %v2940
      %2961 = vmatprep.subr.bf16.mxu0 0
      %2962 = vmatpush1.bf16.msra.mxu0 %v2941
      %2963 = vmatprep.subr.bf16.mxu0 0
      %2964 = vmatpush1.bf16.msra.mxu0 %v2942
      %2965 = vmatprep.subr.bf16.mxu0 0
      %2966 = vmatpush1.bf16.msra.mxu0 %v2943
      %2967 = vmatprep.subr.bf16.mxu0 0
      %2968 = vmatpush1.bf16.msra.mxu0 %v2944
      %2969 = vmatprep.subr.bf16.mxu0 0
      %2970 = vmatpush1.bf16.msra.mxu0 0
      %2971 = vmatprep.subr.bf16.mxu0 0
      %2972 = vmatpush1.bf16.msra.mxu0 0
      %2973 = vmatprep.subr.bf16.mxu0 0
      %2974 = vmatpush1.bf16.msra.mxu0 0
      %2975 = vmatprep.subr.bf16.mxu0 0
      %2976 = vmatpush1.bf16.msra.mxu0 0
      %2977 = vmatprep.subr.bf16.mxu0 0
      %2978 = vmatpush1.bf16.msra.mxu0 0
      %2979 = vmatprep.subr.bf16.mxu0 0
      %2980 = vmatpush1.bf16.msra.mxu0 0
      %2981 = vmatprep.subr.bf16.mxu0 0
      %2982 = vmatpush1.bf16.msra.mxu0 0
      %2983 = vmatprep.subr.bf16.mxu0 0
      %2984 = vmatpush1.bf16.msra.mxu0 0
      %2985 = vmatprep.mubr.bf16.mxu0 0
      %2986 = vmatmul.mubr.bf16.gmra.mrb[0].mxu0 %v2903
      %v2987 = vpop.f32.mrb[0].mxu0
      %v2988 = vadd.f32 0.0, %v2987
      %v2989 = vpop.f32.mrb[0].mxu0
      %v2990 = vpop.f32.mrb[0].mxu0
      %v2991 = vpop.f32.mrb[0].mxu0
      %2992 = vdwg.mxu0
      %v2993 = vpack.i.b16 %v496, %v496
      %v2994 = vlaneseq
      %v2995 = vshrl.u32 %v2994, 7
      %v2996 = vsub.s32 0, %v2995
      %v2997 = vrot.slane %v2993, %v2996
      %v3015 = vunpack.c.l.b16 %v843
      %v3016 = vunpack.c.l.b16 %v844
      %v3017 = vunpack.c.l.b16 %v845
      %v3018 = vunpack.c.l.b16 %v846
      %v3019 = vunpack.c.l.b16 %v847
      %v3020 = vunpack.c.l.b16 %v848
      %v3021 = vunpack.c.l.b16 %v849
      %v3022 = vunpack.c.l.b16 %v850
      %v3023 = vunpack.c.l.b16 %v851
      %v3024 = vunpack.c.l.b16 %v852
      %v3025 = vunpack.c.l.b16 %v853
      %v3026 = vunpack.c.l.b16 %v854
      %v3027 = vunpack.c.l.b16 %v855
      %v3028 = vunpack.c.l.b16 %v856
      %v3029 = vunpack.c.l.b16 %v857
      %v3030 = vunpack.c.l.b16 %v858
      %v3031 = vpack.c.b16 %v3016, %v3015
      %v3032 = vpack.c.b16 %v3018, %v3017
      %v3033 = vpack.c.b16 %v3020, %v3019
      %v3034 = vpack.c.b16 %v3022, %v3021
      %v3035 = vpack.c.b16 %v3024, %v3023
      %v3036 = vpack.c.b16 %v3026, %v3025
      %v3037 = vpack.c.b16 %v3028, %v3027
      %v3038 = vpack.c.b16 %v3030, %v3029
      %3047 = vmatprep.subr.bf16.mxu0 0
      %3048 = vmatpush1.bf16.msra.mxu0 %v3031
      %3049 = vmatprep.subr.bf16.mxu0 0
      %3050 = vmatpush1.bf16.msra.mxu0 %v3032
      %3051 = vmatprep.subr.bf16.mxu0 0
      %3052 = vmatpush1.bf16.msra.mxu0 %v3033
      %3053 = vmatprep.subr.bf16.mxu0 0
      %3054 = vmatpush1.bf16.msra.mxu0 %v3034
      %3055 = vmatprep.subr.bf16.mxu0 0
      %3056 = vmatpush1.bf16.msra.mxu0 %v3035
      %3057 = vmatprep.subr.bf16.mxu0 0
      %3058 = vmatpush1.bf16.msra.mxu0 %v3036
      %3059 = vmatprep.subr.bf16.mxu0 0
      %3060 = vmatpush1.bf16.msra.mxu0 %v3037
      %3061 = vmatprep.subr.bf16.mxu0 0
      %3062 = vmatpush1.bf16.msra.mxu0 %v3038
      %3063 = vmatprep.subr.bf16.mxu0 0
      %3064 = vmatpush1.bf16.msra.mxu0 0
      %3065 = vmatprep.subr.bf16.mxu0 0
      %3066 = vmatpush1.bf16.msra.mxu0 0
      %3067 = vmatprep.subr.bf16.mxu0 0
      %3068 = vmatpush1.bf16.msra.mxu0 0
      %3069 = vmatprep.subr.bf16.mxu0 0
      %3070 = vmatpush1.bf16.msra.mxu0 0
      %3071 = vmatprep.subr.bf16.mxu0 0
      %3072 = vmatpush1.bf16.msra.mxu0 0
      %3073 = vmatprep.subr.bf16.mxu0 0
      %3074 = vmatpush1.bf16.msra.mxu0 0
      %3075 = vmatprep.subr.bf16.mxu0 0
      %3076 = vmatpush1.bf16.msra.mxu0 0
      %3077 = vmatprep.subr.bf16.mxu0 0
      %3078 = vmatpush1.bf16.msra.mxu0 0
      %3079 = vmatprep.mubr.bf16.mxu0 0
      %3080 = vmatmul.mubr.bf16.gmra.mrb[0].mxu0 %v2997
      %v3081 = vpop.f32.mrb[0].mxu0
      %v3082 = vadd.f32 0.0, %v3081
      %v3083 = vpop.f32.mrb[0].mxu0
      %v3084 = vpop.f32.mrb[0].mxu0
      %v3085 = vpop.f32.mrb[0].mxu0
      %3086 = vdwg.mxu0
      %v3087 = vpack.i.b16 %v497, %v497
      %v3088 = vlaneseq
      %v3089 = vshrl.u32 %v3088, 7
      %v3090 = vsub.s32 0, %v3089
      %v3091 = vrot.slane %v3087, %v3090
      %v3109 = vunpack.c.l.b16 %v859
      %v3110 = vunpack.c.l.b16 %v860
      %v3111 = vunpack.c.l.b16 %v861
      %v3112 = vunpack.c.l.b16 %v862
      %v3113 = vunpack.c.l.b16 %v863
      %v3114 = vunpack.c.l.b16 %v864
      %v3115 = vunpack.c.l.b16 %v865
      %v3116 = vunpack.c.l.b16 %v866
      %v3117 = vunpack.c.l.b16 %v867
      %v3118 = vunpack.c.l.b16 %v868
      %v3119 = vunpack.c.l.b16 %v869
      %v3120 = vunpack.c.l.b16 %v870
      %v3121 = vunpack.c.l.b16 %v871
      %v3122 = vunpack.c.l.b16 %v872
      %v3123 = vunpack.c.l.b16 %v873
      %v3124 = vunpack.c.l.b16 %v874
      %v3125 = vpack.c.b16 %v3110, %v3109
      %v3126 = vpack.c.b16 %v3112, %v3111
      %v3127 = vpack.c.b16 %v3114, %v3113
      %v3128 = vpack.c.b16 %v3116, %v3115
      %v3129 = vpack.c.b16 %v3118, %v3117
      %v3130 = vpack.c.b16 %v3120, %v3119
      %v3131 = vpack.c.b16 %v3122, %v3121
      %v3132 = vpack.c.b16 %v3124, %v3123
      %3141 = vmatprep.subr.bf16.mxu0 0
      %3142 = vmatpush1.bf16.msra.mxu0 %v3125
      %3143 = vmatprep.subr.bf16.mxu0 0
      %3144 = vmatpush1.bf16.msra.mxu0 %v3126
      %3145 = vmatprep.subr.bf16.mxu0 0
      %3146 = vmatpush1.bf16.msra.mxu0 %v3127
      %3147 = vmatprep.subr.bf16.mxu0 0
      %3148 = vmatpush1.bf16.msra.mxu0 %v3128
      %3149 = vmatprep.subr.bf16.mxu0 0
      %3150 = vmatpush1.bf16.msra.mxu0 %v3129
      %3151 = vmatprep.subr.bf16.mxu0 0
      %3152 = vmatpush1.bf16.msra.mxu0 %v3130
      %3153 = vmatprep.subr.bf16.mxu0 0
      %3154 = vmatpush1.bf16.msra.mxu0 %v3131
      %3155 = vmatprep.subr.bf16.mxu0 0
      %3156 = vmatpush1.bf16.msra.mxu0 %v3132
      %3157 = vmatprep.subr.bf16.mxu0 0
      %3158 = vmatpush1.bf16.msra.mxu0 0
      %3159 = vmatprep.subr.bf16.mxu0 0
      %3160 = vmatpush1.bf16.msra.mxu0 0
      %3161 = vmatprep.subr.bf16.mxu0 0
      %3162 = vmatpush1.bf16.msra.mxu0 0
      %3163 = vmatprep.subr.bf16.mxu0 0
      %3164 = vmatpush1.bf16.msra.mxu0 0
      %3165 = vmatprep.subr.bf16.mxu0 0
      %3166 = vmatpush1.bf16.msra.mxu0 0
      %3167 = vmatprep.subr.bf16.mxu0 0
      %3168 = vmatpush1.bf16.msra.mxu0 0
      %3169 = vmatprep.subr.bf16.mxu0 0
      %3170 = vmatpush1.bf16.msra.mxu0 0
      %3171 = vmatprep.subr.bf16.mxu0 0
      %3172 = vmatpush1.bf16.msra.mxu0 0
      %3173 = vmatprep.mubr.bf16.mxu0 0
      %3174 = vmatmul.mubr.bf16.gmra.mrb[0].mxu0 %v3091
      %v3175 = vpop.f32.mrb[0].mxu0
      %v3176 = vadd.f32 0.0, %v3175
      %v3177 = vpop.f32.mrb[0].mxu0
      %v3178 = vpop.f32.mrb[0].mxu0
      %v3179 = vpop.f32.mrb[0].mxu0
      %3180 = vdwg.mxu0
      %v3181 = vpack.i.b16 %v498, %v498
      %v3182 = vlaneseq
      %v3183 = vshrl.u32 %v3182, 7
      %v3184 = vsub.s32 0, %v3183
      %v3185 = vrot.slane %v3181, %v3184
      %v3203 = vunpack.c.l.b16 %v875
      %v3204 = vunpack.c.l.b16 %v876
      %v3205 = vunpack.c.l.b16 %v877
      %v3206 = vunpack.c.l.b16 %v878
      %v3207 = vunpack.c.l.b16 %v879
      %v3208 = vunpack.c.l.b16 %v880
      %v3209 = vunpack.c.l.b16 %v881
      %v3210 = vunpack.c.l.b16 %v882
      %v3211 = vunpack.c.l.b16 %v883
      %v3212 = vunpack.c.l.b16 %v884
      %v3213 = vunpack.c.l.b16 %v885
      %v3214 = vunpack.c.l.b16 %v886
      %v3215 = vunpack.c.l.b16 %v887
      %v3216 = vunpack.c.l.b16 %v888
      %v3217 = vunpack.c.l.b16 %v889
      %v3218 = vunpack.c.l.b16 %v890
      %v3219 = vpack.c.b16 %v3204, %v3203
      %v3220 = vpack.c.b16 %v3206, %v3205
      %v3221 = vpack.c.b16 %v3208, %v3207
      %v3222 = vpack.c.b16 %v3210, %v3209
      %v3223 = vpack.c.b16 %v3212, %v3211
      %v3224 = vpack.c.b16 %v3214, %v3213
      %v3225 = vpack.c.b16 %v3216, %v3215
      %v3226 = vpack.c.b16 %v3218, %v3217
      %3235 = vmatprep.subr.bf16.mxu0 0
      %3236 = vmatpush1.bf16.msra.mxu0 %v3219
      %3237 = vmatprep.subr.bf16.mxu0 0
      %3238 = vmatpush1.bf16.msra.mxu0 %v3220
      %3239 = vmatprep.subr.bf16.mxu0 0
      %3240 = vmatpush1.bf16.msra.mxu0 %v3221
      %3241 = vmatprep.subr.bf16.mxu0 0
      %3242 = vmatpush1.bf16.msra.mxu0 %v3222
      %3243 = vmatprep.subr.bf16.mxu0 0
      %3244 = vmatpush1.bf16.msra.mxu0 %v3223
      %3245 = vmatprep.subr.bf16.mxu0 0
      %3246 = vmatpush1.bf16.msra.mxu0 %v3224
      %3247 = vmatprep.subr.bf16.mxu0 0
      %3248 = vmatpush1.bf16.msra.mxu0 %v3225
      %3249 = vmatprep.subr.bf16.mxu0 0
      %3250 = vmatpush1.bf16.msra.mxu0 %v3226
      %3251 = vmatprep.subr.bf16.mxu0 0
      %3252 = vmatpush1.bf16.msra.mxu0 0
      %3253 = vmatprep.subr.bf16.mxu0 0
      %3254 = vmatpush1.bf16.msra.mxu0 0
      %3255 = vmatprep.subr.bf16.mxu0 0
      %3256 = vmatpush1.bf16.msra.mxu0 0
      %3257 = vmatprep.subr.bf16.mxu0 0
      %3258 = vmatpush1.bf16.msra.mxu0 0
      %3259 = vmatprep.subr.bf16.mxu0 0
      %3260 = vmatpush1.bf16.msra.mxu0 0
      %3261 = vmatprep.subr.bf16.mxu0 0
      %3262 = vmatpush1.bf16.msra.mxu0 0
      %3263 = vmatprep.subr.bf16.mxu0 0
      %3264 = vmatpush1.bf16.msra.mxu0 0
      %3265 = vmatprep.subr.bf16.mxu0 0
      %3266 = vmatpush1.bf16.msra.mxu0 0
      %3267 = vmatprep.mubr.bf16.mxu0 0
      %3268 = vmatmul.mubr.bf16.gmra.mrb[0].mxu0 %v3185
      %v3269 = vpop.f32.mrb[0].mxu0
      %v3270 = vadd.f32 0.0, %v3269
      %v3271 = vpop.f32.mrb[0].mxu0
      %v3272 = vpop.f32.mrb[0].mxu0
      %v3273 = vpop.f32.mrb[0].mxu0
      %3274 = vdwg.mxu0
      %v3275 = vpack.i.b16 %v499, %v499
      %v3276 = vlaneseq
      %v3277 = vshrl.u32 %v3276, 7
      %v3278 = vsub.s32 0, %v3277
      %v3279 = vrot.slane %v3275, %v3278
      %v3297 = vunpack.c.l.b16 %v891
      %v3298 = vunpack.c.l.b16 %v892
      %v3299 = vunpack.c.l.b16 %v893
      %v3300 = vunpack.c.l.b16 %v894
      %v3301 = vunpack.c.l.b16 %v895
      %v3302 = vunpack.c.l.b16 %v896
      %v3303 = vunpack.c.l.b16 %v897
      %v3304 = vunpack.c.l.b16 %v898
      %v3305 = vunpack.c.l.b16 %v899
      %v3306 = vunpack.c.l.b16 %v900
      %v3307 = vunpack.c.l.b16 %v901
      %v3308 = vunpack.c.l.b16 %v902
      %v3309 = vunpack.c.l.b16 %v903
      %v3310 = vunpack.c.l.b16 %v904
      %v3311 = vunpack.c.l.b16 %v905
      %v3312 = vunpack.c.l.b16 %v906
      %v3313 = vpack.c.b16 %v3298, %v3297
      %v3314 = vpack.c.b16 %v3300, %v3299
      %v3315 = vpack.c.b16 %v3302, %v3301
      %v3316 = vpack.c.b16 %v3304, %v3303
      %v3317 = vpack.c.b16 %v3306, %v3305
      %v3318 = vpack.c.b16 %v3308, %v3307
      %v3319 = vpack.c.b16 %v3310, %v3309
      %v3320 = vpack.c.b16 %v3312, %v3311
      %3329 = vmatprep.subr.bf16.mxu0 0
      %3330 = vmatpush1.bf16.msra.mxu0 %v3313
      %3331 = vmatprep.subr.bf16.mxu0 0
      %3332 = vmatpush1.bf16.msra.mxu0 %v3314
      %3333 = vmatprep.subr.bf16.mxu0 0
      %3334 = vmatpush1.bf16.msra.mxu0 %v3315
      %3335 = vmatprep.subr.bf16.mxu0 0
      %3336 = vmatpush1.bf16.msra.mxu0 %v3316
      %3337 = vmatprep.subr.bf16.mxu0 0
      %3338 = vmatpush1.bf16.msra.mxu0 %v3317
      %3339 = vmatprep.subr.bf16.mxu0 0
      %3340 = vmatpush1.bf16.msra.mxu0 %v3318
      %3341 = vmatprep.subr.bf16.mxu0 0
      %3342 = vmatpush1.bf16.msra.mxu0 %v3319
      %3343 = vmatprep.subr.bf16.mxu0 0
      %3344 = vmatpush1.bf16.msra.mxu0 %v3320
      %3345 = vmatprep.subr.bf16.mxu0 0
      %3346 = vmatpush1.bf16.msra.mxu0 0
      %3347 = vmatprep.subr.bf16.mxu0 0
      %3348 = vmatpush1.bf16.msra.mxu0 0
      %3349 = vmatprep.subr.bf16.mxu0 0
      %3350 = vmatpush1.bf16.msra.mxu0 0
      %3351 = vmatprep.subr.bf16.mxu0 0
      %3352 = vmatpush1.bf16.msra.mxu0 0
      %3353 = vmatprep.subr.bf16.mxu0 0
      %3354 = vmatpush1.bf16.msra.mxu0 0
      %3355 = vmatprep.subr.bf16.mxu0 0
      %3356 = vmatpush1.bf16.msra.mxu0 0
      %3357 = vmatprep.subr.bf16.mxu0 0
      %3358 = vmatpush1.bf16.msra.mxu0 0
      %3359 = vmatprep.subr.bf16.mxu0 0
      %3360 = vmatpush1.bf16.msra.mxu0 0
      %3361 = vmatprep.mubr.bf16.mxu0 0
      %3362 = vmatmul.mubr.bf16.gmra.mrb[0].mxu0 %v3279
      %v3363 = vpop.f32.mrb[0].mxu0
      %v3364 = vadd.f32 0.0, %v3363
      %v3365 = vpop.f32.mrb[0].mxu0
      %v3366 = vpop.f32.mrb[0].mxu0
      %v3367 = vpop.f32.mrb[0].mxu0
      %3368 = vdwg.mxu0
      %v3369 = vpack.i.b16 %v500, %v500
      %v3370 = vlaneseq
      %v3371 = vshrl.u32 %v3370, 7
      %v3372 = vsub.s32 0, %v3371
      %v3373 = vrot.slane %v3369, %v3372
      %v3391 = vunpack.c.l.b16 %v907
      %v3392 = vunpack.c.l.b16 %v908
      %v3393 = vunpack.c.l.b16 %v909
      %v3394 = vunpack.c.l.b16 %v910
      %v3395 = vunpack.c.l.b16 %v911
      %v3396 = vunpack.c.l.b16 %v912
      %v3397 = vunpack.c.l.b16 %v913
      %v3398 = vunpack.c.l.b16 %v914
      %v3399 = vunpack.c.l.b16 %v915
      %v3400 = vunpack.c.l.b16 %v916
      %v3401 = vunpack.c.l.b16 %v917
      %v3402 = vunpack.c.l.b16 %v918
      %v3403 = vunpack.c.l.b16 %v919
      %v3404 = vunpack.c.l.b16 %v920
      %v3405 = vunpack.c.l.b16 %v921
      %v3406 = vunpack.c.l.b16 %v922
      %v3407 = vpack.c.b16 %v3392, %v3391
      %v3408 = vpack.c.b16 %v3394, %v3393
      %v3409 = vpack.c.b16 %v3396, %v3395
      %v3410 = vpack.c.b16 %v3398, %v3397
      %v3411 = vpack.c.b16 %v3400, %v3399
      %v3412 = vpack.c.b16 %v3402, %v3401
      %v3413 = vpack.c.b16 %v3404, %v3403
      %v3414 = vpack.c.b16 %v3406, %v3405
      %3423 = vmatprep.subr.bf16.mxu0 0
      %3424 = vmatpush1.bf16.msra.mxu0 %v3407
      %3425 = vmatprep.subr.bf16.mxu0 0
      %3426 = vmatpush1.bf16.msra.mxu0 %v3408
      %3427 = vmatprep.subr.bf16.mxu0 0
      %3428 = vmatpush1.bf16.msra.mxu0 %v3409
      %3429 = vmatprep.subr.bf16.mxu0 0
      %3430 = vmatpush1.bf16.msra.mxu0 %v3410
      %3431 = vmatprep.subr.bf16.mxu0 0
      %3432 = vmatpush1.bf16.msra.mxu0 %v3411
      %3433 = vmatprep.subr.bf16.mxu0 0
      %3434 = vmatpush1.bf16.msra.mxu0 %v3412
      %3435 = vmatprep.subr.bf16.mxu0 0
      %3436 = vmatpush1.bf16.msra.mxu0 %v3413
      %3437 = vmatprep.subr.bf16.mxu0 0
      %3438 = vmatpush1.bf16.msra.mxu0 %v3414
      %3439 = vmatprep.subr.bf16.mxu0 0
      %3440 = vmatpush1.bf16.msra.mxu0 0
      %3441 = vmatprep.subr.bf16.mxu0 0
      %3442 = vmatpush1.bf16.msra.mxu0 0
      %3443 = vmatprep.subr.bf16.mxu0 0
      %3444 = vmatpush1.bf16.msra.mxu0 0
      %3445 = vmatprep.subr.bf16.mxu0 0
      %3446 = vmatpush1.bf16.msra.mxu0 0
      %3447 = vmatprep.subr.bf16.mxu0 0
      %3448 = vmatpush1.bf16.msra.mxu0 0
      %3449 = vmatprep.subr.bf16.mxu0 0
      %3450 = vmatpush1.bf16.msra.mxu0 0
      %3451 = vmatprep.subr.bf16.mxu0 0
      %3452 = vmatpush1.bf16.msra.mxu0 0
      %3453 = vmatprep.subr.bf16.mxu0 0
      %3454 = vmatpush1.bf16.msra.mxu0 0
      %3455 = vmatprep.mubr.bf16.mxu0 0
      %3456 = vmatmul.mubr.bf16.gmra.mrb[0].mxu0 %v3373
      %v3457 = vpop.f32.mrb[0].mxu0
      %v3458 = vadd.f32 0.0, %v3457
      %v3459 = vpop.f32.mrb[0].mxu0
      %v3460 = vpop.f32.mrb[0].mxu0
      %v3461 = vpop.f32.mrb[0].mxu0
      %3462 = vdwg.mxu0
      %v3463 = vpack.i.b16 %v501, %v501
      %v3464 = vlaneseq
      %v3465 = vshrl.u32 %v3464, 7
      %v3466 = vsub.s32 0, %v3465
      %v3467 = vrot.slane %v3463, %v3466
      %v3485 = vunpack.c.l.b16 %v923
      %v3486 = vunpack.c.l.b16 %v924
      %v3487 = vunpack.c.l.b16 %v925
      %v3488 = vunpack.c.l.b16 %v926
      %v3489 = vunpack.c.l.b16 %v927
      %v3490 = vunpack.c.l.b16 %v928
      %v3491 = vunpack.c.l.b16 %v929
      %v3492 = vunpack.c.l.b16 %v930
      %v3493 = vunpack.c.l.b16 %v931
      %v3494 = vunpack.c.l.b16 %v932
      %v3495 = vunpack.c.l.b16 %v933
      %v3496 = vunpack.c.l.b16 %v934
      %v3497 = vunpack.c.l.b16 %v935
      %v3498 = vunpack.c.l.b16 %v936
      %v3499 = vunpack.c.l.b16 %v937
      %v3500 = vunpack.c.l.b16 %v938
      %v3501 = vpack.c.b16 %v3486, %v3485
      %v3502 = vpack.c.b16 %v3488, %v3487
      %v3503 = vpack.c.b16 %v3490, %v3489
      %v3504 = vpack.c.b16 %v3492, %v3491
      %v3505 = vpack.c.b16 %v3494, %v3493
      %v3506 = vpack.c.b16 %v3496, %v3495
      %v3507 = vpack.c.b16 %v3498, %v3497
      %v3508 = vpack.c.b16 %v3500, %v3499
      %3517 = vmatprep.subr.bf16.mxu0 0
      %3518 = vmatpush1.bf16.msra.mxu0 %v3501
      %3519 = vmatprep.subr.bf16.mxu0 0
      %3520 = vmatpush1.bf16.msra.mxu0 %v3502
      %3521 = vmatprep.subr.bf16.mxu0 0
      %3522 = vmatpush1.bf16.msra.mxu0 %v3503
      %3523 = vmatprep.subr.bf16.mxu0 0
      %3524 = vmatpush1.bf16.msra.mxu0 %v3504
      %3525 = vmatprep.subr.bf16.mxu0 0
      %3526 = vmatpush1.bf16.msra.mxu0 %v3505
      %3527 = vmatprep.subr.bf16.mxu0 0
      %3528 = vmatpush1.bf16.msra.mxu0 %v3506
      %3529 = vmatprep.subr.bf16.mxu0 0
      %3530 = vmatpush1.bf16.msra.mxu0 %v3507
      %3531 = vmatprep.subr.bf16.mxu0 0
      %3532 = vmatpush1.bf16.msra.mxu0 %v3508
      %3533 = vmatprep.subr.bf16.mxu0 0
      %3534 = vmatpush1.bf16.msra.mxu0 0
      %3535 = vmatprep.subr.bf16.mxu0 0
      %3536 = vmatpush1.bf16.msra.mxu0 0
      %3537 = vmatprep.subr.bf16.mxu0 0
      %3538 = vmatpush1.bf16.msra.mxu0 0
      %3539 = vmatprep.subr.bf16.mxu0 0
      %3540 = vmatpush1.bf16.msra.mxu0 0
      %3541 = vmatprep.subr.bf16.mxu0 0
      %3542 = vmatpush1.bf16.msra.mxu0 0
      %3543 = vmatprep.subr.bf16.mxu0 0
      %3544 = vmatpush1.bf16.msra.mxu0 0
      %3545 = vmatprep.subr.bf16.mxu0 0
      %3546 = vmatpush1.bf16.msra.mxu0 0
      %3547 = vmatprep.subr.bf16.mxu0 0
      %3548 = vmatpush1.bf16.msra.mxu0 0
      %3549 = vmatprep.mubr.bf16.mxu0 0
      %3550 = vmatmul.mubr.bf16.gmra.mrb[0].mxu0 %v3467
      %v3551 = vpop.f32.mrb[0].mxu0
      %v3552 = vadd.f32 0.0, %v3551
      %v3553 = vpop.f32.mrb[0].mxu0
      %v3554 = vpop.f32.mrb[0].mxu0
      %v3555 = vpop.f32.mrb[0].mxu0
      %3556 = vdwg.mxu0
      %v3557 = vpack.i.b16 %v502, %v502
      %v3558 = vlaneseq
      %v3559 = vshrl.u32 %v3558, 7
      %v3560 = vsub.s32 0, %v3559
      %v3561 = vrot.slane %v3557, %v3560
      %v3579 = vunpack.c.l.b16 %v939
      %v3580 = vunpack.c.l.b16 %v940
      %v3581 = vunpack.c.l.b16 %v941
      %v3582 = vunpack.c.l.b16 %v942
      %v3583 = vunpack.c.l.b16 %v943
      %v3584 = vunpack.c.l.b16 %v944
      %v3585 = vunpack.c.l.b16 %v945
      %v3586 = vunpack.c.l.b16 %v946
      %v3587 = vunpack.c.l.b16 %v947
      %v3588 = vunpack.c.l.b16 %v948
      %v3589 = vunpack.c.l.b16 %v949
      %v3590 = vunpack.c.l.b16 %v950
      %v3591 = vunpack.c.l.b16 %v951
      %v3592 = vunpack.c.l.b16 %v952
      %v3593 = vunpack.c.l.b16 %v953
      %v3594 = vunpack.c.l.b16 %v954
      %v3595 = vpack.c.b16 %v3580, %v3579
      %v3596 = vpack.c.b16 %v3582, %v3581
      %v3597 = vpack.c.b16 %v3584, %v3583
      %v3598 = vpack.c.b16 %v3586, %v3585
      %v3599 = vpack.c.b16 %v3588, %v3587
      %v3600 = vpack.c.b16 %v3590, %v3589
      %v3601 = vpack.c.b16 %v3592, %v3591
      %v3602 = vpack.c.b16 %v3594, %v3593
      %3611 = vmatprep.subr.bf16.mxu0 0
      %3612 = vmatpush1.bf16.msra.mxu0 %v3595
      %3613 = vmatprep.subr.bf16.mxu0 0
      %3614 = vmatpush1.bf16.msra.mxu0 %v3596
      %3615 = vmatprep.subr.bf16.mxu0 0
      %3616 = vmatpush1.bf16.msra.mxu0 %v3597
      %3617 = vmatprep.subr.bf16.mxu0 0
      %3618 = vmatpush1.bf16.msra.mxu0 %v3598
      %3619 = vmatprep.subr.bf16.mxu0 0
      %3620 = vmatpush1.bf16.msra.mxu0 %v3599
      %3621 = vmatprep.subr.bf16.mxu0 0
      %3622 = vmatpush1.bf16.msra.mxu0 %v3600
      %3623 = vmatprep.subr.bf16.mxu0 0
      %3624 = vmatpush1.bf16.msra.mxu0 %v3601
      %3625 = vmatprep.subr.bf16.mxu0 0
      %3626 = vmatpush1.bf16.msra.mxu0 %v3602
      %3627 = vmatprep.subr.bf16.mxu0 0
      %3628 = vmatpush1.bf16.msra.mxu0 0
      %3629 = vmatprep.subr.bf16.mxu0 0
      %3630 = vmatpush1.bf16.msra.mxu0 0
      %3631 = vmatprep.subr.bf16.mxu0 0
      %3632 = vmatpush1.bf16.msra.mxu0 0
      %3633 = vmatprep.subr.bf16.mxu0 0
      %3634 = vmatpush1.bf16.msra.mxu0 0
      %3635 = vmatprep.subr.bf16.mxu0 0
      %3636 = vmatpush1.bf16.msra.mxu0 0
      %3637 = vmatprep.subr.bf16.mxu0 0
      %3638 = vmatpush1.bf16.msra.mxu0 0
      %3639 = vmatprep.subr.bf16.mxu0 0
      %3640 = vmatpush1.bf16.msra.mxu0 0
      %3641 = vmatprep.subr.bf16.mxu0 0
      %3642 = vmatpush1.bf16.msra.mxu0 0
      %3643 = vmatprep.mubr.bf16.mxu0 0
      %3644 = vmatmul.mubr.bf16.gmra.mrb[0].mxu0 %v3561
      %v3645 = vpop.f32.mrb[0].mxu0
      %v3646 = vadd.f32 0.0, %v3645
      %v3647 = vpop.f32.mrb[0].mxu0
      %v3648 = vpop.f32.mrb[0].mxu0
      %v3649 = vpop.f32.mrb[0].mxu0
      %3650 = vdwg.mxu0
      %v3651 = vpack.i.b16 %v503, %v503
      %v3652 = vlaneseq
      %v3653 = vshrl.u32 %v3652, 7
      %v3654 = vsub.s32 0, %v3653
      %v3655 = vrot.slane %v3651, %v3654
      %v3673 = vunpack.c.l.b16 %v955
      %v3674 = vunpack.c.l.b16 %v956
      %v3675 = vunpack.c.l.b16 %v957
      %v3676 = vunpack.c.l.b16 %v958
      %v3677 = vunpack.c.l.b16 %v959
      %v3678 = vunpack.c.l.b16 %v960
      %v3679 = vunpack.c.l.b16 %v961
      %v3680 = vunpack.c.l.b16 %v962
      %v3681 = vunpack.c.l.b16 %v963
      %v3682 = vunpack.c.l.b16 %v964
      %v3683 = vunpack.c.l.b16 %v965
      %v3684 = vunpack.c.l.b16 %v966
      %v3685 = vunpack.c.l.b16 %v967
      %v3686 = vunpack.c.l.b16 %v968
      %v3687 = vunpack.c.l.b16 %v969
      %v3688 = vunpack.c.l.b16 %v970
      %v3689 = vpack.c.b16 %v3674, %v3673
      %v3690 = vpack.c.b16 %v3676, %v3675
      %v3691 = vpack.c.b16 %v3678, %v3677
      %v3692 = vpack.c.b16 %v3680, %v3679
      %v3693 = vpack.c.b16 %v3682, %v3681
      %v3694 = vpack.c.b16 %v3684, %v3683
      %v3695 = vpack.c.b16 %v3686, %v3685
      %v3696 = vpack.c.b16 %v3688, %v3687
      %3705 = vmatprep.subr.bf16.mxu0 0
      %3706 = vmatpush1.bf16.msra.mxu0 %v3689
      %3707 = vmatprep.subr.bf16.mxu0 0
      %3708 = vmatpush1.bf16.msra.mxu0 %v3690
      %3709 = vmatprep.subr.bf16.mxu0 0
      %3710 = vmatpush1.bf16.msra.mxu0 %v3691
      %3711 = vmatprep.subr.bf16.mxu0 0
      %3712 = vmatpush1.bf16.msra.mxu0 %v3692
      %3713 = vmatprep.subr.bf16.mxu0 0
      %3714 = vmatpush1.bf16.msra.mxu0 %v3693
      %3715 = vmatprep.subr.bf16.mxu0 0
      %3716 = vmatpush1.bf16.msra.mxu0 %v3694
      %3717 = vmatprep.subr.bf16.mxu0 0
      %3718 = vmatpush1.bf16.msra.mxu0 %v3695
      %3719 = vmatprep.subr.bf16.mxu0 0
      %3720 = vmatpush1.bf16.msra.mxu0 %v3696
      %3721 = vmatprep.subr.bf16.mxu0 0
      %3722 = vmatpush1.bf16.msra.mxu0 0
      %3723 = vmatprep.subr.bf16.mxu0 0
      %3724 = vmatpush1.bf16.msra.mxu0 0
      %3725 = vmatprep.subr.bf16.mxu0 0
      %3726 = vmatpush1.bf16.msra.mxu0 0
      %3727 = vmatprep.subr.bf16.mxu0 0
      %3728 = vmatpush1.bf16.msra.mxu0 0
      %3729 = vmatprep.subr.bf16.mxu0 0
      %3730 = vmatpush1.bf16.msra.mxu0 0
      %3731 = vmatprep.subr.bf16.mxu0 0
      %3732 = vmatpush1.bf16.msra.mxu0 0
      %3733 = vmatprep.subr.bf16.mxu0 0
      %3734 = vmatpush1.bf16.msra.mxu0 0
      %3735 = vmatprep.subr.bf16.mxu0 0
      %3736 = vmatpush1.bf16.msra.mxu0 0
      %3737 = vmatprep.mubr.bf16.mxu0 0
      %3738 = vmatmul.mubr.bf16.gmra.mrb[0].mxu0 %v3655
      %v3739 = vpop.f32.mrb[0].mxu0
      %v3740 = vadd.f32 0.0, %v3739
      %v3741 = vpop.f32.mrb[0].mxu0
      %v3742 = vpop.f32.mrb[0].mxu0
      %v3743 = vpop.f32.mrb[0].mxu0
      %3744 = vdwg.mxu0
      %v3745 = vpack.i.b16 %v504, %v504
      %v3746 = vlaneseq
      %v3747 = vshrl.u32 %v3746, 7
      %v3748 = vsub.s32 0, %v3747
      %v3749 = vrot.slane %v3745, %v3748
      %v3767 = vunpack.c.l.b16 %v971
      %v3768 = vunpack.c.l.b16 %v972
      %v3769 = vunpack.c.l.b16 %v973
      %v3770 = vunpack.c.l.b16 %v974
      %v3771 = vunpack.c.l.b16 %v975
      %v3772 = vunpack.c.l.b16 %v976
      %v3773 = vunpack.c.l.b16 %v977
      %v3774 = vunpack.c.l.b16 %v978
      %v3775 = vunpack.c.l.b16 %v979
      %v3776 = vunpack.c.l.b16 %v980
      %v3777 = vunpack.c.l.b16 %v981
      %v3778 = vunpack.c.l.b16 %v982
      %v3779 = vunpack.c.l.b16 %v983
      %v3780 = vunpack.c.l.b16 %v984
      %v3781 = vunpack.c.l.b16 %v985
      %v3782 = vunpack.c.l.b16 %v986
      %v3783 = vpack.c.b16 %v3768, %v3767
      %v3784 = vpack.c.b16 %v3770, %v3769
      %v3785 = vpack.c.b16 %v3772, %v3771
      %v3786 = vpack.c.b16 %v3774, %v3773
      %v3787 = vpack.c.b16 %v3776, %v3775
      %v3788 = vpack.c.b16 %v3778, %v3777
      %v3789 = vpack.c.b16 %v3780, %v3779
      %v3790 = vpack.c.b16 %v3782, %v3781
      %3799 = vmatprep.subr.bf16.mxu0 0
      %3800 = vmatpush1.bf16.msra.mxu0 %v3783
      %3801 = vmatprep.subr.bf16.mxu0 0
      %3802 = vmatpush1.bf16.msra.mxu0 %v3784
      %3803 = vmatprep.subr.bf16.mxu0 0
      %3804 = vmatpush1.bf16.msra.mxu0 %v3785
      %3805 = vmatprep.subr.bf16.mxu0 0
      %3806 = vmatpush1.bf16.msra.mxu0 %v3786
      %3807 = vmatprep.subr.bf16.mxu0 0
      %3808 = vmatpush1.bf16.msra.mxu0 %v3787
      %3809 = vmatprep.subr.bf16.mxu0 0
      %3810 = vmatpush1.bf16.msra.mxu0 %v3788
      %3811 = vmatprep.subr.bf16.mxu0 0
      %3812 = vmatpush1.bf16.msra.mxu0 %v3789
      %3813 = vmatprep.subr.bf16.mxu0 0
      %3814 = vmatpush1.bf16.msra.mxu0 %v3790
      %3815 = vmatprep.subr.bf16.mxu0 0
      %3816 = vmatpush1.bf16.msra.mxu0 0
      %3817 = vmatprep.subr.bf16.mxu0 0
      %3818 = vmatpush1.bf16.msra.mxu0 0
      %3819 = vmatprep.subr.bf16.mxu0 0
      %3820 = vmatpush1.bf16.msra.mxu0 0
      %3821 = vmatprep.subr.bf16.mxu0 0
      %3822 = vmatpush1.bf16.msra.mxu0 0
      %3823 = vmatprep.subr.bf16.mxu0 0
      %3824 = vmatpush1.bf16.msra.mxu0 0
      %3825 = vmatprep.subr.bf16.mxu0 0
      %3826 = vmatpush1.bf16.msra.mxu0 0
      %3827 = vmatprep.subr.bf16.mxu0 0
      %3828 = vmatpush1.bf16.msra.mxu0 0
      %3829 = vmatprep.subr.bf16.mxu0 0
      %3830 = vmatpush1.bf16.msra.mxu0 0
      %3831 = vmatprep.mubr.bf16.mxu0 0
      %3832 = vmatmul.mubr.bf16.gmra.mrb[0].mxu0 %v3749
      %v3833 = vpop.f32.mrb[0].mxu0
      %v3834 = vadd.f32 0.0, %v3833
      %v3835 = vpop.f32.mrb[0].mxu0
      %v3836 = vpop.f32.mrb[0].mxu0
      %v3837 = vpop.f32.mrb[0].mxu0
      %3838 = vdwg.mxu0
      %v3839 = vpack.i.b16 %v505, %v505
      %v3840 = vlaneseq
      %v3841 = vshrl.u32 %v3840, 7
      %v3842 = vsub.s32 0, %v3841
      %v3843 = vrot.slane %v3839, %v3842
      %v3861 = vunpack.c.l.b16 %v987
      %v3862 = vunpack.c.l.b16 %v988
      %v3863 = vunpack.c.l.b16 %v989
      %v3864 = vunpack.c.l.b16 %v990
      %v3865 = vunpack.c.l.b16 %v991
      %v3866 = vunpack.c.l.b16 %v992
      %v3867 = vunpack.c.l.b16 %v993
      %v3868 = vunpack.c.l.b16 %v994
      %v3869 = vunpack.c.l.b16 %v995
      %v3870 = vunpack.c.l.b16 %v996
      %v3871 = vunpack.c.l.b16 %v997
      %v3872 = vunpack.c.l.b16 %v998
      %v3873 = vunpack.c.l.b16 %v999
      %v3874 = vunpack.c.l.b16 %v1000
      %v3875 = vunpack.c.l.b16 %v1001
      %v3876 = vunpack.c.l.b16 %v1002
      %v3877 = vpack.c.b16 %v3862, %v3861
      %v3878 = vpack.c.b16 %v3864, %v3863
      %v3879 = vpack.c.b16 %v3866, %v3865
      %v3880 = vpack.c.b16 %v3868, %v3867
      %v3881 = vpack.c.b16 %v3870, %v3869
      %v3882 = vpack.c.b16 %v3872, %v3871
      %v3883 = vpack.c.b16 %v3874, %v3873
      %v3884 = vpack.c.b16 %v3876, %v3875
      %3893 = vmatprep.subr.bf16.mxu0 0
      %3894 = vmatpush1.bf16.msra.mxu0 %v3877
      %3895 = vmatprep.subr.bf16.mxu0 0
      %3896 = vmatpush1.bf16.msra.mxu0 %v3878
      %3897 = vmatprep.subr.bf16.mxu0 0
      %3898 = vmatpush1.bf16.msra.mxu0 %v3879
      %3899 = vmatprep.subr.bf16.mxu0 0
      %3900 = vmatpush1.bf16.msra.mxu0 %v3880
      %3901 = vmatprep.subr.bf16.mxu0 0
      %3902 = vmatpush1.bf16.msra.mxu0 %v3881
      %3903 = vmatprep.subr.bf16.mxu0 0
      %3904 = vmatpush1.bf16.msra.mxu0 %v3882
      %3905 = vmatprep.subr.bf16.mxu0 0
      %3906 = vmatpush1.bf16.msra.mxu0 %v3883
      %3907 = vmatprep.subr.bf16.mxu0 0
      %3908 = vmatpush1.bf16.msra.mxu0 %v3884
      %3909 = vmatprep.subr.bf16.mxu0 0
      %3910 = vmatpush1.bf16.msra.mxu0 0
      %3911 = vmatprep.subr.bf16.mxu0 0
      %3912 = vmatpush1.bf16.msra.mxu0 0
      %3913 = vmatprep.subr.bf16.mxu0 0
      %3914 = vmatpush1.bf16.msra.mxu0 0
      %3915 = vmatprep.subr.bf16.mxu0 0
      %3916 = vmatpush1.bf16.msra.mxu0 0
      %3917 = vmatprep.subr.bf16.mxu0 0
      %3918 = vmatpush1.bf16.msra.mxu0 0
      %3919 = vmatprep.subr.bf16.mxu0 0
      %3920 = vmatpush1.bf16.msra.mxu0 0
      %3921 = vmatprep.subr.bf16.mxu0 0
      %3922 = vmatpush1.bf16.msra.mxu0 0
      %3923 = vmatprep.subr.bf16.mxu0 0
      %3924 = vmatpush1.bf16.msra.mxu0 0
      %3925 = vmatprep.mubr.bf16.mxu0 0
      %3926 = vmatmul.mubr.bf16.gmra.mrb[0].mxu0 %v3843
      %v3927 = vpop.f32.mrb[0].mxu0
      %v3928 = vadd.f32 0.0, %v3927
      %v3929 = vpop.f32.mrb[0].mxu0
      %v3930 = vpop.f32.mrb[0].mxu0
      %v3931 = vpop.f32.mrb[0].mxu0
      %3932 = vdwg.mxu0
      %v3933 = vpack.i.b16 %v506, %v506
      %v3934 = vlaneseq
      %v3935 = vshrl.u32 %v3934, 7
      %v3936 = vsub.s32 0, %v3935
      %v3937 = vrot.slane %v3933, %v3936
      %v3955 = vunpack.c.l.b16 %v1003
      %v3956 = vunpack.c.l.b16 %v1004
      %v3957 = vunpack.c.l.b16 %v1005
      %v3958 = vunpack.c.l.b16 %v1006
      %v3959 = vunpack.c.l.b16 %v1007
      %v3960 = vunpack.c.l.b16 %v1008
      %v3961 = vunpack.c.l.b16 %v1009
      %v3962 = vunpack.c.l.b16 %v1010
      %v3963 = vunpack.c.l.b16 %v1011
      %v3964 = vunpack.c.l.b16 %v1012
      %v3965 = vunpack.c.l.b16 %v1013
      %v3966 = vunpack.c.l.b16 %v1014
      %v3967 = vunpack.c.l.b16 %v1015
      %v3968 = vunpack.c.l.b16 %v1016
      %v3969 = vunpack.c.l.b16 %v1017
      %v3970 = vunpack.c.l.b16 %v1018
      %v3971 = vpack.c.b16 %v3956, %v3955
      %v3972 = vpack.c.b16 %v3958, %v3957
      %v3973 = vpack.c.b16 %v3960, %v3959
      %v3974 = vpack.c.b16 %v3962, %v3961
      %v3975 = vpack.c.b16 %v3964, %v3963
      %v3976 = vpack.c.b16 %v3966, %v3965
      %v3977 = vpack.c.b16 %v3968, %v3967
      %v3978 = vpack.c.b16 %v3970, %v3969
      %3987 = vmatprep.subr.bf16.mxu0 0
      %3988 = vmatpush1.bf16.msra.mxu0 %v3971
      %3989 = vmatprep.subr.bf16.mxu0 0
      %3990 = vmatpush1.bf16.msra.mxu0 %v3972
      %3991 = vmatprep.subr.bf16.mxu0 0
      %3992 = vmatpush1.bf16.msra.mxu0 %v3973
      %3993 = vmatprep.subr.bf16.mxu0 0
      %3994 = vmatpush1.bf16.msra.mxu0 %v3974
      %3995 = vmatprep.subr.bf16.mxu0 0
      %3996 = vmatpush1.bf16.msra.mxu0 %v3975
      %3997 = vmatprep.subr.bf16.mxu0 0
      %3998 = vmatpush1.bf16.msra.mxu0 %v3976
      %3999 = vmatprep.subr.bf16.mxu0 0
      %4000 = vmatpush1.bf16.msra.mxu0 %v3977
      %4001 = vmatprep.subr.bf16.mxu0 0
      %4002 = vmatpush1.bf16.msra.mxu0 %v3978
      %4003 = vmatprep.subr.bf16.mxu0 0
      %4004 = vmatpush1.bf16.msra.mxu0 0
      %4005 = vmatprep.subr.bf16.mxu0 0
      %4006 = vmatpush1.bf16.msra.mxu0 0
      %4007 = vmatprep.subr.bf16.mxu0 0
      %4008 = vmatpush1.bf16.msra.mxu0 0
      %4009 = vmatprep.subr.bf16.mxu0 0
      %4010 = vmatpush1.bf16.msra.mxu0 0
      %4011 = vmatprep.subr.bf16.mxu0 0
      %4012 = vmatpush1.bf16.msra.mxu0 0
      %4013 = vmatprep.subr.bf16.mxu0 0
      %4014 = vmatpush1.bf16.msra.mxu0 0
      %4015 = vmatprep.subr.bf16.mxu0 0
      %4016 = vmatpush1.bf16.msra.mxu0 0
      %4017 = vmatprep.subr.bf16.mxu0 0
      %4018 = vmatpush1.bf16.msra.mxu0 0
      %4019 = vmatprep.mubr.bf16.mxu0 0
      %4020 = vmatmul.mubr.bf16.gmra.mrb[0].mxu0 %v3937
      %v4021 = vpop.f32.mrb[0].mxu0
      %v4022 = vadd.f32 0.0, %v4021
      %v4023 = vpop.f32.mrb[0].mxu0
      %v4024 = vpop.f32.mrb[0].mxu0
      %v4025 = vpop.f32.mrb[0].mxu0
      %4026 = vdwg.mxu0
      %v4027 = vld [vmem:[%s4] sm:$0xff]
      %v4028 = vld [vmem:[%s4 + $0x8] sm:$0xff]
      %v4029 = vld [vmem:[%s4 + $0x10] sm:$0xff]
      %v4030 = vld [vmem:[%s4 + $0x18] sm:$0xff]
      %4032 = vset.pattern.permute.xlu0 0
      %4033 = vperm.xlu0 %4032, %v4027
      %v4034 = vpop.permute.xlu0 %4033
      %4037 = vset.pattern.permute.xlu0 0
      %4038 = vperm.xlu0 %4037, %v4028
      %v4039 = vpop.permute.xlu0 %4038
      %4042 = vset.pattern.permute.xlu0 0
      %4043 = vperm.xlu0 %4042, %v4029
      %v4044 = vpop.permute.xlu0 %4043
      %4047 = vset.pattern.permute.xlu0 0
      %4048 = vperm.xlu0 %4047, %v4030
      %v4049 = vpop.permute.xlu0 %4048
      %v4051 = vmul.f32 %v369, %v4034
      %v4052 = vmul.f32 %v370, %v4039
      %v4053 = vmul.f32 %v371, %v4044
      %v4054 = vmul.f32 %v372, %v4049
      %v4059 = vrot.slane %v4051, 1
      %v4060 = vrot.slane %v4051, 2
      %v4061 = vrot.slane %v4051, 3
      %v4062 = vrot.slane %v4051, 4
      %v4063 = vrot.slane %v4051, 5
      %v4064 = vrot.slane %v4051, 6
      %v4065 = vrot.slane %v4051, 7
      %v4066 = vrot.slane %v4052, 1
      %v4067 = vrot.slane %v4052, 2
      %v4068 = vrot.slane %v4052, 3
      %v4069 = vrot.slane %v4052, 4
      %v4070 = vrot.slane %v4052, 5
      %v4071 = vrot.slane %v4052, 6
      %v4072 = vrot.slane %v4052, 7
      %v4073 = vrot.slane %v4053, 1
      %v4074 = vrot.slane %v4053, 2
      %v4075 = vrot.slane %v4053, 3
      %v4076 = vrot.slane %v4053, 4
      %v4077 = vrot.slane %v4053, 5
      %v4078 = vrot.slane %v4053, 6
      %v4079 = vrot.slane %v4053, 7
      %v4080 = vrot.slane %v4054, 1
      %v4081 = vrot.slane %v4054, 2
      %v4082 = vrot.slane %v4054, 3
      %v4083 = vrot.slane %v4054, 4
      %v4084 = vrot.slane %v4054, 5
      %v4085 = vrot.slane %v4054, 6
      %v4086 = vrot.slane %v4054, 7
      %v4119 = vadd.f32 %v1108, %v4051
      %v4120 = vadd.f32 %v1202, %v4059
      %v4121 = vadd.f32 %v1296, %v4060
      %v4122 = vadd.f32 %v1390, %v4061
      %v4123 = vadd.f32 %v1484, %v4062
      %v4124 = vadd.f32 %v1578, %v4063
      %v4125 = vadd.f32 %v1672, %v4064
      %v4126 = vadd.f32 %v1766, %v4065
      %v4127 = vadd.f32 %v1860, %v4052
      %v4128 = vadd.f32 %v1954, %v4066
      %v4129 = vadd.f32 %v2048, %v4067
      %v4130 = vadd.f32 %v2142, %v4068
      %v4131 = vadd.f32 %v2236, %v4069
      %v4132 = vadd.f32 %v2330, %v4070
      %v4133 = vadd.f32 %v2424, %v4071
      %v4134 = vadd.f32 %v2518, %v4072
      %v4135 = vadd.f32 %v2612, %v4053
      %v4136 = vadd.f32 %v2706, %v4073
      %v4137 = vadd.f32 %v2800, %v4074
      %v4138 = vadd.f32 %v2894, %v4075
      %v4139 = vadd.f32 %v2988, %v4076
      %v4140 = vadd.f32 %v3082, %v4077
      %v4141 = vadd.f32 %v3176, %v4078
      %v4142 = vadd.f32 %v3270, %v4079
      %v4143 = vadd.f32 %v3364, %v4054
      %v4144 = vadd.f32 %v3458, %v4080
      %v4145 = vadd.f32 %v3552, %v4081
      %v4146 = vadd.f32 %v3646, %v4082
      %v4147 = vadd.f32 %v3740, %v4083
      %v4148 = vadd.f32 %v3834, %v4084
      %v4149 = vadd.f32 %v3928, %v4085
      %v4150 = vadd.f32 %v4022, %v4086
      %v4151 = vmul.f32 %v4119, 0.5
      %v4152 = vmul.f32 %v4120, 0.5
      %v4153 = vmul.f32 %v4121, 0.5
      %v4154 = vmul.f32 %v4122, 0.5
      %v4155 = vmul.f32 %v4123, 0.5
      %v4156 = vmul.f32 %v4124, 0.5
      %v4157 = vmul.f32 %v4125, 0.5
      %v4158 = vmul.f32 %v4126, 0.5
      %v4159 = vmul.f32 %v4127, 0.5
      %v4160 = vmul.f32 %v4128, 0.5
      %v4161 = vmul.f32 %v4129, 0.5
      %v4162 = vmul.f32 %v4130, 0.5
      %v4163 = vmul.f32 %v4131, 0.5
      %v4164 = vmul.f32 %v4132, 0.5
      %v4165 = vmul.f32 %v4133, 0.5
      %v4166 = vmul.f32 %v4134, 0.5
      %v4167 = vmul.f32 %v4135, 0.5
      %v4168 = vmul.f32 %v4136, 0.5
      %v4169 = vmul.f32 %v4137, 0.5
      %v4170 = vmul.f32 %v4138, 0.5
      %v4171 = vmul.f32 %v4139, 0.5
      %v4172 = vmul.f32 %v4140, 0.5
      %v4173 = vmul.f32 %v4141, 0.5
      %v4174 = vmul.f32 %v4142, 0.5
      %v4175 = vmul.f32 %v4143, 0.5
      %v4176 = vmul.f32 %v4144, 0.5
      %v4177 = vmul.f32 %v4145, 0.5
      %v4178 = vmul.f32 %v4146, 0.5
      %v4179 = vmul.f32 %v4147, 0.5
      %v4180 = vmul.f32 %v4148, 0.5
      %v4181 = vmul.f32 %v4149, 0.5
      %v4182 = vmul.f32 %v4150, 0.5
      %v4183 = vmul.f32 %v4119, 0.044715
      %v4184 = vmul.f32 %v4120, 0.044715
      %v4185 = vmul.f32 %v4121, 0.044715
      %v4186 = vmul.f32 %v4122, 0.044715
      %v4187 = vmul.f32 %v4123, 0.044715
      %v4188 = vmul.f32 %v4124, 0.044715
      %v4189 = vmul.f32 %v4125, 0.044715
      %v4190 = vmul.f32 %v4126, 0.044715
      %v4191 = vmul.f32 %v4127, 0.044715
      %v4192 = vmul.f32 %v4128, 0.044715
      %v4193 = vmul.f32 %v4129, 0.044715
      %v4194 = vmul.f32 %v4130, 0.044715
      %v4195 = vmul.f32 %v4131, 0.044715
      %v4196 = vmul.f32 %v4132, 0.044715
      %v4197 = vmul.f32 %v4133, 0.044715
      %v4198 = vmul.f32 %v4134, 0.044715
      %v4199 = vmul.f32 %v4135, 0.044715
      %v4200 = vmul.f32 %v4136, 0.044715
      %v4201 = vmul.f32 %v4137, 0.044715
      %v4202 = vmul.f32 %v4138, 0.044715
      %v4203 = vmul.f32 %v4139, 0.044715
      %v4204 = vmul.f32 %v4140, 0.044715
      %v4205 = vmul.f32 %v4141, 0.044715
      %v4206 = vmul.f32 %v4142, 0.044715
      %v4207 = vmul.f32 %v4143, 0.044715
      %v4208 = vmul.f32 %v4144, 0.044715
      %v4209 = vmul.f32 %v4145, 0.044715
      %v4210 = vmul.f32 %v4146, 0.044715
      %v4211 = vmul.f32 %v4147, 0.044715
      %v4212 = vmul.f32 %v4148, 0.044715
      %v4213 = vmul.f32 %v4149, 0.044715
      %v4214 = vmul.f32 %v4150, 0.044715
      %v4215 = vmul.f32 %v4183, %v4119
      %v4216 = vmul.f32 %v4184, %v4120
      %v4217 = vmul.f32 %v4185, %v4121
      %v4218 = vmul.f32 %v4186, %v4122
      %v4219 = vmul.f32 %v4187, %v4123
      %v4220 = vmul.f32 %v4188, %v4124
      %v4221 = vmul.f32 %v4189, %v4125
      %v4222 = vmul.f32 %v4190, %v4126
      %v4223 = vmul.f32 %v4191, %v4127
      %v4224 = vmul.f32 %v4192, %v4128
      %v4225 = vmul.f32 %v4193, %v4129
      %v4226 = vmul.f32 %v4194, %v4130
      %v4227 = vmul.f32 %v4195, %v4131
      %v4228 = vmul.f32 %v4196, %v4132
      %v4229 = vmul.f32 %v4197, %v4133
      %v4230 = vmul.f32 %v4198, %v4134
      %v4231 = vmul.f32 %v4199, %v4135
      %v4232 = vmul.f32 %v4200, %v4136
      %v4233 = vmul.f32 %v4201, %v4137
      %v4234 = vmul.f32 %v4202, %v4138
      %v4235 = vmul.f32 %v4203, %v4139
      %v4236 = vmul.f32 %v4204, %v4140
      %v4237 = vmul.f32 %v4205, %v4141
      %v4238 = vmul.f32 %v4206, %v4142
      %v4239 = vmul.f32 %v4207, %v4143
      %v4240 = vmul.f32 %v4208, %v4144
      %v4241 = vmul.f32 %v4209, %v4145
      %v4242 = vmul.f32 %v4210, %v4146
      %v4243 = vmul.f32 %v4211, %v4147
      %v4244 = vmul.f32 %v4212, %v4148
      %v4245 = vmul.f32 %v4213, %v4149
      %v4246 = vmul.f32 %v4214, %v4150
      %v4247 = vmul.f32 %v4215, %v4119
      %v4248 = vmul.f32 %v4216, %v4120
      %v4249 = vmul.f32 %v4217, %v4121
      %v4250 = vmul.f32 %v4218, %v4122
      %v4251 = vmul.f32 %v4219, %v4123
      %v4252 = vmul.f32 %v4220, %v4124
      %v4253 = vmul.f32 %v4221, %v4125
      %v4254 = vmul.f32 %v4222, %v4126
      %v4255 = vmul.f32 %v4223, %v4127
      %v4256 = vmul.f32 %v4224, %v4128
      %v4257 = vmul.f32 %v4225, %v4129
      %v4258 = vmul.f32 %v4226, %v4130
      %v4259 = vmul.f32 %v4227, %v4131
      %v4260 = vmul.f32 %v4228, %v4132
      %v4261 = vmul.f32 %v4229, %v4133
      %v4262 = vmul.f32 %v4230, %v4134
      %v4263 = vmul.f32 %v4231, %v4135
      %v4264 = vmul.f32 %v4232, %v4136
      %v4265 = vmul.f32 %v4233, %v4137
      %v4266 = vmul.f32 %v4234, %v4138
      %v4267 = vmul.f32 %v4235, %v4139
      %v4268 = vmul.f32 %v4236, %v4140
      %v4269 = vmul.f32 %v4237, %v4141
      %v4270 = vmul.f32 %v4238, %v4142
      %v4271 = vmul.f32 %v4239, %v4143
      %v4272 = vmul.f32 %v4240, %v4144
      %v4273 = vmul.f32 %v4241, %v4145
      %v4274 = vmul.f32 %v4242, %v4146
      %v4275 = vmul.f32 %v4243, %v4147
      %v4276 = vmul.f32 %v4244, %v4148
      %v4277 = vmul.f32 %v4245, %v4149
      %v4278 = vmul.f32 %v4246, %v4150
      %v4279 = vadd.f32 %v4119, %v4247
      %v4280 = vadd.f32 %v4120, %v4248
      %v4281 = vadd.f32 %v4121, %v4249
      %v4282 = vadd.f32 %v4122, %v4250
      %v4283 = vadd.f32 %v4123, %v4251
      %v4284 = vadd.f32 %v4124, %v4252
      %v4285 = vadd.f32 %v4125, %v4253
      %v4286 = vadd.f32 %v4126, %v4254
      %v4287 = vadd.f32 %v4127, %v4255
      %v4288 = vadd.f32 %v4128, %v4256
      %v4289 = vadd.f32 %v4129, %v4257
      %v4290 = vadd.f32 %v4130, %v4258
      %v4291 = vadd.f32 %v4131, %v4259
      %v4292 = vadd.f32 %v4132, %v4260
      %v4293 = vadd.f32 %v4133, %v4261
      %v4294 = vadd.f32 %v4134, %v4262
      %v4295 = vadd.f32 %v4135, %v4263
      %v4296 = vadd.f32 %v4136, %v4264
      %v4297 = vadd.f32 %v4137, %v4265
      %v4298 = vadd.f32 %v4138, %v4266
      %v4299 = vadd.f32 %v4139, %v4267
      %v4300 = vadd.f32 %v4140, %v4268
      %v4301 = vadd.f32 %v4141, %v4269
      %v4302 = vadd.f32 %v4142, %v4270
      %v4303 = vadd.f32 %v4143, %v4271
      %v4304 = vadd.f32 %v4144, %v4272
      %v4305 = vadd.f32 %v4145, %v4273
      %v4306 = vadd.f32 %v4146, %v4274
      %v4307 = vadd.f32 %v4147, %v4275
      %v4308 = vadd.f32 %v4148, %v4276
      %v4309 = vadd.f32 %v4149, %v4277
      %v4310 = vadd.f32 %v4150, %v4278
      %v4311 = vmul.f32 %v4279, 0.7978846
      %v4312 = vmul.f32 %v4280, 0.7978846
      %v4313 = vmul.f32 %v4281, 0.7978846
      %v4314 = vmul.f32 %v4282, 0.7978846
      %v4315 = vmul.f32 %v4283, 0.7978846
      %v4316 = vmul.f32 %v4284, 0.7978846
      %v4317 = vmul.f32 %v4285, 0.7978846
      %v4318 = vmul.f32 %v4286, 0.7978846
      %v4319 = vmul.f32 %v4287, 0.7978846
      %v4320 = vmul.f32 %v4288, 0.7978846
      %v4321 = vmul.f32 %v4289, 0.7978846
      %v4322 = vmul.f32 %v4290, 0.7978846
      %v4323 = vmul.f32 %v4291, 0.7978846
      %v4324 = vmul.f32 %v4292, 0.7978846
      %v4325 = vmul.f32 %v4293, 0.7978846
      %v4326 = vmul.f32 %v4294, 0.7978846
      %v4327 = vmul.f32 %v4295, 0.7978846
      %v4328 = vmul.f32 %v4296, 0.7978846
      %v4329 = vmul.f32 %v4297, 0.7978846
      %v4330 = vmul.f32 %v4298, 0.7978846
      %v4331 = vmul.f32 %v4299, 0.7978846
      %v4332 = vmul.f32 %v4300, 0.7978846
      %v4333 = vmul.f32 %v4301, 0.7978846
      %v4334 = vmul.f32 %v4302, 0.7978846
      %v4335 = vmul.f32 %v4303, 0.7978846
      %v4336 = vmul.f32 %v4304, 0.7978846
      %v4337 = vmul.f32 %v4305, 0.7978846
      %v4338 = vmul.f32 %v4306, 0.7978846
      %v4339 = vmul.f32 %v4307, 0.7978846
      %v4340 = vmul.f32 %v4308, 0.7978846
      %v4341 = vmul.f32 %v4309, 0.7978846
      %v4342 = vmul.f32 %v4310, 0.7978846
      %v4343 = vtanh.pop %v4311
      %v4344 = vtanh.pop %v4312
      %v4345 = vtanh.pop %v4313
      %v4346 = vtanh.pop %v4314
      %v4347 = vtanh.pop %v4315
      %v4348 = vtanh.pop %v4316
      %v4349 = vtanh.pop %v4317
      %v4350 = vtanh.pop %v4318
      %v4351 = vtanh.pop %v4319
      %v4352 = vtanh.pop %v4320
      %v4353 = vtanh.pop %v4321
      %v4354 = vtanh.pop %v4322
      %v4355 = vtanh.pop %v4323
      %v4356 = vtanh.pop %v4324
      %v4357 = vtanh.pop %v4325
      %v4358 = vtanh.pop %v4326
      %v4359 = vtanh.pop %v4327
      %v4360 = vtanh.pop %v4328
      %v4361 = vtanh.pop %v4329
      %v4362 = vtanh.pop %v4330
      %v4363 = vtanh.pop %v4331
      %v4364 = vtanh.pop %v4332
      %v4365 = vtanh.pop %v4333
      %v4366 = vtanh.pop %v4334
      %v4367 = vtanh.pop %v4335
      %v4368 = vtanh.pop %v4336
      %v4369 = vtanh.pop %v4337
      %v4370 = vtanh.pop %v4338
      %v4371 = vtanh.pop %v4339
      %v4372 = vtanh.pop %v4340
      %v4373 = vtanh.pop %v4341
      %v4374 = vtanh.pop %v4342
      %v4375 = vadd.f32 %v4343, 1.0
      %v4376 = vadd.f32 %v4344, 1.0
      %v4377 = vadd.f32 %v4345, 1.0
      %v4378 = vadd.f32 %v4346, 1.0
      %v4379 = vadd.f32 %v4347, 1.0
      %v4380 = vadd.f32 %v4348, 1.0
      %v4381 = vadd.f32 %v4349, 1.0
      %v4382 = vadd.f32 %v4350, 1.0
      %v4383 = vadd.f32 %v4351, 1.0
      %v4384 = vadd.f32 %v4352, 1.0
      %v4385 = vadd.f32 %v4353, 1.0
      %v4386 = vadd.f32 %v4354, 1.0
      %v4387 = vadd.f32 %v4355, 1.0
      %v4388 = vadd.f32 %v4356, 1.0
      %v4389 = vadd.f32 %v4357, 1.0
      %v4390 = vadd.f32 %v4358, 1.0
      %v4391 = vadd.f32 %v4359, 1.0
      %v4392 = vadd.f32 %v4360, 1.0
      %v4393 = vadd.f32 %v4361, 1.0
      %v4394 = vadd.f32 %v4362, 1.0
      %v4395 = vadd.f32 %v4363, 1.0
      %v4396 = vadd.f32 %v4364, 1.0
      %v4397 = vadd.f32 %v4365, 1.0
      %v4398 = vadd.f32 %v4366, 1.0
      %v4399 = vadd.f32 %v4367, 1.0
      %v4400 = vadd.f32 %v4368, 1.0
      %v4401 = vadd.f32 %v4369, 1.0
      %v4402 = vadd.f32 %v4370, 1.0
      %v4403 = vadd.f32 %v4371, 1.0
      %v4404 = vadd.f32 %v4372, 1.0
      %v4405 = vadd.f32 %v4373, 1.0
      %v4406 = vadd.f32 %v4374, 1.0
      %v4407 = vmul.f32 %v4151, %v4375
      %v4408 = vmul.f32 %v4152, %v4376
      %v4409 = vmul.f32 %v4153, %v4377
      %v4410 = vmul.f32 %v4154, %v4378
      %v4411 = vmul.f32 %v4155, %v4379
      %v4412 = vmul.f32 %v4156, %v4380
      %v4413 = vmul.f32 %v4157, %v4381
      %v4414 = vmul.f32 %v4158, %v4382
      %v4415 = vmul.f32 %v4159, %v4383
      %v4416 = vmul.f32 %v4160, %v4384
      %v4417 = vmul.f32 %v4161, %v4385
      %v4418 = vmul.f32 %v4162, %v4386
      %v4419 = vmul.f32 %v4163, %v4387
      %v4420 = vmul.f32 %v4164, %v4388
      %v4421 = vmul.f32 %v4165, %v4389
      %v4422 = vmul.f32 %v4166, %v4390
      %v4423 = vmul.f32 %v4167, %v4391
      %v4424 = vmul.f32 %v4168, %v4392
      %v4425 = vmul.f32 %v4169, %v4393
      %v4426 = vmul.f32 %v4170, %v4394
      %v4427 = vmul.f32 %v4171, %v4395
      %v4428 = vmul.f32 %v4172, %v4396
      %v4429 = vmul.f32 %v4173, %v4397
      %v4430 = vmul.f32 %v4174, %v4398
      %v4431 = vmul.f32 %v4175, %v4399
      %v4432 = vmul.f32 %v4176, %v4400
      %v4433 = vmul.f32 %v4177, %v4401
      %v4434 = vmul.f32 %v4178, %v4402
      %v4435 = vmul.f32 %v4179, %v4403
      %v4436 = vmul.f32 %v4180, %v4404
      %v4437 = vmul.f32 %v4181, %v4405
      %v4438 = vmul.f32 %v4182, %v4406
      %v4439 = vld [vmem:[%s5] sm:$0xff]
      %v4440 = vld [vmem:[%s5 + $0x8] sm:$0xff]
      %v4441 = vld [vmem:[%s5 + $0x10] sm:$0xff]
      %v4442 = vld [vmem:[%s5 + $0x18] sm:$0xff]
      %v4443 = vld [vmem:[%s5 + $0x20] sm:$0xff]
      %v4444 = vld [vmem:[%s5 + $0x28] sm:$0xff]
      %v4445 = vld [vmem:[%s5 + $0x30] sm:$0xff]
      %v4446 = vld [vmem:[%s5 + $0x38] sm:$0xff]
      %v4447 = vpack.c.bf16 %v4440, %v4439
      %v4448 = vpack.c.bf16 %v4442, %v4441
      %v4449 = vpack.c.bf16 %v4444, %v4443
      %v4450 = vpack.c.bf16 %v4446, %v4445
      %v4451 = vpack.c.bf16 %v4407, %v4407
      %v4452 = vpack.c.bf16 %v4408, %v4408
      %v4453 = vpack.c.bf16 %v4409, %v4409
      %v4454 = vpack.c.bf16 %v4410, %v4410
      %v4455 = vpack.c.bf16 %v4411, %v4411
      %v4456 = vpack.c.bf16 %v4412, %v4412
      %v4457 = vpack.c.bf16 %v4413, %v4413
      %v4458 = vpack.c.bf16 %v4414, %v4414
      %v4459 = vpack.c.bf16 %v4415, %v4415
      %v4460 = vpack.c.bf16 %v4416, %v4416
      %v4461 = vpack.c.bf16 %v4417, %v4417
      %v4462 = vpack.c.bf16 %v4418, %v4418
      %v4463 = vpack.c.bf16 %v4419, %v4419
      %v4464 = vpack.c.bf16 %v4420, %v4420
      %v4465 = vpack.c.bf16 %v4421, %v4421
      %v4466 = vpack.c.bf16 %v4422, %v4422
      %v4467 = vpack.c.bf16 %v4423, %v4423
      %v4468 = vpack.c.bf16 %v4424, %v4424
      %v4469 = vpack.c.bf16 %v4425, %v4425
      %v4470 = vpack.c.bf16 %v4426, %v4426
      %v4471 = vpack.c.bf16 %v4427, %v4427
      %v4472 = vpack.c.bf16 %v4428, %v4428
      %v4473 = vpack.c.bf16 %v4429, %v4429
      %v4474 = vpack.c.bf16 %v4430, %v4430
      %v4475 = vpack.c.bf16 %v4431, %v4431
      %v4476 = vpack.c.bf16 %v4432, %v4432
      %v4477 = vpack.c.bf16 %v4433, %v4433
      %v4478 = vpack.c.bf16 %v4434, %v4434
      %v4479 = vpack.c.bf16 %v4435, %v4435
      %v4480 = vpack.c.bf16 %v4436, %v4436
      %v4481 = vpack.c.bf16 %v4437, %v4437
      %v4482 = vpack.c.bf16 %v4438, %v4438
      %v4483 = vld [vmem:[%s6] sm:$0xff]
      %v4484 = vld [vmem:[%s6 + $0x8] sm:$0xff]
      %v4485 = vld [vmem:[%s6 + $0x10] sm:$0xff]
      %v4486 = vld [vmem:[%s6 + $0x18] sm:$0xff]
      %v4487 = vld [vmem:[%s6 + $0x20] sm:$0xff]
      %v4488 = vld [vmem:[%s6 + $0x28] sm:$0xff]
      %v4489 = vld [vmem:[%s6 + $0x30] sm:$0xff]
      %v4490 = vld [vmem:[%s6 + $0x38] sm:$0xff]
      %4492 = vset.pattern.permute.xlu0 0
      %4493 = vperm.xlu0 %4492, %v4483
      %v4494 = vpop.permute.xlu0 %4493
      %4497 = vset.pattern.permute.xlu0 0
      %4498 = vperm.xlu0 %4497, %v4484
      %v4499 = vpop.permute.xlu0 %4498
      %4502 = vset.pattern.permute.xlu0 0
      %4503 = vperm.xlu0 %4502, %v4485
      %v4504 = vpop.permute.xlu0 %4503
      %4507 = vset.pattern.permute.xlu0 0
      %4508 = vperm.xlu0 %4507, %v4486
      %v4509 = vpop.permute.xlu0 %4508
      %4512 = vset.pattern.permute.xlu0 0
      %4513 = vperm.xlu0 %4512, %v4487
      %v4514 = vpop.permute.xlu0 %4513
      %4517 = vset.pattern.permute.xlu0 0
      %4518 = vperm.xlu0 %4517, %v4488
      %v4519 = vpop.permute.xlu0 %4518
      %4522 = vset.pattern.permute.xlu0 0
      %4523 = vperm.xlu0 %4522, %v4489
      %v4524 = vpop.permute.xlu0 %4523
      %4527 = vset.pattern.permute.xlu0 0
      %4528 = vperm.xlu0 %4527, %v4490
      %v4529 = vpop.permute.xlu0 %4528
      %v4563 = vunpack.c.l.b16 %v4451
      %v4564 = vunpack.c.l.b16 %v4452
      %v4565 = vunpack.c.l.b16 %v4453
      %v4566 = vunpack.c.l.b16 %v4454
      %v4567 = vunpack.c.l.b16 %v4455
      %v4568 = vunpack.c.l.b16 %v4456
      %v4569 = vunpack.c.l.b16 %v4457
      %v4570 = vunpack.c.l.b16 %v4458
      %v4571 = vunpack.c.l.b16 %v4459
      %v4572 = vunpack.c.l.b16 %v4460
      %v4573 = vunpack.c.l.b16 %v4461
      %v4574 = vunpack.c.l.b16 %v4462
      %v4575 = vunpack.c.l.b16 %v4463
      %v4576 = vunpack.c.l.b16 %v4464
      %v4577 = vunpack.c.l.b16 %v4465
      %v4578 = vunpack.c.l.b16 %v4466
      %v4579 = vunpack.c.l.b16 %v4467
      %v4580 = vunpack.c.l.b16 %v4468
      %v4581 = vunpack.c.l.b16 %v4469
      %v4582 = vunpack.c.l.b16 %v4470
      %v4583 = vunpack.c.l.b16 %v4471
      %v4584 = vunpack.c.l.b16 %v4472
      %v4585 = vunpack.c.l.b16 %v4473
      %v4586 = vunpack.c.l.b16 %v4474
      %v4587 = vunpack.c.l.b16 %v4475
      %v4588 = vunpack.c.l.b16 %v4476
      %v4589 = vunpack.c.l.b16 %v4477
      %v4590 = vunpack.c.l.b16 %v4478
      %v4591 = vunpack.c.l.b16 %v4479
      %v4592 = vunpack.c.l.b16 %v4480
      %v4593 = vunpack.c.l.b16 %v4481
      %v4594 = vunpack.c.l.b16 %v4482
      %v4595 = vrot.slane %v4564, 7
      %vm4596 = vcmask 1041409
      %v4597 = vsel %vm4596, %v4595, %v4563
      %v4598 = vrot.slane %v4565, 6
      %vm4599 = vcmask 1042434
      %v4600 = vsel %vm4599, %v4598, %v4597
      %v4601 = vrot.slane %v4566, 5
      %vm4602 = vcmask 1043459
      %v4603 = vsel %vm4602, %v4601, %v4600
      %v4604 = vrot.slane %v4567, 4
      %vm4605 = vcmask 1044484
      %v4606 = vsel %vm4605, %v4604, %v4603
      %v4607 = vrot.slane %v4568, 3
      %vm4608 = vcmask 1045509
      %v4609 = vsel %vm4608, %v4607, %v4606
      %v4610 = vrot.slane %v4569, 2
      %vm4611 = vcmask 1046534
      %v4612 = vsel %vm4611, %v4610, %v4609
      %v4613 = vrot.slane %v4570, 1
      %vm4614 = vcmask 1047559
      %v4615 = vsel %vm4614, %v4613, %v4612
      %v4616 = vrot.slane %v4572, 7
      %v4617 = vsel %vm4596, %v4616, %v4571
      %v4618 = vrot.slane %v4573, 6
      %v4619 = vsel %vm4599, %v4618, %v4617
      %v4620 = vrot.slane %v4574, 5
      %v4621 = vsel %vm4602, %v4620, %v4619
      %v4622 = vrot.slane %v4575, 4
      %v4623 = vsel %vm4605, %v4622, %v4621
      %v4624 = vrot.slane %v4576, 3
      %v4625 = vsel %vm4608, %v4624, %v4623
      %v4626 = vrot.slane %v4577, 2
      %v4627 = vsel %vm4611, %v4626, %v4625
      %v4628 = vrot.slane %v4578, 1
      %v4629 = vsel %vm4614, %v4628, %v4627
      %v4630 = vrot.slane %v4580, 7
      %v4631 = vsel %vm4596, %v4630, %v4579
      %v4632 = vrot.slane %v4581, 6
      %v4633 = vsel %vm4599, %v4632, %v4631
      %v4634 = vrot.slane %v4582, 5
      %v4635 = vsel %vm4602, %v4634, %v4633
      %v4636 = vrot.slane %v4583, 4
      %v4637 = vsel %vm4605, %v4636, %v4635
      %v4638 = vrot.slane %v4584, 3
      %v4639 = vsel %vm4608, %v4638, %v4637
      %v4640 = vrot.slane %v4585, 2
      %v4641 = vsel %vm4611, %v4640, %v4639
      %v4642 = vrot.slane %v4586, 1
      %v4643 = vsel %vm4614, %v4642, %v4641
      %v4644 = vrot.slane %v4588, 7
      %v4645 = vsel %vm4596, %v4644, %v4587
      %v4646 = vrot.slane %v4589, 6
      %v4647 = vsel %vm4599, %v4646, %v4645
      %v4648 = vrot.slane %v4590, 5
      %v4649 = vsel %vm4602, %v4648, %v4647
      %v4650 = vrot.slane %v4591, 4
      %v4651 = vsel %vm4605, %v4650, %v4649
      %v4652 = vrot.slane %v4592, 3
      %v4653 = vsel %vm4608, %v4652, %v4651
      %v4654 = vrot.slane %v4593, 2
      %v4655 = vsel %vm4611, %v4654, %v4653
      %v4656 = vrot.slane %v4594, 1
      %v4657 = vsel %vm4614, %v4656, %v4655
      %v4658 = vpack.c.b16 %v4629, %v4615
      %v4659 = vpack.c.b16 %v4657, %v4643
      %vm4662 = vcmask 261120
      %v4664 = vsel %vm4662, %v4447, 0
      %v4667 = vsel %vm4662, %v4448, 0
      %v4670 = vsel %vm4662, %v4449, 0
      %v4673 = vsel %vm4662, %v4450, 0
      %4675 = vmatprep.subr.bf16.mxu0 0
      %4676 = vmatpush1.bf16.msra.mxu0 %v4658
      %4677 = vmatprep.subr.bf16.mxu0 0
      %4678 = vmatpush1.bf16.msra.mxu0 %v4659
      %4679 = vmatprep.subr.bf16.mxu0 0
      %4680 = vmatpush1.bf16.msra.mxu0 0
      %4681 = vmatprep.subr.bf16.mxu0 0
      %4682 = vmatpush1.bf16.msra.mxu0 0
      %4683 = vmatprep.subr.bf16.mxu0 0
      %4684 = vmatpush1.bf16.msra.mxu0 0
      %4685 = vmatprep.subr.bf16.mxu0 0
      %4686 = vmatpush1.bf16.msra.mxu0 0
      %4687 = vmatprep.subr.bf16.mxu0 0
      %4688 = vmatpush1.bf16.msra.mxu0 0
      %4689 = vmatprep.subr.bf16.mxu0 0
      %4690 = vmatpush1.bf16.msra.mxu0 0
      %4691 = vmatprep.subr.bf16.mxu0 0
      %4692 = vmatpush1.bf16.msra.mxu0 0
      %4693 = vmatprep.subr.bf16.mxu0 0
      %4694 = vmatpush1.bf16.msra.mxu0 0
      %4695 = vmatprep.subr.bf16.mxu0 0
      %4696 = vmatpush1.bf16.msra.mxu0 0
      %4697 = vmatprep.subr.bf16.mxu0 0
      %4698 = vmatpush1.bf16.msra.mxu0 0
      %4699 = vmatprep.subr.bf16.mxu0 0
      %4700 = vmatpush1.bf16.msra.mxu0 0
      %4701 = vmatprep.subr.bf16.mxu0 0
      %4702 = vmatpush1.bf16.msra.mxu0 0
      %4703 = vmatprep.subr.bf16.mxu0 0
      %4704 = vmatpush1.bf16.msra.mxu0 0
      %4705 = vmatprep.subr.bf16.mxu0 0
      %4706 = vmatpush1.bf16.msra.mxu0 0
      %4707 = vmatprep.mubr.bf16.mxu0 0
      %4708 = vmatmul.mubr.bf16.gmra.mrb[0].mxu0 %v4664
      %v4709 = vpop.f32.mrb[0].mxu0
      %v4710 = vadd.f32 %v4494, %v4709
      %v4711 = vpop.f32.mrb[0].mxu0
      %v4712 = vpop.f32.mrb[0].mxu0
      %v4713 = vadd.f32 %v4499, %v4712
      %v4714 = vpop.f32.mrb[0].mxu0
      %4715 = vmatprep.mubr.bf16.mxu0 0
      %4716 = vmatmul.mubr.bf16.gmra.mrb[0].mxu0 %v4667
      %v4717 = vpop.f32.mrb[0].mxu0
      %v4718 = vadd.f32 %v4504, %v4717
      %v4719 = vpop.f32.mrb[0].mxu0
      %v4720 = vpop.f32.mrb[0].mxu0
      %v4721 = vadd.f32 %v4509, %v4720
      %v4722 = vpop.f32.mrb[0].mxu0
      %4723 = vmatprep.mubr.bf16.mxu0 0
      %4724 = vmatmul.mubr.bf16.gmra.mrb[0].mxu0 %v4670
      %v4725 = vpop.f32.mrb[0].mxu0
      %v4726 = vadd.f32 %v4514, %v4725
      %v4727 = vpop.f32.mrb[0].mxu0
      %v4728 = vpop.f32.mrb[0].mxu0
      %v4729 = vadd.f32 %v4519, %v4728
      %v4730 = vpop.f32.mrb[0].mxu0
      %4731 = vmatprep.mubr.bf16.mxu0 0
      %4732 = vmatmul.mubr.bf16.gmra.mrb[0].mxu0 %v4673
      %v4733 = vpop.f32.mrb[0].mxu0
      %v4734 = vadd.f32 %v4524, %v4733
      %v4735 = vpop.f32.mrb[0].mxu0
      %v4736 = vpop.f32.mrb[0].mxu0
      %v4737 = vadd.f32 %v4529, %v4736
      %v4738 = vpop.f32.mrb[0].mxu0
      %4739 = vdwg.mxu0
      %v4740 = vxor.u32 %v4726, 2147483648
      %v4741 = vxor.u32 %v4729, 2147483648
      %v4742 = vxor.u32 %v4734, 2147483648
      %v4743 = vxor.u32 %v4737, 2147483648
      %v4744 = vmul.f32 %v4740, 1.442695
      %v4745 = vpow.pop %v4744
      %v4746 = vmul.f32 %v4741, 1.442695
      %v4747 = vpow.pop %v4746
      %v4748 = vmul.f32 %v4742, 1.442695
      %v4749 = vpow.pop %v4748
      %v4750 = vmul.f32 %v4743, 1.442695
      %v4751 = vpow.pop %v4750
      %v4752 = vadd.f32 %v4745, 1.0
      %v4753 = vadd.f32 %v4747, 1.0
      %v4754 = vadd.f32 %v4749, 1.0
      %v4755 = vadd.f32 %v4751, 1.0
      %v4756 = vrcp.pop %v4752
      %v4757 = vmul.f32 1.0, %v4756
      %v4758 = vrcp.pop %v4753
      %v4759 = vmul.f32 1.0, %v4758
      %v4760 = vrcp.pop %v4754
      %v4761 = vmul.f32 1.0, %v4760
      %v4762 = vrcp.pop %v4755
      %v4763 = vmul.f32 1.0, %v4762
      %v4764 = vmul.f32 %v4710, %v4757
      %v4765 = vmul.f32 %v4713, %v4759
      %v4766 = vmul.f32 %v4718, %v4761
      %v4767 = vmul.f32 %v4721, %v4763
      %v4768 = vadd.f32 %v4764, %v330
      %v4769 = vadd.f32 %v4765, %v331
      %v4770 = vadd.f32 %v4766, %v332
      %v4771 = vadd.f32 %v4767, %v333
      %4772 = vst [vmem:[%s325] sm:$0xff] %v4768
      %4773 = vst [vmem:[%s325 + $0x8] sm:$0xff] %v4769
      %4774 = vst [vmem:[%s325 + $0x10] sm:$0xff] %v4770
      %4775 = vst [vmem:[%s325 + $0x18] sm:$0xff] %v4771
      %v4776 = vmul.f32 %v4768, %v4768
      %v4777 = vmul.f32 %v4769, %v4769
      %v4778 = vmul.f32 %v4770, %v4770
      %v4779 = vmul.f32 %v4771, %v4771
      %v4780 = vadd.f32 %v4776, %v4777
      %v4781 = vadd.f32 %v4780, %v4778
      %v4782 = vadd.f32 %v4781, %v4779
      %v4783 = vrot.slane %v4782, 4
      %v4784 = vadd.f32 %v4782, %v4783
      %v4785 = vrot.slane %v4784, 2
      %v4786 = vadd.f32 %v4784, %v4785
      %v4787 = vrot.slane %v4786, 1
      %v4788 = vadd.f32 %v4786, %v4787
      %v4789 = vmul.f32 %v4788, 0.03125
      %v4790 = vrsqrt.pop %v4789
      %v4791 = vmul.f32 %v4789, %v4790
      %vm4792 = vcmp.eq.f32.partialorder %v4789, inf
      %v4793 = vsel %vm4792, %v4789, %v4791
      %vm4794 = vcmp.eq.f32.partialorder %v4789, 0.0
      %v4795 = vand.u32 %v4789, 2147483648
      %v4796 = vsel %vm4794, %v4795, %v4793
      %v4797 = vadd.f32 %v4796, 1e-08
      %v4798 = vrcp.pop %v4797
      %4799 = vst [vmem:[%s328] sm:$0x1] %v4798
      %p4800 = scmp.lt.s32.totalorder %s20, 1
      %s4801 = scalar_select %p4800, %s20, 1
      %s4802 = smul.addr %s4801, 4
      %s4803 = smul.addr %s4802, 8
      %s4804 = scalar_lea.vmem %s7, %s4803
      %p4805 = scmp.lt.s32.totalorder %s20, 1
      %s4806 = scalar_select %p4805, %s20, 1
      %s4807 = scalar_lea.vmem %s8, %s4806
      // Predicated region
      $region49: #{janus_forward.5} parent=47 // pred_check
        %p4808 = pneg %p195
      $region50: #{janus_forward.5} parent=47 // pred_check_branch
        %4810 = sbr.rel (%p4808) target = $region52
      $region51: #{janus_forward.5} parent=47 // pred_region
        _
      $region52: #{janus_forward.5} parent=47 // pred_fallthru
        _
      // Predicated region
      $region53: #{janus_forward.5} parent=47 // pred_check
        %p4811 = pneg %p221
      $region54: #{janus_forward.5} parent=47 // pred_check_branch
        %4813 = sbr.rel (%p4811) target = $region56
      $region55: #{janus_forward.5} parent=47 // pred_region
        _
      $region56: #{janus_forward.5} parent=47 // pred_fallthru
        _
    $region48: #{janus_forward.5} parent=5 // pred_fallthru
      _
    %p4814 = scmp.le.s32.totalorder 2, %s15
    // Predicated region
    $region57: #{janus_forward.5} parent=5 // pred_check
      %p4815 = pneg %p4814
    $region58: #{janus_forward.5} parent=5 // pred_check_branch
      %4817 = sbr.rel (%p4815) target = $region60
    $region59: #{janus_forward.5} parent=5 // pred_region
      %s4818 = ssub.s32 %s15, 2
      // Predicated region
      $region61: #{janus_forward.5} parent=59 // pred_check
        %p4819 = pneg %p201
      $region62: #{janus_forward.5} parent=59 // pred_check_branch
        %4821 = sbr.rel (%p4819) target = $region64
      $region63: #{janus_forward.5} parent=59 // pred_region
        %p4822 = scmp.lt.s32.totalorder %s21, 1
        %s4823 = scalar_select %p4822, %s21, 1
        %s4824 = smul.addr %s4823, 4
        %s4825 = smul.addr %s4824, 8
        %s4826 = scalar_lea.vmem %s7, %s4825
      $region64: #{janus_forward.5} parent=59 // pred_fallthru
        _
      // Predicated region
      $region65: #{janus_forward.5} parent=59 // pred_check
        %p4827 = pneg %p227
      $region66: #{janus_forward.5} parent=59 // pred_check_branch
        %4829 = sbr.rel (%p4827) target = $region68
      $region67: #{janus_forward.5} parent=59 // pred_region
        %p4830 = scmp.lt.s32.totalorder %s21, 1
        %s4831 = scalar_select %p4830, %s21, 1
        %s4832 = scalar_lea.vmem %s8, %s4831
      $region68: #{janus_forward.5} parent=59 // pred_fallthru
        _
    $region60: #{janus_forward.5} parent=5 // pred_fallthru
      _
  $region6: #{janus_forward.5} parent=0 // loop_footer
    %s19 = sadd.s32 1, %s15
  $region7: #{janus_forward.5} parent=0 // loop_footer_branch
    %14 = sbr.rel target = $region3
  $region8: #{janus_forward.5} parent=0 // loop_exit
    _

// kernel: janus_forward.7
$region0: #{janus_forward.7}
  #allocation0 [shape = 'u32[]', space=smem, size = 0x4, offset = 0x4, fixed_abs, tag = 'smem constant byte address 0x4 - core index']
  #allocation1 [shape = 'u32[144,128]{1,0:T(1,128)}', space=vmem, size = 0x12000, scoped, tag = 'internal scratch']
  #allocation2 [shape = 'f32[2,32]{1,0:T(2,128)}', space=vmem, size = 0x400, scoped, tag = 'scratch operand']
  %s0 = inlined_call_operand.vmem [shape: f32[2,32,128], index: 0, kind: input, shape index: {}]
  %s1 = inlined_call_operand.vmem [shape: f32[32,10], index: 1, kind: input, shape index: {}]
  %s2 = inlined_call_operand.vmem [shape: f32[1,10], index: 2, kind: input, shape index: {}]
  %s3 = inlined_call_operand.hbm [shape: f32[2,10], index: 3, kind: output, shape index: {}]
  %s4 = sld [smem:[#allocation0]]
  $region30: #{janus_forward.7} parent=0
    _
  %s6 = ssub.s32 1, %s4
  %s7 = scalar_select 0, %s6, %s4
  $region1: #{janus_forward.7} parent=0
    #allocation3 [shape = 'u8[1024]{0}', space=vmem, size = 0x400, scoped, tag = 'output window, operand 0, single buffered']
    #allocation4 [shape = 's32[1]{0}', space=sflag, size = 0x4, scoped, tag = 'scoped memory for janus_forward.7']
    %8 = vsyncpa [#allocation4], 0
    // Predicated region
    $region2: #{janus_forward.7} parent=1 // pred_check
      _
    $region3: #{janus_forward.7} parent=1 // pred_check_branch
      %10 = sbr.rel (0) target = $region5
    $region4: #{janus_forward.7} parent=1 // pred_region
      _
    $region5: #{janus_forward.7} parent=1 // pred_fallthru
      _
    // Predicated region
    $region6: #{janus_forward.7} parent=1 // pred_check
      _
    $region7: #{janus_forward.7} parent=1 // pred_check_branch
      %12 = sbr.rel (0) target = $region9
    $region8: #{janus_forward.7} parent=1 // pred_region
      _
    $region9: #{janus_forward.7} parent=1 // pred_fallthru
      _
    // Predicated region
    $region10: #{janus_forward.7} parent=1 // pred_check
      _
    $region11: #{janus_forward.7} parent=1 // pred_check_branch
      %14 = sbr.rel (0) target = $region13
    $region12: #{janus_forward.7} parent=1 // pred_region
      _
    $region13: #{janus_forward.7} parent=1 // pred_fallthru
      _
    %p15 = scmp.eq.s32.totalorder 0, 0
    // Predicated region
    $region14: #{janus_forward.7} parent=1 // pred_check
      %p16 = pneg %p15
    $region15: #{janus_forward.7} parent=1 // pred_check_branch
      %18 = sbr.rel (%p16) target = $region17
    $region16: #{janus_forward.7} parent=1 // pred_region
      %vm19 = vcmask 254976
      %20 = vst.msk [vmem:[#allocation2] sm:$0x3] %vm19, 0.0
    $region17: #{janus_forward.7} parent=1 // pred_fallthru
      _
    %v21 = vld [vmem:[#allocation2] sm:$0x3]
    %v22 = vld [vmem:[%s0] sm:$0xff]
    %v23 = vld [vmem:[%s0 + $0x8] sm:$0xff]
    %v24 = vld [vmem:[%s0 + $0x10] sm:$0xff]
    %v25 = vld [vmem:[%s0 + $0x18] sm:$0xff]
    %v26 = vld [vmem:[%s0 + $0x20] sm:$0xff]
    %v27 = vld [vmem:[%s0 + $0x28] sm:$0xff]
    %v28 = vld [vmem:[%s0 + $0x30] sm:$0xff]
    %v29 = vld [vmem:[%s0 + $0x38] sm:$0xff]
    %30 = vadd.xlane.f32.xlu0 %v22
    %v31 = vpop.xlane.xlu0 %30
    %32 = vadd.xlane.f32.xlu0 %v23
    %v33 = vpop.xlane.xlu0 %32
    %34 = vadd.xlane.f32.xlu0 %v24
    %v35 = vpop.xlane.xlu0 %34
    %36 = vadd.xlane.f32.xlu0 %v25
    %v37 = vpop.xlane.xlu0 %36
    %38 = vadd.xlane.f32.xlu0 %v26
    %v39 = vpop.xlane.xlu0 %38
    %40 = vadd.xlane.f32.xlu0 %v27
    %v41 = vpop.xlane.xlu0 %40
    %42 = vadd.xlane.f32.xlu0 %v28
    %v43 = vpop.xlane.xlu0 %42
    %44 = vadd.xlane.f32.xlu0 %v29
    %v45 = vpop.xlane.xlu0 %44
    %v54 = vlaneseq
    %v55 = vand.u32 %v54, 127
    %v56 = vlaneseq
    %v57 = vshrl.u32 %v56, 7
    %v58 = vsub.s32 %v55, %v57
    %v59 = vrot.slane %v31, %v58
    %v60 = vadd.s32 %v55, 4294967288
    %v61 = vlaneseq
    %v62 = vshrl.u32 %v61, 7
    %v63 = vsub.s32 %v60, %v62
    %v64 = vrot.slane %v33, %v63
    %vm65 = vcmask 130112
    %v66 = vsel %vm65, %v64, %v59
    %v67 = vadd.s32 %v55, 4294967280
    %v68 = vlaneseq
    %v69 = vshrl.u32 %v68, 7
    %v70 = vsub.s32 %v67, %v69
    %v71 = vrot.slane %v35, %v70
    %vm72 = vcmask 195712
    %v73 = vsel %vm72, %v71, %v66
    %v74 = vadd.s32 %v55, 4294967272
    %v75 = vlaneseq
    %v76 = vshrl.u32 %v75, 7
    %v77 = vsub.s32 %v74, %v76
    %v78 = vrot.slane %v37, %v77
    %vm79 = vcmask 261312
    %v80 = vsel %vm79, %v78, %v73
    %v81 = vlaneseq
    %v82 = vshrl.u32 %v81, 7
    %v83 = vsub.s32 %v55, %v82
    %v84 = vrot.slane %v39, %v83
    %v85 = vlaneseq
    %v86 = vshrl.u32 %v85, 7
    %v87 = vsub.s32 %v60, %v86
    %v88 = vrot.slane %v41, %v87
    %v89 = vsel %vm65, %v88, %v84
    %v90 = vlaneseq
    %v91 = vshrl.u32 %v90, 7
    %v92 = vsub.s32 %v67, %v91
    %v93 = vrot.slane %v43, %v92
    %v94 = vsel %vm72, %v93, %v89
    %v95 = vlaneseq
    %v96 = vshrl.u32 %v95, 7
    %v97 = vsub.s32 %v74, %v96
    %v98 = vrot.slane %v45, %v97
    %v99 = vsel %vm79, %v98, %v94
    %vm100 = vcmask 1041409
    %v101 = vsel %vm100, %v99, %v80
    %v103 = vadd.f32 %v21, %v101
    %vm104 = vcmask 254976
    %105 = vst.msk [vmem:[#allocation2] sm:$0x3] %vm104, %v103
    // Predicated region
    $region18: #{janus_forward.7} parent=1 // pred_check
      %p106 = pneg %p15
    $region19: #{janus_forward.7} parent=1 // pred_check_branch
      %108 = sbr.rel (%p106) target = $region21
    $region20: #{janus_forward.7} parent=1 // pred_region
      %v109 = vld [vmem:[#allocation2] sm:$0x3]
      %v110 = vmul.f32 %v109, 0.0078125
      %v111 = vld [vmem:[%s1] sm:$0xff]
      %v112 = vld [vmem:[%s1 + $0x8] sm:$0xff]
      %v113 = vld [vmem:[%s1 + $0x10] sm:$0xff]
      %v114 = vld [vmem:[%s1 + $0x18] sm:$0xff]
      %v115 = vld [vmem:[%s2] sm:$0x1]
      %v117 = vlaneseq
      %v118 = vshrl.u32 %v117, 7
      %v119 = vsub.s32 0, %v118
      %v120 = vrot.slane %v115, %v119
      %vm122 = vcmask 261120
      %v124 = vsel %vm122, %v110, 0
      %126 = vmatprep.subr.mxu0 0.0
      %127 = vmatpush1.msra.mxu0 %v111
      %128 = vmatprep.subr.mxu0 0.0
      %129 = vmatpush1.msra.mxu0 %v112
      %130 = vmatprep.subr.mxu0 0.0
      %131 = vmatpush1.msra.mxu0 %v113
      %132 = vmatprep.subr.mxu0 0.0
      %133 = vmatpush1.msra.mxu0 %v114
      %134 = vmatprep.subr.mxu0 0.0
      %135 = vmatpush1.msra.mxu0 0.0
      %136 = vmatprep.subr.mxu0 0.0
      %137 = vmatpush1.msra.mxu0 0.0
      %138 = vmatprep.subr.mxu0 0.0
      %139 = vmatpush1.msra.mxu0 0.0
      %140 = vmatprep.subr.mxu0 0.0
      %141 = vmatpush1.msra.mxu0 0.0
      %142 = vmatprep.subr.mxu0 0.0
      %143 = vmatpush1.msra.mxu0 0.0
      %144 = vmatprep.subr.mxu0 0.0
      %145 = vmatpush1.msra.mxu0 0.0
      %146 = vmatprep.subr.mxu0 0.0
      %147 = vmatpush1.msra.mxu0 0.0
      %148 = vmatprep.subr.mxu0 0.0
      %149 = vmatpush1.msra.mxu0 0.0
      %150 = vmatprep.subr.mxu0 0.0
      %151 = vmatpush1.msra.mxu0 0.0
      %152 = vmatprep.subr.mxu0 0.0
      %153 = vmatpush1.msra.mxu0 0.0
      %154 = vmatprep.subr.mxu0 0.0
      %155 = vmatpush1.msra.mxu0 0.0
      %156 = vmatprep.subr.mxu0 0.0
      %157 = vmatpush1.msra.mxu0 0.0
      %158 = vmatprep.subr.mxu0 0.0
      %159 = vmatpush1.msra.mxu0 0.0
      %160 = vmatprep.subr.mxu0 0.0
      %161 = vmatpush1.msra.mxu0 0.0
      %162 = vmatprep.subr.mxu0 0.0
      %163 = vmatpush1.msra.mxu0 0.0
      %164 = vmatprep.subr.mxu0 0.0
      %165 = vmatpush1.msra.mxu0 0.0
      %166 = vmatprep.subr.mxu0 0.0
      %167 = vmatpush1.msra.mxu0 0.0
      %168 = vmatprep.subr.mxu0 0.0
      %169 = vmatpush1.msra.mxu0 0.0
      %170 = vmatprep.subr.mxu0 0.0
      %171 = vmatpush1.msra.mxu0 0.0
      %172 = vmatprep.subr.mxu0 0.0
      %173 = vmatpush1.msra.mxu0 0.0
      %174 = vmatprep.subr.mxu0 0.0
      %175 = vmatpush1.msra.mxu0 0.0
      %176 = vmatprep.subr.mxu0 0.0
      %177 = vmatpush1.msra.mxu0 0.0
      %178 = vmatprep.subr.mxu0 0.0
      %179 = vmatpush1.msra.mxu0 0.0
      %180 = vmatprep.subr.mxu0 0.0
      %181 = vmatpush1.msra.mxu0 0.0
      %182 = vmatprep.subr.mxu0 0.0
      %183 = vmatpush1.msra.mxu0 0.0
      %184 = vmatprep.subr.mxu0 0.0
      %185 = vmatpush1.msra.mxu0 0.0
      %186 = vmatprep.subr.mxu0 0.0
      %187 = vmatpush1.msra.mxu0 0.0
      %188 = vmatprep.subr.mxu0 0.0
      %189 = vmatpush1.msra.mxu0 0.0
      %190 = vmatprep.mubr.f32.mxu0 0.0
      %191 = vmatmul.mubr.f32.gmra.mrb[0].mxu0 %v124
      %v192 = vpop.f32.mrb[0].mxu0
      %v193 = vadd.f32 %v120, %v192
      %v194 = vpop.f32.mrb[0].mxu0
      %195 = vdwg.mxu0
      %vm196 = vcmask 74752
      %197 = vst.msk [vmem:[#allocation3] sm:$0x3] %vm196, %v193
    $region21: #{janus_forward.7} parent=1 // pred_fallthru
      _
    // Predicated region
    $region22: #{janus_forward.7} parent=1 // pred_check
      _
    $region23: #{janus_forward.7} parent=1 // pred_check_branch
      %199 = sbr.rel (0) target = $region25
    $region24: #{janus_forward.7} parent=1 // pred_region
      %s201 = ssub.s32 32, 32
      %202 = vsyncadd [#allocation4], %s201
      %s204 = sshll.u32 [#allocation3], 4
      %s205 = int_to_ptr.vmem [resolvable:$true] %s204
      %207 = dma.vmem_to_hbm [thread:$0]  %s205, 32, %s3, [#allocation4]
    $region25: #{janus_forward.7} parent=1 // pred_fallthru
      _
    // Predicated region
    $region26: #{janus_forward.7} parent=1 // pred_check
      _
    $region27: #{janus_forward.7} parent=1 // pred_check_branch
      %209 = sbr.rel (0) target = $region29
    $region28: #{janus_forward.7} parent=1 // pred_region
      %210 = dma.done [#allocation4], 32
    $region29: #{janus_forward.7} parent=1 // pred_fallthru
      _
    %211 = vsyncpa [#allocation4], 1

// kernel: janus_forward.6
$region0: #{janus_forward.6}
  #allocation0 [shape = 'u32[]', space=smem, size = 0x4, offset = 0x4, fixed_abs, tag = 'smem constant byte address 0x4 - core index']
  #allocation1 [shape = 'u32[144,128]{1,0:T(1,128)}', space=vmem, size = 0x12000, scoped, tag = 'internal scratch']
  %s0 = inlined_call_operand.vmem [shape: f32[2,32,128], index: 0, kind: input, shape index: {}]
  %s1 = inlined_call_operand.vmem [shape: f32[2,1,128], index: 1, kind: input, shape index: {}]
  %s2 = inlined_call_operand.vmem [shape: f32[32,1], index: 2, kind: input, shape index: {}]
  %s3 = inlined_call_operand.vmem [shape: bf16[32,128,128], index: 3, kind: input, shape index: {}]
  %s4 = inlined_call_operand.vmem [shape: f32[32,1], index: 4, kind: input, shape index: {}]
  %s5 = inlined_call_operand.vmem [shape: f32[64,32], index: 5, kind: input, shape index: {}]
  %s6 = inlined_call_operand.vmem [shape: f32[64,1], index: 6, kind: input, shape index: {}]
  %s7 = inlined_call_operand.vmem [shape: f32[2,32,128], index: 7, kind: output, shape index: {0}]
  %s8 = inlined_call_operand.hbm [shape: f32[2,1,128], index: 8, kind: output, shape index: {1}]
  %9 = xla_tuple %s7, %s8
  %s10 = sld [smem:[#allocation0]]
  $region69: #{janus_forward.6} parent=0
    _
  %s12 = ssub.s32 1, %s10
  %s13 = scalar_select 0, %s12, %s10
  $region1: #{janus_forward.6} parent=0
    #allocation2 [shape = 'u8[1024]{0}', space=vmem, size = 0x400, scoped, tag = 'output window, operand 1']
    #allocation3 [shape = 's32[2]{0}', space=sflag, size = 0x8, scoped, tag = 'scoped memory for janus_forward.6']
    %14 = vsyncpa [#allocation3], 0
    %s15 = scalar_lea.sflag [#allocation3], 1
    %16 = vsyncpa %s15, 0
    loop: start=0, step=1, limit=4
    $region2: #{janus_forward.6} parent=1 // loop_pre_header
      _
    $region3: #{janus_forward.6} parent=1 // loop_header
      %s18 = sphi 0, %s22
      %p19 = scmp.ge.s32.totalorder %s18, 4
      %s28 = sphi 0, %s30
      %s31 = sphi 0, %s28
      %s32 = sphi 0, %s31
      %s48 = sphi 0, %s32
      %s54 = sphi 0, %s56
      %s57 = sphi 0, %s54
      %s58 = sphi 0, %s57
      %s74 = sphi 0, %s58
      %s78 = sphi 0, %s78
      %s80 = sphi 0, %s78
      %s81 = sphi 0, %s80
      %s95 = sphi 0, %s81
      %s99 = sphi 0, %s99
      %s101 = sphi 0, %s99
      %s102 = sphi 0, %s101
      %s116 = sphi 0, %s102
      %s120 = sphi 0, %s120
      %s122 = sphi 0, %s120
      %s123 = sphi 0, %s122
      %s137 = sphi 0, %s123
      %s141 = sphi 0, %s141
      %s143 = sphi 0, %s141
      %s144 = sphi 0, %s143
      %s158 = sphi 0, %s144
      %s162 = sphi 0, %s162
      %s164 = sphi 0, %s162
      %s165 = sphi 0, %s164
      %s179 = sphi 0, %s165
      %s185 = sphi 0, %s187
      %s188 = sphi 0, %s185
      %s189 = sphi 0, %s188
      %s205 = sphi 0, %s189
      %s211 = sphi 0, %s213
      %s214 = sphi 0, %s211
      %s215 = sphi 0, %s214
      %s231 = sphi 0, %s215
    $region4: #{janus_forward.6} parent=1 // loop_header_branch
      %21 = sbr.rel (%p19) target = $region8
    $region5: #{janus_forward.6} parent=1 // loop_body
      %s23 = ssub.s32 %s18, 1
      %s24 = ssub.s32 %s18, 2
      %s25 = sadd.s32 %s18, 1
      %s26 = ssub.s32 %s18, %s25
      %p27 = scmp.eq.s32.totalorder %s26, 0
      %s29 = sadd.s32 %s28, 1
      %s30 = scalar_select %p27, %s28, %s29
      %p33 = pneg %p27
      %p34 = scmp.eq.s32.totalorder %s18, 1
      %p35 = por %p33, %p34
      %p36 = scmp.ne.s32.totalorder %s28, %s31
      %p37 = scmp.eq.s32.totalorder %s18, 0
      %p38 = por %p36, %p37
      %p39 = scmp.ne.s32.totalorder %s28, %s31
      %p40 = scmp.eq.s32.totalorder %s23, 1
      %p41 = por %p39, %p40
      %p42 = scmp.ne.s32.totalorder %s31, %s32
      %p43 = scmp.eq.s32.totalorder %s23, 0
      %p44 = por %p42, %p43
      %p45 = scmp.ne.s32.totalorder %s31, %s32
      %p46 = scmp.eq.s32.totalorder %s24, 1
      %p47 = por %p45, %p46
      %p49 = scmp.ne.s32.totalorder %s32, %s48
      %p50 = scmp.eq.s32.totalorder %s24, 0
      %p51 = por %p49, %p50
      %s52 = ssub.s32 %s18, %s25
      %p53 = scmp.eq.s32.totalorder %s52, 0
      %s55 = sadd.s32 %s54, 1
      %s56 = scalar_select %p53, %s54, %s55
      %p59 = pneg %p53
      %p60 = scmp.eq.s32.totalorder %s18, 1
      %p61 = por %p59, %p60
      %p62 = scmp.ne.s32.totalorder %s54, %s57
      %p63 = scmp.eq.s32.totalorder %s18, 0
      %p64 = por %p62, %p63
      %p65 = scmp.ne.s32.totalorder %s54, %s57
      %p66 = scmp.eq.s32.totalorder %s23, 1
      %p67 = por %p65, %p66
      %p68 = scmp.ne.s32.totalorder %s57, %s58
      %p69 = scmp.eq.s32.totalorder %s23, 0
      %p70 = por %p68, %p69
      %p71 = scmp.ne.s32.totalorder %s57, %s58
      %p72 = scmp.eq.s32.totalorder %s24, 1
      %p73 = por %p71, %p72
      %p75 = scmp.ne.s32.totalorder %s58, %s74
      %p76 = scmp.eq.s32.totalorder %s24, 0
      %p77 = por %p75, %p76
      %s79 = sadd.s32 %s78, 1
      %p82 = scmp.eq.s32.totalorder %s18, 1
      %p83 = scmp.ne.s32.totalorder %s78, %s80
      %p84 = scmp.eq.s32.totalorder %s18, 0
      %p85 = por %p83, %p84
      %p86 = scmp.ne.s32.totalorder %s78, %s80
      %p87 = scmp.eq.s32.totalorder %s23, 1
      %p88 = por %p86, %p87
      %p89 = scmp.ne.s32.totalorder %s80, %s81
      %p90 = scmp.eq.s32.totalorder %s23, 0
      %p91 = por %p89, %p90
      %p92 = scmp.ne.s32.totalorder %s80, %s81
      %p93 = scmp.eq.s32.totalorder %s24, 1
      %p94 = por %p92, %p93
      %p96 = scmp.ne.s32.totalorder %s81, %s95
      %p97 = scmp.eq.s32.totalorder %s24, 0
      %p98 = por %p96, %p97
      %s100 = sadd.s32 %s99, 1
      %p103 = scmp.eq.s32.totalorder %s18, 1
      %p104 = scmp.ne.s32.totalorder %s99, %s101
      %p105 = scmp.eq.s32.totalorder %s18, 0
      %p106 = por %p104, %p105
      %p107 = scmp.ne.s32.totalorder %s99, %s101
      %p108 = scmp.eq.s32.totalorder %s23, 1
      %p109 = por %p107, %p108
      %p110 = scmp.ne.s32.totalorder %s101, %s102
      %p111 = scmp.eq.s32.totalorder %s23, 0
      %p112 = por %p110, %p111
      %p113 = scmp.ne.s32.totalorder %s101, %s102
      %p114 = scmp.eq.s32.totalorder %s24, 1
      %p115 = por %p113, %p114
      %p117 = scmp.ne.s32.totalorder %s102, %s116
      %p118 = scmp.eq.s32.totalorder %s24, 0
      %p119 = por %p117, %p118
      %s121 = sadd.s32 %s120, 1
      %p124 = scmp.eq.s32.totalorder %s18, 1
      %p125 = scmp.ne.s32.totalorder %s120, %s122
      %p126 = scmp.eq.s32.totalorder %s18, 0
      %p127 = por %p125, %p126
      %p128 = scmp.ne.s32.totalorder %s120, %s122
      %p129 = scmp.eq.s32.totalorder %s23, 1
      %p130 = por %p128, %p129
      %p131 = scmp.ne.s32.totalorder %s122, %s123
      %p132 = scmp.eq.s32.totalorder %s23, 0
      %p133 = por %p131, %p132
      %p134 = scmp.ne.s32.totalorder %s122, %s123
      %p135 = scmp.eq.s32.totalorder %s24, 1
      %p136 = por %p134, %p135
      %p138 = scmp.ne.s32.totalorder %s123, %s137
      %p139 = scmp.eq.s32.totalorder %s24, 0
      %p140 = por %p138, %p139
      %s142 = sadd.s32 %s141, 1
      %p145 = scmp.eq.s32.totalorder %s18, 1
      %p146 = scmp.ne.s32.totalorder %s141, %s143
      %p147 = scmp.eq.s32.totalorder %s18, 0
      %p148 = por %p146, %p147
      %p149 = scmp.ne.s32.totalorder %s141, %s143
      %p150 = scmp.eq.s32.totalorder %s23, 1
      %p151 = por %p149, %p150
      %p152 = scmp.ne.s32.totalorder %s143, %s144
      %p153 = scmp.eq.s32.totalorder %s23, 0
      %p154 = por %p152, %p153
      %p155 = scmp.ne.s32.totalorder %s143, %s144
      %p156 = scmp.eq.s32.totalorder %s24, 1
      %p157 = por %p155, %p156
      %p159 = scmp.ne.s32.totalorder %s144, %s158
      %p160 = scmp.eq.s32.totalorder %s24, 0
      %p161 = por %p159, %p160
      %s163 = sadd.s32 %s162, 1
      %p166 = scmp.eq.s32.totalorder %s18, 1
      %p167 = scmp.ne.s32.totalorder %s162, %s164
      %p168 = scmp.eq.s32.totalorder %s18, 0
      %p169 = por %p167, %p168
      %p170 = scmp.ne.s32.totalorder %s162, %s164
      %p171 = scmp.eq.s32.totalorder %s23, 1
      %p172 = por %p170, %p171
      %p173 = scmp.ne.s32.totalorder %s164, %s165
      %p174 = scmp.eq.s32.totalorder %s23, 0
      %p175 = por %p173, %p174
      %p176 = scmp.ne.s32.totalorder %s164, %s165
      %p177 = scmp.eq.s32.totalorder %s24, 1
      %p178 = por %p176, %p177
      %p180 = scmp.ne.s32.totalorder %s165, %s179
      %p181 = scmp.eq.s32.totalorder %s24, 0
      %p182 = por %p180, %p181
      %s183 = ssub.s32 %s18, %s25
      %p184 = scmp.eq.s32.totalorder %s183, 0
      %s186 = sadd.s32 %s185, 1
      %s187 = scalar_select %p184, %s185, %s186
      %p190 = pneg %p184
      %p191 = scmp.eq.s32.totalorder %s18, 1
      %p192 = por %p190, %p191
      %p193 = scmp.ne.s32.totalorder %s185, %s188
      %p194 = scmp.eq.s32.totalorder %s18, 0
      %p195 = por %p193, %p194
      %p196 = scmp.ne.s32.totalorder %s185, %s188
      %p197 = scmp.eq.s32.totalorder %s23, 1
      %p198 = por %p196, %p197
      %p199 = scmp.ne.s32.totalorder %s188, %s189
      %p200 = scmp.eq.s32.totalorder %s23, 0
      %p201 = por %p199, %p200
      %p202 = scmp.ne.s32.totalorder %s188, %s189
      %p203 = scmp.eq.s32.totalorder %s24, 1
      %p204 = por %p202, %p203
      %p206 = scmp.ne.s32.totalorder %s189, %s205
      %p207 = scmp.eq.s32.totalorder %s24, 0
      %p208 = por %p206, %p207
      %s209 = ssub.s32 %s18, %s25
      %p210 = scmp.eq.s32.totalorder %s209, 0
      %s212 = sadd.s32 %s211, 1
      %s213 = scalar_select %p210, %s211, %s212
      %p216 = pneg %p210
      %p217 = scmp.eq.s32.totalorder %s18, 1
      %p218 = por %p216, %p217
      %p219 = scmp.ne.s32.totalorder %s211, %s214
      %p220 = scmp.eq.s32.totalorder %s18, 0
      %p221 = por %p219, %p220
      %p222 = scmp.ne.s32.totalorder %s211, %s214
      %p223 = scmp.eq.s32.totalorder %s23, 1
      %p224 = por %p222, %p223
      %p225 = scmp.ne.s32.totalorder %s214, %s215
      %p226 = scmp.eq.s32.totalorder %s23, 0
      %p227 = por %p225, %p226
      %p228 = scmp.ne.s32.totalorder %s214, %s215
      %p229 = scmp.eq.s32.totalorder %s24, 1
      %p230 = por %p228, %p229
      %p232 = scmp.ne.s32.totalorder %s215, %s231
      %p233 = scmp.eq.s32.totalorder %s24, 0
      %p234 = por %p232, %p233
      %p235 = scmp.le.s32.totalorder 1, %s18
      %p236 = scmp.lt.s32.totalorder %s18, 3
      %p237 = pnand %p235, %p236
      %p238 = pneg %p237
      // Predicated region
      $region9: #{janus_forward.6} parent=5 // pred_check
        _
      $region10: #{janus_forward.6} parent=5 // pred_check_branch
        %240 = sbr.rel (%p237) target = $region12
      $region11: #{janus_forward.6} parent=5 // pred_region
        %s241 = ssub.s32 %s18, 1
        // Predicated region
        $region13: #{janus_forward.6} parent=11 // pred_check
          %p242 = pneg %p91
        $region14: #{janus_forward.6} parent=11 // pred_check_branch
          %244 = sbr.rel (%p242) target = $region16
        $region15: #{janus_forward.6} parent=11 // pred_region
          _
        $region16: #{janus_forward.6} parent=11 // pred_fallthru
          _
        // Predicated region
        $region17: #{janus_forward.6} parent=11 // pred_check
          %p245 = pneg %p112
        $region18: #{janus_forward.6} parent=11 // pred_check_branch
          %247 = sbr.rel (%p245) target = $region20
        $region19: #{janus_forward.6} parent=11 // pred_region
          _
        $region20: #{janus_forward.6} parent=11 // pred_fallthru
          _
        // Predicated region
        $region21: #{janus_forward.6} parent=11 // pred_check
          %p248 = pneg %p133
        $region22: #{janus_forward.6} parent=11 // pred_check_branch
          %250 = sbr.rel (%p248) target = $region24
        $region23: #{janus_forward.6} parent=11 // pred_region
          _
        $region24: #{janus_forward.6} parent=11 // pred_fallthru
          _
        // Predicated region
        $region25: #{janus_forward.6} parent=11 // pred_check
          %p251 = pneg %p154
        $region26: #{janus_forward.6} parent=11 // pred_check_branch
          %253 = sbr.rel (%p251) target = $region28
        $region27: #{janus_forward.6} parent=11 // pred_region
          _
        $region28: #{janus_forward.6} parent=11 // pred_fallthru
          _
        // Predicated region
        $region29: #{janus_forward.6} parent=11 // pred_check
          %p254 = pneg %p175
        $region30: #{janus_forward.6} parent=11 // pred_check_branch
          %256 = sbr.rel (%p254) target = $region32
        $region31: #{janus_forward.6} parent=11 // pred_region
          _
        $region32: #{janus_forward.6} parent=11 // pred_fallthru
          _
      $region12: #{janus_forward.6} parent=5 // pred_fallthru
        _
      %p257 = scmp.lt.s32.totalorder %s18, 2
      // Predicated region
      $region33: #{janus_forward.6} parent=5 // pred_check
        %p258 = pneg %p257
      $region34: #{janus_forward.6} parent=5 // pred_check_branch
        %260 = sbr.rel (%p258) target = $region36
      $region35: #{janus_forward.6} parent=5 // pred_region
        // Predicated region
        $region37: #{janus_forward.6} parent=35 // pred_check
          %p261 = pneg %p38
        $region38: #{janus_forward.6} parent=35 // pred_check_branch
          %263 = sbr.rel (%p261) target = $region40
        $region39: #{janus_forward.6} parent=35 // pred_region
          %p264 = scmp.lt.s32.totalorder %s18, 1
          %s265 = scalar_select %p264, %s18, 1
          %s266 = smul.addr %s265, 4
          %s267 = smul.addr %s266, 8
          %s268 = scalar_lea.vmem %s0, %s267
        $region40: #{janus_forward.6} parent=35 // pred_fallthru
          _
        // Predicated region
        $region41: #{janus_forward.6} parent=35 // pred_check
          %p269 = pneg %p64
        $region42: #{janus_forward.6} parent=35 // pred_check_branch
          %271 = sbr.rel (%p269) target = $region44
        $region43: #{janus_forward.6} parent=35 // pred_region
          %p272 = scmp.lt.s32.totalorder %s18, 1
          %s273 = scalar_select %p272, %s18, 1
          %s274 = scalar_lea.vmem %s1, %s273
        $region44: #{janus_forward.6} parent=35 // pred_fallthru
          _
      $region36: #{janus_forward.6} parent=5 // pred_fallthru
        _
      %p275 = scmp.le.s32.totalorder 1, %s18
      %p276 = scmp.lt.s32.totalorder %s18, 3
      %p277 = pnand %p275, %p276
      %p278 = pneg %p277
      // Predicated region
      $region45: #{janus_forward.6} parent=5 // pred_check
        _
      $region46: #{janus_forward.6} parent=5 // pred_check_branch
        %280 = sbr.rel (%p277) target = $region48
      $region47: #{janus_forward.6} parent=5 // pred_region
        %s281 = ssub.s32 %s18, 1
        %p282 = scmp.lt.s32.totalorder %s23, 1
        %s283 = scalar_select %p282, %s23, 1
        %s284 = smul.addr %s283, 4
        %s285 = smul.addr %s284, 8
        %s286 = scalar_lea.vmem %s0, %s285
        %p287 = pneg %p44
        %p288 = pneg %p41
        %p289 = scmp.lt.s32.totalorder %s23, 1
        %s290 = scalar_select %p289, %s23, 1
        %s291 = scalar_lea.vmem %s1, %s290
        %p292 = pneg %p70
        %p293 = pneg %p67
        %p294 = pneg %p91
        %p295 = pneg %p88
        %p296 = pneg %p112
        %p297 = pneg %p109
        %p298 = pneg %p133
        %p299 = pneg %p130
        %p300 = pneg %p154
        %p301 = pneg %p151
        %p302 = pneg %p175
        %p303 = pneg %p172
        %p304 = pneg %p201
        %p305 = pneg %p198
        %p306 = scmp.lt.s32.totalorder %s23, 1
        %s307 = scalar_select %p306, %s23, 1
        %s308 = smul.addr %s307, 4
        %s309 = smul.addr %s308, 8
        %s310 = scalar_lea.vmem %s7, %s309
        %p311 = pneg %p227
        %p312 = pneg %p224
        %s313 = sand.u32 %s214, 1
        %s314 = scalar_lea.sflag [#allocation3], %s313
        %s315 = sand.u32 %s214, 1
        %s316 = scalar_lea.vmem [#allocation2], %s315
        %p317 = scmp.lt.s32.totalorder %s23, 1
        %s318 = scalar_select %p317, %s23, 1
        %s319 = smul.addr %s318, 4
        %s320 = smul.addr %s319, 8
        %s321 = scalar_lea.vmem %s0, %s320
        %p322 = scmp.lt.s32.totalorder %s23, 1
        %s323 = scalar_select %p322, %s23, 1
        %s324 = scalar_lea.vmem %s1, %s323
        %p325 = scmp.lt.s32.totalorder %s23, 1
        %s326 = scalar_select %p325, %s23, 1
        %s327 = smul.addr %s326, 4
        %s328 = smul.addr %s327, 8
        %s329 = scalar_lea.vmem %s7, %s328
        %v331 = vld [vmem:[%s321] sm:$0xff]
        %v332 = vld [vmem:[%s321 + $0x8] sm:$0xff]
        %v333 = vld [vmem:[%s321 + $0x10] sm:$0xff]
        %v334 = vld [vmem:[%s321 + $0x18] sm:$0xff]
        %v335 = vld [vmem:[%s324] sm:$0x1]
        %v337 = vlaneseq
        %v338 = vshrl.u32 %v337, 7
        %v339 = vsub.s32 0, %v338
        %v340 = vrot.slane %v335, %v339
        %v342 = vmul.f32 %v331, %v340
        %v343 = vmul.f32 %v332, %v340
        %v344 = vmul.f32 %v333, %v340
        %v345 = vmul.f32 %v334, %v340
        %v346 = vld [vmem:[%s2] sm:$0xff]
        %v347 = vld [vmem:[%s2 + $0x8] sm:$0xff]
        %v348 = vld [vmem:[%s2 + $0x10] sm:$0xff]
        %v349 = vld [vmem:[%s2 + $0x18] sm:$0xff]
        %351 = vset.pattern.permute.xlu0 0
        %352 = vperm.xlu0 %351, %v346
        %v353 = vpop.permute.xlu0 %352
        %356 = vset.pattern.permute.xlu0 0
        %357 = vperm.xlu0 %356, %v347
        %v358 = vpop.permute.xlu0 %357
        %361 = vset.pattern.permute.xlu0 0
        %362 = vperm.xlu0 %361, %v348
        %v363 = vpop.permute.xlu0 %362
        %366 = vset.pattern.permute.xlu0 0
        %367 = vperm.xlu0 %366, %v349
        %v368 = vpop.permute.xlu0 %367
        %v370 = vmul.f32 %v342, %v353
        %v371 = vmul.f32 %v343, %v358
        %v372 = vmul.f32 %v344, %v363
        %v373 = vmul.f32 %v345, %v368
        %v374 = vpack.c.bf16 %v371, %v370
        %v375 = vpack.c.bf16 %v373, %v372
        %v378 = vcombine.high %v374, %v374
        %v380 = vunpack.c.l.s4 1966171168
        %v381 = vunpack.c.0.s8 %v380
        %v382 = vlaneseq
        %v383 = vshrl.u32 %v382, 7
        %v384 = vsub.s32 %v381, %v383
        %v385 = vrot.slane %v374, %v384
        %v387 = vunpack.c.l.s4 1966171168
        %v388 = vunpack.c.0.s8 %v387
        %v389 = vlaneseq
        %v390 = vshrl.u32 %v389, 7
        %v391 = vsub.s32 %v388, %v390
        %v392 = vrot.slane %v378, %v391
        %v393 = vcombine.high %v385, %v385
        %v394 = vcombine.high %v392, %v392
        %v396 = vunpack.c.l.s4 1966171168
        %v397 = vunpack.c.0.s8 %v396
        %v398 = vlaneseq
        %v399 = vshrl.u32 %v398, 7
        %v400 = vsub.s32 %v397, %v399
        %v401 = vrot.slane %v385, %v400
        %v403 = vunpack.c.l.s4 1966171168
        %v404 = vunpack.c.0.s8 %v403
        %v405 = vlaneseq
        %v406 = vshrl.u32 %v405, 7
        %v407 = vsub.s32 %v404, %v406
        %v408 = vrot.slane %v392, %v407
        %v410 = vunpack.c.l.s4 1966171168
        %v411 = vunpack.c.0.s8 %v410
        %v412 = vlaneseq
        %v413 = vshrl.u32 %v412, 7
        %v414 = vsub.s32 %v411, %v413
        %v415 = vrot.slane %v393, %v414
        %v417 = vunpack.c.l.s4 1966171168
        %v418 = vunpack.c.0.s8 %v417
        %v419 = vlaneseq
        %v420 = vshrl.u32 %v419, 7
        %v421 = vsub.s32 %v418, %v420
        %v422 = vrot.slane %v394, %v421
        %v423 = vcombine.high %v401, %v401
        %v424 = vcombine.high %v408, %v408
        %v425 = vcombine.high %v415, %v415
        %v426 = vcombine.high %v422, %v422
        %v427 = vcombine.high %v375, %v375
        %v429 = vunpack.c.l.s4 1966171168
        %v430 = vunpack.c.0.s8 %v429
        %v431 = vlaneseq
        %v432 = vshrl.u32 %v431, 7
        %v433 = vsub.s32 %v430, %v432
        %v434 = vrot.slane %v375, %v433
        %v436 = vunpack.c.l.s4 1966171168
        %v437 = vunpack.c.0.s8 %v436
        %v438 = vlaneseq
        %v439 = vshrl.u32 %v438, 7
        %v440 = vsub.s32 %v437, %v439
        %v441 = vrot.slane %v427, %v440
        %v442 = vcombine.high %v434, %v434
        %v443 = vcombine.high %v441, %v441
        %v445 = vunpack.c.l.s4 1966171168
        %v446 = vunpack.c.0.s8 %v445
        %v447 = vlaneseq
        %v448 = vshrl.u32 %v447, 7
        %v449 = vsub.s32 %v446, %v448
        %v450 = vrot.slane %v434, %v449
        %v452 = vunpack.c.l.s4 1966171168
        %v453 = vunpack.c.0.s8 %v452
        %v454 = vlaneseq
        %v455 = vshrl.u32 %v454, 7
        %v456 = vsub.s32 %v453, %v455
        %v457 = vrot.slane %v441, %v456
        %v459 = vunpack.c.l.s4 1966171168
        %v460 = vunpack.c.0.s8 %v459
        %v461 = vlaneseq
        %v462 = vshrl.u32 %v461, 7
        %v463 = vsub.s32 %v460, %v462
        %v464 = vrot.slane %v442, %v463
        %v466 = vunpack.c.l.s4 1966171168
        %v467 = vunpack.c.0.s8 %v466
        %v468 = vlaneseq
        %v469 = vshrl.u32 %v468, 7
        %v470 = vsub.s32 %v467, %v469
        %v471 = vrot.slane %v443, %v470
        %v472 = vcombine.high %v450, %v450
        %v473 = vcombine.high %v457, %v457
        %v474 = vcombine.high %v464, %v464
        %v475 = vcombine.high %v471, %v471
        %v476 = vunpack.i.l.s16 %v401
        %v477 = vunpack.i.h.s16 %v401
        %v478 = vunpack.i.l.s16 %v415
        %v479 = vunpack.i.h.s16 %v415
        %v480 = vunpack.i.l.s16 %v423
        %v481 = vunpack.i.h.s16 %v423
        %v482 = vunpack.i.l.s16 %v425
        %v483 = vunpack.i.h.s16 %v425
        %v484 = vunpack.i.l.s16 %v408
        %v485 = vunpack.i.h.s16 %v408
        %v486 = vunpack.i.l.s16 %v422
        %v487 = vunpack.i.h.s16 %v422
        %v488 = vunpack.i.l.s16 %v424
        %v489 = vunpack.i.h.s16 %v424
        %v490 = vunpack.i.l.s16 %v426
        %v491 = vunpack.i.h.s16 %v426
        %v492 = vunpack.i.l.s16 %v450
        %v493 = vunpack.i.h.s16 %v450
        %v494 = vunpack.i.l.s16 %v464
        %v495 = vunpack.i.h.s16 %v464
        %v496 = vunpack.i.l.s16 %v472
        %v497 = vunpack.i.h.s16 %v472
        %v498 = vunpack.i.l.s16 %v474
        %v499 = vunpack.i.h.s16 %v474
        %v500 = vunpack.i.l.s16 %v457
        %v501 = vunpack.i.h.s16 %v457
        %v502 = vunpack.i.l.s16 %v471
        %v503 = vunpack.i.h.s16 %v471
        %v504 = vunpack.i.l.s16 %v473
        %v505 = vunpack.i.h.s16 %v473
        %v506 = vunpack.i.l.s16 %v475
        %v507 = vunpack.i.h.s16 %v475
        %v508 = vld [vmem:[%s3] sm:$0xf]
        %v509 = vld [vmem:[%s3 + $0x4] sm:$0xf]
        %v510 = vld [vmem:[%s3 + $0x8] sm:$0xf]
        %v511 = vld [vmem:[%s3 + $0xc] sm:$0xf]
        %v512 = vld [vmem:[%s3 + $0x10] sm:$0xf]
        %v513 = vld [vmem:[%s3 + $0x14] sm:$0xf]
        %v514 = vld [vmem:[%s3 + $0x18] sm:$0xf]
        %v515 = vld [vmem:[%s3 + $0x1c] sm:$0xf]
        %v516 = vld [vmem:[%s3 + $0x20] sm:$0xf]
        %v517 = vld [vmem:[%s3 + $0x24] sm:$0xf]
        %v518 = vld [vmem:[%s3 + $0x28] sm:$0xf]
        %v519 = vld [vmem:[%s3 + $0x2c] sm:$0xf]
        %v520 = vld [vmem:[%s3 + $0x30] sm:$0xf]
        %v521 = vld [vmem:[%s3 + $0x34] sm:$0xf]
        %v522 = vld [vmem:[%s3 + $0x38] sm:$0xf]
        %v523 = vld [vmem:[%s3 + $0x3c] sm:$0xf]
        %v524 = vld [vmem:[%s3 + $0x40] sm:$0xf]
        %v525 = vld [vmem:[%s3 + $0x44] sm:$0xf]
        %v526 = vld [vmem:[%s3 + $0x48] sm:$0xf]
        %v527 = vld [vmem:[%s3 + $0x4c] sm:$0xf]
        %v528 = vld [vmem:[%s3 + $0x50] sm:$0xf]
        %v529 = vld [vmem:[%s3 + $0x54] sm:$0xf]
        %v530 = vld [vmem:[%s3 + $0x58] sm:$0xf]
        %v531 = vld [vmem:[%s3 + $0x5c] sm:$0xf]
        %v532 = vld [vmem:[%s3 + $0x60] sm:$0xf]
        %v533 = vld [vmem:[%s3 + $0x64] sm:$0xf]
        %v534 = vld [vmem:[%s3 + $0x68] sm:$0xf]
        %v535 = vld [vmem:[%s3 + $0x6c] sm:$0xf]
        %v536 = vld [vmem:[%s3 + $0x70] sm:$0xf]
        %v537 = vld [vmem:[%s3 + $0x74] sm:$0xf]
        %v538 = vld [vmem:[%s3 + $0x78] sm:$0xf]
        %v539 = vld [vmem:[%s3 + $0x7c] sm:$0xf]
        %v540 = vld [vmem:[%s3 + $0x80] sm:$0xf]
        %v541 = vld [vmem:[%s3 + $0x84] sm:$0xf]
        %v542 = vld [vmem:[%s3 + $0x88] sm:$0xf]
        %v543 = vld [vmem:[%s3 + $0x8c] sm:$0xf]
        %v544 = vld [vmem:[%s3 + $0x90] sm:$0xf]
        %v545 = vld [vmem:[%s3 + $0x94] sm:$0xf]
        %v546 = vld [vmem:[%s3 + $0x98] sm:$0xf]
        %v547 = vld [vmem:[%s3 + $0x9c] sm:$0xf]
        %v548 = vld [vmem:[%s3 + $0xa0] sm:$0xf]
        %v549 = vld [vmem:[%s3 + $0xa4] sm:$0xf]
        %v550 = vld [vmem:[%s3 + $0xa8] sm:$0xf]
        %v551 = vld [vmem:[%s3 + $0xac] sm:$0xf]
        %v552 = vld [vmem:[%s3 + $0xb0] sm:$0xf]
        %v553 = vld [vmem:[%s3 + $0xb4] sm:$0xf]
        %v554 = vld [vmem:[%s3 + $0xb8] sm:$0xf]
        %v555 = vld [vmem:[%s3 + $0xbc] sm:$0xf]
        %v556 = vld [vmem:[%s3 + $0xc0] sm:$0xf]
        %v557 = vld [vmem:[%s3 + $0xc4] sm:$0xf]
        %v558 = vld [vmem:[%s3 + $0xc8] sm:$0xf]
        %v559 = vld [vmem:[%s3 + $0xcc] sm:$0xf]
        %v560 = vld [vmem:[%s3 + $0xd0] sm:$0xf]
        %v561 = vld [vmem:[%s3 + $0xd4] sm:$0xf]
        %v562 = vld [vmem:[%s3 + $0xd8] sm:$0xf]
        %v563 = vld [vmem:[%s3 + $0xdc] sm:$0xf]
        %v564 = vld [vmem:[%s3 + $0xe0] sm:$0xf]
        %v565 = vld [vmem:[%s3 + $0xe4] sm:$0xf]
        %v566 = vld [vmem:[%s3 + $0xe8] sm:$0xf]
        %v567 = vld [vmem:[%s3 + $0xec] sm:$0xf]
        %v568 = vld [vmem:[%s3 + $0xf0] sm:$0xf]
        %v569 = vld [vmem:[%s3 + $0xf4] sm:$0xf]
        %v570 = vld [vmem:[%s3 + $0xf8] sm:$0xf]
        %v571 = vld [vmem:[%s3 + $0xfc] sm:$0xf]
        %v572 = vld [vmem:[%s3 + $0x100] sm:$0xf]
        %v573 = vld [vmem:[%s3 + $0x104] sm:$0xf]
        %v574 = vld [vmem:[%s3 + $0x108] sm:$0xf]
        %v575 = vld [vmem:[%s3 + $0x10c] sm:$0xf]
        %v576 = vld [vmem:[%s3 + $0x110] sm:$0xf]
        %v577 = vld [vmem:[%s3 + $0x114] sm:$0xf]
        %v578 = vld [vmem:[%s3 + $0x118] sm:$0xf]
        %v579 = vld [vmem:[%s3 + $0x11c] sm:$0xf]
        %v580 = vld [vmem:[%s3 + $0x120] sm:$0xf]
        %v581 = vld [vmem:[%s3 + $0x124] sm:$0xf]
        %v582 = vld [vmem:[%s3 + $0x128] sm:$0xf]
        %v583 = vld [vmem:[%s3 + $0x12c] sm:$0xf]
        %v584 = vld [vmem:[%s3 + $0x130] sm:$0xf]
        %v585 = vld [vmem:[%s3 + $0x134] sm:$0xf]
        %v586 = vld [vmem:[%s3 + $0x138] sm:$0xf]
        %v587 = vld [vmem:[%s3 + $0x13c] sm:$0xf]
        %v588 = vld [vmem:[%s3 + $0x140] sm:$0xf]
        %v589 = vld [vmem:[%s3 + $0x144] sm:$0xf]
        %v590 = vld [vmem:[%s3 + $0x148] sm:$0xf]
        %v591 = vld [vmem:[%s3 + $0x14c] sm:$0xf]
        %v592 = vld [vmem:[%s3 + $0x150] sm:$0xf]
        %v593 = vld [vmem:[%s3 + $0x154] sm:$0xf]
        %v594 = vld [vmem:[%s3 + $0x158] sm:$0xf]
        %v595 = vld [vmem:[%s3 + $0x15c] sm:$0xf]
        %v596 = vld [vmem:[%s3 + $0x160] sm:$0xf]
        %v597 = vld [vmem:[%s3 + $0x164] sm:$0xf]
        %v598 = vld [vmem:[%s3 + $0x168] sm:$0xf]
        %v599 = vld [vmem:[%s3 + $0x16c] sm:$0xf]
        %v600 = vld [vmem:[%s3 + $0x170] sm:$0xf]
        %v601 = vld [vmem:[%s3 + $0x174] sm:$0xf]
        %v602 = vld [vmem:[%s3 + $0x178] sm:$0xf]
        %v603 = vld [vmem:[%s3 + $0x17c] sm:$0xf]
        %v604 = vld [vmem:[%s3 + $0x180] sm:$0xf]
        %v605 = vld [vmem:[%s3 + $0x184] sm:$0xf]
        %v606 = vld [vmem:[%s3 + $0x188] sm:$0xf]
        %v607 = vld [vmem:[%s3 + $0x18c] sm:$0xf]
        %v608 = vld [vmem:[%s3 + $0x190] sm:$0xf]
        %v609 = vld [vmem:[%s3 + $0x194] sm:$0xf]
        %v610 = vld [vmem:[%s3 + $0x198] sm:$0xf]
        %v611 = vld [vmem:[%s3 + $0x19c] sm:$0xf]
        %v612 = vld [vmem:[%s3 + $0x1a0] sm:$0xf]
        %v613 = vld [vmem:[%s3 + $0x1a4] sm:$0xf]
        %v614 = vld [vmem:[%s3 + $0x1a8] sm:$0xf]
        %v615 = vld [vmem:[%s3 + $0x1ac] sm:$0xf]
        %v616 = vld [vmem:[%s3 + $0x1b0] sm:$0xf]
        %v617 = vld [vmem:[%s3 + $0x1b4] sm:$0xf]
        %v618 = vld [vmem:[%s3 + $0x1b8] sm:$0xf]
        %v619 = vld [vmem:[%s3 + $0x1bc] sm:$0xf]
        %v620 = vld [vmem:[%s3 + $0x1c0] sm:$0xf]
        %v621 = vld [vmem:[%s3 + $0x1c4] sm:$0xf]
        %v622 = vld [vmem:[%s3 + $0x1c8] sm:$0xf]
        %v623 = vld [vmem:[%s3 + $0x1cc] sm:$0xf]
        %v624 = vld [vmem:[%s3 + $0x1d0] sm:$0xf]
        %v625 = vld [vmem:[%s3 + $0x1d4] sm:$0xf]
        %v626 = vld [vmem:[%s3 + $0x1d8] sm:$0xf]
        %v627 = vld [vmem:[%s3 + $0x1dc] sm:$0xf]
        %v628 = vld [vmem:[%s3 + $0x1e0] sm:$0xf]
        %v629 = vld [vmem:[%s3 + $0x1e4] sm:$0xf]
        %v630 = vld [vmem:[%s3 + $0x1e8] sm:$0xf]
        %v631 = vld [vmem:[%s3 + $0x1ec] sm:$0xf]
        %v632 = vld [vmem:[%s3 + $0x1f0] sm:$0xf]
        %v633 = vld [vmem:[%s3 + $0x1f4] sm:$0xf]
        %v634 = vld [vmem:[%s3 + $0x1f8] sm:$0xf]
        %v635 = vld [vmem:[%s3 + $0x1fc] sm:$0xf]
        %v636 = vld [vmem:[%s3 + $0x200] sm:$0xf]
        %v637 = vld [vmem:[%s3 + $0x204] sm:$0xf]
        %v638 = vld [vmem:[%s3 + $0x208] sm:$0xf]
        %v639 = vld [vmem:[%s3 + $0x20c] sm:$0xf]
        %v640 = vld [vmem:[%s3 + $0x210] sm:$0xf]
        %v641 = vld [vmem:[%s3 + $0x214] sm:$0xf]
        %v642 = vld [vmem:[%s3 + $0x218] sm:$0xf]
        %v643 = vld [vmem:[%s3 + $0x21c] sm:$0xf]
        %v644 = vld [vmem:[%s3 + $0x220] sm:$0xf]
        %v645 = vld [vmem:[%s3 + $0x224] sm:$0xf]
        %v646 = vld [vmem:[%s3 + $0x228] sm:$0xf]
        %v647 = vld [vmem:[%s3 + $0x22c] sm:$0xf]
        %v648 = vld [vmem:[%s3 + $0x230] sm:$0xf]
        %v649 = vld [vmem:[%s3 + $0x234] sm:$0xf]
        %v650 = vld [vmem:[%s3 + $0x238] sm:$0xf]
        %v651 = vld [vmem:[%s3 + $0x23c] sm:$0xf]
        %v652 = vld [vmem:[%s3 + $0x240] sm:$0xf]
        %v653 = vld [vmem:[%s3 + $0x244] sm:$0xf]
        %v654 = vld [vmem:[%s3 + $0x248] sm:$0xf]
        %v655 = vld [vmem:[%s3 + $0x24c] sm:$0xf]
        %v656 = vld [vmem:[%s3 + $0x250] sm:$0xf]
        %v657 = vld [vmem:[%s3 + $0x254] sm:$0xf]
        %v658 = vld [vmem:[%s3 + $0x258] sm:$0xf]
        %v659 = vld [vmem:[%s3 + $0x25c] sm:$0xf]
        %v660 = vld [vmem:[%s3 + $0x260] sm:$0xf]
        %v661 = vld [vmem:[%s3 + $0x264] sm:$0xf]
        %v662 = vld [vmem:[%s3 + $0x268] sm:$0xf]
        %v663 = vld [vmem:[%s3 + $0x26c] sm:$0xf]
        %v664 = vld [vmem:[%s3 + $0x270] sm:$0xf]
        %v665 = vld [vmem:[%s3 + $0x274] sm:$0xf]
        %v666 = vld [vmem:[%s3 + $0x278] sm:$0xf]
        %v667 = vld [vmem:[%s3 + $0x27c] sm:$0xf]
        %v668 = vld [vmem:[%s3 + $0x280] sm:$0xf]
        %v669 = vld [vmem:[%s3 + $0x284] sm:$0xf]
        %v670 = vld [vmem:[%s3 + $0x288] sm:$0xf]
        %v671 = vld [vmem:[%s3 + $0x28c] sm:$0xf]
        %v672 = vld [vmem:[%s3 + $0x290] sm:$0xf]
        %v673 = vld [vmem:[%s3 + $0x294] sm:$0xf]
        %v674 = vld [vmem:[%s3 + $0x298] sm:$0xf]
        %v675 = vld [vmem:[%s3 + $0x29c] sm:$0xf]
        %v676 = vld [vmem:[%s3 + $0x2a0] sm:$0xf]
        %v677 = vld [vmem:[%s3 + $0x2a4] sm:$0xf]
        %v678 = vld [vmem:[%s3 + $0x2a8] sm:$0xf]
        %v679 = vld [vmem:[%s3 + $0x2ac] sm:$0xf]
        %v680 = vld [vmem:[%s3 + $0x2b0] sm:$0xf]
        %v681 = vld [vmem:[%s3 + $0x2b4] sm:$0xf]
        %v682 = vld [vmem:[%s3 + $0x2b8] sm:$0xf]
        %v683 = vld [vmem:[%s3 + $0x2bc] sm:$0xf]
        %v684 = vld [vmem:[%s3 + $0x2c0] sm:$0xf]
        %v685 = vld [vmem:[%s3 + $0x2c4] sm:$0xf]
        %v686 = vld [vmem:[%s3 + $0x2c8] sm:$0xf]
        %v687 = vld [vmem:[%s3 + $0x2cc] sm:$0xf]
        %v688 = vld [vmem:[%s3 + $0x2d0] sm:$0xf]
        %v689 = vld [vmem:[%s3 + $0x2d4] sm:$0xf]
        %v690 = vld [vmem:[%s3 + $0x2d8] sm:$0xf]
        %v691 = vld [vmem:[%s3 + $0x2dc] sm:$0xf]
        %v692 = vld [vmem:[%s3 + $0x2e0] sm:$0xf]
        %v693 = vld [vmem:[%s3 + $0x2e4] sm:$0xf]
        %v694 = vld [vmem:[%s3 + $0x2e8] sm:$0xf]
        %v695 = vld [vmem:[%s3 + $0x2ec] sm:$0xf]
        %v696 = vld [vmem:[%s3 + $0x2f0] sm:$0xf]
        %v697 = vld [vmem:[%s3 + $0x2f4] sm:$0xf]
        %v698 = vld [vmem:[%s3 + $0x2f8] sm:$0xf]
        %v699 = vld [vmem:[%s3 + $0x2fc] sm:$0xf]
        %v700 = vld [vmem:[%s3 + $0x300] sm:$0xf]
        %v701 = vld [vmem:[%s3 + $0x304] sm:$0xf]
        %v702 = vld [vmem:[%s3 + $0x308] sm:$0xf]
        %v703 = vld [vmem:[%s3 + $0x30c] sm:$0xf]
        %v704 = vld [vmem:[%s3 + $0x310] sm:$0xf]
        %v705 = vld [vmem:[%s3 + $0x314] sm:$0xf]
        %v706 = vld [vmem:[%s3 + $0x318] sm:$0xf]
        %v707 = vld [vmem:[%s3 + $0x31c] sm:$0xf]
        %v708 = vld [vmem:[%s3 + $0x320] sm:$0xf]
        %v709 = vld [vmem:[%s3 + $0x324] sm:$0xf]
        %v710 = vld [vmem:[%s3 + $0x328] sm:$0xf]
        %v711 = vld [vmem:[%s3 + $0x32c] sm:$0xf]
        %v712 = vld [vmem:[%s3 + $0x330] sm:$0xf]
        %v713 = vld [vmem:[%s3 + $0x334] sm:$0xf]
        %v714 = vld [vmem:[%s3 + $0x338] sm:$0xf]
        %v715 = vld [vmem:[%s3 + $0x33c] sm:$0xf]
        %v716 = vld [vmem:[%s3 + $0x340] sm:$0xf]
        %v717 = vld [vmem:[%s3 + $0x344] sm:$0xf]
        %v718 = vld [vmem:[%s3 + $0x348] sm:$0xf]
        %v719 = vld [vmem:[%s3 + $0x34c] sm:$0xf]
        %v720 = vld [vmem:[%s3 + $0x350] sm:$0xf]
        %v721 = vld [vmem:[%s3 + $0x354] sm:$0xf]
        %v722 = vld [vmem:[%s3 + $0x358] sm:$0xf]
        %v723 = vld [vmem:[%s3 + $0x35c] sm:$0xf]
        %v724 = vld [vmem:[%s3 + $0x360] sm:$0xf]
        %v725 = vld [vmem:[%s3 + $0x364] sm:$0xf]
        %v726 = vld [vmem:[%s3 + $0x368] sm:$0xf]
        %v727 = vld [vmem:[%s3 + $0x36c] sm:$0xf]
        %v728 = vld [vmem:[%s3 + $0x370] sm:$0xf]
        %v729 = vld [vmem:[%s3 + $0x374] sm:$0xf]
        %v730 = vld [vmem:[%s3 + $0x378] sm:$0xf]
        %v731 = vld [vmem:[%s3 + $0x37c] sm:$0xf]
        %v732 = vld [vmem:[%s3 + $0x380] sm:$0xf]
        %v733 = vld [vmem:[%s3 + $0x384] sm:$0xf]
        %v734 = vld [vmem:[%s3 + $0x388] sm:$0xf]
        %v735 = vld [vmem:[%s3 + $0x38c] sm:$0xf]
        %v736 = vld [vmem:[%s3 + $0x390] sm:$0xf]
        %v737 = vld [vmem:[%s3 + $0x394] sm:$0xf]
        %v738 = vld [vmem:[%s3 + $0x398] sm:$0xf]
        %v739 = vld [vmem:[%s3 + $0x39c] sm:$0xf]
        %v740 = vld [vmem:[%s3 + $0x3a0] sm:$0xf]
        %v741 = vld [vmem:[%s3 + $0x3a4] sm:$0xf]
        %v742 = vld [vmem:[%s3 + $0x3a8] sm:$0xf]
        %v743 = vld [vmem:[%s3 + $0x3ac] sm:$0xf]
        %v744 = vld [vmem:[%s3 + $0x3b0] sm:$0xf]
        %v745 = vld [vmem:[%s3 + $0x3b4] sm:$0xf]
        %v746 = vld [vmem:[%s3 + $0x3b8] sm:$0xf]
        %v747 = vld [vmem:[%s3 + $0x3bc] sm:$0xf]
        %v748 = vld [vmem:[%s3 + $0x3c0] sm:$0xf]
        %v749 = vld [vmem:[%s3 + $0x3c4] sm:$0xf]
        %v750 = vld [vmem:[%s3 + $0x3c8] sm:$0xf]
        %v751 = vld [vmem:[%s3 + $0x3cc] sm:$0xf]
        %v752 = vld [vmem:[%s3 + $0x3d0] sm:$0xf]
        %v753 = vld [vmem:[%s3 + $0x3d4] sm:$0xf]
        %v754 = vld [vmem:[%s3 + $0x3d8] sm:$0xf]
        %v755 = vld [vmem:[%s3 + $0x3dc] sm:$0xf]
        %v756 = vld [vmem:[%s3 + $0x3e0] sm:$0xf]
        %v757 = vld [vmem:[%s3 + $0x3e4] sm:$0xf]
        %v758 = vld [vmem:[%s3 + $0x3e8] sm:$0xf]
        %v759 = vld [vmem:[%s3 + $0x3ec] sm:$0xf]
        %v760 = vld [vmem:[%s3 + $0x3f0] sm:$0xf]
        %v761 = vld [vmem:[%s3 + $0x3f4] sm:$0xf]
        %v762 = vld [vmem:[%s3 + $0x3f8] sm:$0xf]
        %v763 = vld [vmem:[%s3 + $0x3fc] sm:$0xf]
        %v764 = vld [vmem:[%s3 + $0x400] sm:$0xf]
        %v765 = vld [vmem:[%s3 + $0x404] sm:$0xf]
        %v766 = vld [vmem:[%s3 + $0x408] sm:$0xf]
        %v767 = vld [vmem:[%s3 + $0x40c] sm:$0xf]
        %v768 = vld [vmem:[%s3 + $0x410] sm:$0xf]
        %v769 = vld [vmem:[%s3 + $0x414] sm:$0xf]
        %v770 = vld [vmem:[%s3 + $0x418] sm:$0xf]
        %v771 = vld [vmem:[%s3 + $0x41c] sm:$0xf]
        %v772 = vld [vmem:[%s3 + $0x420] sm:$0xf]
        %v773 = vld [vmem:[%s3 + $0x424] sm:$0xf]
        %v774 = vld [vmem:[%s3 + $0x428] sm:$0xf]
        %v775 = vld [vmem:[%s3 + $0x42c] sm:$0xf]
        %v776 = vld [vmem:[%s3 + $0x430] sm:$0xf]
        %v777 = vld [vmem:[%s3 + $0x434] sm:$0xf]
        %v778 = vld [vmem:[%s3 + $0x438] sm:$0xf]
        %v779 = vld [vmem:[%s3 + $0x43c] sm:$0xf]
        %v780 = vld [vmem:[%s3 + $0x440] sm:$0xf]
        %v781 = vld [vmem:[%s3 + $0x444] sm:$0xf]
        %v782 = vld [vmem:[%s3 + $0x448] sm:$0xf]
        %v783 = vld [vmem:[%s3 + $0x44c] sm:$0xf]
        %v784 = vld [vmem:[%s3 + $0x450] sm:$0xf]
        %v785 = vld [vmem:[%s3 + $0x454] sm:$0xf]
        %v786 = vld [vmem:[%s3 + $0x458] sm:$0xf]
        %v787 = vld [vmem:[%s3 + $0x45c] sm:$0xf]
        %v788 = vld [vmem:[%s3 + $0x460] sm:$0xf]
        %v789 = vld [vmem:[%s3 + $0x464] sm:$0xf]
        %v790 = vld [vmem:[%s3 + $0x468] sm:$0xf]
        %v791 = vld [vmem:[%s3 + $0x46c] sm:$0xf]
        %v792 = vld [vmem:[%s3 + $0x470] sm:$0xf]
        %v793 = vld [vmem:[%s3 + $0x474] sm:$0xf]
        %v794 = vld [vmem:[%s3 + $0x478] sm:$0xf]
        %v795 = vld [vmem:[%s3 + $0x47c] sm:$0xf]
        %v796 = vld [vmem:[%s3 + $0x480] sm:$0xf]
        %v797 = vld [vmem:[%s3 + $0x484] sm:$0xf]
        %v798 = vld [vmem:[%s3 + $0x488] sm:$0xf]
        %v799 = vld [vmem:[%s3 + $0x48c] sm:$0xf]
        %v800 = vld [vmem:[%s3 + $0x490] sm:$0xf]
        %v801 = vld [vmem:[%s3 + $0x494] sm:$0xf]
        %v802 = vld [vmem:[%s3 + $0x498] sm:$0xf]
        %v803 = vld [vmem:[%s3 + $0x49c] sm:$0xf]
        %v804 = vld [vmem:[%s3 + $0x4a0] sm:$0xf]
        %v805 = vld [vmem:[%s3 + $0x4a4] sm:$0xf]
        %v806 = vld [vmem:[%s3 + $0x4a8] sm:$0xf]
        %v807 = vld [vmem:[%s3 + $0x4ac] sm:$0xf]
        %v808 = vld [vmem:[%s3 + $0x4b0] sm:$0xf]
        %v809 = vld [vmem:[%s3 + $0x4b4] sm:$0xf]
        %v810 = vld [vmem:[%s3 + $0x4b8] sm:$0xf]
        %v811 = vld [vmem:[%s3 + $0x4bc] sm:$0xf]
        %v812 = vld [vmem:[%s3 + $0x4c0] sm:$0xf]
        %v813 = vld [vmem:[%s3 + $0x4c4] sm:$0xf]
        %v814 = vld [vmem:[%s3 + $0x4c8] sm:$0xf]
        %v815 = vld [vmem:[%s3 + $0x4cc] sm:$0xf]
        %v816 = vld [vmem:[%s3 + $0x4d0] sm:$0xf]
        %v817 = vld [vmem:[%s3 + $0x4d4] sm:$0xf]
        %v818 = vld [vmem:[%s3 + $0x4d8] sm:$0xf]
        %v819 = vld [vmem:[%s3 + $0x4dc] sm:$0xf]
        %v820 = vld [vmem:[%s3 + $0x4e0] sm:$0xf]
        %v821 = vld [vmem:[%s3 + $0x4e4] sm:$0xf]
        %v822 = vld [vmem:[%s3 + $0x4e8] sm:$0xf]
        %v823 = vld [vmem:[%s3 + $0x4ec] sm:$0xf]
        %v824 = vld [vmem:[%s3 + $0x4f0] sm:$0xf]
        %v825 = vld [vmem:[%s3 + $0x4f4] sm:$0xf]
        %v826 = vld [vmem:[%s3 + $0x4f8] sm:$0xf]
        %v827 = vld [vmem:[%s3 + $0x4fc] sm:$0xf]
        %v828 = vld [vmem:[%s3 + $0x500] sm:$0xf]
        %v829 = vld [vmem:[%s3 + $0x504] sm:$0xf]
        %v830 = vld [vmem:[%s3 + $0x508] sm:$0xf]
        %v831 = vld [vmem:[%s3 + $0x50c] sm:$0xf]
        %v832 = vld [vmem:[%s3 + $0x510] sm:$0xf]
        %v833 = vld [vmem:[%s3 + $0x514] sm:$0xf]
        %v834 = vld [vmem:[%s3 + $0x518] sm:$0xf]
        %v835 = vld [vmem:[%s3 + $0x51c] sm:$0xf]
        %v836 = vld [vmem:[%s3 + $0x520] sm:$0xf]
        %v837 = vld [vmem:[%s3 + $0x524] sm:$0xf]
        %v838 = vld [vmem:[%s3 + $0x528] sm:$0xf]
        %v839 = vld [vmem:[%s3 + $0x52c] sm:$0xf]
        %v840 = vld [vmem:[%s3 + $0x530] sm:$0xf]
        %v841 = vld [vmem:[%s3 + $0x534] sm:$0xf]
        %v842 = vld [vmem:[%s3 + $0x538] sm:$0xf]
        %v843 = vld [vmem:[%s3 + $0x53c] sm:$0xf]
        %v844 = vld [vmem:[%s3 + $0x540] sm:$0xf]
        %v845 = vld [vmem:[%s3 + $0x544] sm:$0xf]
        %v846 = vld [vmem:[%s3 + $0x548] sm:$0xf]
        %v847 = vld [vmem:[%s3 + $0x54c] sm:$0xf]
        %v848 = vld [vmem:[%s3 + $0x550] sm:$0xf]
        %v849 = vld [vmem:[%s3 + $0x554] sm:$0xf]
        %v850 = vld [vmem:[%s3 + $0x558] sm:$0xf]
        %v851 = vld [vmem:[%s3 + $0x55c] sm:$0xf]
        %v852 = vld [vmem:[%s3 + $0x560] sm:$0xf]
        %v853 = vld [vmem:[%s3 + $0x564] sm:$0xf]
        %v854 = vld [vmem:[%s3 + $0x568] sm:$0xf]
        %v855 = vld [vmem:[%s3 + $0x56c] sm:$0xf]
        %v856 = vld [vmem:[%s3 + $0x570] sm:$0xf]
        %v857 = vld [vmem:[%s3 + $0x574] sm:$0xf]
        %v858 = vld [vmem:[%s3 + $0x578] sm:$0xf]
        %v859 = vld [vmem:[%s3 + $0x57c] sm:$0xf]
        %v860 = vld [vmem:[%s3 + $0x580] sm:$0xf]
        %v861 = vld [vmem:[%s3 + $0x584] sm:$0xf]
        %v862 = vld [vmem:[%s3 + $0x588] sm:$0xf]
        %v863 = vld [vmem:[%s3 + $0x58c] sm:$0xf]
        %v864 = vld [vmem:[%s3 + $0x590] sm:$0xf]
        %v865 = vld [vmem:[%s3 + $0x594] sm:$0xf]
        %v866 = vld [vmem:[%s3 + $0x598] sm:$0xf]
        %v867 = vld [vmem:[%s3 + $0x59c] sm:$0xf]
        %v868 = vld [vmem:[%s3 + $0x5a0] sm:$0xf]
        %v869 = vld [vmem:[%s3 + $0x5a4] sm:$0xf]
        %v870 = vld [vmem:[%s3 + $0x5a8] sm:$0xf]
        %v871 = vld [vmem:[%s3 + $0x5ac] sm:$0xf]
        %v872 = vld [vmem:[%s3 + $0x5b0] sm:$0xf]
        %v873 = vld [vmem:[%s3 + $0x5b4] sm:$0xf]
        %v874 = vld [vmem:[%s3 + $0x5b8] sm:$0xf]
        %v875 = vld [vmem:[%s3 + $0x5bc] sm:$0xf]
        %v876 = vld [vmem:[%s3 + $0x5c0] sm:$0xf]
        %v877 = vld [vmem:[%s3 + $0x5c4] sm:$0xf]
        %v878 = vld [vmem:[%s3 + $0x5c8] sm:$0xf]
        %v879 = vld [vmem:[%s3 + $0x5cc] sm:$0xf]
        %v880 = vld [vmem:[%s3 + $0x5d0] sm:$0xf]
        %v881 = vld [vmem:[%s3 + $0x5d4] sm:$0xf]
        %v882 = vld [vmem:[%s3 + $0x5d8] sm:$0xf]
        %v883 = vld [vmem:[%s3 + $0x5dc] sm:$0xf]
        %v884 = vld [vmem:[%s3 + $0x5e0] sm:$0xf]
        %v885 = vld [vmem:[%s3 + $0x5e4] sm:$0xf]
        %v886 = vld [vmem:[%s3 + $0x5e8] sm:$0xf]
        %v887 = vld [vmem:[%s3 + $0x5ec] sm:$0xf]
        %v888 = vld [vmem:[%s3 + $0x5f0] sm:$0xf]
        %v889 = vld [vmem:[%s3 + $0x5f4] sm:$0xf]
        %v890 = vld [vmem:[%s3 + $0x5f8] sm:$0xf]
        %v891 = vld [vmem:[%s3 + $0x5fc] sm:$0xf]
        %v892 = vld [vmem:[%s3 + $0x600] sm:$0xf]
        %v893 = vld [vmem:[%s3 + $0x604] sm:$0xf]
        %v894 = vld [vmem:[%s3 + $0x608] sm:$0xf]
        %v895 = vld [vmem:[%s3 + $0x60c] sm:$0xf]
        %v896 = vld [vmem:[%s3 + $0x610] sm:$0xf]
        %v897 = vld [vmem:[%s3 + $0x614] sm:$0xf]
        %v898 = vld [vmem:[%s3 + $0x618] sm:$0xf]
        %v899 = vld [vmem:[%s3 + $0x61c] sm:$0xf]
        %v900 = vld [vmem:[%s3 + $0x620] sm:$0xf]
        %v901 = vld [vmem:[%s3 + $0x624] sm:$0xf]
        %v902 = vld [vmem:[%s3 + $0x628] sm:$0xf]
        %v903 = vld [vmem:[%s3 + $0x62c] sm:$0xf]
        %v904 = vld [vmem:[%s3 + $0x630] sm:$0xf]
        %v905 = vld [vmem:[%s3 + $0x634] sm:$0xf]
        %v906 = vld [vmem:[%s3 + $0x638] sm:$0xf]
        %v907 = vld [vmem:[%s3 + $0x63c] sm:$0xf]
        %v908 = vld [vmem:[%s3 + $0x640] sm:$0xf]
        %v909 = vld [vmem:[%s3 + $0x644] sm:$0xf]
        %v910 = vld [vmem:[%s3 + $0x648] sm:$0xf]
        %v911 = vld [vmem:[%s3 + $0x64c] sm:$0xf]
        %v912 = vld [vmem:[%s3 + $0x650] sm:$0xf]
        %v913 = vld [vmem:[%s3 + $0x654] sm:$0xf]
        %v914 = vld [vmem:[%s3 + $0x658] sm:$0xf]
        %v915 = vld [vmem:[%s3 + $0x65c] sm:$0xf]
        %v916 = vld [vmem:[%s3 + $0x660] sm:$0xf]
        %v917 = vld [vmem:[%s3 + $0x664] sm:$0xf]
        %v918 = vld [vmem:[%s3 + $0x668] sm:$0xf]
        %v919 = vld [vmem:[%s3 + $0x66c] sm:$0xf]
        %v920 = vld [vmem:[%s3 + $0x670] sm:$0xf]
        %v921 = vld [vmem:[%s3 + $0x674] sm:$0xf]
        %v922 = vld [vmem:[%s3 + $0x678] sm:$0xf]
        %v923 = vld [vmem:[%s3 + $0x67c] sm:$0xf]
        %v924 = vld [vmem:[%s3 + $0x680] sm:$0xf]
        %v925 = vld [vmem:[%s3 + $0x684] sm:$0xf]
        %v926 = vld [vmem:[%s3 + $0x688] sm:$0xf]
        %v927 = vld [vmem:[%s3 + $0x68c] sm:$0xf]
        %v928 = vld [vmem:[%s3 + $0x690] sm:$0xf]
        %v929 = vld [vmem:[%s3 + $0x694] sm:$0xf]
        %v930 = vld [vmem:[%s3 + $0x698] sm:$0xf]
        %v931 = vld [vmem:[%s3 + $0x69c] sm:$0xf]
        %v932 = vld [vmem:[%s3 + $0x6a0] sm:$0xf]
        %v933 = vld [vmem:[%s3 + $0x6a4] sm:$0xf]
        %v934 = vld [vmem:[%s3 + $0x6a8] sm:$0xf]
        %v935 = vld [vmem:[%s3 + $0x6ac] sm:$0xf]
        %v936 = vld [vmem:[%s3 + $0x6b0] sm:$0xf]
        %v937 = vld [vmem:[%s3 + $0x6b4] sm:$0xf]
        %v938 = vld [vmem:[%s3 + $0x6b8] sm:$0xf]
        %v939 = vld [vmem:[%s3 + $0x6bc] sm:$0xf]
        %v940 = vld [vmem:[%s3 + $0x6c0] sm:$0xf]
        %v941 = vld [vmem:[%s3 + $0x6c4] sm:$0xf]
        %v942 = vld [vmem:[%s3 + $0x6c8] sm:$0xf]
        %v943 = vld [vmem:[%s3 + $0x6cc] sm:$0xf]
        %v944 = vld [vmem:[%s3 + $0x6d0] sm:$0xf]
        %v945 = vld [vmem:[%s3 + $0x6d4] sm:$0xf]
        %v946 = vld [vmem:[%s3 + $0x6d8] sm:$0xf]
        %v947 = vld [vmem:[%s3 + $0x6dc] sm:$0xf]
        %v948 = vld [vmem:[%s3 + $0x6e0] sm:$0xf]
        %v949 = vld [vmem:[%s3 + $0x6e4] sm:$0xf]
        %v950 = vld [vmem:[%s3 + $0x6e8] sm:$0xf]
        %v951 = vld [vmem:[%s3 + $0x6ec] sm:$0xf]
        %v952 = vld [vmem:[%s3 + $0x6f0] sm:$0xf]
        %v953 = vld [vmem:[%s3 + $0x6f4] sm:$0xf]
        %v954 = vld [vmem:[%s3 + $0x6f8] sm:$0xf]
        %v955 = vld [vmem:[%s3 + $0x6fc] sm:$0xf]
        %v956 = vld [vmem:[%s3 + $0x700] sm:$0xf]
        %v957 = vld [vmem:[%s3 + $0x704] sm:$0xf]
        %v958 = vld [vmem:[%s3 + $0x708] sm:$0xf]
        %v959 = vld [vmem:[%s3 + $0x70c] sm:$0xf]
        %v960 = vld [vmem:[%s3 + $0x710] sm:$0xf]
        %v961 = vld [vmem:[%s3 + $0x714] sm:$0xf]
        %v962 = vld [vmem:[%s3 + $0x718] sm:$0xf]
        %v963 = vld [vmem:[%s3 + $0x71c] sm:$0xf]
        %v964 = vld [vmem:[%s3 + $0x720] sm:$0xf]
        %v965 = vld [vmem:[%s3 + $0x724] sm:$0xf]
        %v966 = vld [vmem:[%s3 + $0x728] sm:$0xf]
        %v967 = vld [vmem:[%s3 + $0x72c] sm:$0xf]
        %v968 = vld [vmem:[%s3 + $0x730] sm:$0xf]
        %v969 = vld [vmem:[%s3 + $0x734] sm:$0xf]
        %v970 = vld [vmem:[%s3 + $0x738] sm:$0xf]
        %v971 = vld [vmem:[%s3 + $0x73c] sm:$0xf]
        %v972 = vld [vmem:[%s3 + $0x740] sm:$0xf]
        %v973 = vld [vmem:[%s3 + $0x744] sm:$0xf]
        %v974 = vld [vmem:[%s3 + $0x748] sm:$0xf]
        %v975 = vld [vmem:[%s3 + $0x74c] sm:$0xf]
        %v976 = vld [vmem:[%s3 + $0x750] sm:$0xf]
        %v977 = vld [vmem:[%s3 + $0x754] sm:$0xf]
        %v978 = vld [vmem:[%s3 + $0x758] sm:$0xf]
        %v979 = vld [vmem:[%s3 + $0x75c] sm:$0xf]
        %v980 = vld [vmem:[%s3 + $0x760] sm:$0xf]
        %v981 = vld [vmem:[%s3 + $0x764] sm:$0xf]
        %v982 = vld [vmem:[%s3 + $0x768] sm:$0xf]
        %v983 = vld [vmem:[%s3 + $0x76c] sm:$0xf]
        %v984 = vld [vmem:[%s3 + $0x770] sm:$0xf]
        %v985 = vld [vmem:[%s3 + $0x774] sm:$0xf]
        %v986 = vld [vmem:[%s3 + $0x778] sm:$0xf]
        %v987 = vld [vmem:[%s3 + $0x77c] sm:$0xf]
        %v988 = vld [vmem:[%s3 + $0x780] sm:$0xf]
        %v989 = vld [vmem:[%s3 + $0x784] sm:$0xf]
        %v990 = vld [vmem:[%s3 + $0x788] sm:$0xf]
        %v991 = vld [vmem:[%s3 + $0x78c] sm:$0xf]
        %v992 = vld [vmem:[%s3 + $0x790] sm:$0xf]
        %v993 = vld [vmem:[%s3 + $0x794] sm:$0xf]
        %v994 = vld [vmem:[%s3 + $0x798] sm:$0xf]
        %v995 = vld [vmem:[%s3 + $0x79c] sm:$0xf]
        %v996 = vld [vmem:[%s3 + $0x7a0] sm:$0xf]
        %v997 = vld [vmem:[%s3 + $0x7a4] sm:$0xf]
        %v998 = vld [vmem:[%s3 + $0x7a8] sm:$0xf]
        %v999 = vld [vmem:[%s3 + $0x7ac] sm:$0xf]
        %v1000 = vld [vmem:[%s3 + $0x7b0] sm:$0xf]
        %v1001 = vld [vmem:[%s3 + $0x7b4] sm:$0xf]
        %v1002 = vld [vmem:[%s3 + $0x7b8] sm:$0xf]
        %v1003 = vld [vmem:[%s3 + $0x7bc] sm:$0xf]
        %v1004 = vld [vmem:[%s3 + $0x7c0] sm:$0xf]
        %v1005 = vld [vmem:[%s3 + $0x7c4] sm:$0xf]
        %v1006 = vld [vmem:[%s3 + $0x7c8] sm:$0xf]
        %v1007 = vld [vmem:[%s3 + $0x7cc] sm:$0xf]
        %v1008 = vld [vmem:[%s3 + $0x7d0] sm:$0xf]
        %v1009 = vld [vmem:[%s3 + $0x7d4] sm:$0xf]
        %v1010 = vld [vmem:[%s3 + $0x7d8] sm:$0xf]
        %v1011 = vld [vmem:[%s3 + $0x7dc] sm:$0xf]
        %v1012 = vld [vmem:[%s3 + $0x7e0] sm:$0xf]
        %v1013 = vld [vmem:[%s3 + $0x7e4] sm:$0xf]
        %v1014 = vld [vmem:[%s3 + $0x7e8] sm:$0xf]
        %v1015 = vld [vmem:[%s3 + $0x7ec] sm:$0xf]
        %v1016 = vld [vmem:[%s3 + $0x7f0] sm:$0xf]
        %v1017 = vld [vmem:[%s3 + $0x7f4] sm:$0xf]
        %v1018 = vld [vmem:[%s3 + $0x7f8] sm:$0xf]
        %v1019 = vld [vmem:[%s3 + $0x7fc] sm:$0xf]
        %v1020 = vpack.i.b16 %v476, %v476
        %v1021 = vlaneseq
        %v1022 = vshrl.u32 %v1021, 7
        %v1023 = vsub.s32 0, %v1022
        %v1024 = vrot.slane %v1020, %v1023
        %v1042 = vunpack.c.l.b16 %v508
        %v1043 = vunpack.c.l.b16 %v509
        %v1044 = vunpack.c.l.b16 %v510
        %v1045 = vunpack.c.l.b16 %v511
        %v1046 = vunpack.c.l.b16 %v512
        %v1047 = vunpack.c.l.b16 %v513
        %v1048 = vunpack.c.l.b16 %v514
        %v1049 = vunpack.c.l.b16 %v515
        %v1050 = vunpack.c.l.b16 %v516
        %v1051 = vunpack.c.l.b16 %v517
        %v1052 = vunpack.c.l.b16 %v518
        %v1053 = vunpack.c.l.b16 %v519
        %v1054 = vunpack.c.l.b16 %v520
        %v1055 = vunpack.c.l.b16 %v521
        %v1056 = vunpack.c.l.b16 %v522
        %v1057 = vunpack.c.l.b16 %v523
        %v1058 = vpack.c.b16 %v1043, %v1042
        %v1059 = vpack.c.b16 %v1045, %v1044
        %v1060 = vpack.c.b16 %v1047, %v1046
        %v1061 = vpack.c.b16 %v1049, %v1048
        %v1062 = vpack.c.b16 %v1051, %v1050
        %v1063 = vpack.c.b16 %v1053, %v1052
        %v1064 = vpack.c.b16 %v1055, %v1054
        %v1065 = vpack.c.b16 %v1057, %v1056
        %1074 = vmatprep.subr.bf16.mxu0 0
        %1075 = vmatpush1.bf16.msra.mxu0 %v1058
        %1076 = vmatprep.subr.bf16.mxu0 0
        %1077 = vmatpush1.bf16.msra.mxu0 %v1059
        %1078 = vmatprep.subr.bf16.mxu0 0
        %1079 = vmatpush1.bf16.msra.mxu0 %v1060
        %1080 = vmatprep.subr.bf16.mxu0 0
        %1081 = vmatpush1.bf16.msra.mxu0 %v1061
        %1082 = vmatprep.subr.bf16.mxu0 0
        %1083 = vmatpush1.bf16.msra.mxu0 %v1062
        %1084 = vmatprep.subr.bf16.mxu0 0
        %1085 = vmatpush1.bf16.msra.mxu0 %v1063
        %1086 = vmatprep.subr.bf16.mxu0 0
        %1087 = vmatpush1.bf16.msra.mxu0 %v1064
        %1088 = vmatprep.subr.bf16.mxu0 0
        %1089 = vmatpush1.bf16.msra.mxu0 %v1065
        %1090 = vmatprep.subr.bf16.mxu0 0
        %1091 = vmatpush1.bf16.msra.mxu0 0
        %1092 = vmatprep.subr.bf16.mxu0 0
        %1093 = vmatpush1.bf16.msra.mxu0 0
        %1094 = vmatprep.subr.bf16.mxu0 0
        %1095 = vmatpush1.bf16.msra.mxu0 0
        %1096 = vmatprep.subr.bf16.mxu0 0
        %1097 = vmatpush1.bf16.msra.mxu0 0
        %1098 = vmatprep.subr.bf16.mxu0 0
        %1099 = vmatpush1.bf16.msra.mxu0 0
        %1100 = vmatprep.subr.bf16.mxu0 0
        %1101 = vmatpush1.bf16.msra.mxu0 0
        %1102 = vmatprep.subr.bf16.mxu0 0
        %1103 = vmatpush1.bf16.msra.mxu0 0
        %1104 = vmatprep.subr.bf16.mxu0 0
        %1105 = vmatpush1.bf16.msra.mxu0 0
        %1106 = vmatprep.mubr.bf16.mxu0 0
        %1107 = vmatmul.mubr.bf16.gmra.mrb[0].mxu0 %v1024
        %v1108 = vpop.f32.mrb[0].mxu0
        %v1109 = vadd.f32 0.0, %v1108
        %v1110 = vpop.f32.mrb[0].mxu0
        %v1111 = vpop.f32.mrb[0].mxu0
        %v1112 = vpop.f32.mrb[0].mxu0
        %1113 = vdwg.mxu0
        %v1114 = vpack.i.b16 %v477, %v477
        %v1115 = vlaneseq
        %v1116 = vshrl.u32 %v1115, 7
        %v1117 = vsub.s32 0, %v1116
        %v1118 = vrot.slane %v1114, %v1117
        %v1136 = vunpack.c.l.b16 %v524
        %v1137 = vunpack.c.l.b16 %v525
        %v1138 = vunpack.c.l.b16 %v526
        %v1139 = vunpack.c.l.b16 %v527
        %v1140 = vunpack.c.l.b16 %v528
        %v1141 = vunpack.c.l.b16 %v529
        %v1142 = vunpack.c.l.b16 %v530
        %v1143 = vunpack.c.l.b16 %v531
        %v1144 = vunpack.c.l.b16 %v532
        %v1145 = vunpack.c.l.b16 %v533
        %v1146 = vunpack.c.l.b16 %v534
        %v1147 = vunpack.c.l.b16 %v535
        %v1148 = vunpack.c.l.b16 %v536
        %v1149 = vunpack.c.l.b16 %v537
        %v1150 = vunpack.c.l.b16 %v538
        %v1151 = vunpack.c.l.b16 %v539
        %v1152 = vpack.c.b16 %v1137, %v1136
        %v1153 = vpack.c.b16 %v1139, %v1138
        %v1154 = vpack.c.b16 %v1141, %v1140
        %v1155 = vpack.c.b16 %v1143, %v1142
        %v1156 = vpack.c.b16 %v1145, %v1144
        %v1157 = vpack.c.b16 %v1147, %v1146
        %v1158 = vpack.c.b16 %v1149, %v1148
        %v1159 = vpack.c.b16 %v1151, %v1150
        %1168 = vmatprep.subr.bf16.mxu0 0
        %1169 = vmatpush1.bf16.msra.mxu0 %v1152
        %1170 = vmatprep.subr.bf16.mxu0 0
        %1171 = vmatpush1.bf16.msra.mxu0 %v1153
        %1172 = vmatprep.subr.bf16.mxu0 0
        %1173 = vmatpush1.bf16.msra.mxu0 %v1154
        %1174 = vmatprep.subr.bf16.mxu0 0
        %1175 = vmatpush1.bf16.msra.mxu0 %v1155
        %1176 = vmatprep.subr.bf16.mxu0 0
        %1177 = vmatpush1.bf16.msra.mxu0 %v1156
        %1178 = vmatprep.subr.bf16.mxu0 0
        %1179 = vmatpush1.bf16.msra.mxu0 %v1157
        %1180 = vmatprep.subr.bf16.mxu0 0
        %1181 = vmatpush1.bf16.msra.mxu0 %v1158
        %1182 = vmatprep.subr.bf16.mxu0 0
        %1183 = vmatpush1.bf16.msra.mxu0 %v1159
        %1184 = vmatprep.subr.bf16.mxu0 0
        %1185 = vmatpush1.bf16.msra.mxu0 0
        %1186 = vmatprep.subr.bf16.mxu0 0
        %1187 = vmatpush1.bf16.msra.mxu0 0
        %1188 = vmatprep.subr.bf16.mxu0 0
        %1189 = vmatpush1.bf16.msra.mxu0 0
        %1190 = vmatprep.subr.bf16.mxu0 0
        %1191 = vmatpush1.bf16.msra.mxu0 0
        %1192 = vmatprep.subr.bf16.mxu0 0
        %1193 = vmatpush1.bf16.msra.mxu0 0
        %1194 = vmatprep.subr.bf16.mxu0 0
        %1195 = vmatpush1.bf16.msra.mxu0 0
        %1196 = vmatprep.subr.bf16.mxu0 0
        %1197 = vmatpush1.bf16.msra.mxu0 0
        %1198 = vmatprep.subr.bf16.mxu0 0
        %1199 = vmatpush1.bf16.msra.mxu0 0
        %1200 = vmatprep.mubr.bf16.mxu0 0
        %1201 = vmatmul.mubr.bf16.gmra.mrb[0].mxu0 %v1118
        %v1202 = vpop.f32.mrb[0].mxu0
        %v1203 = vadd.f32 0.0, %v1202
        %v1204 = vpop.f32.mrb[0].mxu0
        %v1205 = vpop.f32.mrb[0].mxu0
        %v1206 = vpop.f32.mrb[0].mxu0
        %1207 = vdwg.mxu0
        %v1208 = vpack.i.b16 %v478, %v478
        %v1209 = vlaneseq
        %v1210 = vshrl.u32 %v1209, 7
        %v1211 = vsub.s32 0, %v1210
        %v1212 = vrot.slane %v1208, %v1211
        %v1230 = vunpack.c.l.b16 %v540
        %v1231 = vunpack.c.l.b16 %v541
        %v1232 = vunpack.c.l.b16 %v542
        %v1233 = vunpack.c.l.b16 %v543
        %v1234 = vunpack.c.l.b16 %v544
        %v1235 = vunpack.c.l.b16 %v545
        %v1236 = vunpack.c.l.b16 %v546
        %v1237 = vunpack.c.l.b16 %v547
        %v1238 = vunpack.c.l.b16 %v548
        %v1239 = vunpack.c.l.b16 %v549
        %v1240 = vunpack.c.l.b16 %v550
        %v1241 = vunpack.c.l.b16 %v551
        %v1242 = vunpack.c.l.b16 %v552
        %v1243 = vunpack.c.l.b16 %v553
        %v1244 = vunpack.c.l.b16 %v554
        %v1245 = vunpack.c.l.b16 %v555
        %v1246 = vpack.c.b16 %v1231, %v1230
        %v1247 = vpack.c.b16 %v1233, %v1232
        %v1248 = vpack.c.b16 %v1235, %v1234
        %v1249 = vpack.c.b16 %v1237, %v1236
        %v1250 = vpack.c.b16 %v1239, %v1238
        %v1251 = vpack.c.b16 %v1241, %v1240
        %v1252 = vpack.c.b16 %v1243, %v1242
        %v1253 = vpack.c.b16 %v1245, %v1244
        %1262 = vmatprep.subr.bf16.mxu0 0
        %1263 = vmatpush1.bf16.msra.mxu0 %v1246
        %1264 = vmatprep.subr.bf16.mxu0 0
        %1265 = vmatpush1.bf16.msra.mxu0 %v1247
        %1266 = vmatprep.subr.bf16.mxu0 0
        %1267 = vmatpush1.bf16.msra.mxu0 %v1248
        %1268 = vmatprep.subr.bf16.mxu0 0
        %1269 = vmatpush1.bf16.msra.mxu0 %v1249
        %1270 = vmatprep.subr.bf16.mxu0 0
        %1271 = vmatpush1.bf16.msra.mxu0 %v1250
        %1272 = vmatprep.subr.bf16.mxu0 0
        %1273 = vmatpush1.bf16.msra.mxu0 %v1251
        %1274 = vmatprep.subr.bf16.mxu0 0
        %1275 = vmatpush1.bf16.msra.mxu0 %v1252
        %1276 = vmatprep.subr.bf16.mxu0 0
        %1277 = vmatpush1.bf16.msra.mxu0 %v1253
        %1278 = vmatprep.subr.bf16.mxu0 0
        %1279 = vmatpush1.bf16.msra.mxu0 0
        %1280 = vmatprep.subr.bf16.mxu0 0
        %1281 = vmatpush1.bf16.msra.mxu0 0
        %1282 = vmatprep.subr.bf16.mxu0 0
        %1283 = vmatpush1.bf16.msra.mxu0 0
        %1284 = vmatprep.subr.bf16.mxu0 0
        %1285 = vmatpush1.bf16.msra.mxu0 0
        %1286 = vmatprep.subr.bf16.mxu0 0
        %1287 = vmatpush1.bf16.msra.mxu0 0
        %1288 = vmatprep.subr.bf16.mxu0 0
        %1289 = vmatpush1.bf16.msra.mxu0 0
        %1290 = vmatprep.subr.bf16.mxu0 0
        %1291 = vmatpush1.bf16.msra.mxu0 0
        %1292 = vmatprep.subr.bf16.mxu0 0
        %1293 = vmatpush1.bf16.msra.mxu0 0
        %1294 = vmatprep.mubr.bf16.mxu0 0
        %1295 = vmatmul.mubr.bf16.gmra.mrb[0].mxu0 %v1212
        %v1296 = vpop.f32.mrb[0].mxu0
        %v1297 = vadd.f32 0.0, %v1296
        %v1298 = vpop.f32.mrb[0].mxu0
        %v1299 = vpop.f32.mrb[0].mxu0
        %v1300 = vpop.f32.mrb[0].mxu0
        %1301 = vdwg.mxu0
        %v1302 = vpack.i.b16 %v479, %v479
        %v1303 = vlaneseq
        %v1304 = vshrl.u32 %v1303, 7
        %v1305 = vsub.s32 0, %v1304
        %v1306 = vrot.slane %v1302, %v1305
        %v1324 = vunpack.c.l.b16 %v556
        %v1325 = vunpack.c.l.b16 %v557
        %v1326 = vunpack.c.l.b16 %v558
        %v1327 = vunpack.c.l.b16 %v559
        %v1328 = vunpack.c.l.b16 %v560
        %v1329 = vunpack.c.l.b16 %v561
        %v1330 = vunpack.c.l.b16 %v562
        %v1331 = vunpack.c.l.b16 %v563
        %v1332 = vunpack.c.l.b16 %v564
        %v1333 = vunpack.c.l.b16 %v565
        %v1334 = vunpack.c.l.b16 %v566
        %v1335 = vunpack.c.l.b16 %v567
        %v1336 = vunpack.c.l.b16 %v568
        %v1337 = vunpack.c.l.b16 %v569
        %v1338 = vunpack.c.l.b16 %v570
        %v1339 = vunpack.c.l.b16 %v571
        %v1340 = vpack.c.b16 %v1325, %v1324
        %v1341 = vpack.c.b16 %v1327, %v1326
        %v1342 = vpack.c.b16 %v1329, %v1328
        %v1343 = vpack.c.b16 %v1331, %v1330
        %v1344 = vpack.c.b16 %v1333, %v1332
        %v1345 = vpack.c.b16 %v1335, %v1334
        %v1346 = vpack.c.b16 %v1337, %v1336
        %v1347 = vpack.c.b16 %v1339, %v1338
        %1356 = vmatprep.subr.bf16.mxu0 0
        %1357 = vmatpush1.bf16.msra.mxu0 %v1340
        %1358 = vmatprep.subr.bf16.mxu0 0
        %1359 = vmatpush1.bf16.msra.mxu0 %v1341
        %1360 = vmatprep.subr.bf16.mxu0 0
        %1361 = vmatpush1.bf16.msra.mxu0 %v1342
        %1362 = vmatprep.subr.bf16.mxu0 0
        %1363 = vmatpush1.bf16.msra.mxu0 %v1343
        %1364 = vmatprep.subr.bf16.mxu0 0
        %1365 = vmatpush1.bf16.msra.mxu0 %v1344
        %1366 = vmatprep.subr.bf16.mxu0 0
        %1367 = vmatpush1.bf16.msra.mxu0 %v1345
        %1368 = vmatprep.subr.bf16.mxu0 0
        %1369 = vmatpush1.bf16.msra.mxu0 %v1346
        %1370 = vmatprep.subr.bf16.mxu0 0
        %1371 = vmatpush1.bf16.msra.mxu0 %v1347
        %1372 = vmatprep.subr.bf16.mxu0 0
        %1373 = vmatpush1.bf16.msra.mxu0 0
        %1374 = vmatprep.subr.bf16.mxu0 0
        %1375 = vmatpush1.bf16.msra.mxu0 0
        %1376 = vmatprep.subr.bf16.mxu0 0
        %1377 = vmatpush1.bf16.msra.mxu0 0
        %1378 = vmatprep.subr.bf16.mxu0 0
        %1379 = vmatpush1.bf16.msra.mxu0 0
        %1380 = vmatprep.subr.bf16.mxu0 0
        %1381 = vmatpush1.bf16.msra.mxu0 0
        %1382 = vmatprep.subr.bf16.mxu0 0
        %1383 = vmatpush1.bf16.msra.mxu0 0
        %1384 = vmatprep.subr.bf16.mxu0 0
        %1385 = vmatpush1.bf16.msra.mxu0 0
        %1386 = vmatprep.subr.bf16.mxu0 0
        %1387 = vmatpush1.bf16.msra.mxu0 0
        %1388 = vmatprep.mubr.bf16.mxu0 0
        %1389 = vmatmul.mubr.bf16.gmra.mrb[0].mxu0 %v1306
        %v1390 = vpop.f32.mrb[0].mxu0
        %v1391 = vadd.f32 0.0, %v1390
        %v1392 = vpop.f32.mrb[0].mxu0
        %v1393 = vpop.f32.mrb[0].mxu0
        %v1394 = vpop.f32.mrb[0].mxu0
        %1395 = vdwg.mxu0
        %v1396 = vpack.i.b16 %v480, %v480
        %v1397 = vlaneseq
        %v1398 = vshrl.u32 %v1397, 7
        %v1399 = vsub.s32 0, %v1398
        %v1400 = vrot.slane %v1396, %v1399
        %v1418 = vunpack.c.l.b16 %v572
        %v1419 = vunpack.c.l.b16 %v573
        %v1420 = vunpack.c.l.b16 %v574
        %v1421 = vunpack.c.l.b16 %v575
        %v1422 = vunpack.c.l.b16 %v576
        %v1423 = vunpack.c.l.b16 %v577
        %v1424 = vunpack.c.l.b16 %v578
        %v1425 = vunpack.c.l.b16 %v579
        %v1426 = vunpack.c.l.b16 %v580
        %v1427 = vunpack.c.l.b16 %v581
        %v1428 = vunpack.c.l.b16 %v582
        %v1429 = vunpack.c.l.b16 %v583
        %v1430 = vunpack.c.l.b16 %v584
        %v1431 = vunpack.c.l.b16 %v585
        %v1432 = vunpack.c.l.b16 %v586
        %v1433 = vunpack.c.l.b16 %v587
        %v1434 = vpack.c.b16 %v1419, %v1418
        %v1435 = vpack.c.b16 %v1421, %v1420
        %v1436 = vpack.c.b16 %v1423, %v1422
        %v1437 = vpack.c.b16 %v1425, %v1424
        %v1438 = vpack.c.b16 %v1427, %v1426
        %v1439 = vpack.c.b16 %v1429, %v1428
        %v1440 = vpack.c.b16 %v1431, %v1430
        %v1441 = vpack.c.b16 %v1433, %v1432
        %1450 = vmatprep.subr.bf16.mxu0 0
        %1451 = vmatpush1.bf16.msra.mxu0 %v1434
        %1452 = vmatprep.subr.bf16.mxu0 0
        %1453 = vmatpush1.bf16.msra.mxu0 %v1435
        %1454 = vmatprep.subr.bf16.mxu0 0
        %1455 = vmatpush1.bf16.msra.mxu0 %v1436
        %1456 = vmatprep.subr.bf16.mxu0 0
        %1457 = vmatpush1.bf16.msra.mxu0 %v1437
        %1458 = vmatprep.subr.bf16.mxu0 0
        %1459 = vmatpush1.bf16.msra.mxu0 %v1438
        %1460 = vmatprep.subr.bf16.mxu0 0
        %1461 = vmatpush1.bf16.msra.mxu0 %v1439
        %1462 = vmatprep.subr.bf16.mxu0 0
        %1463 = vmatpush1.bf16.msra.mxu0 %v1440
        %1464 = vmatprep.subr.bf16.mxu0 0
        %1465 = vmatpush1.bf16.msra.mxu0 %v1441
        %1466 = vmatprep.subr.bf16.mxu0 0
        %1467 = vmatpush1.bf16.msra.mxu0 0
        %1468 = vmatprep.subr.bf16.mxu0 0
        %1469 = vmatpush1.bf16.msra.mxu0 0
        %1470 = vmatprep.subr.bf16.mxu0 0
        %1471 = vmatpush1.bf16.msra.mxu0 0
        %1472 = vmatprep.subr.bf16.mxu0 0
        %1473 = vmatpush1.bf16.msra.mxu0 0
        %1474 = vmatprep.subr.bf16.mxu0 0
        %1475 = vmatpush1.bf16.msra.mxu0 0
        %1476 = vmatprep.subr.bf16.mxu0 0
        %1477 = vmatpush1.bf16.msra.mxu0 0
        %1478 = vmatprep.subr.bf16.mxu0 0
        %1479 = vmatpush1.bf16.msra.mxu0 0
        %1480 = vmatprep.subr.bf16.mxu0 0
        %1481 = vmatpush1.bf16.msra.mxu0 0
        %1482 = vmatprep.mubr.bf16.mxu0 0
        %1483 = vmatmul.mubr.bf16.gmra.mrb[0].mxu0 %v1400
        %v1484 = vpop.f32.mrb[0].mxu0
        %v1485 = vadd.f32 0.0, %v1484
        %v1486 = vpop.f32.mrb[0].mxu0
        %v1487 = vpop.f32.mrb[0].mxu0
        %v1488 = vpop.f32.mrb[0].mxu0
        %1489 = vdwg.mxu0
        %v1490 = vpack.i.b16 %v481, %v481
        %v1491 = vlaneseq
        %v1492 = vshrl.u32 %v1491, 7
        %v1493 = vsub.s32 0, %v1492
        %v1494 = vrot.slane %v1490, %v1493
        %v1512 = vunpack.c.l.b16 %v588
        %v1513 = vunpack.c.l.b16 %v589
        %v1514 = vunpack.c.l.b16 %v590
        %v1515 = vunpack.c.l.b16 %v591
        %v1516 = vunpack.c.l.b16 %v592
        %v1517 = vunpack.c.l.b16 %v593
        %v1518 = vunpack.c.l.b16 %v594
        %v1519 = vunpack.c.l.b16 %v595
        %v1520 = vunpack.c.l.b16 %v596
        %v1521 = vunpack.c.l.b16 %v597
        %v1522 = vunpack.c.l.b16 %v598
        %v1523 = vunpack.c.l.b16 %v599
        %v1524 = vunpack.c.l.b16 %v600
        %v1525 = vunpack.c.l.b16 %v601
        %v1526 = vunpack.c.l.b16 %v602
        %v1527 = vunpack.c.l.b16 %v603
        %v1528 = vpack.c.b16 %v1513, %v1512
        %v1529 = vpack.c.b16 %v1515, %v1514
        %v1530 = vpack.c.b16 %v1517, %v1516
        %v1531 = vpack.c.b16 %v1519, %v1518
        %v1532 = vpack.c.b16 %v1521, %v1520
        %v1533 = vpack.c.b16 %v1523, %v1522
        %v1534 = vpack.c.b16 %v1525, %v1524
        %v1535 = vpack.c.b16 %v1527, %v1526
        %1544 = vmatprep.subr.bf16.mxu0 0
        %1545 = vmatpush1.bf16.msra.mxu0 %v1528
        %1546 = vmatprep.subr.bf16.mxu0 0
        %1547 = vmatpush1.bf16.msra.mxu0 %v1529
        %1548 = vmatprep.subr.bf16.mxu0 0
        %1549 = vmatpush1.bf16.msra.mxu0 %v1530
        %1550 = vmatprep.subr.bf16.mxu0 0
        %1551 = vmatpush1.bf16.msra.mxu0 %v1531
        %1552 = vmatprep.subr.bf16.mxu0 0
        %1553 = vmatpush1.bf16.msra.mxu0 %v1532
        %1554 = vmatprep.subr.bf16.mxu0 0
        %1555 = vmatpush1.bf16.msra.mxu0 %v1533
        %1556 = vmatprep.subr.bf16.mxu0 0
        %1557 = vmatpush1.bf16.msra.mxu0 %v1534
        %1558 = vmatprep.subr.bf16.mxu0 0
        %1559 = vmatpush1.bf16.msra.mxu0 %v1535
        %1560 = vmatprep.subr.bf16.mxu0 0
        %1561 = vmatpush1.bf16.msra.mxu0 0
        %1562 = vmatprep.subr.bf16.mxu0 0
        %1563 = vmatpush1.bf16.msra.mxu0 0
        %1564 = vmatprep.subr.bf16.mxu0 0
        %1565 = vmatpush1.bf16.msra.mxu0 0
        %1566 = vmatprep.subr.bf16.mxu0 0
        %1567 = vmatpush1.bf16.msra.mxu0 0
        %1568 = vmatprep.subr.bf16.mxu0 0
        %1569 = vmatpush1.bf16.msra.mxu0 0
        %1570 = vmatprep.subr.bf16.mxu0 0
        %1571 = vmatpush1.bf16.msra.mxu0 0
        %1572 = vmatprep.subr.bf16.mxu0 0
        %1573 = vmatpush1.bf16.msra.mxu0 0
        %1574 = vmatprep.subr.bf16.mxu0 0
        %1575 = vmatpush1.bf16.msra.mxu0 0
        %1576 = vmatprep.mubr.bf16.mxu0 0
        %1577 = vmatmul.mubr.bf16.gmra.mrb[0].mxu0 %v1494
        %v1578 = vpop.f32.mrb[0].mxu0
        %v1579 = vadd.f32 0.0, %v1578
        %v1580 = vpop.f32.mrb[0].mxu0
        %v1581 = vpop.f32.mrb[0].mxu0
        %v1582 = vpop.f32.mrb[0].mxu0
        %1583 = vdwg.mxu0
        %v1584 = vpack.i.b16 %v482, %v482
        %v1585 = vlaneseq
        %v1586 = vshrl.u32 %v1585, 7
        %v1587 = vsub.s32 0, %v1586
        %v1588 = vrot.slane %v1584, %v1587
        %v1606 = vunpack.c.l.b16 %v604
        %v1607 = vunpack.c.l.b16 %v605
        %v1608 = vunpack.c.l.b16 %v606
        %v1609 = vunpack.c.l.b16 %v607
        %v1610 = vunpack.c.l.b16 %v608
        %v1611 = vunpack.c.l.b16 %v609
        %v1612 = vunpack.c.l.b16 %v610
        %v1613 = vunpack.c.l.b16 %v611
        %v1614 = vunpack.c.l.b16 %v612
        %v1615 = vunpack.c.l.b16 %v613
        %v1616 = vunpack.c.l.b16 %v614
        %v1617 = vunpack.c.l.b16 %v615
        %v1618 = vunpack.c.l.b16 %v616
        %v1619 = vunpack.c.l.b16 %v617
        %v1620 = vunpack.c.l.b16 %v618
        %v1621 = vunpack.c.l.b16 %v619
        %v1622 = vpack.c.b16 %v1607, %v1606
        %v1623 = vpack.c.b16 %v1609, %v1608
        %v1624 = vpack.c.b16 %v1611, %v1610
        %v1625 = vpack.c.b16 %v1613, %v1612
        %v1626 = vpack.c.b16 %v1615, %v1614
        %v1627 = vpack.c.b16 %v1617, %v1616
        %v1628 = vpack.c.b16 %v1619, %v1618
        %v1629 = vpack.c.b16 %v1621, %v1620
        %1638 = vmatprep.subr.bf16.mxu0 0
        %1639 = vmatpush1.bf16.msra.mxu0 %v1622
        %1640 = vmatprep.subr.bf16.mxu0 0
        %1641 = vmatpush1.bf16.msra.mxu0 %v1623
        %1642 = vmatprep.subr.bf16.mxu0 0
        %1643 = vmatpush1.bf16.msra.mxu0 %v1624
        %1644 = vmatprep.subr.bf16.mxu0 0
        %1645 = vmatpush1.bf16.msra.mxu0 %v1625
        %1646 = vmatprep.subr.bf16.mxu0 0
        %1647 = vmatpush1.bf16.msra.mxu0 %v1626
        %1648 = vmatprep.subr.bf16.mxu0 0
        %1649 = vmatpush1.bf16.msra.mxu0 %v1627
        %1650 = vmatprep.subr.bf16.mxu0 0
        %1651 = vmatpush1.bf16.msra.mxu0 %v1628
        %1652 = vmatprep.subr.bf16.mxu0 0
        %1653 = vmatpush1.bf16.msra.mxu0 %v1629
        %1654 = vmatprep.subr.bf16.mxu0 0
        %1655 = vmatpush1.bf16.msra.mxu0 0
        %1656 = vmatprep.subr.bf16.mxu0 0
        %1657 = vmatpush1.bf16.msra.mxu0 0
        %1658 = vmatprep.subr.bf16.mxu0 0
        %1659 = vmatpush1.bf16.msra.mxu0 0
        %1660 = vmatprep.subr.bf16.mxu0 0
        %1661 = vmatpush1.bf16.msra.mxu0 0
        %1662 = vmatprep.subr.bf16.mxu0 0
        %1663 = vmatpush1.bf16.msra.mxu0 0
        %1664 = vmatprep.subr.bf16.mxu0 0
        %1665 = vmatpush1.bf16.msra.mxu0 0
        %1666 = vmatprep.subr.bf16.mxu0 0
        %1667 = vmatpush1.bf16.msra.mxu0 0
        %1668 = vmatprep.subr.bf16.mxu0 0
        %1669 = vmatpush1.bf16.msra.mxu0 0
        %1670 = vmatprep.mubr.bf16.mxu0 0
        %1671 = vmatmul.mubr.bf16.gmra.mrb[0].mxu0 %v1588
        %v1672 = vpop.f32.mrb[0].mxu0
        %v1673 = vadd.f32 0.0, %v1672
        %v1674 = vpop.f32.mrb[0].mxu0
        %v1675 = vpop.f32.mrb[0].mxu0
        %v1676 = vpop.f32.mrb[0].mxu0
        %1677 = vdwg.mxu0
        %v1678 = vpack.i.b16 %v483, %v483
        %v1679 = vlaneseq
        %v1680 = vshrl.u32 %v1679, 7
        %v1681 = vsub.s32 0, %v1680
        %v1682 = vrot.slane %v1678, %v1681
        %v1700 = vunpack.c.l.b16 %v620
        %v1701 = vunpack.c.l.b16 %v621
        %v1702 = vunpack.c.l.b16 %v622
        %v1703 = vunpack.c.l.b16 %v623
        %v1704 = vunpack.c.l.b16 %v624
        %v1705 = vunpack.c.l.b16 %v625
        %v1706 = vunpack.c.l.b16 %v626
        %v1707 = vunpack.c.l.b16 %v627
        %v1708 = vunpack.c.l.b16 %v628
        %v1709 = vunpack.c.l.b16 %v629
        %v1710 = vunpack.c.l.b16 %v630
        %v1711 = vunpack.c.l.b16 %v631
        %v1712 = vunpack.c.l.b16 %v632
        %v1713 = vunpack.c.l.b16 %v633
        %v1714 = vunpack.c.l.b16 %v634
        %v1715 = vunpack.c.l.b16 %v635
        %v1716 = vpack.c.b16 %v1701, %v1700
        %v1717 = vpack.c.b16 %v1703, %v1702
        %v1718 = vpack.c.b16 %v1705, %v1704
        %v1719 = vpack.c.b16 %v1707, %v1706
        %v1720 = vpack.c.b16 %v1709, %v1708
        %v1721 = vpack.c.b16 %v1711, %v1710
        %v1722 = vpack.c.b16 %v1713, %v1712
        %v1723 = vpack.c.b16 %v1715, %v1714
        %1732 = vmatprep.subr.bf16.mxu0 0
        %1733 = vmatpush1.bf16.msra.mxu0 %v1716
        %1734 = vmatprep.subr.bf16.mxu0 0
        %1735 = vmatpush1.bf16.msra.mxu0 %v1717
        %1736 = vmatprep.subr.bf16.mxu0 0
        %1737 = vmatpush1.bf16.msra.mxu0 %v1718
        %1738 = vmatprep.subr.bf16.mxu0 0
        %1739 = vmatpush1.bf16.msra.mxu0 %v1719
        %1740 = vmatprep.subr.bf16.mxu0 0
        %1741 = vmatpush1.bf16.msra.mxu0 %v1720
        %1742 = vmatprep.subr.bf16.mxu0 0
        %1743 = vmatpush1.bf16.msra.mxu0 %v1721
        %1744 = vmatprep.subr.bf16.mxu0 0
        %1745 = vmatpush1.bf16.msra.mxu0 %v1722
        %1746 = vmatprep.subr.bf16.mxu0 0
        %1747 = vmatpush1.bf16.msra.mxu0 %v1723
        %1748 = vmatprep.subr.bf16.mxu0 0
        %1749 = vmatpush1.bf16.msra.mxu0 0
        %1750 = vmatprep.subr.bf16.mxu0 0
        %1751 = vmatpush1.bf16.msra.mxu0 0
        %1752 = vmatprep.subr.bf16.mxu0 0
        %1753 = vmatpush1.bf16.msra.mxu0 0
        %1754 = vmatprep.subr.bf16.mxu0 0
        %1755 = vmatpush1.bf16.msra.mxu0 0
        %1756 = vmatprep.subr.bf16.mxu0 0
        %1757 = vmatpush1.bf16.msra.mxu0 0
        %1758 = vmatprep.subr.bf16.mxu0 0
        %1759 = vmatpush1.bf16.msra.mxu0 0
        %1760 = vmatprep.subr.bf16.mxu0 0
        %1761 = vmatpush1.bf16.msra.mxu0 0
        %1762 = vmatprep.subr.bf16.mxu0 0
        %1763 = vmatpush1.bf16.msra.mxu0 0
        %1764 = vmatprep.mubr.bf16.mxu0 0
        %1765 = vmatmul.mubr.bf16.gmra.mrb[0].mxu0 %v1682
        %v1766 = vpop.f32.mrb[0].mxu0
        %v1767 = vadd.f32 0.0, %v1766
        %v1768 = vpop.f32.mrb[0].mxu0
        %v1769 = vpop.f32.mrb[0].mxu0
        %v1770 = vpop.f32.mrb[0].mxu0
        %1771 = vdwg.mxu0
        %v1772 = vpack.i.b16 %v484, %v484
        %v1773 = vlaneseq
        %v1774 = vshrl.u32 %v1773, 7
        %v1775 = vsub.s32 0, %v1774
        %v1776 = vrot.slane %v1772, %v1775
        %v1794 = vunpack.c.l.b16 %v636
        %v1795 = vunpack.c.l.b16 %v637
        %v1796 = vunpack.c.l.b16 %v638
        %v1797 = vunpack.c.l.b16 %v639
        %v1798 = vunpack.c.l.b16 %v640
        %v1799 = vunpack.c.l.b16 %v641
        %v1800 = vunpack.c.l.b16 %v642
        %v1801 = vunpack.c.l.b16 %v643
        %v1802 = vunpack.c.l.b16 %v644
        %v1803 = vunpack.c.l.b16 %v645
        %v1804 = vunpack.c.l.b16 %v646
        %v1805 = vunpack.c.l.b16 %v647
        %v1806 = vunpack.c.l.b16 %v648
        %v1807 = vunpack.c.l.b16 %v649
        %v1808 = vunpack.c.l.b16 %v650
        %v1809 = vunpack.c.l.b16 %v651
        %v1810 = vpack.c.b16 %v1795, %v1794
        %v1811 = vpack.c.b16 %v1797, %v1796
        %v1812 = vpack.c.b16 %v1799, %v1798
        %v1813 = vpack.c.b16 %v1801, %v1800
        %v1814 = vpack.c.b16 %v1803, %v1802
        %v1815 = vpack.c.b16 %v1805, %v1804
        %v1816 = vpack.c.b16 %v1807, %v1806
        %v1817 = vpack.c.b16 %v1809, %v1808
        %1826 = vmatprep.subr.bf16.mxu0 0
        %1827 = vmatpush1.bf16.msra.mxu0 %v1810
        %1828 = vmatprep.subr.bf16.mxu0 0
        %1829 = vmatpush1.bf16.msra.mxu0 %v1811
        %1830 = vmatprep.subr.bf16.mxu0 0
        %1831 = vmatpush1.bf16.msra.mxu0 %v1812
        %1832 = vmatprep.subr.bf16.mxu0 0
        %1833 = vmatpush1.bf16.msra.mxu0 %v1813
        %1834 = vmatprep.subr.bf16.mxu0 0
        %1835 = vmatpush1.bf16.msra.mxu0 %v1814
        %1836 = vmatprep.subr.bf16.mxu0 0
        %1837 = vmatpush1.bf16.msra.mxu0 %v1815
        %1838 = vmatprep.subr.bf16.mxu0 0
        %1839 = vmatpush1.bf16.msra.mxu0 %v1816
        %1840 = vmatprep.subr.bf16.mxu0 0
        %1841 = vmatpush1.bf16.msra.mxu0 %v1817
        %1842 = vmatprep.subr.bf16.mxu0 0
        %1843 = vmatpush1.bf16.msra.mxu0 0
        %1844 = vmatprep.subr.bf16.mxu0 0
        %1845 = vmatpush1.bf16.msra.mxu0 0
        %1846 = vmatprep.subr.bf16.mxu0 0
        %1847 = vmatpush1.bf16.msra.mxu0 0
        %1848 = vmatprep.subr.bf16.mxu0 0
        %1849 = vmatpush1.bf16.msra.mxu0 0
        %1850 = vmatprep.subr.bf16.mxu0 0
        %1851 = vmatpush1.bf16.msra.mxu0 0
        %1852 = vmatprep.subr.bf16.mxu0 0
        %1853 = vmatpush1.bf16.msra.mxu0 0
        %1854 = vmatprep.subr.bf16.mxu0 0
        %1855 = vmatpush1.bf16.msra.mxu0 0
        %1856 = vmatprep.subr.bf16.mxu0 0
        %1857 = vmatpush1.bf16.msra.mxu0 0
        %1858 = vmatprep.mubr.bf16.mxu0 0
        %1859 = vmatmul.mubr.bf16.gmra.mrb[0].mxu0 %v1776
        %v1860 = vpop.f32.mrb[0].mxu0
        %v1861 = vadd.f32 0.0, %v1860
        %v1862 = vpop.f32.mrb[0].mxu0
        %v1863 = vpop.f32.mrb[0].mxu0
        %v1864 = vpop.f32.mrb[0].mxu0
        %1865 = vdwg.mxu0
        %v1866 = vpack.i.b16 %v485, %v485
        %v1867 = vlaneseq
        %v1868 = vshrl.u32 %v1867, 7
        %v1869 = vsub.s32 0, %v1868
        %v1870 = vrot.slane %v1866, %v1869
        %v1888 = vunpack.c.l.b16 %v652
        %v1889 = vunpack.c.l.b16 %v653
        %v1890 = vunpack.c.l.b16 %v654
        %v1891 = vunpack.c.l.b16 %v655
        %v1892 = vunpack.c.l.b16 %v656
        %v1893 = vunpack.c.l.b16 %v657
        %v1894 = vunpack.c.l.b16 %v658
        %v1895 = vunpack.c.l.b16 %v659
        %v1896 = vunpack.c.l.b16 %v660
        %v1897 = vunpack.c.l.b16 %v661
        %v1898 = vunpack.c.l.b16 %v662
        %v1899 = vunpack.c.l.b16 %v663
        %v1900 = vunpack.c.l.b16 %v664
        %v1901 = vunpack.c.l.b16 %v665
        %v1902 = vunpack.c.l.b16 %v666
        %v1903 = vunpack.c.l.b16 %v667
        %v1904 = vpack.c.b16 %v1889, %v1888
        %v1905 = vpack.c.b16 %v1891, %v1890
        %v1906 = vpack.c.b16 %v1893, %v1892
        %v1907 = vpack.c.b16 %v1895, %v1894
        %v1908 = vpack.c.b16 %v1897, %v1896
        %v1909 = vpack.c.b16 %v1899, %v1898
        %v1910 = vpack.c.b16 %v1901, %v1900
        %v1911 = vpack.c.b16 %v1903, %v1902
        %1920 = vmatprep.subr.bf16.mxu0 0
        %1921 = vmatpush1.bf16.msra.mxu0 %v1904
        %1922 = vmatprep.subr.bf16.mxu0 0
        %1923 = vmatpush1.bf16.msra.mxu0 %v1905
        %1924 = vmatprep.subr.bf16.mxu0 0
        %1925 = vmatpush1.bf16.msra.mxu0 %v1906
        %1926 = vmatprep.subr.bf16.mxu0 0
        %1927 = vmatpush1.bf16.msra.mxu0 %v1907
        %1928 = vmatprep.subr.bf16.mxu0 0
        %1929 = vmatpush1.bf16.msra.mxu0 %v1908
        %1930 = vmatprep.subr.bf16.mxu0 0
        %1931 = vmatpush1.bf16.msra.mxu0 %v1909
        %1932 = vmatprep.subr.bf16.mxu0 0
        %1933 = vmatpush1.bf16.msra.mxu0 %v1910
        %1934 = vmatprep.subr.bf16.mxu0 0
        %1935 = vmatpush1.bf16.msra.mxu0 %v1911
        %1936 = vmatprep.subr.bf16.mxu0 0
        %1937 = vmatpush1.bf16.msra.mxu0 0
        %1938 = vmatprep.subr.bf16.mxu0 0
        %1939 = vmatpush1.bf16.msra.mxu0 0
        %1940 = vmatprep.subr.bf16.mxu0 0
        %1941 = vmatpush1.bf16.msra.mxu0 0
        %1942 = vmatprep.subr.bf16.mxu0 0
        %1943 = vmatpush1.bf16.msra.mxu0 0
        %1944 = vmatprep.subr.bf16.mxu0 0
        %1945 = vmatpush1.bf16.msra.mxu0 0
        %1946 = vmatprep.subr.bf16.mxu0 0
        %1947 = vmatpush1.bf16.msra.mxu0 0
        %1948 = vmatprep.subr.bf16.mxu0 0
        %1949 = vmatpush1.bf16.msra.mxu0 0
        %1950 = vmatprep.subr.bf16.mxu0 0
        %1951 = vmatpush1.bf16.msra.mxu0 0
        %1952 = vmatprep.mubr.bf16.mxu0 0
        %1953 = vmatmul.mubr.bf16.gmra.mrb[0].mxu0 %v1870
        %v1954 = vpop.f32.mrb[0].mxu0
        %v1955 = vadd.f32 0.0, %v1954
        %v1956 = vpop.f32.mrb[0].mxu0
        %v1957 = vpop.f32.mrb[0].mxu0
        %v1958 = vpop.f32.mrb[0].mxu0
        %1959 = vdwg.mxu0
        %v1960 = vpack.i.b16 %v486, %v486
        %v1961 = vlaneseq
        %v1962 = vshrl.u32 %v1961, 7
        %v1963 = vsub.s32 0, %v1962
        %v1964 = vrot.slane %v1960, %v1963
        %v1982 = vunpack.c.l.b16 %v668
        %v1983 = vunpack.c.l.b16 %v669
        %v1984 = vunpack.c.l.b16 %v670
        %v1985 = vunpack.c.l.b16 %v671
        %v1986 = vunpack.c.l.b16 %v672
        %v1987 = vunpack.c.l.b16 %v673
        %v1988 = vunpack.c.l.b16 %v674
        %v1989 = vunpack.c.l.b16 %v675
        %v1990 = vunpack.c.l.b16 %v676
        %v1991 = vunpack.c.l.b16 %v677
        %v1992 = vunpack.c.l.b16 %v678
        %v1993 = vunpack.c.l.b16 %v679
        %v1994 = vunpack.c.l.b16 %v680
        %v1995 = vunpack.c.l.b16 %v681
        %v1996 = vunpack.c.l.b16 %v682
        %v1997 = vunpack.c.l.b16 %v683
        %v1998 = vpack.c.b16 %v1983, %v1982
        %v1999 = vpack.c.b16 %v1985, %v1984
        %v2000 = vpack.c.b16 %v1987, %v1986
        %v2001 = vpack.c.b16 %v1989, %v1988
        %v2002 = vpack.c.b16 %v1991, %v1990
        %v2003 = vpack.c.b16 %v1993, %v1992
        %v2004 = vpack.c.b16 %v1995, %v1994
        %v2005 = vpack.c.b16 %v1997, %v1996
        %2014 = vmatprep.subr.bf16.mxu0 0
        %2015 = vmatpush1.bf16.msra.mxu0 %v1998
        %2016 = vmatprep.subr.bf16.mxu0 0
        %2017 = vmatpush1.bf16.msra.mxu0 %v1999
        %2018 = vmatprep.subr.bf16.mxu0 0
        %2019 = vmatpush1.bf16.msra.mxu0 %v2000
        %2020 = vmatprep.subr.bf16.mxu0 0
        %2021 = vmatpush1.bf16.msra.mxu0 %v2001
        %2022 = vmatprep.subr.bf16.mxu0 0
        %2023 = vmatpush1.bf16.msra.mxu0 %v2002
        %2024 = vmatprep.subr.bf16.mxu0 0
        %2025 = vmatpush1.bf16.msra.mxu0 %v2003
        %2026 = vmatprep.subr.bf16.mxu0 0
        %2027 = vmatpush1.bf16.msra.mxu0 %v2004
        %2028 = vmatprep.subr.bf16.mxu0 0
        %2029 = vmatpush1.bf16.msra.mxu0 %v2005
        %2030 = vmatprep.subr.bf16.mxu0 0
        %2031 = vmatpush1.bf16.msra.mxu0 0
        %2032 = vmatprep.subr.bf16.mxu0 0
        %2033 = vmatpush1.bf16.msra.mxu0 0
        %2034 = vmatprep.subr.bf16.mxu0 0
        %2035 = vmatpush1.bf16.msra.mxu0 0
        %2036 = vmatprep.subr.bf16.mxu0 0
        %2037 = vmatpush1.bf16.msra.mxu0 0
        %2038 = vmatprep.subr.bf16.mxu0 0
        %2039 = vmatpush1.bf16.msra.mxu0 0
        %2040 = vmatprep.subr.bf16.mxu0 0
        %2041 = vmatpush1.bf16.msra.mxu0 0
        %2042 = vmatprep.subr.bf16.mxu0 0
        %2043 = vmatpush1.bf16.msra.mxu0 0
        %2044 = vmatprep.subr.bf16.mxu0 0
        %2045 = vmatpush1.bf16.msra.mxu0 0
        %2046 = vmatprep.mubr.bf16.mxu0 0
        %2047 = vmatmul.mubr.bf16.gmra.mrb[0].mxu0 %v1964
        %v2048 = vpop.f32.mrb[0].mxu0
        %v2049 = vadd.f32 0.0, %v2048
        %v2050 = vpop.f32.mrb[0].mxu0
        %v2051 = vpop.f32.mrb[0].mxu0
        %v2052 = vpop.f32.mrb[0].mxu0
        %2053 = vdwg.mxu0
        %v2054 = vpack.i.b16 %v487, %v487
        %v2055 = vlaneseq
        %v2056 = vshrl.u32 %v2055, 7
        %v2057 = vsub.s32 0, %v2056
        %v2058 = vrot.slane %v2054, %v2057
        %v2076 = vunpack.c.l.b16 %v684
        %v2077 = vunpack.c.l.b16 %v685
        %v2078 = vunpack.c.l.b16 %v686
        %v2079 = vunpack.c.l.b16 %v687
        %v2080 = vunpack.c.l.b16 %v688
        %v2081 = vunpack.c.l.b16 %v689
        %v2082 = vunpack.c.l.b16 %v690
        %v2083 = vunpack.c.l.b16 %v691
        %v2084 = vunpack.c.l.b16 %v692
        %v2085 = vunpack.c.l.b16 %v693
        %v2086 = vunpack.c.l.b16 %v694
        %v2087 = vunpack.c.l.b16 %v695
        %v2088 = vunpack.c.l.b16 %v696
        %v2089 = vunpack.c.l.b16 %v697
        %v2090 = vunpack.c.l.b16 %v698
        %v2091 = vunpack.c.l.b16 %v699
        %v2092 = vpack.c.b16 %v2077, %v2076
        %v2093 = vpack.c.b16 %v2079, %v2078
        %v2094 = vpack.c.b16 %v2081, %v2080
        %v2095 = vpack.c.b16 %v2083, %v2082
        %v2096 = vpack.c.b16 %v2085, %v2084
        %v2097 = vpack.c.b16 %v2087, %v2086
        %v2098 = vpack.c.b16 %v2089, %v2088
        %v2099 = vpack.c.b16 %v2091, %v2090
        %2108 = vmatprep.subr.bf16.mxu0 0
        %2109 = vmatpush1.bf16.msra.mxu0 %v2092
        %2110 = vmatprep.subr.bf16.mxu0 0
        %2111 = vmatpush1.bf16.msra.mxu0 %v2093
        %2112 = vmatprep.subr.bf16.mxu0 0
        %2113 = vmatpush1.bf16.msra.mxu0 %v2094
        %2114 = vmatprep.subr.bf16.mxu0 0
        %2115 = vmatpush1.bf16.msra.mxu0 %v2095
        %2116 = vmatprep.subr.bf16.mxu0 0
        %2117 = vmatpush1.bf16.msra.mxu0 %v2096
        %2118 = vmatprep.subr.bf16.mxu0 0
        %2119 = vmatpush1.bf16.msra.mxu0 %v2097
        %2120 = vmatprep.subr.bf16.mxu0 0
        %2121 = vmatpush1.bf16.msra.mxu0 %v2098
        %2122 = vmatprep.subr.bf16.mxu0 0
        %2123 = vmatpush1.bf16.msra.mxu0 %v2099
        %2124 = vmatprep.subr.bf16.mxu0 0
        %2125 = vmatpush1.bf16.msra.mxu0 0
        %2126 = vmatprep.subr.bf16.mxu0 0
        %2127 = vmatpush1.bf16.msra.mxu0 0
        %2128 = vmatprep.subr.bf16.mxu0 0
        %2129 = vmatpush1.bf16.msra.mxu0 0
        %2130 = vmatprep.subr.bf16.mxu0 0
        %2131 = vmatpush1.bf16.msra.mxu0 0
        %2132 = vmatprep.subr.bf16.mxu0 0
        %2133 = vmatpush1.bf16.msra.mxu0 0
        %2134 = vmatprep.subr.bf16.mxu0 0
        %2135 = vmatpush1.bf16.msra.mxu0 0
        %2136 = vmatprep.subr.bf16.mxu0 0
        %2137 = vmatpush1.bf16.msra.mxu0 0
        %2138 = vmatprep.subr.bf16.mxu0 0
        %2139 = vmatpush1.bf16.msra.mxu0 0
        %2140 = vmatprep.mubr.bf16.mxu0 0
        %2141 = vmatmul.mubr.bf16.gmra.mrb[0].mxu0 %v2058
        %v2142 = vpop.f32.mrb[0].mxu0
        %v2143 = vadd.f32 0.0, %v2142
        %v2144 = vpop.f32.mrb[0].mxu0
        %v2145 = vpop.f32.mrb[0].mxu0
        %v2146 = vpop.f32.mrb[0].mxu0
        %2147 = vdwg.mxu0
        %v2148 = vpack.i.b16 %v488, %v488
        %v2149 = vlaneseq
        %v2150 = vshrl.u32 %v2149, 7
        %v2151 = vsub.s32 0, %v2150
        %v2152 = vrot.slane %v2148, %v2151
        %v2170 = vunpack.c.l.b16 %v700
        %v2171 = vunpack.c.l.b16 %v701
        %v2172 = vunpack.c.l.b16 %v702
        %v2173 = vunpack.c.l.b16 %v703
        %v2174 = vunpack.c.l.b16 %v704
        %v2175 = vunpack.c.l.b16 %v705
        %v2176 = vunpack.c.l.b16 %v706
        %v2177 = vunpack.c.l.b16 %v707
        %v2178 = vunpack.c.l.b16 %v708
        %v2179 = vunpack.c.l.b16 %v709
        %v2180 = vunpack.c.l.b16 %v710
        %v2181 = vunpack.c.l.b16 %v711
        %v2182 = vunpack.c.l.b16 %v712
        %v2183 = vunpack.c.l.b16 %v713
        %v2184 = vunpack.c.l.b16 %v714
        %v2185 = vunpack.c.l.b16 %v715
        %v2186 = vpack.c.b16 %v2171, %v2170
        %v2187 = vpack.c.b16 %v2173, %v2172
        %v2188 = vpack.c.b16 %v2175, %v2174
        %v2189 = vpack.c.b16 %v2177, %v2176
        %v2190 = vpack.c.b16 %v2179, %v2178
        %v2191 = vpack.c.b16 %v2181, %v2180
        %v2192 = vpack.c.b16 %v2183, %v2182
        %v2193 = vpack.c.b16 %v2185, %v2184
        %2202 = vmatprep.subr.bf16.mxu0 0
        %2203 = vmatpush1.bf16.msra.mxu0 %v2186
        %2204 = vmatprep.subr.bf16.mxu0 0
        %2205 = vmatpush1.bf16.msra.mxu0 %v2187
        %2206 = vmatprep.subr.bf16.mxu0 0
        %2207 = vmatpush1.bf16.msra.mxu0 %v2188
        %2208 = vmatprep.subr.bf16.mxu0 0
        %2209 = vmatpush1.bf16.msra.mxu0 %v2189
        %2210 = vmatprep.subr.bf16.mxu0 0
        %2211 = vmatpush1.bf16.msra.mxu0 %v2190
        %2212 = vmatprep.subr.bf16.mxu0 0
        %2213 = vmatpush1.bf16.msra.mxu0 %v2191
        %2214 = vmatprep.subr.bf16.mxu0 0
        %2215 = vmatpush1.bf16.msra.mxu0 %v2192
        %2216 = vmatprep.subr.bf16.mxu0 0
        %2217 = vmatpush1.bf16.msra.mxu0 %v2193
        %2218 = vmatprep.subr.bf16.mxu0 0
        %2219 = vmatpush1.bf16.msra.mxu0 0
        %2220 = vmatprep.subr.bf16.mxu0 0
        %2221 = vmatpush1.bf16.msra.mxu0 0
        %2222 = vmatprep.subr.bf16.mxu0 0
        %2223 = vmatpush1.bf16.msra.mxu0 0
        %2224 = vmatprep.subr.bf16.mxu0 0
        %2225 = vmatpush1.bf16.msra.mxu0 0
        %2226 = vmatprep.subr.bf16.mxu0 0
        %2227 = vmatpush1.bf16.msra.mxu0 0
        %2228 = vmatprep.subr.bf16.mxu0 0
        %2229 = vmatpush1.bf16.msra.mxu0 0
        %2230 = vmatprep.subr.bf16.mxu0 0
        %2231 = vmatpush1.bf16.msra.mxu0 0
        %2232 = vmatprep.subr.bf16.mxu0 0
        %2233 = vmatpush1.bf16.msra.mxu0 0
        %2234 = vmatprep.mubr.bf16.mxu0 0
        %2235 = vmatmul.mubr.bf16.gmra.mrb[0].mxu0 %v2152
        %v2236 = vpop.f32.mrb[0].mxu0
        %v2237 = vadd.f32 0.0, %v2236
        %v2238 = vpop.f32.mrb[0].mxu0
        %v2239 = vpop.f32.mrb[0].mxu0
        %v2240 = vpop.f32.mrb[0].mxu0
        %2241 = vdwg.mxu0
        %v2242 = vpack.i.b16 %v489, %v489
        %v2243 = vlaneseq
        %v2244 = vshrl.u32 %v2243, 7
        %v2245 = vsub.s32 0, %v2244
        %v2246 = vrot.slane %v2242, %v2245
        %v2264 = vunpack.c.l.b16 %v716
        %v2265 = vunpack.c.l.b16 %v717
        %v2266 = vunpack.c.l.b16 %v718
        %v2267 = vunpack.c.l.b16 %v719
        %v2268 = vunpack.c.l.b16 %v720
        %v2269 = vunpack.c.l.b16 %v721
        %v2270 = vunpack.c.l.b16 %v722
        %v2271 = vunpack.c.l.b16 %v723
        %v2272 = vunpack.c.l.b16 %v724
        %v2273 = vunpack.c.l.b16 %v725
        %v2274 = vunpack.c.l.b16 %v726
        %v2275 = vunpack.c.l.b16 %v727
        %v2276 = vunpack.c.l.b16 %v728
        %v2277 = vunpack.c.l.b16 %v729
        %v2278 = vunpack.c.l.b16 %v730
        %v2279 = vunpack.c.l.b16 %v731
        %v2280 = vpack.c.b16 %v2265, %v2264
        %v2281 = vpack.c.b16 %v2267, %v2266
        %v2282 = vpack.c.b16 %v2269, %v2268
        %v2283 = vpack.c.b16 %v2271, %v2270
        %v2284 = vpack.c.b16 %v2273, %v2272
        %v2285 = vpack.c.b16 %v2275, %v2274
        %v2286 = vpack.c.b16 %v2277, %v2276
        %v2287 = vpack.c.b16 %v2279, %v2278
        %2296 = vmatprep.subr.bf16.mxu0 0
        %2297 = vmatpush1.bf16.msra.mxu0 %v2280
        %2298 = vmatprep.subr.bf16.mxu0 0
        %2299 = vmatpush1.bf16.msra.mxu0 %v2281
        %2300 = vmatprep.subr.bf16.mxu0 0
        %2301 = vmatpush1.bf16.msra.mxu0 %v2282
        %2302 = vmatprep.subr.bf16.mxu0 0
        %2303 = vmatpush1.bf16.msra.mxu0 %v2283
        %2304 = vmatprep.subr.bf16.mxu0 0
        %2305 = vmatpush1.bf16.msra.mxu0 %v2284
        %2306 = vmatprep.subr.bf16.mxu0 0
        %2307 = vmatpush1.bf16.msra.mxu0 %v2285
        %2308 = vmatprep.subr.bf16.mxu0 0
        %2309 = vmatpush1.bf16.msra.mxu0 %v2286
        %2310 = vmatprep.subr.bf16.mxu0 0
        %2311 = vmatpush1.bf16.msra.mxu0 %v2287
        %2312 = vmatprep.subr.bf16.mxu0 0
        %2313 = vmatpush1.bf16.msra.mxu0 0
        %2314 = vmatprep.subr.bf16.mxu0 0
        %2315 = vmatpush1.bf16.msra.mxu0 0
        %2316 = vmatprep.subr.bf16.mxu0 0
        %2317 = vmatpush1.bf16.msra.mxu0 0
        %2318 = vmatprep.subr.bf16.mxu0 0
        %2319 = vmatpush1.bf16.msra.mxu0 0
        %2320 = vmatprep.subr.bf16.mxu0 0
        %2321 = vmatpush1.bf16.msra.mxu0 0
        %2322 = vmatprep.subr.bf16.mxu0 0
        %2323 = vmatpush1.bf16.msra.mxu0 0
        %2324 = vmatprep.subr.bf16.mxu0 0
        %2325 = vmatpush1.bf16.msra.mxu0 0
        %2326 = vmatprep.subr.bf16.mxu0 0
        %2327 = vmatpush1.bf16.msra.mxu0 0
        %2328 = vmatprep.mubr.bf16.mxu0 0
        %2329 = vmatmul.mubr.bf16.gmra.mrb[0].mxu0 %v2246
        %v2330 = vpop.f32.mrb[0].mxu0
        %v2331 = vadd.f32 0.0, %v2330
        %v2332 = vpop.f32.mrb[0].mxu0
        %v2333 = vpop.f32.mrb[0].mxu0
        %v2334 = vpop.f32.mrb[0].mxu0
        %2335 = vdwg.mxu0
        %v2336 = vpack.i.b16 %v490, %v490
        %v2337 = vlaneseq
        %v2338 = vshrl.u32 %v2337, 7
        %v2339 = vsub.s32 0, %v2338
        %v2340 = vrot.slane %v2336, %v2339
        %v2358 = vunpack.c.l.b16 %v732
        %v2359 = vunpack.c.l.b16 %v733
        %v2360 = vunpack.c.l.b16 %v734
        %v2361 = vunpack.c.l.b16 %v735
        %v2362 = vunpack.c.l.b16 %v736
        %v2363 = vunpack.c.l.b16 %v737
        %v2364 = vunpack.c.l.b16 %v738
        %v2365 = vunpack.c.l.b16 %v739
        %v2366 = vunpack.c.l.b16 %v740
        %v2367 = vunpack.c.l.b16 %v741
        %v2368 = vunpack.c.l.b16 %v742
        %v2369 = vunpack.c.l.b16 %v743
        %v2370 = vunpack.c.l.b16 %v744
        %v2371 = vunpack.c.l.b16 %v745
        %v2372 = vunpack.c.l.b16 %v746
        %v2373 = vunpack.c.l.b16 %v747
        %v2374 = vpack.c.b16 %v2359, %v2358
        %v2375 = vpack.c.b16 %v2361, %v2360
        %v2376 = vpack.c.b16 %v2363, %v2362
        %v2377 = vpack.c.b16 %v2365, %v2364
        %v2378 = vpack.c.b16 %v2367, %v2366
        %v2379 = vpack.c.b16 %v2369, %v2368
        %v2380 = vpack.c.b16 %v2371, %v2370
        %v2381 = vpack.c.b16 %v2373, %v2372
        %2390 = vmatprep.subr.bf16.mxu0 0
        %2391 = vmatpush1.bf16.msra.mxu0 %v2374
        %2392 = vmatprep.subr.bf16.mxu0 0
        %2393 = vmatpush1.bf16.msra.mxu0 %v2375
        %2394 = vmatprep.subr.bf16.mxu0 0
        %2395 = vmatpush1.bf16.msra.mxu0 %v2376
        %2396 = vmatprep.subr.bf16.mxu0 0
        %2397 = vmatpush1.bf16.msra.mxu0 %v2377
        %2398 = vmatprep.subr.bf16.mxu0 0
        %2399 = vmatpush1.bf16.msra.mxu0 %v2378
        %2400 = vmatprep.subr.bf16.mxu0 0
        %2401 = vmatpush1.bf16.msra.mxu0 %v2379
        %2402 = vmatprep.subr.bf16.mxu0 0
        %2403 = vmatpush1.bf16.msra.mxu0 %v2380
        %2404 = vmatprep.subr.bf16.mxu0 0
        %2405 = vmatpush1.bf16.msra.mxu0 %v2381
        %2406 = vmatprep.subr.bf16.mxu0 0
        %2407 = vmatpush1.bf16.msra.mxu0 0
        %2408 = vmatprep.subr.bf16.mxu0 0
        %2409 = vmatpush1.bf16.msra.mxu0 0
        %2410 = vmatprep.subr.bf16.mxu0 0
        %2411 = vmatpush1.bf16.msra.mxu0 0
        %2412 = vmatprep.subr.bf16.mxu0 0
        %2413 = vmatpush1.bf16.msra.mxu0 0
        %2414 = vmatprep.subr.bf16.mxu0 0
        %2415 = vmatpush1.bf16.msra.mxu0 0
        %2416 = vmatprep.subr.bf16.mxu0 0
        %2417 = vmatpush1.bf16.msra.mxu0 0
        %2418 = vmatprep.subr.bf16.mxu0 0
        %2419 = vmatpush1.bf16.msra.mxu0 0
        %2420 = vmatprep.subr.bf16.mxu0 0
        %2421 = vmatpush1.bf16.msra.mxu0 0
        %2422 = vmatprep.mubr.bf16.mxu0 0
        %2423 = vmatmul.mubr.bf16.gmra.mrb[0].mxu0 %v2340
        %v2424 = vpop.f32.mrb[0].mxu0
        %v2425 = vadd.f32 0.0, %v2424
        %v2426 = vpop.f32.mrb[0].mxu0
        %v2427 = vpop.f32.mrb[0].mxu0
        %v2428 = vpop.f32.mrb[0].mxu0
        %2429 = vdwg.mxu0
        %v2430 = vpack.i.b16 %v491, %v491
        %v2431 = vlaneseq
        %v2432 = vshrl.u32 %v2431, 7
        %v2433 = vsub.s32 0, %v2432
        %v2434 = vrot.slane %v2430, %v2433
        %v2452 = vunpack.c.l.b16 %v748
        %v2453 = vunpack.c.l.b16 %v749
        %v2454 = vunpack.c.l.b16 %v750
        %v2455 = vunpack.c.l.b16 %v751
        %v2456 = vunpack.c.l.b16 %v752
        %v2457 = vunpack.c.l.b16 %v753
        %v2458 = vunpack.c.l.b16 %v754
        %v2459 = vunpack.c.l.b16 %v755
        %v2460 = vunpack.c.l.b16 %v756
        %v2461 = vunpack.c.l.b16 %v757
        %v2462 = vunpack.c.l.b16 %v758
        %v2463 = vunpack.c.l.b16 %v759
        %v2464 = vunpack.c.l.b16 %v760
        %v2465 = vunpack.c.l.b16 %v761
        %v2466 = vunpack.c.l.b16 %v762
        %v2467 = vunpack.c.l.b16 %v763
        %v2468 = vpack.c.b16 %v2453, %v2452
        %v2469 = vpack.c.b16 %v2455, %v2454
        %v2470 = vpack.c.b16 %v2457, %v2456
        %v2471 = vpack.c.b16 %v2459, %v2458
        %v2472 = vpack.c.b16 %v2461, %v2460
        %v2473 = vpack.c.b16 %v2463, %v2462
        %v2474 = vpack.c.b16 %v2465, %v2464
        %v2475 = vpack.c.b16 %v2467, %v2466
        %2484 = vmatprep.subr.bf16.mxu0 0
        %2485 = vmatpush1.bf16.msra.mxu0 %v2468
        %2486 = vmatprep.subr.bf16.mxu0 0
        %2487 = vmatpush1.bf16.msra.mxu0 %v2469
        %2488 = vmatprep.subr.bf16.mxu0 0
        %2489 = vmatpush1.bf16.msra.mxu0 %v2470
        %2490 = vmatprep.subr.bf16.mxu0 0
        %2491 = vmatpush1.bf16.msra.mxu0 %v2471
        %2492 = vmatprep.subr.bf16.mxu0 0
        %2493 = vmatpush1.bf16.msra.mxu0 %v2472
        %2494 = vmatprep.subr.bf16.mxu0 0
        %2495 = vmatpush1.bf16.msra.mxu0 %v2473
        %2496 = vmatprep.subr.bf16.mxu0 0
        %2497 = vmatpush1.bf16.msra.mxu0 %v2474
        %2498 = vmatprep.subr.bf16.mxu0 0
        %2499 = vmatpush1.bf16.msra.mxu0 %v2475
        %2500 = vmatprep.subr.bf16.mxu0 0
        %2501 = vmatpush1.bf16.msra.mxu0 0
        %2502 = vmatprep.subr.bf16.mxu0 0
        %2503 = vmatpush1.bf16.msra.mxu0 0
        %2504 = vmatprep.subr.bf16.mxu0 0
        %2505 = vmatpush1.bf16.msra.mxu0 0
        %2506 = vmatprep.subr.bf16.mxu0 0
        %2507 = vmatpush1.bf16.msra.mxu0 0
        %2508 = vmatprep.subr.bf16.mxu0 0
        %2509 = vmatpush1.bf16.msra.mxu0 0
        %2510 = vmatprep.subr.bf16.mxu0 0
        %2511 = vmatpush1.bf16.msra.mxu0 0
        %2512 = vmatprep.subr.bf16.mxu0 0
        %2513 = vmatpush1.bf16.msra.mxu0 0
        %2514 = vmatprep.subr.bf16.mxu0 0
        %2515 = vmatpush1.bf16.msra.mxu0 0
        %2516 = vmatprep.mubr.bf16.mxu0 0
        %2517 = vmatmul.mubr.bf16.gmra.mrb[0].mxu0 %v2434
        %v2518 = vpop.f32.mrb[0].mxu0
        %v2519 = vadd.f32 0.0, %v2518
        %v2520 = vpop.f32.mrb[0].mxu0
        %v2521 = vpop.f32.mrb[0].mxu0
        %v2522 = vpop.f32.mrb[0].mxu0
        %2523 = vdwg.mxu0
        %v2524 = vpack.i.b16 %v492, %v492
        %v2525 = vlaneseq
        %v2526 = vshrl.u32 %v2525, 7
        %v2527 = vsub.s32 0, %v2526
        %v2528 = vrot.slane %v2524, %v2527
        %v2546 = vunpack.c.l.b16 %v764
        %v2547 = vunpack.c.l.b16 %v765
        %v2548 = vunpack.c.l.b16 %v766
        %v2549 = vunpack.c.l.b16 %v767
        %v2550 = vunpack.c.l.b16 %v768
        %v2551 = vunpack.c.l.b16 %v769
        %v2552 = vunpack.c.l.b16 %v770
        %v2553 = vunpack.c.l.b16 %v771
        %v2554 = vunpack.c.l.b16 %v772
        %v2555 = vunpack.c.l.b16 %v773
        %v2556 = vunpack.c.l.b16 %v774
        %v2557 = vunpack.c.l.b16 %v775
        %v2558 = vunpack.c.l.b16 %v776
        %v2559 = vunpack.c.l.b16 %v777
        %v2560 = vunpack.c.l.b16 %v778
        %v2561 = vunpack.c.l.b16 %v779
        %v2562 = vpack.c.b16 %v2547, %v2546
        %v2563 = vpack.c.b16 %v2549, %v2548
        %v2564 = vpack.c.b16 %v2551, %v2550
        %v2565 = vpack.c.b16 %v2553, %v2552
        %v2566 = vpack.c.b16 %v2555, %v2554
        %v2567 = vpack.c.b16 %v2557, %v2556
        %v2568 = vpack.c.b16 %v2559, %v2558
        %v2569 = vpack.c.b16 %v2561, %v2560
        %2578 = vmatprep.subr.bf16.mxu0 0
        %2579 = vmatpush1.bf16.msra.mxu0 %v2562
        %2580 = vmatprep.subr.bf16.mxu0 0
        %2581 = vmatpush1.bf16.msra.mxu0 %v2563
        %2582 = vmatprep.subr.bf16.mxu0 0
        %2583 = vmatpush1.bf16.msra.mxu0 %v2564
        %2584 = vmatprep.subr.bf16.mxu0 0
        %2585 = vmatpush1.bf16.msra.mxu0 %v2565
        %2586 = vmatprep.subr.bf16.mxu0 0
        %2587 = vmatpush1.bf16.msra.mxu0 %v2566
        %2588 = vmatprep.subr.bf16.mxu0 0
        %2589 = vmatpush1.bf16.msra.mxu0 %v2567
        %2590 = vmatprep.subr.bf16.mxu0 0
        %2591 = vmatpush1.bf16.msra.mxu0 %v2568
        %2592 = vmatprep.subr.bf16.mxu0 0
        %2593 = vmatpush1.bf16.msra.mxu0 %v2569
        %2594 = vmatprep.subr.bf16.mxu0 0
        %2595 = vmatpush1.bf16.msra.mxu0 0
        %2596 = vmatprep.subr.bf16.mxu0 0
        %2597 = vmatpush1.bf16.msra.mxu0 0
        %2598 = vmatprep.subr.bf16.mxu0 0
        %2599 = vmatpush1.bf16.msra.mxu0 0
        %2600 = vmatprep.subr.bf16.mxu0 0
        %2601 = vmatpush1.bf16.msra.mxu0 0
        %2602 = vmatprep.subr.bf16.mxu0 0
        %2603 = vmatpush1.bf16.msra.mxu0 0
        %2604 = vmatprep.subr.bf16.mxu0 0
        %2605 = vmatpush1.bf16.msra.mxu0 0
        %2606 = vmatprep.subr.bf16.mxu0 0
        %2607 = vmatpush1.bf16.msra.mxu0 0
        %2608 = vmatprep.subr.bf16.mxu0 0
        %2609 = vmatpush1.bf16.msra.mxu0 0
        %2610 = vmatprep.mubr.bf16.mxu0 0
        %2611 = vmatmul.mubr.bf16.gmra.mrb[0].mxu0 %v2528
        %v2612 = vpop.f32.mrb[0].mxu0
        %v2613 = vadd.f32 0.0, %v2612
        %v2614 = vpop.f32.mrb[0].mxu0
        %v2615 = vpop.f32.mrb[0].mxu0
        %v2616 = vpop.f32.mrb[0].mxu0
        %2617 = vdwg.mxu0
        %v2618 = vpack.i.b16 %v493, %v493
        %v2619 = vlaneseq
        %v2620 = vshrl.u32 %v2619, 7
        %v2621 = vsub.s32 0, %v2620
        %v2622 = vrot.slane %v2618, %v2621
        %v2640 = vunpack.c.l.b16 %v780
        %v2641 = vunpack.c.l.b16 %v781
        %v2642 = vunpack.c.l.b16 %v782
        %v2643 = vunpack.c.l.b16 %v783
        %v2644 = vunpack.c.l.b16 %v784
        %v2645 = vunpack.c.l.b16 %v785
        %v2646 = vunpack.c.l.b16 %v786
        %v2647 = vunpack.c.l.b16 %v787
        %v2648 = vunpack.c.l.b16 %v788
        %v2649 = vunpack.c.l.b16 %v789
        %v2650 = vunpack.c.l.b16 %v790
        %v2651 = vunpack.c.l.b16 %v791
        %v2652 = vunpack.c.l.b16 %v792
        %v2653 = vunpack.c.l.b16 %v793
        %v2654 = vunpack.c.l.b16 %v794
        %v2655 = vunpack.c.l.b16 %v795
        %v2656 = vpack.c.b16 %v2641, %v2640
        %v2657 = vpack.c.b16 %v2643, %v2642
        %v2658 = vpack.c.b16 %v2645, %v2644
        %v2659 = vpack.c.b16 %v2647, %v2646
        %v2660 = vpack.c.b16 %v2649, %v2648
        %v2661 = vpack.c.b16 %v2651, %v2650
        %v2662 = vpack.c.b16 %v2653, %v2652
        %v2663 = vpack.c.b16 %v2655, %v2654
        %2672 = vmatprep.subr.bf16.mxu0 0
        %2673 = vmatpush1.bf16.msra.mxu0 %v2656
        %2674 = vmatprep.subr.bf16.mxu0 0
        %2675 = vmatpush1.bf16.msra.mxu0 %v2657
        %2676 = vmatprep.subr.bf16.mxu0 0
        %2677 = vmatpush1.bf16.msra.mxu0 %v2658
        %2678 = vmatprep.subr.bf16.mxu0 0
        %2679 = vmatpush1.bf16.msra.mxu0 %v2659
        %2680 = vmatprep.subr.bf16.mxu0 0
        %2681 = vmatpush1.bf16.msra.mxu0 %v2660
        %2682 = vmatprep.subr.bf16.mxu0 0
        %2683 = vmatpush1.bf16.msra.mxu0 %v2661
        %2684 = vmatprep.subr.bf16.mxu0 0
        %2685 = vmatpush1.bf16.msra.mxu0 %v2662
        %2686 = vmatprep.subr.bf16.mxu0 0
        %2687 = vmatpush1.bf16.msra.mxu0 %v2663
        %2688 = vmatprep.subr.bf16.mxu0 0
        %2689 = vmatpush1.bf16.msra.mxu0 0
        %2690 = vmatprep.subr.bf16.mxu0 0
        %2691 = vmatpush1.bf16.msra.mxu0 0
        %2692 = vmatprep.subr.bf16.mxu0 0
        %2693 = vmatpush1.bf16.msra.mxu0 0
        %2694 = vmatprep.subr.bf16.mxu0 0
        %2695 = vmatpush1.bf16.msra.mxu0 0
        %2696 = vmatprep.subr.bf16.mxu0 0
        %2697 = vmatpush1.bf16.msra.mxu0 0
        %2698 = vmatprep.subr.bf16.mxu0 0
        %2699 = vmatpush1.bf16.msra.mxu0 0
        %2700 = vmatprep.subr.bf16.mxu0 0
        %2701 = vmatpush1.bf16.msra.mxu0 0
        %2702 = vmatprep.subr.bf16.mxu0 0
        %2703 = vmatpush1.bf16.msra.mxu0 0
        %2704 = vmatprep.mubr.bf16.mxu0 0
        %2705 = vmatmul.mubr.bf16.gmra.mrb[0].mxu0 %v2622
        %v2706 = vpop.f32.mrb[0].mxu0
        %v2707 = vadd.f32 0.0, %v2706
        %v2708 = vpop.f32.mrb[0].mxu0
        %v2709 = vpop.f32.mrb[0].mxu0
        %v2710 = vpop.f32.mrb[0].mxu0
        %2711 = vdwg.mxu0
        %v2712 = vpack.i.b16 %v494, %v494
        %v2713 = vlaneseq
        %v2714 = vshrl.u32 %v2713, 7
        %v2715 = vsub.s32 0, %v2714
        %v2716 = vrot.slane %v2712, %v2715
        %v2734 = vunpack.c.l.b16 %v796
        %v2735 = vunpack.c.l.b16 %v797
        %v2736 = vunpack.c.l.b16 %v798
        %v2737 = vunpack.c.l.b16 %v799
        %v2738 = vunpack.c.l.b16 %v800
        %v2739 = vunpack.c.l.b16 %v801
        %v2740 = vunpack.c.l.b16 %v802
        %v2741 = vunpack.c.l.b16 %v803
        %v2742 = vunpack.c.l.b16 %v804
        %v2743 = vunpack.c.l.b16 %v805
        %v2744 = vunpack.c.l.b16 %v806
        %v2745 = vunpack.c.l.b16 %v807
        %v2746 = vunpack.c.l.b16 %v808
        %v2747 = vunpack.c.l.b16 %v809
        %v2748 = vunpack.c.l.b16 %v810
        %v2749 = vunpack.c.l.b16 %v811
        %v2750 = vpack.c.b16 %v2735, %v2734
        %v2751 = vpack.c.b16 %v2737, %v2736
        %v2752 = vpack.c.b16 %v2739, %v2738
        %v2753 = vpack.c.b16 %v2741, %v2740
        %v2754 = vpack.c.b16 %v2743, %v2742
        %v2755 = vpack.c.b16 %v2745, %v2744
        %v2756 = vpack.c.b16 %v2747, %v2746
        %v2757 = vpack.c.b16 %v2749, %v2748
        %2766 = vmatprep.subr.bf16.mxu0 0
        %2767 = vmatpush1.bf16.msra.mxu0 %v2750
        %2768 = vmatprep.subr.bf16.mxu0 0
        %2769 = vmatpush1.bf16.msra.mxu0 %v2751
        %2770 = vmatprep.subr.bf16.mxu0 0
        %2771 = vmatpush1.bf16.msra.mxu0 %v2752
        %2772 = vmatprep.subr.bf16.mxu0 0
        %2773 = vmatpush1.bf16.msra.mxu0 %v2753
        %2774 = vmatprep.subr.bf16.mxu0 0
        %2775 = vmatpush1.bf16.msra.mxu0 %v2754
        %2776 = vmatprep.subr.bf16.mxu0 0
        %2777 = vmatpush1.bf16.msra.mxu0 %v2755
        %2778 = vmatprep.subr.bf16.mxu0 0
        %2779 = vmatpush1.bf16.msra.mxu0 %v2756
        %2780 = vmatprep.subr.bf16.mxu0 0
        %2781 = vmatpush1.bf16.msra.mxu0 %v2757
        %2782 = vmatprep.subr.bf16.mxu0 0
        %2783 = vmatpush1.bf16.msra.mxu0 0
        %2784 = vmatprep.subr.bf16.mxu0 0
        %2785 = vmatpush1.bf16.msra.mxu0 0
        %2786 = vmatprep.subr.bf16.mxu0 0
        %2787 = vmatpush1.bf16.msra.mxu0 0
        %2788 = vmatprep.subr.bf16.mxu0 0
        %2789 = vmatpush1.bf16.msra.mxu0 0
        %2790 = vmatprep.subr.bf16.mxu0 0
        %2791 = vmatpush1.bf16.msra.mxu0 0
        %2792 = vmatprep.subr.bf16.mxu0 0
        %2793 = vmatpush1.bf16.msra.mxu0 0
        %2794 = vmatprep.subr.bf16.mxu0 0
        %2795 = vmatpush1.bf16.msra.mxu0 0
        %2796 = vmatprep.subr.bf16.mxu0 0
        %2797 = vmatpush1.bf16.msra.mxu0 0
        %2798 = vmatprep.mubr.bf16.mxu0 0
        %2799 = vmatmul.mubr.bf16.gmra.mrb[0].mxu0 %v2716
        %v2800 = vpop.f32.mrb[0].mxu0
        %v2801 = vadd.f32 0.0, %v2800
        %v2802 = vpop.f32.mrb[0].mxu0
        %v2803 = vpop.f32.mrb[0].mxu0
        %v2804 = vpop.f32.mrb[0].mxu0
        %2805 = vdwg.mxu0
        %v2806 = vpack.i.b16 %v495, %v495
        %v2807 = vlaneseq
        %v2808 = vshrl.u32 %v2807, 7
        %v2809 = vsub.s32 0, %v2808
        %v2810 = vrot.slane %v2806, %v2809
        %v2828 = vunpack.c.l.b16 %v812
        %v2829 = vunpack.c.l.b16 %v813
        %v2830 = vunpack.c.l.b16 %v814
        %v2831 = vunpack.c.l.b16 %v815
        %v2832 = vunpack.c.l.b16 %v816
        %v2833 = vunpack.c.l.b16 %v817
        %v2834 = vunpack.c.l.b16 %v818
        %v2835 = vunpack.c.l.b16 %v819
        %v2836 = vunpack.c.l.b16 %v820
        %v2837 = vunpack.c.l.b16 %v821
        %v2838 = vunpack.c.l.b16 %v822
        %v2839 = vunpack.c.l.b16 %v823
        %v2840 = vunpack.c.l.b16 %v824
        %v2841 = vunpack.c.l.b16 %v825
        %v2842 = vunpack.c.l.b16 %v826
        %v2843 = vunpack.c.l.b16 %v827
        %v2844 = vpack.c.b16 %v2829, %v2828
        %v2845 = vpack.c.b16 %v2831, %v2830
        %v2846 = vpack.c.b16 %v2833, %v2832
        %v2847 = vpack.c.b16 %v2835, %v2834
        %v2848 = vpack.c.b16 %v2837, %v2836
        %v2849 = vpack.c.b16 %v2839, %v2838
        %v2850 = vpack.c.b16 %v2841, %v2840
        %v2851 = vpack.c.b16 %v2843, %v2842
        %2860 = vmatprep.subr.bf16.mxu0 0
        %2861 = vmatpush1.bf16.msra.mxu0 %v2844
        %2862 = vmatprep.subr.bf16.mxu0 0
        %2863 = vmatpush1.bf16.msra.mxu0 %v2845
        %2864 = vmatprep.subr.bf16.mxu0 0
        %2865 = vmatpush1.bf16.msra.mxu0 %v2846
        %2866 = vmatprep.subr.bf16.mxu0 0
        %2867 = vmatpush1.bf16.msra.mxu0 %v2847
        %2868 = vmatprep.subr.bf16.mxu0 0
        %2869 = vmatpush1.bf16.msra.mxu0 %v2848
        %2870 = vmatprep.subr.bf16.mxu0 0
        %2871 = vmatpush1.bf16.msra.mxu0 %v2849
        %2872 = vmatprep.subr.bf16.mxu0 0
        %2873 = vmatpush1.bf16.msra.mxu0 %v2850
        %2874 = vmatprep.subr.bf16.mxu0 0
        %2875 = vmatpush1.bf16.msra.mxu0 %v2851
        %2876 = vmatprep.subr.bf16.mxu0 0
        %2877 = vmatpush1.bf16.msra.mxu0 0
        %2878 = vmatprep.subr.bf16.mxu0 0
        %2879 = vmatpush1.bf16.msra.mxu0 0
        %2880 = vmatprep.subr.bf16.mxu0 0
        %2881 = vmatpush1.bf16.msra.mxu0 0
        %2882 = vmatprep.subr.bf16.mxu0 0
        %2883 = vmatpush1.bf16.msra.mxu0 0
        %2884 = vmatprep.subr.bf16.mxu0 0
        %2885 = vmatpush1.bf16.msra.mxu0 0
        %2886 = vmatprep.subr.bf16.mxu0 0
        %2887 = vmatpush1.bf16.msra.mxu0 0
        %2888 = vmatprep.subr.bf16.mxu0 0
        %2889 = vmatpush1.bf16.msra.mxu0 0
        %2890 = vmatprep.subr.bf16.mxu0 0
        %2891 = vmatpush1.bf16.msra.mxu0 0
        %2892 = vmatprep.mubr.bf16.mxu0 0
        %2893 = vmatmul.mubr.bf16.gmra.mrb[0].mxu0 %v2810
        %v2894 = vpop.f32.mrb[0].mxu0
        %v2895 = vadd.f32 0.0, %v2894
        %v2896 = vpop.f32.mrb[0].mxu0
        %v2897 = vpop.f32.mrb[0].mxu0
        %v2898 = vpop.f32.mrb[0].mxu0
        %2899 = vdwg.mxu0
        %v2900 = vpack.i.b16 %v496, %v496
        %v2901 = vlaneseq
        %v2902 = vshrl.u32 %v2901, 7
        %v2903 = vsub.s32 0, %v2902
        %v2904 = vrot.slane %v2900, %v2903
        %v2922 = vunpack.c.l.b16 %v828
        %v2923 = vunpack.c.l.b16 %v829
        %v2924 = vunpack.c.l.b16 %v830
        %v2925 = vunpack.c.l.b16 %v831
        %v2926 = vunpack.c.l.b16 %v832
        %v2927 = vunpack.c.l.b16 %v833
        %v2928 = vunpack.c.l.b16 %v834
        %v2929 = vunpack.c.l.b16 %v835
        %v2930 = vunpack.c.l.b16 %v836
        %v2931 = vunpack.c.l.b16 %v837
        %v2932 = vunpack.c.l.b16 %v838
        %v2933 = vunpack.c.l.b16 %v839
        %v2934 = vunpack.c.l.b16 %v840
        %v2935 = vunpack.c.l.b16 %v841
        %v2936 = vunpack.c.l.b16 %v842
        %v2937 = vunpack.c.l.b16 %v843
        %v2938 = vpack.c.b16 %v2923, %v2922
        %v2939 = vpack.c.b16 %v2925, %v2924
        %v2940 = vpack.c.b16 %v2927, %v2926
        %v2941 = vpack.c.b16 %v2929, %v2928
        %v2942 = vpack.c.b16 %v2931, %v2930
        %v2943 = vpack.c.b16 %v2933, %v2932
        %v2944 = vpack.c.b16 %v2935, %v2934
        %v2945 = vpack.c.b16 %v2937, %v2936
        %2954 = vmatprep.subr.bf16.mxu0 0
        %2955 = vmatpush1.bf16.msra.mxu0 %v2938
        %2956 = vmatprep.subr.bf16.mxu0 0
        %2957 = vmatpush1.bf16.msra.mxu0 %v2939
        %2958 = vmatprep.subr.bf16.mxu0 0
        %2959 = vmatpush1.bf16.msra.mxu0 %v2940
        %2960 = vmatprep.subr.bf16.mxu0 0
        %2961 = vmatpush1.bf16.msra.mxu0 %v2941
        %2962 = vmatprep.subr.bf16.mxu0 0
        %2963 = vmatpush1.bf16.msra.mxu0 %v2942
        %2964 = vmatprep.subr.bf16.mxu0 0
        %2965 = vmatpush1.bf16.msra.mxu0 %v2943
        %2966 = vmatprep.subr.bf16.mxu0 0
        %2967 = vmatpush1.bf16.msra.mxu0 %v2944
        %2968 = vmatprep.subr.bf16.mxu0 0
        %2969 = vmatpush1.bf16.msra.mxu0 %v2945
        %2970 = vmatprep.subr.bf16.mxu0 0
        %2971 = vmatpush1.bf16.msra.mxu0 0
        %2972 = vmatprep.subr.bf16.mxu0 0
        %2973 = vmatpush1.bf16.msra.mxu0 0
        %2974 = vmatprep.subr.bf16.mxu0 0
        %2975 = vmatpush1.bf16.msra.mxu0 0
        %2976 = vmatprep.subr.bf16.mxu0 0
        %2977 = vmatpush1.bf16.msra.mxu0 0
        %2978 = vmatprep.subr.bf16.mxu0 0
        %2979 = vmatpush1.bf16.msra.mxu0 0
        %2980 = vmatprep.subr.bf16.mxu0 0
        %2981 = vmatpush1.bf16.msra.mxu0 0
        %2982 = vmatprep.subr.bf16.mxu0 0
        %2983 = vmatpush1.bf16.msra.mxu0 0
        %2984 = vmatprep.subr.bf16.mxu0 0
        %2985 = vmatpush1.bf16.msra.mxu0 0
        %2986 = vmatprep.mubr.bf16.mxu0 0
        %2987 = vmatmul.mubr.bf16.gmra.mrb[0].mxu0 %v2904
        %v2988 = vpop.f32.mrb[0].mxu0
        %v2989 = vadd.f32 0.0, %v2988
        %v2990 = vpop.f32.mrb[0].mxu0
        %v2991 = vpop.f32.mrb[0].mxu0
        %v2992 = vpop.f32.mrb[0].mxu0
        %2993 = vdwg.mxu0
        %v2994 = vpack.i.b16 %v497, %v497
        %v2995 = vlaneseq
        %v2996 = vshrl.u32 %v2995, 7
        %v2997 = vsub.s32 0, %v2996
        %v2998 = vrot.slane %v2994, %v2997
        %v3016 = vunpack.c.l.b16 %v844
        %v3017 = vunpack.c.l.b16 %v845
        %v3018 = vunpack.c.l.b16 %v846
        %v3019 = vunpack.c.l.b16 %v847
        %v3020 = vunpack.c.l.b16 %v848
        %v3021 = vunpack.c.l.b16 %v849
        %v3022 = vunpack.c.l.b16 %v850
        %v3023 = vunpack.c.l.b16 %v851
        %v3024 = vunpack.c.l.b16 %v852
        %v3025 = vunpack.c.l.b16 %v853
        %v3026 = vunpack.c.l.b16 %v854
        %v3027 = vunpack.c.l.b16 %v855
        %v3028 = vunpack.c.l.b16 %v856
        %v3029 = vunpack.c.l.b16 %v857
        %v3030 = vunpack.c.l.b16 %v858
        %v3031 = vunpack.c.l.b16 %v859
        %v3032 = vpack.c.b16 %v3017, %v3016
        %v3033 = vpack.c.b16 %v3019, %v3018
        %v3034 = vpack.c.b16 %v3021, %v3020
        %v3035 = vpack.c.b16 %v3023, %v3022
        %v3036 = vpack.c.b16 %v3025, %v3024
        %v3037 = vpack.c.b16 %v3027, %v3026
        %v3038 = vpack.c.b16 %v3029, %v3028
        %v3039 = vpack.c.b16 %v3031, %v3030
        %3048 = vmatprep.subr.bf16.mxu0 0
        %3049 = vmatpush1.bf16.msra.mxu0 %v3032
        %3050 = vmatprep.subr.bf16.mxu0 0
        %3051 = vmatpush1.bf16.msra.mxu0 %v3033
        %3052 = vmatprep.subr.bf16.mxu0 0
        %3053 = vmatpush1.bf16.msra.mxu0 %v3034
        %3054 = vmatprep.subr.bf16.mxu0 0
        %3055 = vmatpush1.bf16.msra.mxu0 %v3035
        %3056 = vmatprep.subr.bf16.mxu0 0
        %3057 = vmatpush1.bf16.msra.mxu0 %v3036
        %3058 = vmatprep.subr.bf16.mxu0 0
        %3059 = vmatpush1.bf16.msra.mxu0 %v3037
        %3060 = vmatprep.subr.bf16.mxu0 0
        %3061 = vmatpush1.bf16.msra.mxu0 %v3038
        %3062 = vmatprep.subr.bf16.mxu0 0
        %3063 = vmatpush1.bf16.msra.mxu0 %v3039
        %3064 = vmatprep.subr.bf16.mxu0 0
        %3065 = vmatpush1.bf16.msra.mxu0 0
        %3066 = vmatprep.subr.bf16.mxu0 0
        %3067 = vmatpush1.bf16.msra.mxu0 0
        %3068 = vmatprep.subr.bf16.mxu0 0
        %3069 = vmatpush1.bf16.msra.mxu0 0
        %3070 = vmatprep.subr.bf16.mxu0 0
        %3071 = vmatpush1.bf16.msra.mxu0 0
        %3072 = vmatprep.subr.bf16.mxu0 0
        %3073 = vmatpush1.bf16.msra.mxu0 0
        %3074 = vmatprep.subr.bf16.mxu0 0
        %3075 = vmatpush1.bf16.msra.mxu0 0
        %3076 = vmatprep.subr.bf16.mxu0 0
        %3077 = vmatpush1.bf16.msra.mxu0 0
        %3078 = vmatprep.subr.bf16.mxu0 0
        %3079 = vmatpush1.bf16.msra.mxu0 0
        %3080 = vmatprep.mubr.bf16.mxu0 0
        %3081 = vmatmul.mubr.bf16.gmra.mrb[0].mxu0 %v2998
        %v3082 = vpop.f32.mrb[0].mxu0
        %v3083 = vadd.f32 0.0, %v3082
        %v3084 = vpop.f32.mrb[0].mxu0
        %v3085 = vpop.f32.mrb[0].mxu0
        %v3086 = vpop.f32.mrb[0].mxu0
        %3087 = vdwg.mxu0
        %v3088 = vpack.i.b16 %v498, %v498
        %v3089 = vlaneseq
        %v3090 = vshrl.u32 %v3089, 7
        %v3091 = vsub.s32 0, %v3090
        %v3092 = vrot.slane %v3088, %v3091
        %v3110 = vunpack.c.l.b16 %v860
        %v3111 = vunpack.c.l.b16 %v861
        %v3112 = vunpack.c.l.b16 %v862
        %v3113 = vunpack.c.l.b16 %v863
        %v3114 = vunpack.c.l.b16 %v864
        %v3115 = vunpack.c.l.b16 %v865
        %v3116 = vunpack.c.l.b16 %v866
        %v3117 = vunpack.c.l.b16 %v867
        %v3118 = vunpack.c.l.b16 %v868
        %v3119 = vunpack.c.l.b16 %v869
        %v3120 = vunpack.c.l.b16 %v870
        %v3121 = vunpack.c.l.b16 %v871
        %v3122 = vunpack.c.l.b16 %v872
        %v3123 = vunpack.c.l.b16 %v873
        %v3124 = vunpack.c.l.b16 %v874
        %v3125 = vunpack.c.l.b16 %v875
        %v3126 = vpack.c.b16 %v3111, %v3110
        %v3127 = vpack.c.b16 %v3113, %v3112
        %v3128 = vpack.c.b16 %v3115, %v3114
        %v3129 = vpack.c.b16 %v3117, %v3116
        %v3130 = vpack.c.b16 %v3119, %v3118
        %v3131 = vpack.c.b16 %v3121, %v3120
        %v3132 = vpack.c.b16 %v3123, %v3122
        %v3133 = vpack.c.b16 %v3125, %v3124
        %3142 = vmatprep.subr.bf16.mxu0 0
        %3143 = vmatpush1.bf16.msra.mxu0 %v3126
        %3144 = vmatprep.subr.bf16.mxu0 0
        %3145 = vmatpush1.bf16.msra.mxu0 %v3127
        %3146 = vmatprep.subr.bf16.mxu0 0
        %3147 = vmatpush1.bf16.msra.mxu0 %v3128
        %3148 = vmatprep.subr.bf16.mxu0 0
        %3149 = vmatpush1.bf16.msra.mxu0 %v3129
        %3150 = vmatprep.subr.bf16.mxu0 0
        %3151 = vmatpush1.bf16.msra.mxu0 %v3130
        %3152 = vmatprep.subr.bf16.mxu0 0
        %3153 = vmatpush1.bf16.msra.mxu0 %v3131
        %3154 = vmatprep.subr.bf16.mxu0 0
        %3155 = vmatpush1.bf16.msra.mxu0 %v3132
        %3156 = vmatprep.subr.bf16.mxu0 0
        %3157 = vmatpush1.bf16.msra.mxu0 %v3133
        %3158 = vmatprep.subr.bf16.mxu0 0
        %3159 = vmatpush1.bf16.msra.mxu0 0
        %3160 = vmatprep.subr.bf16.mxu0 0
        %3161 = vmatpush1.bf16.msra.mxu0 0
        %3162 = vmatprep.subr.bf16.mxu0 0
        %3163 = vmatpush1.bf16.msra.mxu0 0
        %3164 = vmatprep.subr.bf16.mxu0 0
        %3165 = vmatpush1.bf16.msra.mxu0 0
        %3166 = vmatprep.subr.bf16.mxu0 0
        %3167 = vmatpush1.bf16.msra.mxu0 0
        %3168 = vmatprep.subr.bf16.mxu0 0
        %3169 = vmatpush1.bf16.msra.mxu0 0
        %3170 = vmatprep.subr.bf16.mxu0 0
        %3171 = vmatpush1.bf16.msra.mxu0 0
        %3172 = vmatprep.subr.bf16.mxu0 0
        %3173 = vmatpush1.bf16.msra.mxu0 0
        %3174 = vmatprep.mubr.bf16.mxu0 0
        %3175 = vmatmul.mubr.bf16.gmra.mrb[0].mxu0 %v3092
        %v3176 = vpop.f32.mrb[0].mxu0
        %v3177 = vadd.f32 0.0, %v3176
        %v3178 = vpop.f32.mrb[0].mxu0
        %v3179 = vpop.f32.mrb[0].mxu0
        %v3180 = vpop.f32.mrb[0].mxu0
        %3181 = vdwg.mxu0
        %v3182 = vpack.i.b16 %v499, %v499
        %v3183 = vlaneseq
        %v3184 = vshrl.u32 %v3183, 7
        %v3185 = vsub.s32 0, %v3184
        %v3186 = vrot.slane %v3182, %v3185
        %v3204 = vunpack.c.l.b16 %v876
        %v3205 = vunpack.c.l.b16 %v877
        %v3206 = vunpack.c.l.b16 %v878
        %v3207 = vunpack.c.l.b16 %v879
        %v3208 = vunpack.c.l.b16 %v880
        %v3209 = vunpack.c.l.b16 %v881
        %v3210 = vunpack.c.l.b16 %v882
        %v3211 = vunpack.c.l.b16 %v883
        %v3212 = vunpack.c.l.b16 %v884
        %v3213 = vunpack.c.l.b16 %v885
        %v3214 = vunpack.c.l.b16 %v886
        %v3215 = vunpack.c.l.b16 %v887
        %v3216 = vunpack.c.l.b16 %v888
        %v3217 = vunpack.c.l.b16 %v889
        %v3218 = vunpack.c.l.b16 %v890
        %v3219 = vunpack.c.l.b16 %v891
        %v3220 = vpack.c.b16 %v3205, %v3204
        %v3221 = vpack.c.b16 %v3207, %v3206
        %v3222 = vpack.c.b16 %v3209, %v3208
        %v3223 = vpack.c.b16 %v3211, %v3210
        %v3224 = vpack.c.b16 %v3213, %v3212
        %v3225 = vpack.c.b16 %v3215, %v3214
        %v3226 = vpack.c.b16 %v3217, %v3216
        %v3227 = vpack.c.b16 %v3219, %v3218
        %3236 = vmatprep.subr.bf16.mxu0 0
        %3237 = vmatpush1.bf16.msra.mxu0 %v3220
        %3238 = vmatprep.subr.bf16.mxu0 0
        %3239 = vmatpush1.bf16.msra.mxu0 %v3221
        %3240 = vmatprep.subr.bf16.mxu0 0
        %3241 = vmatpush1.bf16.msra.mxu0 %v3222
        %3242 = vmatprep.subr.bf16.mxu0 0
        %3243 = vmatpush1.bf16.msra.mxu0 %v3223
        %3244 = vmatprep.subr.bf16.mxu0 0
        %3245 = vmatpush1.bf16.msra.mxu0 %v3224
        %3246 = vmatprep.subr.bf16.mxu0 0
        %3247 = vmatpush1.bf16.msra.mxu0 %v3225
        %3248 = vmatprep.subr.bf16.mxu0 0
        %3249 = vmatpush1.bf16.msra.mxu0 %v3226
        %3250 = vmatprep.subr.bf16.mxu0 0
        %3251 = vmatpush1.bf16.msra.mxu0 %v3227
        %3252 = vmatprep.subr.bf16.mxu0 0
        %3253 = vmatpush1.bf16.msra.mxu0 0
        %3254 = vmatprep.subr.bf16.mxu0 0
        %3255 = vmatpush1.bf16.msra.mxu0 0
        %3256 = vmatprep.subr.bf16.mxu0 0
        %3257 = vmatpush1.bf16.msra.mxu0 0
        %3258 = vmatprep.subr.bf16.mxu0 0
        %3259 = vmatpush1.bf16.msra.mxu0 0
        %3260 = vmatprep.subr.bf16.mxu0 0
        %3261 = vmatpush1.bf16.msra.mxu0 0
        %3262 = vmatprep.subr.bf16.mxu0 0
        %3263 = vmatpush1.bf16.msra.mxu0 0
        %3264 = vmatprep.subr.bf16.mxu0 0
        %3265 = vmatpush1.bf16.msra.mxu0 0
        %3266 = vmatprep.subr.bf16.mxu0 0
        %3267 = vmatpush1.bf16.msra.mxu0 0
        %3268 = vmatprep.mubr.bf16.mxu0 0
        %3269 = vmatmul.mubr.bf16.gmra.mrb[0].mxu0 %v3186
        %v3270 = vpop.f32.mrb[0].mxu0
        %v3271 = vadd.f32 0.0, %v3270
        %v3272 = vpop.f32.mrb[0].mxu0
        %v3273 = vpop.f32.mrb[0].mxu0
        %v3274 = vpop.f32.mrb[0].mxu0
        %3275 = vdwg.mxu0
        %v3276 = vpack.i.b16 %v500, %v500
        %v3277 = vlaneseq
        %v3278 = vshrl.u32 %v3277, 7
        %v3279 = vsub.s32 0, %v3278
        %v3280 = vrot.slane %v3276, %v3279
        %v3298 = vunpack.c.l.b16 %v892
        %v3299 = vunpack.c.l.b16 %v893
        %v3300 = vunpack.c.l.b16 %v894
        %v3301 = vunpack.c.l.b16 %v895
        %v3302 = vunpack.c.l.b16 %v896
        %v3303 = vunpack.c.l.b16 %v897
        %v3304 = vunpack.c.l.b16 %v898
        %v3305 = vunpack.c.l.b16 %v899
        %v3306 = vunpack.c.l.b16 %v900
        %v3307 = vunpack.c.l.b16 %v901
        %v3308 = vunpack.c.l.b16 %v902
        %v3309 = vunpack.c.l.b16 %v903
        %v3310 = vunpack.c.l.b16 %v904
        %v3311 = vunpack.c.l.b16 %v905
        %v3312 = vunpack.c.l.b16 %v906
        %v3313 = vunpack.c.l.b16 %v907
        %v3314 = vpack.c.b16 %v3299, %v3298
        %v3315 = vpack.c.b16 %v3301, %v3300
        %v3316 = vpack.c.b16 %v3303, %v3302
        %v3317 = vpack.c.b16 %v3305, %v3304
        %v3318 = vpack.c.b16 %v3307, %v3306
        %v3319 = vpack.c.b16 %v3309, %v3308
        %v3320 = vpack.c.b16 %v3311, %v3310
        %v3321 = vpack.c.b16 %v3313, %v3312
        %3330 = vmatprep.subr.bf16.mxu0 0
        %3331 = vmatpush1.bf16.msra.mxu0 %v3314
        %3332 = vmatprep.subr.bf16.mxu0 0
        %3333 = vmatpush1.bf16.msra.mxu0 %v3315
        %3334 = vmatprep.subr.bf16.mxu0 0
        %3335 = vmatpush1.bf16.msra.mxu0 %v3316
        %3336 = vmatprep.subr.bf16.mxu0 0
        %3337 = vmatpush1.bf16.msra.mxu0 %v3317
        %3338 = vmatprep.subr.bf16.mxu0 0
        %3339 = vmatpush1.bf16.msra.mxu0 %v3318
        %3340 = vmatprep.subr.bf16.mxu0 0
        %3341 = vmatpush1.bf16.msra.mxu0 %v3319
        %3342 = vmatprep.subr.bf16.mxu0 0
        %3343 = vmatpush1.bf16.msra.mxu0 %v3320
        %3344 = vmatprep.subr.bf16.mxu0 0
        %3345 = vmatpush1.bf16.msra.mxu0 %v3321
        %3346 = vmatprep.subr.bf16.mxu0 0
        %3347 = vmatpush1.bf16.msra.mxu0 0
        %3348 = vmatprep.subr.bf16.mxu0 0
        %3349 = vmatpush1.bf16.msra.mxu0 0
        %3350 = vmatprep.subr.bf16.mxu0 0
        %3351 = vmatpush1.bf16.msra.mxu0 0
        %3352 = vmatprep.subr.bf16.mxu0 0
        %3353 = vmatpush1.bf16.msra.mxu0 0
        %3354 = vmatprep.subr.bf16.mxu0 0
        %3355 = vmatpush1.bf16.msra.mxu0 0
        %3356 = vmatprep.subr.bf16.mxu0 0
        %3357 = vmatpush1.bf16.msra.mxu0 0
        %3358 = vmatprep.subr.bf16.mxu0 0
        %3359 = vmatpush1.bf16.msra.mxu0 0
        %3360 = vmatprep.subr.bf16.mxu0 0
        %3361 = vmatpush1.bf16.msra.mxu0 0
        %3362 = vmatprep.mubr.bf16.mxu0 0
        %3363 = vmatmul.mubr.bf16.gmra.mrb[0].mxu0 %v3280
        %v3364 = vpop.f32.mrb[0].mxu0
        %v3365 = vadd.f32 0.0, %v3364
        %v3366 = vpop.f32.mrb[0].mxu0
        %v3367 = vpop.f32.mrb[0].mxu0
        %v3368 = vpop.f32.mrb[0].mxu0
        %3369 = vdwg.mxu0
        %v3370 = vpack.i.b16 %v501, %v501
        %v3371 = vlaneseq
        %v3372 = vshrl.u32 %v3371, 7
        %v3373 = vsub.s32 0, %v3372
        %v3374 = vrot.slane %v3370, %v3373
        %v3392 = vunpack.c.l.b16 %v908
        %v3393 = vunpack.c.l.b16 %v909
        %v3394 = vunpack.c.l.b16 %v910
        %v3395 = vunpack.c.l.b16 %v911
        %v3396 = vunpack.c.l.b16 %v912
        %v3397 = vunpack.c.l.b16 %v913
        %v3398 = vunpack.c.l.b16 %v914
        %v3399 = vunpack.c.l.b16 %v915
        %v3400 = vunpack.c.l.b16 %v916
        %v3401 = vunpack.c.l.b16 %v917
        %v3402 = vunpack.c.l.b16 %v918
        %v3403 = vunpack.c.l.b16 %v919
        %v3404 = vunpack.c.l.b16 %v920
        %v3405 = vunpack.c.l.b16 %v921
        %v3406 = vunpack.c.l.b16 %v922
        %v3407 = vunpack.c.l.b16 %v923
        %v3408 = vpack.c.b16 %v3393, %v3392
        %v3409 = vpack.c.b16 %v3395, %v3394
        %v3410 = vpack.c.b16 %v3397, %v3396
        %v3411 = vpack.c.b16 %v3399, %v3398
        %v3412 = vpack.c.b16 %v3401, %v3400
        %v3413 = vpack.c.b16 %v3403, %v3402
        %v3414 = vpack.c.b16 %v3405, %v3404
        %v3415 = vpack.c.b16 %v3407, %v3406
        %3424 = vmatprep.subr.bf16.mxu0 0
        %3425 = vmatpush1.bf16.msra.mxu0 %v3408
        %3426 = vmatprep.subr.bf16.mxu0 0
        %3427 = vmatpush1.bf16.msra.mxu0 %v3409
        %3428 = vmatprep.subr.bf16.mxu0 0
        %3429 = vmatpush1.bf16.msra.mxu0 %v3410
        %3430 = vmatprep.subr.bf16.mxu0 0
        %3431 = vmatpush1.bf16.msra.mxu0 %v3411
        %3432 = vmatprep.subr.bf16.mxu0 0
        %3433 = vmatpush1.bf16.msra.mxu0 %v3412
        %3434 = vmatprep.subr.bf16.mxu0 0
        %3435 = vmatpush1.bf16.msra.mxu0 %v3413
        %3436 = vmatprep.subr.bf16.mxu0 0
        %3437 = vmatpush1.bf16.msra.mxu0 %v3414
        %3438 = vmatprep.subr.bf16.mxu0 0
        %3439 = vmatpush1.bf16.msra.mxu0 %v3415
        %3440 = vmatprep.subr.bf16.mxu0 0
        %3441 = vmatpush1.bf16.msra.mxu0 0
        %3442 = vmatprep.subr.bf16.mxu0 0
        %3443 = vmatpush1.bf16.msra.mxu0 0
        %3444 = vmatprep.subr.bf16.mxu0 0
        %3445 = vmatpush1.bf16.msra.mxu0 0
        %3446 = vmatprep.subr.bf16.mxu0 0
        %3447 = vmatpush1.bf16.msra.mxu0 0
        %3448 = vmatprep.subr.bf16.mxu0 0
        %3449 = vmatpush1.bf16.msra.mxu0 0
        %3450 = vmatprep.subr.bf16.mxu0 0
        %3451 = vmatpush1.bf16.msra.mxu0 0
        %3452 = vmatprep.subr.bf16.mxu0 0
        %3453 = vmatpush1.bf16.msra.mxu0 0
        %3454 = vmatprep.subr.bf16.mxu0 0
        %3455 = vmatpush1.bf16.msra.mxu0 0
        %3456 = vmatprep.mubr.bf16.mxu0 0
        %3457 = vmatmul.mubr.bf16.gmra.mrb[0].mxu0 %v3374
        %v3458 = vpop.f32.mrb[0].mxu0
        %v3459 = vadd.f32 0.0, %v3458
        %v3460 = vpop.f32.mrb[0].mxu0
        %v3461 = vpop.f32.mrb[0].mxu0
        %v3462 = vpop.f32.mrb[0].mxu0
        %3463 = vdwg.mxu0
        %v3464 = vpack.i.b16 %v502, %v502
        %v3465 = vlaneseq
        %v3466 = vshrl.u32 %v3465, 7
        %v3467 = vsub.s32 0, %v3466
        %v3468 = vrot.slane %v3464, %v3467
        %v3486 = vunpack.c.l.b16 %v924
        %v3487 = vunpack.c.l.b16 %v925
        %v3488 = vunpack.c.l.b16 %v926
        %v3489 = vunpack.c.l.b16 %v927
        %v3490 = vunpack.c.l.b16 %v928
        %v3491 = vunpack.c.l.b16 %v929
        %v3492 = vunpack.c.l.b16 %v930
        %v3493 = vunpack.c.l.b16 %v931
        %v3494 = vunpack.c.l.b16 %v932
        %v3495 = vunpack.c.l.b16 %v933
        %v3496 = vunpack.c.l.b16 %v934
        %v3497 = vunpack.c.l.b16 %v935
        %v3498 = vunpack.c.l.b16 %v936
        %v3499 = vunpack.c.l.b16 %v937
        %v3500 = vunpack.c.l.b16 %v938
        %v3501 = vunpack.c.l.b16 %v939
        %v3502 = vpack.c.b16 %v3487, %v3486
        %v3503 = vpack.c.b16 %v3489, %v3488
        %v3504 = vpack.c.b16 %v3491, %v3490
        %v3505 = vpack.c.b16 %v3493, %v3492
        %v3506 = vpack.c.b16 %v3495, %v3494
        %v3507 = vpack.c.b16 %v3497, %v3496
        %v3508 = vpack.c.b16 %v3499, %v3498
        %v3509 = vpack.c.b16 %v3501, %v3500
        %3518 = vmatprep.subr.bf16.mxu0 0
        %3519 = vmatpush1.bf16.msra.mxu0 %v3502
        %3520 = vmatprep.subr.bf16.mxu0 0
        %3521 = vmatpush1.bf16.msra.mxu0 %v3503
        %3522 = vmatprep.subr.bf16.mxu0 0
        %3523 = vmatpush1.bf16.msra.mxu0 %v3504
        %3524 = vmatprep.subr.bf16.mxu0 0
        %3525 = vmatpush1.bf16.msra.mxu0 %v3505
        %3526 = vmatprep.subr.bf16.mxu0 0
        %3527 = vmatpush1.bf16.msra.mxu0 %v3506
        %3528 = vmatprep.subr.bf16.mxu0 0
        %3529 = vmatpush1.bf16.msra.mxu0 %v3507
        %3530 = vmatprep.subr.bf16.mxu0 0
        %3531 = vmatpush1.bf16.msra.mxu0 %v3508
        %3532 = vmatprep.subr.bf16.mxu0 0
        %3533 = vmatpush1.bf16.msra.mxu0 %v3509
        %3534 = vmatprep.subr.bf16.mxu0 0
        %3535 = vmatpush1.bf16.msra.mxu0 0
        %3536 = vmatprep.subr.bf16.mxu0 0
        %3537 = vmatpush1.bf16.msra.mxu0 0
        %3538 = vmatprep.subr.bf16.mxu0 0
        %3539 = vmatpush1.bf16.msra.mxu0 0
        %3540 = vmatprep.subr.bf16.mxu0 0
        %3541 = vmatpush1.bf16.msra.mxu0 0
        %3542 = vmatprep.subr.bf16.mxu0 0
        %3543 = vmatpush1.bf16.msra.mxu0 0
        %3544 = vmatprep.subr.bf16.mxu0 0
        %3545 = vmatpush1.bf16.msra.mxu0 0
        %3546 = vmatprep.subr.bf16.mxu0 0
        %3547 = vmatpush1.bf16.msra.mxu0 0
        %3548 = vmatprep.subr.bf16.mxu0 0
        %3549 = vmatpush1.bf16.msra.mxu0 0
        %3550 = vmatprep.mubr.bf16.mxu0 0
        %3551 = vmatmul.mubr.bf16.gmra.mrb[0].mxu0 %v3468
        %v3552 = vpop.f32.mrb[0].mxu0
        %v3553 = vadd.f32 0.0, %v3552
        %v3554 = vpop.f32.mrb[0].mxu0
        %v3555 = vpop.f32.mrb[0].mxu0
        %v3556 = vpop.f32.mrb[0].mxu0
        %3557 = vdwg.mxu0
        %v3558 = vpack.i.b16 %v503, %v503
        %v3559 = vlaneseq
        %v3560 = vshrl.u32 %v3559, 7
        %v3561 = vsub.s32 0, %v3560
        %v3562 = vrot.slane %v3558, %v3561
        %v3580 = vunpack.c.l.b16 %v940
        %v3581 = vunpack.c.l.b16 %v941
        %v3582 = vunpack.c.l.b16 %v942
        %v3583 = vunpack.c.l.b16 %v943
        %v3584 = vunpack.c.l.b16 %v944
        %v3585 = vunpack.c.l.b16 %v945
        %v3586 = vunpack.c.l.b16 %v946
        %v3587 = vunpack.c.l.b16 %v947
        %v3588 = vunpack.c.l.b16 %v948
        %v3589 = vunpack.c.l.b16 %v949
        %v3590 = vunpack.c.l.b16 %v950
        %v3591 = vunpack.c.l.b16 %v951
        %v3592 = vunpack.c.l.b16 %v952
        %v3593 = vunpack.c.l.b16 %v953
        %v3594 = vunpack.c.l.b16 %v954
        %v3595 = vunpack.c.l.b16 %v955
        %v3596 = vpack.c.b16 %v3581, %v3580
        %v3597 = vpack.c.b16 %v3583, %v3582
        %v3598 = vpack.c.b16 %v3585, %v3584
        %v3599 = vpack.c.b16 %v3587, %v3586
        %v3600 = vpack.c.b16 %v3589, %v3588
        %v3601 = vpack.c.b16 %v3591, %v3590
        %v3602 = vpack.c.b16 %v3593, %v3592
        %v3603 = vpack.c.b16 %v3595, %v3594
        %3612 = vmatprep.subr.bf16.mxu0 0
        %3613 = vmatpush1.bf16.msra.mxu0 %v3596
        %3614 = vmatprep.subr.bf16.mxu0 0
        %3615 = vmatpush1.bf16.msra.mxu0 %v3597
        %3616 = vmatprep.subr.bf16.mxu0 0
        %3617 = vmatpush1.bf16.msra.mxu0 %v3598
        %3618 = vmatprep.subr.bf16.mxu0 0
        %3619 = vmatpush1.bf16.msra.mxu0 %v3599
        %3620 = vmatprep.subr.bf16.mxu0 0
        %3621 = vmatpush1.bf16.msra.mxu0 %v3600
        %3622 = vmatprep.subr.bf16.mxu0 0
        %3623 = vmatpush1.bf16.msra.mxu0 %v3601
        %3624 = vmatprep.subr.bf16.mxu0 0
        %3625 = vmatpush1.bf16.msra.mxu0 %v3602
        %3626 = vmatprep.subr.bf16.mxu0 0
        %3627 = vmatpush1.bf16.msra.mxu0 %v3603
        %3628 = vmatprep.subr.bf16.mxu0 0
        %3629 = vmatpush1.bf16.msra.mxu0 0
        %3630 = vmatprep.subr.bf16.mxu0 0
        %3631 = vmatpush1.bf16.msra.mxu0 0
        %3632 = vmatprep.subr.bf16.mxu0 0
        %3633 = vmatpush1.bf16.msra.mxu0 0
        %3634 = vmatprep.subr.bf16.mxu0 0
        %3635 = vmatpush1.bf16.msra.mxu0 0
        %3636 = vmatprep.subr.bf16.mxu0 0
        %3637 = vmatpush1.bf16.msra.mxu0 0
        %3638 = vmatprep.subr.bf16.mxu0 0
        %3639 = vmatpush1.bf16.msra.mxu0 0
        %3640 = vmatprep.subr.bf16.mxu0 0
        %3641 = vmatpush1.bf16.msra.mxu0 0
        %3642 = vmatprep.subr.bf16.mxu0 0
        %3643 = vmatpush1.bf16.msra.mxu0 0
        %3644 = vmatprep.mubr.bf16.mxu0 0
        %3645 = vmatmul.mubr.bf16.gmra.mrb[0].mxu0 %v3562
        %v3646 = vpop.f32.mrb[0].mxu0
        %v3647 = vadd.f32 0.0, %v3646
        %v3648 = vpop.f32.mrb[0].mxu0
        %v3649 = vpop.f32.mrb[0].mxu0
        %v3650 = vpop.f32.mrb[0].mxu0
        %3651 = vdwg.mxu0
        %v3652 = vpack.i.b16 %v504, %v504
        %v3653 = vlaneseq
        %v3654 = vshrl.u32 %v3653, 7
        %v3655 = vsub.s32 0, %v3654
        %v3656 = vrot.slane %v3652, %v3655
        %v3674 = vunpack.c.l.b16 %v956
        %v3675 = vunpack.c.l.b16 %v957
        %v3676 = vunpack.c.l.b16 %v958
        %v3677 = vunpack.c.l.b16 %v959
        %v3678 = vunpack.c.l.b16 %v960
        %v3679 = vunpack.c.l.b16 %v961
        %v3680 = vunpack.c.l.b16 %v962
        %v3681 = vunpack.c.l.b16 %v963
        %v3682 = vunpack.c.l.b16 %v964
        %v3683 = vunpack.c.l.b16 %v965
        %v3684 = vunpack.c.l.b16 %v966
        %v3685 = vunpack.c.l.b16 %v967
        %v3686 = vunpack.c.l.b16 %v968
        %v3687 = vunpack.c.l.b16 %v969
        %v3688 = vunpack.c.l.b16 %v970
        %v3689 = vunpack.c.l.b16 %v971
        %v3690 = vpack.c.b16 %v3675, %v3674
        %v3691 = vpack.c.b16 %v3677, %v3676
        %v3692 = vpack.c.b16 %v3679, %v3678
        %v3693 = vpack.c.b16 %v3681, %v3680
        %v3694 = vpack.c.b16 %v3683, %v3682
        %v3695 = vpack.c.b16 %v3685, %v3684
        %v3696 = vpack.c.b16 %v3687, %v3686
        %v3697 = vpack.c.b16 %v3689, %v3688
        %3706 = vmatprep.subr.bf16.mxu0 0
        %3707 = vmatpush1.bf16.msra.mxu0 %v3690
        %3708 = vmatprep.subr.bf16.mxu0 0
        %3709 = vmatpush1.bf16.msra.mxu0 %v3691
        %3710 = vmatprep.subr.bf16.mxu0 0
        %3711 = vmatpush1.bf16.msra.mxu0 %v3692
        %3712 = vmatprep.subr.bf16.mxu0 0
        %3713 = vmatpush1.bf16.msra.mxu0 %v3693
        %3714 = vmatprep.subr.bf16.mxu0 0
        %3715 = vmatpush1.bf16.msra.mxu0 %v3694
        %3716 = vmatprep.subr.bf16.mxu0 0
        %3717 = vmatpush1.bf16.msra.mxu0 %v3695
        %3718 = vmatprep.subr.bf16.mxu0 0
        %3719 = vmatpush1.bf16.msra.mxu0 %v3696
        %3720 = vmatprep.subr.bf16.mxu0 0
        %3721 = vmatpush1.bf16.msra.mxu0 %v3697
        %3722 = vmatprep.subr.bf16.mxu0 0
        %3723 = vmatpush1.bf16.msra.mxu0 0
        %3724 = vmatprep.subr.bf16.mxu0 0
        %3725 = vmatpush1.bf16.msra.mxu0 0
        %3726 = vmatprep.subr.bf16.mxu0 0
        %3727 = vmatpush1.bf16.msra.mxu0 0
        %3728 = vmatprep.subr.bf16.mxu0 0
        %3729 = vmatpush1.bf16.msra.mxu0 0
        %3730 = vmatprep.subr.bf16.mxu0 0
        %3731 = vmatpush1.bf16.msra.mxu0 0
        %3732 = vmatprep.subr.bf16.mxu0 0
        %3733 = vmatpush1.bf16.msra.mxu0 0
        %3734 = vmatprep.subr.bf16.mxu0 0
        %3735 = vmatpush1.bf16.msra.mxu0 0
        %3736 = vmatprep.subr.bf16.mxu0 0
        %3737 = vmatpush1.bf16.msra.mxu0 0
        %3738 = vmatprep.mubr.bf16.mxu0 0
        %3739 = vmatmul.mubr.bf16.gmra.mrb[0].mxu0 %v3656
        %v3740 = vpop.f32.mrb[0].mxu0
        %v3741 = vadd.f32 0.0, %v3740
        %v3742 = vpop.f32.mrb[0].mxu0
        %v3743 = vpop.f32.mrb[0].mxu0
        %v3744 = vpop.f32.mrb[0].mxu0
        %3745 = vdwg.mxu0
        %v3746 = vpack.i.b16 %v505, %v505
        %v3747 = vlaneseq
        %v3748 = vshrl.u32 %v3747, 7
        %v3749 = vsub.s32 0, %v3748
        %v3750 = vrot.slane %v3746, %v3749
        %v3768 = vunpack.c.l.b16 %v972
        %v3769 = vunpack.c.l.b16 %v973
        %v3770 = vunpack.c.l.b16 %v974
        %v3771 = vunpack.c.l.b16 %v975
        %v3772 = vunpack.c.l.b16 %v976
        %v3773 = vunpack.c.l.b16 %v977
        %v3774 = vunpack.c.l.b16 %v978
        %v3775 = vunpack.c.l.b16 %v979
        %v3776 = vunpack.c.l.b16 %v980
        %v3777 = vunpack.c.l.b16 %v981
        %v3778 = vunpack.c.l.b16 %v982
        %v3779 = vunpack.c.l.b16 %v983
        %v3780 = vunpack.c.l.b16 %v984
        %v3781 = vunpack.c.l.b16 %v985
        %v3782 = vunpack.c.l.b16 %v986
        %v3783 = vunpack.c.l.b16 %v987
        %v3784 = vpack.c.b16 %v3769, %v3768
        %v3785 = vpack.c.b16 %v3771, %v3770
        %v3786 = vpack.c.b16 %v3773, %v3772
        %v3787 = vpack.c.b16 %v3775, %v3774
        %v3788 = vpack.c.b16 %v3777, %v3776
        %v3789 = vpack.c.b16 %v3779, %v3778
        %v3790 = vpack.c.b16 %v3781, %v3780
        %v3791 = vpack.c.b16 %v3783, %v3782
        %3800 = vmatprep.subr.bf16.mxu0 0
        %3801 = vmatpush1.bf16.msra.mxu0 %v3784
        %3802 = vmatprep.subr.bf16.mxu0 0
        %3803 = vmatpush1.bf16.msra.mxu0 %v3785
        %3804 = vmatprep.subr.bf16.mxu0 0
        %3805 = vmatpush1.bf16.msra.mxu0 %v3786
        %3806 = vmatprep.subr.bf16.mxu0 0
        %3807 = vmatpush1.bf16.msra.mxu0 %v3787
        %3808 = vmatprep.subr.bf16.mxu0 0
        %3809 = vmatpush1.bf16.msra.mxu0 %v3788
        %3810 = vmatprep.subr.bf16.mxu0 0
        %3811 = vmatpush1.bf16.msra.mxu0 %v3789
        %3812 = vmatprep.subr.bf16.mxu0 0
        %3813 = vmatpush1.bf16.msra.mxu0 %v3790
        %3814 = vmatprep.subr.bf16.mxu0 0
        %3815 = vmatpush1.bf16.msra.mxu0 %v3791
        %3816 = vmatprep.subr.bf16.mxu0 0
        %3817 = vmatpush1.bf16.msra.mxu0 0
        %3818 = vmatprep.subr.bf16.mxu0 0
        %3819 = vmatpush1.bf16.msra.mxu0 0
        %3820 = vmatprep.subr.bf16.mxu0 0
        %3821 = vmatpush1.bf16.msra.mxu0 0
        %3822 = vmatprep.subr.bf16.mxu0 0
        %3823 = vmatpush1.bf16.msra.mxu0 0
        %3824 = vmatprep.subr.bf16.mxu0 0
        %3825 = vmatpush1.bf16.msra.mxu0 0
        %3826 = vmatprep.subr.bf16.mxu0 0
        %3827 = vmatpush1.bf16.msra.mxu0 0
        %3828 = vmatprep.subr.bf16.mxu0 0
        %3829 = vmatpush1.bf16.msra.mxu0 0
        %3830 = vmatprep.subr.bf16.mxu0 0
        %3831 = vmatpush1.bf16.msra.mxu0 0
        %3832 = vmatprep.mubr.bf16.mxu0 0
        %3833 = vmatmul.mubr.bf16.gmra.mrb[0].mxu0 %v3750
        %v3834 = vpop.f32.mrb[0].mxu0
        %v3835 = vadd.f32 0.0, %v3834
        %v3836 = vpop.f32.mrb[0].mxu0
        %v3837 = vpop.f32.mrb[0].mxu0
        %v3838 = vpop.f32.mrb[0].mxu0
        %3839 = vdwg.mxu0
        %v3840 = vpack.i.b16 %v506, %v506
        %v3841 = vlaneseq
        %v3842 = vshrl.u32 %v3841, 7
        %v3843 = vsub.s32 0, %v3842
        %v3844 = vrot.slane %v3840, %v3843
        %v3862 = vunpack.c.l.b16 %v988
        %v3863 = vunpack.c.l.b16 %v989
        %v3864 = vunpack.c.l.b16 %v990
        %v3865 = vunpack.c.l.b16 %v991
        %v3866 = vunpack.c.l.b16 %v992
        %v3867 = vunpack.c.l.b16 %v993
        %v3868 = vunpack.c.l.b16 %v994
        %v3869 = vunpack.c.l.b16 %v995
        %v3870 = vunpack.c.l.b16 %v996
        %v3871 = vunpack.c.l.b16 %v997
        %v3872 = vunpack.c.l.b16 %v998
        %v3873 = vunpack.c.l.b16 %v999
        %v3874 = vunpack.c.l.b16 %v1000
        %v3875 = vunpack.c.l.b16 %v1001
        %v3876 = vunpack.c.l.b16 %v1002
        %v3877 = vunpack.c.l.b16 %v1003
        %v3878 = vpack.c.b16 %v3863, %v3862
        %v3879 = vpack.c.b16 %v3865, %v3864
        %v3880 = vpack.c.b16 %v3867, %v3866
        %v3881 = vpack.c.b16 %v3869, %v3868
        %v3882 = vpack.c.b16 %v3871, %v3870
        %v3883 = vpack.c.b16 %v3873, %v3872
        %v3884 = vpack.c.b16 %v3875, %v3874
        %v3885 = vpack.c.b16 %v3877, %v3876
        %3894 = vmatprep.subr.bf16.mxu0 0
        %3895 = vmatpush1.bf16.msra.mxu0 %v3878
        %3896 = vmatprep.subr.bf16.mxu0 0
        %3897 = vmatpush1.bf16.msra.mxu0 %v3879
        %3898 = vmatprep.subr.bf16.mxu0 0
        %3899 = vmatpush1.bf16.msra.mxu0 %v3880
        %3900 = vmatprep.subr.bf16.mxu0 0
        %3901 = vmatpush1.bf16.msra.mxu0 %v3881
        %3902 = vmatprep.subr.bf16.mxu0 0
        %3903 = vmatpush1.bf16.msra.mxu0 %v3882
        %3904 = vmatprep.subr.bf16.mxu0 0
        %3905 = vmatpush1.bf16.msra.mxu0 %v3883
        %3906 = vmatprep.subr.bf16.mxu0 0
        %3907 = vmatpush1.bf16.msra.mxu0 %v3884
        %3908 = vmatprep.subr.bf16.mxu0 0
        %3909 = vmatpush1.bf16.msra.mxu0 %v3885
        %3910 = vmatprep.subr.bf16.mxu0 0
        %3911 = vmatpush1.bf16.msra.mxu0 0
        %3912 = vmatprep.subr.bf16.mxu0 0
        %3913 = vmatpush1.bf16.msra.mxu0 0
        %3914 = vmatprep.subr.bf16.mxu0 0
        %3915 = vmatpush1.bf16.msra.mxu0 0
        %3916 = vmatprep.subr.bf16.mxu0 0
        %3917 = vmatpush1.bf16.msra.mxu0 0
        %3918 = vmatprep.subr.bf16.mxu0 0
        %3919 = vmatpush1.bf16.msra.mxu0 0
        %3920 = vmatprep.subr.bf16.mxu0 0
        %3921 = vmatpush1.bf16.msra.mxu0 0
        %3922 = vmatprep.subr.bf16.mxu0 0
        %3923 = vmatpush1.bf16.msra.mxu0 0
        %3924 = vmatprep.subr.bf16.mxu0 0
        %3925 = vmatpush1.bf16.msra.mxu0 0
        %3926 = vmatprep.mubr.bf16.mxu0 0
        %3927 = vmatmul.mubr.bf16.gmra.mrb[0].mxu0 %v3844
        %v3928 = vpop.f32.mrb[0].mxu0
        %v3929 = vadd.f32 0.0, %v3928
        %v3930 = vpop.f32.mrb[0].mxu0
        %v3931 = vpop.f32.mrb[0].mxu0
        %v3932 = vpop.f32.mrb[0].mxu0
        %3933 = vdwg.mxu0
        %v3934 = vpack.i.b16 %v507, %v507
        %v3935 = vlaneseq
        %v3936 = vshrl.u32 %v3935, 7
        %v3937 = vsub.s32 0, %v3936
        %v3938 = vrot.slane %v3934, %v3937
        %v3956 = vunpack.c.l.b16 %v1004
        %v3957 = vunpack.c.l.b16 %v1005
        %v3958 = vunpack.c.l.b16 %v1006
        %v3959 = vunpack.c.l.b16 %v1007
        %v3960 = vunpack.c.l.b16 %v1008
        %v3961 = vunpack.c.l.b16 %v1009
        %v3962 = vunpack.c.l.b16 %v1010
        %v3963 = vunpack.c.l.b16 %v1011
        %v3964 = vunpack.c.l.b16 %v1012
        %v3965 = vunpack.c.l.b16 %v1013
        %v3966 = vunpack.c.l.b16 %v1014
        %v3967 = vunpack.c.l.b16 %v1015
        %v3968 = vunpack.c.l.b16 %v1016
        %v3969 = vunpack.c.l.b16 %v1017
        %v3970 = vunpack.c.l.b16 %v1018
        %v3971 = vunpack.c.l.b16 %v1019
        %v3972 = vpack.c.b16 %v3957, %v3956
        %v3973 = vpack.c.b16 %v3959, %v3958
        %v3974 = vpack.c.b16 %v3961, %v3960
        %v3975 = vpack.c.b16 %v3963, %v3962
        %v3976 = vpack.c.b16 %v3965, %v3964
        %v3977 = vpack.c.b16 %v3967, %v3966
        %v3978 = vpack.c.b16 %v3969, %v3968
        %v3979 = vpack.c.b16 %v3971, %v3970
        %3988 = vmatprep.subr.bf16.mxu0 0
        %3989 = vmatpush1.bf16.msra.mxu0 %v3972
        %3990 = vmatprep.subr.bf16.mxu0 0
        %3991 = vmatpush1.bf16.msra.mxu0 %v3973
        %3992 = vmatprep.subr.bf16.mxu0 0
        %3993 = vmatpush1.bf16.msra.mxu0 %v3974
        %3994 = vmatprep.subr.bf16.mxu0 0
        %3995 = vmatpush1.bf16.msra.mxu0 %v3975
        %3996 = vmatprep.subr.bf16.mxu0 0
        %3997 = vmatpush1.bf16.msra.mxu0 %v3976
        %3998 = vmatprep.subr.bf16.mxu0 0
        %3999 = vmatpush1.bf16.msra.mxu0 %v3977
        %4000 = vmatprep.subr.bf16.mxu0 0
        %4001 = vmatpush1.bf16.msra.mxu0 %v3978
        %4002 = vmatprep.subr.bf16.mxu0 0
        %4003 = vmatpush1.bf16.msra.mxu0 %v3979
        %4004 = vmatprep.subr.bf16.mxu0 0
        %4005 = vmatpush1.bf16.msra.mxu0 0
        %4006 = vmatprep.subr.bf16.mxu0 0
        %4007 = vmatpush1.bf16.msra.mxu0 0
        %4008 = vmatprep.subr.bf16.mxu0 0
        %4009 = vmatpush1.bf16.msra.mxu0 0
        %4010 = vmatprep.subr.bf16.mxu0 0
        %4011 = vmatpush1.bf16.msra.mxu0 0
        %4012 = vmatprep.subr.bf16.mxu0 0
        %4013 = vmatpush1.bf16.msra.mxu0 0
        %4014 = vmatprep.subr.bf16.mxu0 0
        %4015 = vmatpush1.bf16.msra.mxu0 0
        %4016 = vmatprep.subr.bf16.mxu0 0
        %4017 = vmatpush1.bf16.msra.mxu0 0
        %4018 = vmatprep.subr.bf16.mxu0 0
        %4019 = vmatpush1.bf16.msra.mxu0 0
        %4020 = vmatprep.mubr.bf16.mxu0 0
        %4021 = vmatmul.mubr.bf16.gmra.mrb[0].mxu0 %v3938
        %v4022 = vpop.f32.mrb[0].mxu0
        %v4023 = vadd.f32 0.0, %v4022
        %v4024 = vpop.f32.mrb[0].mxu0
        %v4025 = vpop.f32.mrb[0].mxu0
        %v4026 = vpop.f32.mrb[0].mxu0
        %4027 = vdwg.mxu0
        %v4028 = vld [vmem:[%s4] sm:$0xff]
        %v4029 = vld [vmem:[%s4 + $0x8] sm:$0xff]
        %v4030 = vld [vmem:[%s4 + $0x10] sm:$0xff]
        %v4031 = vld [vmem:[%s4 + $0x18] sm:$0xff]
        %4033 = vset.pattern.permute.xlu0 0
        %4034 = vperm.xlu0 %4033, %v4028
        %v4035 = vpop.permute.xlu0 %4034
        %4038 = vset.pattern.permute.xlu0 0
        %4039 = vperm.xlu0 %4038, %v4029
        %v4040 = vpop.permute.xlu0 %4039
        %4043 = vset.pattern.permute.xlu0 0
        %4044 = vperm.xlu0 %4043, %v4030
        %v4045 = vpop.permute.xlu0 %4044
        %4048 = vset.pattern.permute.xlu0 0
        %4049 = vperm.xlu0 %4048, %v4031
        %v4050 = vpop.permute.xlu0 %4049
        %v4052 = vmul.f32 %v370, %v4035
        %v4053 = vmul.f32 %v371, %v4040
        %v4054 = vmul.f32 %v372, %v4045
        %v4055 = vmul.f32 %v373, %v4050
        %v4060 = vrot.slane %v4052, 1
        %v4061 = vrot.slane %v4052, 2
        %v4062 = vrot.slane %v4052, 3
        %v4063 = vrot.slane %v4052, 4
        %v4064 = vrot.slane %v4052, 5
        %v4065 = vrot.slane %v4052, 6
        %v4066 = vrot.slane %v4052, 7
        %v4067 = vrot.slane %v4053, 1
        %v4068 = vrot.slane %v4053, 2
        %v4069 = vrot.slane %v4053, 3
        %v4070 = vrot.slane %v4053, 4
        %v4071 = vrot.slane %v4053, 5
        %v4072 = vrot.slane %v4053, 6
        %v4073 = vrot.slane %v4053, 7
        %v4074 = vrot.slane %v4054, 1
        %v4075 = vrot.slane %v4054, 2
        %v4076 = vrot.slane %v4054, 3
        %v4077 = vrot.slane %v4054, 4
        %v4078 = vrot.slane %v4054, 5
        %v4079 = vrot.slane %v4054, 6
        %v4080 = vrot.slane %v4054, 7
        %v4081 = vrot.slane %v4055, 1
        %v4082 = vrot.slane %v4055, 2
        %v4083 = vrot.slane %v4055, 3
        %v4084 = vrot.slane %v4055, 4
        %v4085 = vrot.slane %v4055, 5
        %v4086 = vrot.slane %v4055, 6
        %v4087 = vrot.slane %v4055, 7
        %v4120 = vadd.f32 %v1109, %v4052
        %v4121 = vadd.f32 %v1203, %v4060
        %v4122 = vadd.f32 %v1297, %v4061
        %v4123 = vadd.f32 %v1391, %v4062
        %v4124 = vadd.f32 %v1485, %v4063
        %v4125 = vadd.f32 %v1579, %v4064
        %v4126 = vadd.f32 %v1673, %v4065
        %v4127 = vadd.f32 %v1767, %v4066
        %v4128 = vadd.f32 %v1861, %v4053
        %v4129 = vadd.f32 %v1955, %v4067
        %v4130 = vadd.f32 %v2049, %v4068
        %v4131 = vadd.f32 %v2143, %v4069
        %v4132 = vadd.f32 %v2237, %v4070
        %v4133 = vadd.f32 %v2331, %v4071
        %v4134 = vadd.f32 %v2425, %v4072
        %v4135 = vadd.f32 %v2519, %v4073
        %v4136 = vadd.f32 %v2613, %v4054
        %v4137 = vadd.f32 %v2707, %v4074
        %v4138 = vadd.f32 %v2801, %v4075
        %v4139 = vadd.f32 %v2895, %v4076
        %v4140 = vadd.f32 %v2989, %v4077
        %v4141 = vadd.f32 %v3083, %v4078
        %v4142 = vadd.f32 %v3177, %v4079
        %v4143 = vadd.f32 %v3271, %v4080
        %v4144 = vadd.f32 %v3365, %v4055
        %v4145 = vadd.f32 %v3459, %v4081
        %v4146 = vadd.f32 %v3553, %v4082
        %v4147 = vadd.f32 %v3647, %v4083
        %v4148 = vadd.f32 %v3741, %v4084
        %v4149 = vadd.f32 %v3835, %v4085
        %v4150 = vadd.f32 %v3929, %v4086
        %v4151 = vadd.f32 %v4023, %v4087
        %v4152 = vmul.f32 %v4120, 0.5
        %v4153 = vmul.f32 %v4121, 0.5
        %v4154 = vmul.f32 %v4122, 0.5
        %v4155 = vmul.f32 %v4123, 0.5
        %v4156 = vmul.f32 %v4124, 0.5
        %v4157 = vmul.f32 %v4125, 0.5
        %v4158 = vmul.f32 %v4126, 0.5
        %v4159 = vmul.f32 %v4127, 0.5
        %v4160 = vmul.f32 %v4128, 0.5
        %v4161 = vmul.f32 %v4129, 0.5
        %v4162 = vmul.f32 %v4130, 0.5
        %v4163 = vmul.f32 %v4131, 0.5
        %v4164 = vmul.f32 %v4132, 0.5
        %v4165 = vmul.f32 %v4133, 0.5
        %v4166 = vmul.f32 %v4134, 0.5
        %v4167 = vmul.f32 %v4135, 0.5
        %v4168 = vmul.f32 %v4136, 0.5
        %v4169 = vmul.f32 %v4137, 0.5
        %v4170 = vmul.f32 %v4138, 0.5
        %v4171 = vmul.f32 %v4139, 0.5
        %v4172 = vmul.f32 %v4140, 0.5
        %v4173 = vmul.f32 %v4141, 0.5
        %v4174 = vmul.f32 %v4142, 0.5
        %v4175 = vmul.f32 %v4143, 0.5
        %v4176 = vmul.f32 %v4144, 0.5
        %v4177 = vmul.f32 %v4145, 0.5
        %v4178 = vmul.f32 %v4146, 0.5
        %v4179 = vmul.f32 %v4147, 0.5
        %v4180 = vmul.f32 %v4148, 0.5
        %v4181 = vmul.f32 %v4149, 0.5
        %v4182 = vmul.f32 %v4150, 0.5
        %v4183 = vmul.f32 %v4151, 0.5
        %v4184 = vmul.f32 %v4120, 0.044715
        %v4185 = vmul.f32 %v4121, 0.044715
        %v4186 = vmul.f32 %v4122, 0.044715
        %v4187 = vmul.f32 %v4123, 0.044715
        %v4188 = vmul.f32 %v4124, 0.044715
        %v4189 = vmul.f32 %v4125, 0.044715
        %v4190 = vmul.f32 %v4126, 0.044715
        %v4191 = vmul.f32 %v4127, 0.044715
        %v4192 = vmul.f32 %v4128, 0.044715
        %v4193 = vmul.f32 %v4129, 0.044715
        %v4194 = vmul.f32 %v4130, 0.044715
        %v4195 = vmul.f32 %v4131, 0.044715
        %v4196 = vmul.f32 %v4132, 0.044715
        %v4197 = vmul.f32 %v4133, 0.044715
        %v4198 = vmul.f32 %v4134, 0.044715
        %v4199 = vmul.f32 %v4135, 0.044715
        %v4200 = vmul.f32 %v4136, 0.044715
        %v4201 = vmul.f32 %v4137, 0.044715
        %v4202 = vmul.f32 %v4138, 0.044715
        %v4203 = vmul.f32 %v4139, 0.044715
        %v4204 = vmul.f32 %v4140, 0.044715
        %v4205 = vmul.f32 %v4141, 0.044715
        %v4206 = vmul.f32 %v4142, 0.044715
        %v4207 = vmul.f32 %v4143, 0.044715
        %v4208 = vmul.f32 %v4144, 0.044715
        %v4209 = vmul.f32 %v4145, 0.044715
        %v4210 = vmul.f32 %v4146, 0.044715
        %v4211 = vmul.f32 %v4147, 0.044715
        %v4212 = vmul.f32 %v4148, 0.044715
        %v4213 = vmul.f32 %v4149, 0.044715
        %v4214 = vmul.f32 %v4150, 0.044715
        %v4215 = vmul.f32 %v4151, 0.044715
        %v4216 = vmul.f32 %v4184, %v4120
        %v4217 = vmul.f32 %v4185, %v4121
        %v4218 = vmul.f32 %v4186, %v4122
        %v4219 = vmul.f32 %v4187, %v4123
        %v4220 = vmul.f32 %v4188, %v4124
        %v4221 = vmul.f32 %v4189, %v4125
        %v4222 = vmul.f32 %v4190, %v4126
        %v4223 = vmul.f32 %v4191, %v4127
        %v4224 = vmul.f32 %v4192, %v4128
        %v4225 = vmul.f32 %v4193, %v4129
        %v4226 = vmul.f32 %v4194, %v4130
        %v4227 = vmul.f32 %v4195, %v4131
        %v4228 = vmul.f32 %v4196, %v4132
        %v4229 = vmul.f32 %v4197, %v4133
        %v4230 = vmul.f32 %v4198, %v4134
        %v4231 = vmul.f32 %v4199, %v4135
        %v4232 = vmul.f32 %v4200, %v4136
        %v4233 = vmul.f32 %v4201, %v4137
        %v4234 = vmul.f32 %v4202, %v4138
        %v4235 = vmul.f32 %v4203, %v4139
        %v4236 = vmul.f32 %v4204, %v4140
        %v4237 = vmul.f32 %v4205, %v4141
        %v4238 = vmul.f32 %v4206, %v4142
        %v4239 = vmul.f32 %v4207, %v4143
        %v4240 = vmul.f32 %v4208, %v4144
        %v4241 = vmul.f32 %v4209, %v4145
        %v4242 = vmul.f32 %v4210, %v4146
        %v4243 = vmul.f32 %v4211, %v4147
        %v4244 = vmul.f32 %v4212, %v4148
        %v4245 = vmul.f32 %v4213, %v4149
        %v4246 = vmul.f32 %v4214, %v4150
        %v4247 = vmul.f32 %v4215, %v4151
        %v4248 = vmul.f32 %v4216, %v4120
        %v4249 = vmul.f32 %v4217, %v4121
        %v4250 = vmul.f32 %v4218, %v4122
        %v4251 = vmul.f32 %v4219, %v4123
        %v4252 = vmul.f32 %v4220, %v4124
        %v4253 = vmul.f32 %v4221, %v4125
        %v4254 = vmul.f32 %v4222, %v4126
        %v4255 = vmul.f32 %v4223, %v4127
        %v4256 = vmul.f32 %v4224, %v4128
        %v4257 = vmul.f32 %v4225, %v4129
        %v4258 = vmul.f32 %v4226, %v4130
        %v4259 = vmul.f32 %v4227, %v4131
        %v4260 = vmul.f32 %v4228, %v4132
        %v4261 = vmul.f32 %v4229, %v4133
        %v4262 = vmul.f32 %v4230, %v4134
        %v4263 = vmul.f32 %v4231, %v4135
        %v4264 = vmul.f32 %v4232, %v4136
        %v4265 = vmul.f32 %v4233, %v4137
        %v4266 = vmul.f32 %v4234, %v4138
        %v4267 = vmul.f32 %v4235, %v4139
        %v4268 = vmul.f32 %v4236, %v4140
        %v4269 = vmul.f32 %v4237, %v4141
        %v4270 = vmul.f32 %v4238, %v4142
        %v4271 = vmul.f32 %v4239, %v4143
        %v4272 = vmul.f32 %v4240, %v4144
        %v4273 = vmul.f32 %v4241, %v4145
        %v4274 = vmul.f32 %v4242, %v4146
        %v4275 = vmul.f32 %v4243, %v4147
        %v4276 = vmul.f32 %v4244, %v4148
        %v4277 = vmul.f32 %v4245, %v4149
        %v4278 = vmul.f32 %v4246, %v4150
        %v4279 = vmul.f32 %v4247, %v4151
        %v4280 = vadd.f32 %v4120, %v4248
        %v4281 = vadd.f32 %v4121, %v4249
        %v4282 = vadd.f32 %v4122, %v4250
        %v4283 = vadd.f32 %v4123, %v4251
        %v4284 = vadd.f32 %v4124, %v4252
        %v4285 = vadd.f32 %v4125, %v4253
        %v4286 = vadd.f32 %v4126, %v4254
        %v4287 = vadd.f32 %v4127, %v4255
        %v4288 = vadd.f32 %v4128, %v4256
        %v4289 = vadd.f32 %v4129, %v4257
        %v4290 = vadd.f32 %v4130, %v4258
        %v4291 = vadd.f32 %v4131, %v4259
        %v4292 = vadd.f32 %v4132, %v4260
        %v4293 = vadd.f32 %v4133, %v4261
        %v4294 = vadd.f32 %v4134, %v4262
        %v4295 = vadd.f32 %v4135, %v4263
        %v4296 = vadd.f32 %v4136, %v4264
        %v4297 = vadd.f32 %v4137, %v4265
        %v4298 = vadd.f32 %v4138, %v4266
        %v4299 = vadd.f32 %v4139, %v4267
        %v4300 = vadd.f32 %v4140, %v4268
        %v4301 = vadd.f32 %v4141, %v4269
        %v4302 = vadd.f32 %v4142, %v4270
        %v4303 = vadd.f32 %v4143, %v4271
        %v4304 = vadd.f32 %v4144, %v4272
        %v4305 = vadd.f32 %v4145, %v4273
        %v4306 = vadd.f32 %v4146, %v4274
        %v4307 = vadd.f32 %v4147, %v4275
        %v4308 = vadd.f32 %v4148, %v4276
        %v4309 = vadd.f32 %v4149, %v4277
        %v4310 = vadd.f32 %v4150, %v4278
        %v4311 = vadd.f32 %v4151, %v4279
        %v4312 = vmul.f32 %v4280, 0.7978846
        %v4313 = vmul.f32 %v4281, 0.7978846
        %v4314 = vmul.f32 %v4282, 0.7978846
        %v4315 = vmul.f32 %v4283, 0.7978846
        %v4316 = vmul.f32 %v4284, 0.7978846
        %v4317 = vmul.f32 %v4285, 0.7978846
        %v4318 = vmul.f32 %v4286, 0.7978846
        %v4319 = vmul.f32 %v4287, 0.7978846
        %v4320 = vmul.f32 %v4288, 0.7978846
        %v4321 = vmul.f32 %v4289, 0.7978846
        %v4322 = vmul.f32 %v4290, 0.7978846
        %v4323 = vmul.f32 %v4291, 0.7978846
        %v4324 = vmul.f32 %v4292, 0.7978846
        %v4325 = vmul.f32 %v4293, 0.7978846
        %v4326 = vmul.f32 %v4294, 0.7978846
        %v4327 = vmul.f32 %v4295, 0.7978846
        %v4328 = vmul.f32 %v4296, 0.7978846
        %v4329 = vmul.f32 %v4297, 0.7978846
        %v4330 = vmul.f32 %v4298, 0.7978846
        %v4331 = vmul.f32 %v4299, 0.7978846
        %v4332 = vmul.f32 %v4300, 0.7978846
        %v4333 = vmul.f32 %v4301, 0.7978846
        %v4334 = vmul.f32 %v4302, 0.7978846
        %v4335 = vmul.f32 %v4303, 0.7978846
        %v4336 = vmul.f32 %v4304, 0.7978846
        %v4337 = vmul.f32 %v4305, 0.7978846
        %v4338 = vmul.f32 %v4306, 0.7978846
        %v4339 = vmul.f32 %v4307, 0.7978846
        %v4340 = vmul.f32 %v4308, 0.7978846
        %v4341 = vmul.f32 %v4309, 0.7978846
        %v4342 = vmul.f32 %v4310, 0.7978846
        %v4343 = vmul.f32 %v4311, 0.7978846
        %v4344 = vtanh.pop %v4312
        %v4345 = vtanh.pop %v4313
        %v4346 = vtanh.pop %v4314
        %v4347 = vtanh.pop %v4315
        %v4348 = vtanh.pop %v4316
        %v4349 = vtanh.pop %v4317
        %v4350 = vtanh.pop %v4318
        %v4351 = vtanh.pop %v4319
        %v4352 = vtanh.pop %v4320
        %v4353 = vtanh.pop %v4321
        %v4354 = vtanh.pop %v4322
        %v4355 = vtanh.pop %v4323
        %v4356 = vtanh.pop %v4324
        %v4357 = vtanh.pop %v4325
        %v4358 = vtanh.pop %v4326
        %v4359 = vtanh.pop %v4327
        %v4360 = vtanh.pop %v4328
        %v4361 = vtanh.pop %v4329
        %v4362 = vtanh.pop %v4330
        %v4363 = vtanh.pop %v4331
        %v4364 = vtanh.pop %v4332
        %v4365 = vtanh.pop %v4333
        %v4366 = vtanh.pop %v4334
        %v4367 = vtanh.pop %v4335
        %v4368 = vtanh.pop %v4336
        %v4369 = vtanh.pop %v4337
        %v4370 = vtanh.pop %v4338
        %v4371 = vtanh.pop %v4339
        %v4372 = vtanh.pop %v4340
        %v4373 = vtanh.pop %v4341
        %v4374 = vtanh.pop %v4342
        %v4375 = vtanh.pop %v4343
        %v4376 = vadd.f32 %v4344, 1.0
        %v4377 = vadd.f32 %v4345, 1.0
        %v4378 = vadd.f32 %v4346, 1.0
        %v4379 = vadd.f32 %v4347, 1.0
        %v4380 = vadd.f32 %v4348, 1.0
        %v4381 = vadd.f32 %v4349, 1.0
        %v4382 = vadd.f32 %v4350, 1.0
        %v4383 = vadd.f32 %v4351, 1.0
        %v4384 = vadd.f32 %v4352, 1.0
        %v4385 = vadd.f32 %v4353, 1.0
        %v4386 = vadd.f32 %v4354, 1.0
        %v4387 = vadd.f32 %v4355, 1.0
        %v4388 = vadd.f32 %v4356, 1.0
        %v4389 = vadd.f32 %v4357, 1.0
        %v4390 = vadd.f32 %v4358, 1.0
        %v4391 = vadd.f32 %v4359, 1.0
        %v4392 = vadd.f32 %v4360, 1.0
        %v4393 = vadd.f32 %v4361, 1.0
        %v4394 = vadd.f32 %v4362, 1.0
        %v4395 = vadd.f32 %v4363, 1.0
        %v4396 = vadd.f32 %v4364, 1.0
        %v4397 = vadd.f32 %v4365, 1.0
        %v4398 = vadd.f32 %v4366, 1.0
        %v4399 = vadd.f32 %v4367, 1.0
        %v4400 = vadd.f32 %v4368, 1.0
        %v4401 = vadd.f32 %v4369, 1.0
        %v4402 = vadd.f32 %v4370, 1.0
        %v4403 = vadd.f32 %v4371, 1.0
        %v4404 = vadd.f32 %v4372, 1.0
        %v4405 = vadd.f32 %v4373, 1.0
        %v4406 = vadd.f32 %v4374, 1.0
        %v4407 = vadd.f32 %v4375, 1.0
        %v4408 = vmul.f32 %v4152, %v4376
        %v4409 = vmul.f32 %v4153, %v4377
        %v4410 = vmul.f32 %v4154, %v4378
        %v4411 = vmul.f32 %v4155, %v4379
        %v4412 = vmul.f32 %v4156, %v4380
        %v4413 = vmul.f32 %v4157, %v4381
        %v4414 = vmul.f32 %v4158, %v4382
        %v4415 = vmul.f32 %v4159, %v4383
        %v4416 = vmul.f32 %v4160, %v4384
        %v4417 = vmul.f32 %v4161, %v4385
        %v4418 = vmul.f32 %v4162, %v4386
        %v4419 = vmul.f32 %v4163, %v4387
        %v4420 = vmul.f32 %v4164, %v4388
        %v4421 = vmul.f32 %v4165, %v4389
        %v4422 = vmul.f32 %v4166, %v4390
        %v4423 = vmul.f32 %v4167, %v4391
        %v4424 = vmul.f32 %v4168, %v4392
        %v4425 = vmul.f32 %v4169, %v4393
        %v4426 = vmul.f32 %v4170, %v4394
        %v4427 = vmul.f32 %v4171, %v4395
        %v4428 = vmul.f32 %v4172, %v4396
        %v4429 = vmul.f32 %v4173, %v4397
        %v4430 = vmul.f32 %v4174, %v4398
        %v4431 = vmul.f32 %v4175, %v4399
        %v4432 = vmul.f32 %v4176, %v4400
        %v4433 = vmul.f32 %v4177, %v4401
        %v4434 = vmul.f32 %v4178, %v4402
        %v4435 = vmul.f32 %v4179, %v4403
        %v4436 = vmul.f32 %v4180, %v4404
        %v4437 = vmul.f32 %v4181, %v4405
        %v4438 = vmul.f32 %v4182, %v4406
        %v4439 = vmul.f32 %v4183, %v4407
        %v4440 = vld [vmem:[%s5] sm:$0xff]
        %v4441 = vld [vmem:[%s5 + $0x8] sm:$0xff]
        %v4442 = vld [vmem:[%s5 + $0x10] sm:$0xff]
        %v4443 = vld [vmem:[%s5 + $0x18] sm:$0xff]
        %v4444 = vld [vmem:[%s5 + $0x20] sm:$0xff]
        %v4445 = vld [vmem:[%s5 + $0x28] sm:$0xff]
        %v4446 = vld [vmem:[%s5 + $0x30] sm:$0xff]
        %v4447 = vld [vmem:[%s5 + $0x38] sm:$0xff]
        %v4448 = vpack.c.bf16 %v4441, %v4440
        %v4449 = vpack.c.bf16 %v4443, %v4442
        %v4450 = vpack.c.bf16 %v4445, %v4444
        %v4451 = vpack.c.bf16 %v4447, %v4446
        %v4452 = vpack.c.bf16 %v4408, %v4408
        %v4453 = vpack.c.bf16 %v4409, %v4409
        %v4454 = vpack.c.bf16 %v4410, %v4410
        %v4455 = vpack.c.bf16 %v4411, %v4411
        %v4456 = vpack.c.bf16 %v4412, %v4412
        %v4457 = vpack.c.bf16 %v4413, %v4413
        %v4458 = vpack.c.bf16 %v4414, %v4414
        %v4459 = vpack.c.bf16 %v4415, %v4415
        %v4460 = vpack.c.bf16 %v4416, %v4416
        %v4461 = vpack.c.bf16 %v4417, %v4417
        %v4462 = vpack.c.bf16 %v4418, %v4418
        %v4463 = vpack.c.bf16 %v4419, %v4419
        %v4464 = vpack.c.bf16 %v4420, %v4420
        %v4465 = vpack.c.bf16 %v4421, %v4421
        %v4466 = vpack.c.bf16 %v4422, %v4422
        %v4467 = vpack.c.bf16 %v4423, %v4423
        %v4468 = vpack.c.bf16 %v4424, %v4424
        %v4469 = vpack.c.bf16 %v4425, %v4425
        %v4470 = vpack.c.bf16 %v4426, %v4426
        %v4471 = vpack.c.bf16 %v4427, %v4427
        %v4472 = vpack.c.bf16 %v4428, %v4428
        %v4473 = vpack.c.bf16 %v4429, %v4429
        %v4474 = vpack.c.bf16 %v4430, %v4430
        %v4475 = vpack.c.bf16 %v4431, %v4431
        %v4476 = vpack.c.bf16 %v4432, %v4432
        %v4477 = vpack.c.bf16 %v4433, %v4433
        %v4478 = vpack.c.bf16 %v4434, %v4434
        %v4479 = vpack.c.bf16 %v4435, %v4435
        %v4480 = vpack.c.bf16 %v4436, %v4436
        %v4481 = vpack.c.bf16 %v4437, %v4437
        %v4482 = vpack.c.bf16 %v4438, %v4438
        %v4483 = vpack.c.bf16 %v4439, %v4439
        %v4484 = vld [vmem:[%s6] sm:$0xff]
        %v4485 = vld [vmem:[%s6 + $0x8] sm:$0xff]
        %v4486 = vld [vmem:[%s6 + $0x10] sm:$0xff]
        %v4487 = vld [vmem:[%s6 + $0x18] sm:$0xff]
        %v4488 = vld [vmem:[%s6 + $0x20] sm:$0xff]
        %v4489 = vld [vmem:[%s6 + $0x28] sm:$0xff]
        %v4490 = vld [vmem:[%s6 + $0x30] sm:$0xff]
        %v4491 = vld [vmem:[%s6 + $0x38] sm:$0xff]
        %4493 = vset.pattern.permute.xlu0 0
        %4494 = vperm.xlu0 %4493, %v4484
        %v4495 = vpop.permute.xlu0 %4494
        %4498 = vset.pattern.permute.xlu0 0
        %4499 = vperm.xlu0 %4498, %v4485
        %v4500 = vpop.permute.xlu0 %4499
        %4503 = vset.pattern.permute.xlu0 0
        %4504 = vperm.xlu0 %4503, %v4486
        %v4505 = vpop.permute.xlu0 %4504
        %4508 = vset.pattern.permute.xlu0 0
        %4509 = vperm.xlu0 %4508, %v4487
        %v4510 = vpop.permute.xlu0 %4509
        %4513 = vset.pattern.permute.xlu0 0
        %4514 = vperm.xlu0 %4513, %v4488
        %v4515 = vpop.permute.xlu0 %4514
        %4518 = vset.pattern.permute.xlu0 0
        %4519 = vperm.xlu0 %4518, %v4489
        %v4520 = vpop.permute.xlu0 %4519
        %4523 = vset.pattern.permute.xlu0 0
        %4524 = vperm.xlu0 %4523, %v4490
        %v4525 = vpop.permute.xlu0 %4524
        %4528 = vset.pattern.permute.xlu0 0
        %4529 = vperm.xlu0 %4528, %v4491
        %v4530 = vpop.permute.xlu0 %4529
        %v4564 = vunpack.c.l.b16 %v4452
        %v4565 = vunpack.c.l.b16 %v4453
        %v4566 = vunpack.c.l.b16 %v4454
        %v4567 = vunpack.c.l.b16 %v4455
        %v4568 = vunpack.c.l.b16 %v4456
        %v4569 = vunpack.c.l.b16 %v4457
        %v4570 = vunpack.c.l.b16 %v4458
        %v4571 = vunpack.c.l.b16 %v4459
        %v4572 = vunpack.c.l.b16 %v4460
        %v4573 = vunpack.c.l.b16 %v4461
        %v4574 = vunpack.c.l.b16 %v4462
        %v4575 = vunpack.c.l.b16 %v4463
        %v4576 = vunpack.c.l.b16 %v4464
        %v4577 = vunpack.c.l.b16 %v4465
        %v4578 = vunpack.c.l.b16 %v4466
        %v4579 = vunpack.c.l.b16 %v4467
        %v4580 = vunpack.c.l.b16 %v4468
        %v4581 = vunpack.c.l.b16 %v4469
        %v4582 = vunpack.c.l.b16 %v4470
        %v4583 = vunpack.c.l.b16 %v4471
        %v4584 = vunpack.c.l.b16 %v4472
        %v4585 = vunpack.c.l.b16 %v4473
        %v4586 = vunpack.c.l.b16 %v4474
        %v4587 = vunpack.c.l.b16 %v4475
        %v4588 = vunpack.c.l.b16 %v4476
        %v4589 = vunpack.c.l.b16 %v4477
        %v4590 = vunpack.c.l.b16 %v4478
        %v4591 = vunpack.c.l.b16 %v4479
        %v4592 = vunpack.c.l.b16 %v4480
        %v4593 = vunpack.c.l.b16 %v4481
        %v4594 = vunpack.c.l.b16 %v4482
        %v4595 = vunpack.c.l.b16 %v4483
        %v4596 = vrot.slane %v4565, 7
        %vm4597 = vcmask 1041409
        %v4598 = vsel %vm4597, %v4596, %v4564
        %v4599 = vrot.slane %v4566, 6
        %vm4600 = vcmask 1042434
        %v4601 = vsel %vm4600, %v4599, %v4598
        %v4602 = vrot.slane %v4567, 5
        %vm4603 = vcmask 1043459
        %v4604 = vsel %vm4603, %v4602, %v4601
        %v4605 = vrot.slane %v4568, 4
        %vm4606 = vcmask 1044484
        %v4607 = vsel %vm4606, %v4605, %v4604
        %v4608 = vrot.slane %v4569, 3
        %vm4609 = vcmask 1045509
        %v4610 = vsel %vm4609, %v4608, %v4607
        %v4611 = vrot.slane %v4570, 2
        %vm4612 = vcmask 1046534
        %v4613 = vsel %vm4612, %v4611, %v4610
        %v4614 = vrot.slane %v4571, 1
        %vm4615 = vcmask 1047559
        %v4616 = vsel %vm4615, %v4614, %v4613
        %v4617 = vrot.slane %v4573, 7
        %v4618 = vsel %vm4597, %v4617, %v4572
        %v4619 = vrot.slane %v4574, 6
        %v4620 = vsel %vm4600, %v4619, %v4618
        %v4621 = vrot.slane %v4575, 5
        %v4622 = vsel %vm4603, %v4621, %v4620
        %v4623 = vrot.slane %v4576, 4
        %v4624 = vsel %vm4606, %v4623, %v4622
        %v4625 = vrot.slane %v4577, 3
        %v4626 = vsel %vm4609, %v4625, %v4624
        %v4627 = vrot.slane %v4578, 2
        %v4628 = vsel %vm4612, %v4627, %v4626
        %v4629 = vrot.slane %v4579, 1
        %v4630 = vsel %vm4615, %v4629, %v4628
        %v4631 = vrot.slane %v4581, 7
        %v4632 = vsel %vm4597, %v4631, %v4580
        %v4633 = vrot.slane %v4582, 6
        %v4634 = vsel %vm4600, %v4633, %v4632
        %v4635 = vrot.slane %v4583, 5
        %v4636 = vsel %vm4603, %v4635, %v4634
        %v4637 = vrot.slane %v4584, 4
        %v4638 = vsel %vm4606, %v4637, %v4636
        %v4639 = vrot.slane %v4585, 3
        %v4640 = vsel %vm4609, %v4639, %v4638
        %v4641 = vrot.slane %v4586, 2
        %v4642 = vsel %vm4612, %v4641, %v4640
        %v4643 = vrot.slane %v4587, 1
        %v4644 = vsel %vm4615, %v4643, %v4642
        %v4645 = vrot.slane %v4589, 7
        %v4646 = vsel %vm4597, %v4645, %v4588
        %v4647 = vrot.slane %v4590, 6
        %v4648 = vsel %vm4600, %v4647, %v4646
        %v4649 = vrot.slane %v4591, 5
        %v4650 = vsel %vm4603, %v4649, %v4648
        %v4651 = vrot.slane %v4592, 4
        %v4652 = vsel %vm4606, %v4651, %v4650
        %v4653 = vrot.slane %v4593, 3
        %v4654 = vsel %vm4609, %v4653, %v4652
        %v4655 = vrot.slane %v4594, 2
        %v4656 = vsel %vm4612, %v4655, %v4654
        %v4657 = vrot.slane %v4595, 1
        %v4658 = vsel %vm4615, %v4657, %v4656
        %v4659 = vpack.c.b16 %v4630, %v4616
        %v4660 = vpack.c.b16 %v4658, %v4644
        %vm4663 = vcmask 261120
        %v4665 = vsel %vm4663, %v4448, 0
        %v4668 = vsel %vm4663, %v4449, 0
        %v4671 = vsel %vm4663, %v4450, 0
        %v4674 = vsel %vm4663, %v4451, 0
        %4676 = vmatprep.subr.bf16.mxu0 0
        %4677 = vmatpush1.bf16.msra.mxu0 %v4659
        %4678 = vmatprep.subr.bf16.mxu0 0
        %4679 = vmatpush1.bf16.msra.mxu0 %v4660
        %4680 = vmatprep.subr.bf16.mxu0 0
        %4681 = vmatpush1.bf16.msra.mxu0 0
        %4682 = vmatprep.subr.bf16.mxu0 0
        %4683 = vmatpush1.bf16.msra.mxu0 0
        %4684 = vmatprep.subr.bf16.mxu0 0
        %4685 = vmatpush1.bf16.msra.mxu0 0
        %4686 = vmatprep.subr.bf16.mxu0 0
        %4687 = vmatpush1.bf16.msra.mxu0 0
        %4688 = vmatprep.subr.bf16.mxu0 0
        %4689 = vmatpush1.bf16.msra.mxu0 0
        %4690 = vmatprep.subr.bf16.mxu0 0
        %4691 = vmatpush1.bf16.msra.mxu0 0
        %4692 = vmatprep.subr.bf16.mxu0 0
        %4693 = vmatpush1.bf16.msra.mxu0 0
        %4694 = vmatprep.subr.bf16.mxu0 0
        %4695 = vmatpush1.bf16.msra.mxu0 0
        %4696 = vmatprep.subr.bf16.mxu0 0
        %4697 = vmatpush1.bf16.msra.mxu0 0
        %4698 = vmatprep.subr.bf16.mxu0 0
        %4699 = vmatpush1.bf16.msra.mxu0 0
        %4700 = vmatprep.subr.bf16.mxu0 0
        %4701 = vmatpush1.bf16.msra.mxu0 0
        %4702 = vmatprep.subr.bf16.mxu0 0
        %4703 = vmatpush1.bf16.msra.mxu0 0
        %4704 = vmatprep.subr.bf16.mxu0 0
        %4705 = vmatpush1.bf16.msra.mxu0 0
        %4706 = vmatprep.subr.bf16.mxu0 0
        %4707 = vmatpush1.bf16.msra.mxu0 0
        %4708 = vmatprep.mubr.bf16.mxu0 0
        %4709 = vmatmul.mubr.bf16.gmra.mrb[0].mxu0 %v4665
        %v4710 = vpop.f32.mrb[0].mxu0
        %v4711 = vadd.f32 %v4495, %v4710
        %v4712 = vpop.f32.mrb[0].mxu0
        %v4713 = vpop.f32.mrb[0].mxu0
        %v4714 = vadd.f32 %v4500, %v4713
        %v4715 = vpop.f32.mrb[0].mxu0
        %4716 = vmatprep.mubr.bf16.mxu0 0
        %4717 = vmatmul.mubr.bf16.gmra.mrb[0].mxu0 %v4668
        %v4718 = vpop.f32.mrb[0].mxu0
        %v4719 = vadd.f32 %v4505, %v4718
        %v4720 = vpop.f32.mrb[0].mxu0
        %v4721 = vpop.f32.mrb[0].mxu0
        %v4722 = vadd.f32 %v4510, %v4721
        %v4723 = vpop.f32.mrb[0].mxu0
        %4724 = vmatprep.mubr.bf16.mxu0 0
        %4725 = vmatmul.mubr.bf16.gmra.mrb[0].mxu0 %v4671
        %v4726 = vpop.f32.mrb[0].mxu0
        %v4727 = vadd.f32 %v4515, %v4726
        %v4728 = vpop.f32.mrb[0].mxu0
        %v4729 = vpop.f32.mrb[0].mxu0
        %v4730 = vadd.f32 %v4520, %v4729
        %v4731 = vpop.f32.mrb[0].mxu0
        %4732 = vmatprep.mubr.bf16.mxu0 0
        %4733 = vmatmul.mubr.bf16.gmra.mrb[0].mxu0 %v4674
        %v4734 = vpop.f32.mrb[0].mxu0
        %v4735 = vadd.f32 %v4525, %v4734
        %v4736 = vpop.f32.mrb[0].mxu0
        %v4737 = vpop.f32.mrb[0].mxu0
        %v4738 = vadd.f32 %v4530, %v4737
        %v4739 = vpop.f32.mrb[0].mxu0
        %4740 = vdwg.mxu0
        %v4741 = vxor.u32 %v4727, 2147483648
        %v4742 = vxor.u32 %v4730, 2147483648
        %v4743 = vxor.u32 %v4735, 2147483648
        %v4744 = vxor.u32 %v4738, 2147483648
        %v4745 = vmul.f32 %v4741, 1.442695
        %v4746 = vpow.pop %v4745
        %v4747 = vmul.f32 %v4742, 1.442695
        %v4748 = vpow.pop %v4747
        %v4749 = vmul.f32 %v4743, 1.442695
        %v4750 = vpow.pop %v4749
        %v4751 = vmul.f32 %v4744, 1.442695
        %v4752 = vpow.pop %v4751
        %v4753 = vadd.f32 %v4746, 1.0
        %v4754 = vadd.f32 %v4748, 1.0
        %v4755 = vadd.f32 %v4750, 1.0
        %v4756 = vadd.f32 %v4752, 1.0
        %v4757 = vrcp.pop %v4753
        %v4758 = vmul.f32 1.0, %v4757
        %v4759 = vrcp.pop %v4754
        %v4760 = vmul.f32 1.0, %v4759
        %v4761 = vrcp.pop %v4755
        %v4762 = vmul.f32 1.0, %v4761
        %v4763 = vrcp.pop %v4756
        %v4764 = vmul.f32 1.0, %v4763
        %v4765 = vmul.f32 %v4711, %v4758
        %v4766 = vmul.f32 %v4714, %v4760
        %v4767 = vmul.f32 %v4719, %v4762
        %v4768 = vmul.f32 %v4722, %v4764
        %v4769 = vadd.f32 %v4765, %v331
        %v4770 = vadd.f32 %v4766, %v332
        %v4771 = vadd.f32 %v4767, %v333
        %v4772 = vadd.f32 %v4768, %v334
        %4773 = vst [vmem:[%s329] sm:$0xff] %v4769
        %4774 = vst [vmem:[%s329 + $0x8] sm:$0xff] %v4770
        %4775 = vst [vmem:[%s329 + $0x10] sm:$0xff] %v4771
        %4776 = vst [vmem:[%s329 + $0x18] sm:$0xff] %v4772
        %v4777 = vmul.f32 %v4769, %v4769
        %v4778 = vmul.f32 %v4770, %v4770
        %v4779 = vmul.f32 %v4771, %v4771
        %v4780 = vmul.f32 %v4772, %v4772
        %v4781 = vadd.f32 %v4777, %v4778
        %v4782 = vadd.f32 %v4781, %v4779
        %v4783 = vadd.f32 %v4782, %v4780
        %v4784 = vrot.slane %v4783, 4
        %v4785 = vadd.f32 %v4783, %v4784
        %v4786 = vrot.slane %v4785, 2
        %v4787 = vadd.f32 %v4785, %v4786
        %v4788 = vrot.slane %v4787, 1
        %v4789 = vadd.f32 %v4787, %v4788
        %v4790 = vmul.f32 %v4789, 0.03125
        %v4791 = vrsqrt.pop %v4790
        %v4792 = vmul.f32 %v4790, %v4791
        %vm4793 = vcmp.eq.f32.partialorder %v4790, inf
        %v4794 = vsel %vm4793, %v4790, %v4792
        %vm4795 = vcmp.eq.f32.partialorder %v4790, 0.0
        %v4796 = vand.u32 %v4790, 2147483648
        %v4797 = vsel %vm4795, %v4796, %v4794
        %v4798 = vadd.f32 %v4797, 1e-08
        %v4799 = vrcp.pop %v4798
        %4800 = vst [vmem:[%s316] sm:$0x1] %v4799
        %p4801 = scmp.lt.s32.totalorder %s23, 1
        %s4802 = scalar_select %p4801, %s23, 1
        %s4803 = smul.addr %s4802, 4
        %s4804 = smul.addr %s4803, 8
        %s4805 = scalar_lea.vmem %s7, %s4804
        %s4806 = sand.u32 %s214, 1
        %s4807 = scalar_lea.sflag [#allocation3], %s4806
        %s4808 = sand.u32 %s214, 1
        %s4809 = scalar_lea.vmem [#allocation2], %s4808
        // Predicated region
        $region49: #{janus_forward.6} parent=47 // pred_check
          %p4810 = pneg %p198
        $region50: #{janus_forward.6} parent=47 // pred_check_branch
          %4812 = sbr.rel (%p4810) target = $region52
        $region51: #{janus_forward.6} parent=47 // pred_region
          _
        $region52: #{janus_forward.6} parent=47 // pred_fallthru
          _
        // Predicated region
        $region53: #{janus_forward.6} parent=47 // pred_check
          %p4813 = pneg %p224
        $region54: #{janus_forward.6} parent=47 // pred_check_branch
          %4815 = sbr.rel (%p4813) target = $region56
        $region55: #{janus_forward.6} parent=47 // pred_region
          %s4817 = ssub.s32 16, 16
          %4818 = vsyncadd %s4807, %s4817
          %s4819 = smul.addr %s23, 16
          %s4820 = scalar_lea.hbm %s8, %s4819
          %s4822 = sshll.u32 %s4809, 4
          %s4823 = int_to_ptr.vmem [resolvable:$true] %s4822
          %4825 = dma.vmem_to_hbm [thread:$0]  %s4823, 16, %s4820, %s4807
        $region56: #{janus_forward.6} parent=47 // pred_fallthru
          _
      $region48: #{janus_forward.6} parent=5 // pred_fallthru
        _
      %p4826 = scmp.le.s32.totalorder 2, %s18
      // Predicated region
      $region57: #{janus_forward.6} parent=5 // pred_check
        %p4827 = pneg %p4826
      $region58: #{janus_forward.6} parent=5 // pred_check_branch
        %4829 = sbr.rel (%p4827) target = $region60
      $region59: #{janus_forward.6} parent=5 // pred_region
        %s4830 = ssub.s32 %s18, 2
        // Predicated region
        $region61: #{janus_forward.6} parent=59 // pred_check
          %p4831 = pneg %p204
        $region62: #{janus_forward.6} parent=59 // pred_check_branch
          %4833 = sbr.rel (%p4831) target = $region64
        $region63: #{janus_forward.6} parent=59 // pred_region
          %p4834 = scmp.lt.s32.totalorder %s24, 1
          %s4835 = scalar_select %p4834, %s24, 1
          %s4836 = smul.addr %s4835, 4
          %s4837 = smul.addr %s4836, 8
          %s4838 = scalar_lea.vmem %s7, %s4837
        $region64: #{janus_forward.6} parent=59 // pred_fallthru
          _
        // Predicated region
        $region65: #{janus_forward.6} parent=59 // pred_check
          %p4839 = pneg %p230
        $region66: #{janus_forward.6} parent=59 // pred_check_branch
          %4841 = sbr.rel (%p4839) target = $region68
        $region67: #{janus_forward.6} parent=59 // pred_region
          %s4842 = sand.u32 %s215, 1
          %s4843 = scalar_lea.sflag [#allocation3], %s4842
          %s4844 = sand.u32 %s215, 1
          %s4845 = scalar_lea.vmem [#allocation2], %s4844
          %4846 = dma.done %s4843, 16
        $region68: #{janus_forward.6} parent=59 // pred_fallthru
          _
      $region60: #{janus_forward.6} parent=5 // pred_fallthru
        _
    $region6: #{janus_forward.6} parent=1 // loop_footer
      %s22 = sadd.s32 1, %s18
    $region7: #{janus_forward.6} parent=1 // loop_footer_branch
      %17 = sbr.rel target = $region3
    $region8: #{janus_forward.6} parent=1 // loop_exit
      _
    %4847 = vsyncpa [#allocation3], 1
    %s4848 = scalar_lea.sflag [#allocation3], 1
    %4849 = vsyncpa %s4848, 1

</llo_original>
